<compile_context>
chip_gen: v6e
topology: v6e:2x2x1
jax: 0.10.0
libtpu: 0.0.40
codegen_flags: <defaults>
</compile_context>

<pallas_src>
import jax
import jax.numpy as jnp
import numpy as np
from jax import lax
from jax.experimental import pallas as pl
from jax.experimental.pallas import tpu as pltpu

# config: TransformerBlock(dim=32, num_heads=4, ffn_expansion_factor=2,
#                          bias=True, LayerNorm_type='WithBias')
DIM = 32
NUM_HEADS = 4
FFN_EXPANSION = 2.0
HIDDEN = int(DIM * FFN_EXPANSION)          # 64
B, H, W = 2, 16, 16
HW = H * W
LANES = B * HW                             # 512 = 4 full lane tiles
EPS_LN = 1e-5
EPS_NORM = 1e-12
SQRT_2_OVER_PI = 0.7978845608028654

# packed-column offsets inside the (672, 1) constant bank (all 32-aligned)
_LN1_W, _LN1_B = 0, 32
_BQKV = 64            # 96 rows
_DWQKV_B = 160        # 96 rows (q:160, k:192, v:224)
_TEMP = 256
_BO = 288
_LN2_W, _LN2_B = 320, 352
_BI = 384             # 128 rows
_DWF_B = 512          # 128 rows
_BOUT = 640
_COLS_TOTAL = 672


# ---------------------------------------------------------------------------
# Pallas kernel: whole (batch-fused) problem in one invocation, all in VMEM.
# ---------------------------------------------------------------------------
def transformer_block_kernel(x_ref, cols_ref, dw_ref, tap_masks_ref,
                             head_bias_ref, w1_ref, wout_ref, out_ref):
    f32 = jnp.float32
    bf16 = jnp.bfloat16
    x = x_ref[...]                                     # (C, B*HW) f32

    def col(lo, hi):
        return cols_ref[lo:hi]                         # (hi-lo, 1) f32

    # hoist the 9 per-tap boundary masks (shared by every dwconv chunk)
    tap_masks = [tap_masks_ref[t] for t in range(9)]   # each (1, LANES)

    def layernorm(z, w_c, b_c):
        # WithBias_LayerNorm over channels (sublane axis), unbiased=False var.
        mu = jnp.mean(z, axis=0, keepdims=True)
        var = jnp.mean((z - mu) ** 2, axis=0, keepdims=True)
        return (z - mu) * lax.rsqrt(var + EPS_LN) * w_c + b_c

    def dwconv3x3(z, w_base, b_c):
        # Depthwise 3x3, stride 1, zero pad 1, on a 32-channel chunk.
        # Tap (di, dj): out[c, p] += w[c, di+1, dj+1] * z[c, p + di*W + dj],
        # realized as a static lane roll (XLU) + boundary mask + per-channel
        # weight column.  Batch seams are zeroed by the same masks (exact).
        c = z.shape[0]
        acc = z * dw_ref[4, w_base:w_base + c]         # center tap, mask == 1
        for t in range(9):
            if t == 4:
                continue
            di, dj = t // 3 - 1, t % 3 - 1
            shift = (-(di * W + dj)) % LANES           # rolled[p] = z[p+di*W+dj]
            rolled = pltpu.roll(z, shift=shift, axis=1)
            acc = acc + (rolled * tap_masks[t]) * dw_ref[t, w_base:w_base + c]
        return acc + b_c

    def l2norm(z):
        ss = jnp.sum(z * z, axis=1, keepdims=True)
        return z * lax.rsqrt(jnp.maximum(ss, EPS_NORM * EPS_NORM))

    # ---------------- attention branch ----------------
    y1 = layernorm(x, col(_LN1_W, _LN1_W + 32), col(_LN1_B, _LN1_B + 32))
    qkv = jnp.dot(w1_ref[0:3 * DIM], y1.astype(bf16),
                  preferred_element_type=f32) + col(_BQKV, _BQKV + 3 * DIM)

    # depthwise conv per 32-channel chunk (limits vreg pressure)
    q = dwconv3x3(qkv[0:DIM],           0,       col(_DWQKV_B,            _DWQKV_B + DIM))
    k = dwconv3x3(qkv[DIM:2 * DIM],     DIM,     col(_DWQKV_B + DIM,      _DWQKV_B + 2 * DIM))
    v = dwconv3x3(qkv[2 * DIM:3 * DIM], 2 * DIM, col(_DWQKV_B + 2 * DIM,  _DWQKV_B + 3 * DIM))

    temp = col(_TEMP, _TEMP + DIM)                     # per-row head temperature
    head_bias = head_bias_ref[...]                     # 0 / -1e30 additive mask

    # channel-channel attention, per batch element (static 256-lane slices)
    ctx_parts = []
    for nb in range(B):
        s0 = nb * HW
        qb = l2norm(q[:, s0:s0 + HW]).astype(bf16)     # torch F.normalize(dim=-1)
        kb = l2norm(k[:, s0:s0 + HW]).astype(bf16)
        vb = v[:, s0:s0 + HW].astype(bf16)
        logits = lax.dot_general(qb, kb, (((1,), (1,)), ((), ())),
                                 preferred_element_type=f32)        # (C, C)
        logits = logits * temp + head_bias
        m = jnp.max(logits, axis=-1, keepdims=True)
        e = jnp.exp(logits - m)
        attn = e * pl.reciprocal(jnp.sum(e, axis=-1, keepdims=True), approx=True)
        ctx_parts.append(jnp.dot(attn.astype(bf16), vb,
                                 preferred_element_type=f32))       # (C, HW)
    ctx = jnp.concatenate(ctx_parts, axis=1)                        # (C, B*HW)

    attn_out = jnp.dot(w1_ref[3 * DIM:4 * DIM], ctx.astype(bf16),
                       preferred_element_type=f32) + col(_BO, _BO + DIM)
    x2 = x + attn_out

    # ---------------- feed-forward branch ----------------
    y2 = layernorm(x2, col(_LN2_W, _LN2_W + 32), col(_LN2_B, _LN2_B + 32))
    hh = jnp.dot(w1_ref[4 * DIM:4 * DIM + 2 * HIDDEN], y2.astype(bf16),
                 preferred_element_type=f32) + col(_BI, _BI + 2 * HIDDEN)

    # FFN depthwise conv in 4 chunks of 32 channels (taps start at row 96)
    hch = [dwconv3x3(hh[32 * i:32 * (i + 1)], 3 * DIM + 32 * i,
                     col(_DWF_B + 32 * i, _DWF_B + 32 * (i + 1)))
           for i in range(4)]
    h1 = jnp.concatenate(hch[0:2], axis=0)             # (HIDDEN, LANES)
    h2 = jnp.concatenate(hch[2:4], axis=0)

    # TODO(synk): exact-erf F.gelu has no Mosaic erf primitive; tanh-GELU used
    # (max abs deviation well inside tolerance).  0.5 factor folded into wout.
    g = h1 * (1.0 + jnp.tanh(SQRT_2_OVER_PI * (h1 + 0.044715 * (h1 * h1 * h1)))) * h2
    ffn_out = jnp.dot(wout_ref[...], g.astype(bf16),
                      preferred_element_type=f32) + col(_BOUT, _BOUT + DIM)

    out_ref[...] = x2 + ffn_out


# ---------------------------------------------------------------------------
# One-time parameter packing (host/device constants; do NOT redo per call).
# ---------------------------------------------------------------------------
def pack_params(params):
    ch = DIM // NUM_HEADS

    def taps(w):                       # (C, 3, 3) -> (9, C), t = i*3 + j
        return jnp.transpose(w, (1, 2, 0)).reshape(9, w.shape[0])

    temp_col = jnp.repeat(params['temp'], ch)                        # (C,)
    cols = jnp.concatenate([
        params['ln1_w'], params['ln1_b'],
        params['bqkv'], params['dwqkv_b'],
        temp_col, params['bo'],
        params['ln2_w'], params['ln2_b'],
        params['bi'], params['dwf_b'],
        params['bout'],
    ], axis=0).astype(jnp.float32)[:, None]                          # (672, 1)
    assert cols.shape[0] == _COLS_TOTAL

    dw = jnp.concatenate([taps(params['dwqkv_w']), taps(params['dwf_w'])],
                         axis=1).astype(jnp.float32)[:, :, None]     # (9, 224, 1)

    # stacked 1x1-conv weights: wqkv (96,32) | wo (32,32) | wi (128,32)
    w1 = jnp.concatenate([params['wqkv'], params['wo'], params['wi']],
                         axis=0).astype(jnp.bfloat16)                # (256, 32)
    wout = (0.5 * params['wout']).astype(jnp.bfloat16)               # (32, 64)

    head_id = jnp.arange(DIM) // ch
    head_bias = jnp.where(head_id[:, None] == head_id[None, :],
                          0.0, -1e30).astype(jnp.float32)            # (C, C)

    # boundary-validity masks for the 9 depthwise-conv taps, tiled over batch
    ii = np.arange(HW) // W
    jj = np.arange(HW) % W
    masks = []
    for di in (-1, 0, 1):
        for dj in (-1, 0, 1):
            valid = ((ii + di >= 0) & (ii + di < H) &
                     (jj + dj >= 0) & (jj + dj < W)).astype(np.float32)
            masks.append(np.tile(valid, B))
    tap_masks = jnp.asarray(np.stack(masks))[:, None, :]             # (9, 1, LANES)

    return dict(cols=cols, dw=dw, tap_masks=tap_masks, head_bias=head_bias,
                w1=w1, wout=wout)


# ---------------------------------------------------------------------------
# Forward wrapper (jit this): only the x layout shuffle is done per call.
# ---------------------------------------------------------------------------
def transformer_block(x_nchw, packed):
    Bb, Cc, Hh, Ww = x_nchw.shape
    lanes = Bb * Hh * Ww
    # (B, C, H, W) -> (C, B*HW): channels on sublanes, batch-major spatial lanes
    x_flat = jnp.transpose(x_nchw.reshape(Bb, Cc, Hh * Ww), (1, 0, 2)).reshape(Cc, lanes)

    in_arrays = [x_flat, packed['cols'], packed['dw'], packed['tap_masks'],
                 packed['head_bias'], packed['w1'], packed['wout']]

    def full_spec(a):
        nd = a.ndim
        return pl.BlockSpec(a.shape, lambda i, _nd=nd: (0,) * _nd)

    out = pl.pallas_call(
        transformer_block_kernel,
        out_shape=jax.ShapeDtypeStruct((Cc, lanes), jnp.float32),
        grid_spec=pltpu.PrefetchScalarGridSpec(
            num_scalar_prefetch=0,
            grid=(1,),
            in_specs=[full_spec(a) for a in in_arrays],
            out_specs=pl.BlockSpec((Cc, lanes), lambda i: (0, 0)),
        ),
        compiler_params=pltpu.CompilerParams(
            dimension_semantics=("arbitrary",)),
    )(*in_arrays)
    return jnp.transpose(out.reshape(Cc, Bb, Hh * Ww), (1, 0, 2)).reshape(Bb, Cc, Hh, Ww)


# ---------------------------------------------------------------------------
# Deterministic synthetic parameter init (shapes mirror the module __init__).
# ---------------------------------------------------------------------------
def init_params(key):
    keys = jax.random.split(key, 24)
    it = iter(keys)

    def nrm(shape, scale=0.05):
        return scale * jax.random.normal(next(it), shape, dtype=jnp.float32)

    return dict(
        ln1_w=1.0 + nrm((DIM,)), ln1_b=nrm((DIM,)),
        wqkv=nrm((3 * DIM, DIM)), bqkv=nrm((3 * DIM,)),
        dwqkv_w=nrm((3 * DIM, 3, 3)), dwqkv_b=nrm((3 * DIM,)),
        temp=1.0 + 0.1 * jax.random.normal(next(it), (NUM_HEADS,), dtype=jnp.float32),
        wo=nrm((DIM, DIM)), bo=nrm((DIM,)),
        ln2_w=1.0 + nrm((DIM,)), ln2_b=nrm((DIM,)),
        wi=nrm((2 * HIDDEN, DIM)), bi=nrm((2 * HIDDEN,)),
        dwf_w=nrm((2 * HIDDEN, 3, 3)), dwf_b=nrm((2 * HIDDEN,)),
        wout=nrm((DIM, HIDDEN)), bout=nrm((DIM,)),
    )


# ---------------------------------------------------------------------------
# Pure-JAX reference (mirrors the PyTorch forward; NCHW layout, exact erf)
# ---------------------------------------------------------------------------
def reference_forward(x, p):
    Bb, Cc, Hh, Ww = x.shape
    hw = Hh * Ww
    ch = Cc // NUM_HEADS

    def layernorm(z4, w, b):
        z = jnp.transpose(z4.reshape(Bb, Cc, hw), (0, 2, 1))       # (B, HW, C)
        mu = jnp.mean(z, axis=-1, keepdims=True)
        var = jnp.mean((z - mu) ** 2, axis=-1, keepdims=True)
        zn = (z - mu) / jnp.sqrt(var + EPS_LN) * w + b
        return jnp.transpose(zn, (0, 2, 1)).reshape(Bb, Cc, Hh, Ww)

    def conv1x1(z, w, b):
        return (jnp.einsum('oc,bchw->bohw', w, z, precision='highest')
                + b[None, :, None, None])

    def dwconv3x3(z, w, b):
        zp = jnp.pad(z, ((0, 0), (0, 0), (1, 1), (1, 1)))
        acc = jnp.zeros_like(z)
        for i in range(3):
            for j in range(3):
                acc = acc + zp[:, :, i:i + Hh, j:j + Ww] * w[None, :, i, j, None, None]
        return acc + b[None, :, None, None]

    y1 = layernorm(x, p['ln1_w'], p['ln1_b'])
    qkv = dwconv3x3(conv1x1(y1, p['wqkv'], p['bqkv']), p['dwqkv_w'], p['dwqkv_b'])
    q, k, v = qkv[:, :Cc], qkv[:, Cc:2 * Cc], qkv[:, 2 * Cc:]

    def heads(z):                       # 'b (head c) h w -> b head c (h w)'
        return z.reshape(Bb, NUM_HEADS, ch, hw)

    qh, kh, vh = heads(q), heads(k), heads(v)
    qh = qh / jnp.maximum(jnp.sqrt(jnp.sum(qh * qh, axis=-1, keepdims=True)), EPS_NORM)
    kh = kh / jnp.maximum(jnp.sqrt(jnp.sum(kh * kh, axis=-1, keepdims=True)), EPS_NORM)
    attn = jnp.einsum('bhcp,bhdp->bhcd', qh, kh, precision='highest')
    attn = attn * p['temp'][None, :, None, None]
    attn = jax.nn.softmax(attn, axis=-1)
    outh = jnp.einsum('bhcd,bhdp->bhcp', attn, vh, precision='highest')
    out = outh.reshape(Bb, Cc, Hh, Ww)
    x2 = x + conv1x1(out, p['wo'], p['bo'])

    y2 = layernorm(x2, p['ln2_w'], p['ln2_b'])
    hh = dwconv3x3(conv1x1(y2, p['wi'], p['bi']), p['dwf_w'], p['dwf_b'])
    h1, h2 = hh[:, :HIDDEN], hh[:, HIDDEN:]
    g = 0.5 * h1 * (1.0 + lax.erf(h1 * 0.7071067811865476)) * h2
    ffn_out = conv1x1(g, p['wout'], p['bout'])
    return x2 + ffn_out


if __name__ == "__main__":
    key = jax.random.PRNGKey(0)
    kx, kp = jax.random.split(key)
    x = jax.random.normal(kx, (B, DIM, H, W), dtype=jnp.float32)   # NCHW, like PyTorch
    params = init_params(kp)
    packed = pack_params(params)          # one-time repacking (device constants)

    fwd = jax.jit(transformer_block)
    out = jax.block_until_ready(fwd(x, packed))

    ref = reference_forward(x, params)
    err = float(jnp.max(jnp.abs(out - ref)))
    if not (err < 5e-3):
        raise AssertionError(f"mismatch vs reference: max abs err = {err}")
    print("KERNEL_OK")
</pallas_src>

<mosaic_0001>
module attributes {stable_mosaic.version = 11 : i64} {
  func.func @transformer_block_kernel(%arg0: i32, %arg1: memref<32x512xf32, #tpu.memory_space<vmem>>, %arg2: memref<672x1xf32, #tpu.memory_space<vmem>>, %arg3: memref<9x224x1xf32, #tpu.memory_space<vmem>>, %arg4: memref<9x1x512xf32, #tpu.memory_space<vmem>>, %arg5: memref<32x32xf32, #tpu.memory_space<vmem>>, %arg6: memref<256x32xbf16, #tpu.memory_space<vmem>>, %arg7: memref<32x64xbf16, #tpu.memory_space<vmem>>, %arg8: memref<32x512xf32, #tpu.memory_space<vmem>>) attributes {dimension_semantics = [#tpu.dimension_semantics<arbitrary>], iteration_bounds = array<i64: 1>, scalar_prefetch = 0 : i64, scratch_operands = 0 : i64, tpu.core_type = #tpu.core_type<tc>, window_params = [{pipeline_mode = #tpu.pipeline_mode<synchronous>, transform_indices = @transform_0, window_bounds = array<i64: 32, 512>}, {pipeline_mode = #tpu.pipeline_mode<synchronous>, transform_indices = @transform_1, window_bounds = array<i64: 672, 1>}, {pipeline_mode = #tpu.pipeline_mode<synchronous>, transform_indices = @transform_2, window_bounds = array<i64: 9, 224, 1>}, {pipeline_mode = #tpu.pipeline_mode<synchronous>, transform_indices = @transform_3, window_bounds = array<i64: 9, 1, 512>}, {pipeline_mode = #tpu.pipeline_mode<synchronous>, transform_indices = @transform_4, window_bounds = array<i64: 32, 32>}, {pipeline_mode = #tpu.pipeline_mode<synchronous>, transform_indices = @transform_5, window_bounds = array<i64: 256, 32>}, {pipeline_mode = #tpu.pipeline_mode<synchronous>, transform_indices = @transform_6, window_bounds = array<i64: 32, 64>}, {pipeline_mode = #tpu.pipeline_mode<synchronous>, transform_indices = @transform_7, window_bounds = array<i64: 32, 512>}]} {
    %c0 = arith.constant 0 : index
    %c0_0 = arith.constant 0 : index
    %0 = vector.load %arg1[%c0, %c0_0] : memref<32x512xf32, #tpu.memory_space<vmem>>, vector<32x512xf32>
    %c0_1 = arith.constant 0 : index
    %c0_2 = arith.constant 0 : index
    %c0_3 = arith.constant 0 : index
    %1 = vector.load %arg4[%c0_1, %c0_2, %c0_3] : memref<9x1x512xf32, #tpu.memory_space<vmem>>, vector<1x1x512xf32>
    %2 = vector.shape_cast %1 : vector<1x1x512xf32> to vector<1x512xf32>
    %c1 = arith.constant 1 : index
    %c0_4 = arith.constant 0 : index
    %c0_5 = arith.constant 0 : index
    %3 = vector.load %arg4[%c1, %c0_4, %c0_5] : memref<9x1x512xf32, #tpu.memory_space<vmem>>, vector<1x1x512xf32>
    %4 = vector.shape_cast %3 : vector<1x1x512xf32> to vector<1x512xf32>
    %c2 = arith.constant 2 : index
    %c0_6 = arith.constant 0 : index
    %c0_7 = arith.constant 0 : index
    %5 = vector.load %arg4[%c2, %c0_6, %c0_7] : memref<9x1x512xf32, #tpu.memory_space<vmem>>, vector<1x1x512xf32>
    %6 = vector.shape_cast %5 : vector<1x1x512xf32> to vector<1x512xf32>
    %c3 = arith.constant 3 : index
    %c0_8 = arith.constant 0 : index
    %c0_9 = arith.constant 0 : index
    %7 = vector.load %arg4[%c3, %c0_8, %c0_9] : memref<9x1x512xf32, #tpu.memory_space<vmem>>, vector<1x1x512xf32>
    %8 = vector.shape_cast %7 : vector<1x1x512xf32> to vector<1x512xf32>
    %c5 = arith.constant 5 : index
    %c0_10 = arith.constant 0 : index
    %c0_11 = arith.constant 0 : index
    %9 = vector.load %arg4[%c5, %c0_10, %c0_11] : memref<9x1x512xf32, #tpu.memory_space<vmem>>, vector<1x1x512xf32>
    %10 = vector.shape_cast %9 : vector<1x1x512xf32> to vector<1x512xf32>
    %c6 = arith.constant 6 : index
    %c0_12 = arith.constant 0 : index
    %c0_13 = arith.constant 0 : index
    %11 = vector.load %arg4[%c6, %c0_12, %c0_13] : memref<9x1x512xf32, #tpu.memory_space<vmem>>, vector<1x1x512xf32>
    %12 = vector.shape_cast %11 : vector<1x1x512xf32> to vector<1x512xf32>
    %c7 = arith.constant 7 : index
    %c0_14 = arith.constant 0 : index
    %c0_15 = arith.constant 0 : index
    %13 = vector.load %arg4[%c7, %c0_14, %c0_15] : memref<9x1x512xf32, #tpu.memory_space<vmem>>, vector<1x1x512xf32>
    %14 = vector.shape_cast %13 : vector<1x1x512xf32> to vector<1x512xf32>
    %c8 = arith.constant 8 : index
    %c0_16 = arith.constant 0 : index
    %c0_17 = arith.constant 0 : index
    %15 = vector.load %arg4[%c8, %c0_16, %c0_17] : memref<9x1x512xf32, #tpu.memory_space<vmem>>, vector<1x1x512xf32>
    %16 = vector.shape_cast %15 : vector<1x1x512xf32> to vector<1x512xf32>
    %c0_18 = arith.constant 0 : index
    %c0_19 = arith.constant 0 : index
    %17 = vector.load %arg2[%c0_18, %c0_19] : memref<672x1xf32, #tpu.memory_space<vmem>>, vector<32x1xf32>
    %c32 = arith.constant 32 : index
    %c0_20 = arith.constant 0 : index
    %18 = vector.load %arg2[%c32, %c0_20] : memref<672x1xf32, #tpu.memory_space<vmem>>, vector<32x1xf32>
    %cst = arith.constant dense<0.000000e+00> : vector<512xf32>
    %19 = vector.multi_reduction <add>, %0, %cst [0] : vector<32x512xf32> to vector<512xf32>
    %20 = vector.shape_cast %19 : vector<512xf32> to vector<1x512xf32>
    %cst_21 = arith.constant 3.200000e+01 : f32
    %21 = vector.broadcast %cst_21 : f32 to vector<1x512xf32>
    %22 = arith.divf %20, %21 : vector<1x512xf32>
    %23 = vector.broadcast %22 : vector<1x512xf32> to vector<32x512xf32>
    %24 = arith.subf %0, %23 : vector<32x512xf32>
    %25 = arith.mulf %24, %24 : vector<32x512xf32>
    %cst_22 = arith.constant dense<0.000000e+00> : vector<512xf32>
    %26 = vector.multi_reduction <add>, %25, %cst_22 [0] : vector<32x512xf32> to vector<512xf32>
    %27 = vector.shape_cast %26 : vector<512xf32> to vector<1x512xf32>
    %cst_23 = arith.constant 3.200000e+01 : f32
    %28 = vector.broadcast %cst_23 : f32 to vector<1x512xf32>
    %29 = arith.divf %27, %28 : vector<1x512xf32>
    %30 = vector.broadcast %22 : vector<1x512xf32> to vector<32x512xf32>
    %31 = arith.subf %0, %30 : vector<32x512xf32>
    %cst_24 = arith.constant 9.99999974E-6 : f32
    %32 = vector.broadcast %cst_24 : f32 to vector<1x512xf32>
    %33 = arith.addf %29, %32 : vector<1x512xf32>
    %34 = math.rsqrt %33 : vector<1x512xf32>
    %35 = vector.broadcast %34 : vector<1x512xf32> to vector<32x512xf32>
    %36 = arith.mulf %31, %35 : vector<32x512xf32>
    %37 = vector.broadcast %17 : vector<32x1xf32> to vector<32x512xf32>
    %38 = arith.mulf %36, %37 : vector<32x512xf32>
    %39 = vector.broadcast %18 : vector<32x1xf32> to vector<32x512xf32>
    %40 = arith.addf %38, %39 : vector<32x512xf32>
    %c0_25 = arith.constant 0 : index
    %c0_26 = arith.constant 0 : index
    %41 = vector.load %arg6[%c0_25, %c0_26] : memref<256x32xbf16, #tpu.memory_space<vmem>>, vector<96x32xbf16>
    %42 = arith.truncf %40 : vector<32x512xf32> to vector<32x512xbf16>
    %cst_27 = arith.constant dense<0.000000e+00> : vector<96x512xf32>
    %43 = tpu.matmul %41, %42, %cst_27 {dimension_numbers = #tpu.dot_dimension_numbers<[1], [0], [0], [1], [0, 0, 1, 1], [], []>} : vector<96x32xbf16>, vector<32x512xbf16>, vector<96x512xf32> -> vector<96x512xf32>
    %c64 = arith.constant 64 : index
    %c0_28 = arith.constant 0 : index
    %44 = vector.load %arg2[%c64, %c0_28] : memref<672x1xf32, #tpu.memory_space<vmem>>, vector<96x1xf32>
    %45 = vector.broadcast %44 : vector<96x1xf32> to vector<96x512xf32>
    %46 = arith.addf %43, %45 : vector<96x512xf32>
    %47 = vector.extract_strided_slice %46 {offsets = [0, 0], sizes = [32, 512], strides = [1, 1]} : vector<96x512xf32> to vector<32x512xf32>
    %c160 = arith.constant 160 : index
    %c0_29 = arith.constant 0 : index
    %48 = vector.load %arg2[%c160, %c0_29] : memref<672x1xf32, #tpu.memory_space<vmem>>, vector<32x1xf32>
    %c4 = arith.constant 4 : index
    %c0_30 = arith.constant 0 : index
    %c0_31 = arith.constant 0 : index
    %49 = vector.load %arg3[%c4, %c0_30, %c0_31] : memref<9x224x1xf32, #tpu.memory_space<vmem>>, vector<1x32x1xf32>
    %50 = vector.shape_cast %49 : vector<1x32x1xf32> to vector<32x1xf32>
    %51 = vector.broadcast %50 : vector<32x1xf32> to vector<32x512xf32>
    %52 = arith.mulf %47, %51 : vector<32x512xf32>
    %c17_i32 = arith.constant 17 : i32
    %53 = tpu.dynamic_rotate %47 by %c17_i32 dim 1 : vector<32x512xf32>, i32 -> vector<32x512xf32>
    %54 = vector.broadcast %2 : vector<1x512xf32> to vector<32x512xf32>
    %55 = arith.mulf %53, %54 : vector<32x512xf32>
    %c0_32 = arith.constant 0 : index
    %c0_33 = arith.constant 0 : index
    %c0_34 = arith.constant 0 : index
    %56 = vector.load %arg3[%c0_32, %c0_33, %c0_34] : memref<9x224x1xf32, #tpu.memory_space<vmem>>, vector<1x32x1xf32>
    %57 = vector.shape_cast %56 : vector<1x32x1xf32> to vector<32x1xf32>
    %58 = vector.broadcast %57 : vector<32x1xf32> to vector<32x512xf32>
    %59 = arith.mulf %55, %58 : vector<32x512xf32>
    %60 = arith.addf %52, %59 : vector<32x512xf32>
    %c16_i32 = arith.constant 16 : i32
    %61 = tpu.dynamic_rotate %47 by %c16_i32 dim 1 : vector<32x512xf32>, i32 -> vector<32x512xf32>
    %62 = vector.broadcast %4 : vector<1x512xf32> to vector<32x512xf32>
    %63 = arith.mulf %61, %62 : vector<32x512xf32>
    %c1_35 = arith.constant 1 : index
    %c0_36 = arith.constant 0 : index
    %c0_37 = arith.constant 0 : index
    %64 = vector.load %arg3[%c1_35, %c0_36, %c0_37] : memref<9x224x1xf32, #tpu.memory_space<vmem>>, vector<1x32x1xf32>
    %65 = vector.shape_cast %64 : vector<1x32x1xf32> to vector<32x1xf32>
    %66 = vector.broadcast %65 : vector<32x1xf32> to vector<32x512xf32>
    %67 = arith.mulf %63, %66 : vector<32x512xf32>
    %68 = arith.addf %60, %67 : vector<32x512xf32>
    %c15_i32 = arith.constant 15 : i32
    %69 = tpu.dynamic_rotate %47 by %c15_i32 dim 1 : vector<32x512xf32>, i32 -> vector<32x512xf32>
    %70 = vector.broadcast %6 : vector<1x512xf32> to vector<32x512xf32>
    %71 = arith.mulf %69, %70 : vector<32x512xf32>
    %c2_38 = arith.constant 2 : index
    %c0_39 = arith.constant 0 : index
    %c0_40 = arith.constant 0 : index
    %72 = vector.load %arg3[%c2_38, %c0_39, %c0_40] : memref<9x224x1xf32, #tpu.memory_space<vmem>>, vector<1x32x1xf32>
    %73 = vector.shape_cast %72 : vector<1x32x1xf32> to vector<32x1xf32>
    %74 = vector.broadcast %73 : vector<32x1xf32> to vector<32x512xf32>
    %75 = arith.mulf %71, %74 : vector<32x512xf32>
    %76 = arith.addf %68, %75 : vector<32x512xf32>
    %c1_i32 = arith.constant 1 : i32
    %77 = tpu.dynamic_rotate %47 by %c1_i32 dim 1 : vector<32x512xf32>, i32 -> vector<32x512xf32>
    %78 = vector.broadcast %8 : vector<1x512xf32> to vector<32x512xf32>
    %79 = arith.mulf %77, %78 : vector<32x512xf32>
    %c3_41 = arith.constant 3 : index
    %c0_42 = arith.constant 0 : index
    %c0_43 = arith.constant 0 : index
    %80 = vector.load %arg3[%c3_41, %c0_42, %c0_43] : memref<9x224x1xf32, #tpu.memory_space<vmem>>, vector<1x32x1xf32>
    %81 = vector.shape_cast %80 : vector<1x32x1xf32> to vector<32x1xf32>
    %82 = vector.broadcast %81 : vector<32x1xf32> to vector<32x512xf32>
    %83 = arith.mulf %79, %82 : vector<32x512xf32>
    %84 = arith.addf %76, %83 : vector<32x512xf32>
    %c511_i32 = arith.constant 511 : i32
    %85 = tpu.dynamic_rotate %47 by %c511_i32 dim 1 : vector<32x512xf32>, i32 -> vector<32x512xf32>
    %86 = vector.broadcast %10 : vector<1x512xf32> to vector<32x512xf32>
    %87 = arith.mulf %85, %86 : vector<32x512xf32>
    %c5_44 = arith.constant 5 : index
    %c0_45 = arith.constant 0 : index
    %c0_46 = arith.constant 0 : index
    %88 = vector.load %arg3[%c5_44, %c0_45, %c0_46] : memref<9x224x1xf32, #tpu.memory_space<vmem>>, vector<1x32x1xf32>
    %89 = vector.shape_cast %88 : vector<1x32x1xf32> to vector<32x1xf32>
    %90 = vector.broadcast %89 : vector<32x1xf32> to vector<32x512xf32>
    %91 = arith.mulf %87, %90 : vector<32x512xf32>
    %92 = arith.addf %84, %91 : vector<32x512xf32>
    %c497_i32 = arith.constant 497 : i32
    %93 = tpu.dynamic_rotate %47 by %c497_i32 dim 1 : vector<32x512xf32>, i32 -> vector<32x512xf32>
    %94 = vector.broadcast %12 : vector<1x512xf32> to vector<32x512xf32>
    %95 = arith.mulf %93, %94 : vector<32x512xf32>
    %c6_47 = arith.constant 6 : index
    %c0_48 = arith.constant 0 : index
    %c0_49 = arith.constant 0 : index
    %96 = vector.load %arg3[%c6_47, %c0_48, %c0_49] : memref<9x224x1xf32, #tpu.memory_space<vmem>>, vector<1x32x1xf32>
    %97 = vector.shape_cast %96 : vector<1x32x1xf32> to vector<32x1xf32>
    %98 = vector.broadcast %97 : vector<32x1xf32> to vector<32x512xf32>
    %99 = arith.mulf %95, %98 : vector<32x512xf32>
    %100 = arith.addf %92, %99 : vector<32x512xf32>
    %c496_i32 = arith.constant 496 : i32
    %101 = tpu.dynamic_rotate %47 by %c496_i32 dim 1 : vector<32x512xf32>, i32 -> vector<32x512xf32>
    %102 = vector.broadcast %14 : vector<1x512xf32> to vector<32x512xf32>
    %103 = arith.mulf %101, %102 : vector<32x512xf32>
    %c7_50 = arith.constant 7 : index
    %c0_51 = arith.constant 0 : index
    %c0_52 = arith.constant 0 : index
    %104 = vector.load %arg3[%c7_50, %c0_51, %c0_52] : memref<9x224x1xf32, #tpu.memory_space<vmem>>, vector<1x32x1xf32>
    %105 = vector.shape_cast %104 : vector<1x32x1xf32> to vector<32x1xf32>
    %106 = vector.broadcast %105 : vector<32x1xf32> to vector<32x512xf32>
    %107 = arith.mulf %103, %106 : vector<32x512xf32>
    %108 = arith.addf %100, %107 : vector<32x512xf32>
    %c495_i32 = arith.constant 495 : i32
    %109 = tpu.dynamic_rotate %47 by %c495_i32 dim 1 : vector<32x512xf32>, i32 -> vector<32x512xf32>
    %110 = vector.broadcast %16 : vector<1x512xf32> to vector<32x512xf32>
    %111 = arith.mulf %109, %110 : vector<32x512xf32>
    %c8_53 = arith.constant 8 : index
    %c0_54 = arith.constant 0 : index
    %c0_55 = arith.constant 0 : index
    %112 = vector.load %arg3[%c8_53, %c0_54, %c0_55] : memref<9x224x1xf32, #tpu.memory_space<vmem>>, vector<1x32x1xf32>
    %113 = vector.shape_cast %112 : vector<1x32x1xf32> to vector<32x1xf32>
    %114 = vector.broadcast %113 : vector<32x1xf32> to vector<32x512xf32>
    %115 = arith.mulf %111, %114 : vector<32x512xf32>
    %116 = arith.addf %108, %115 : vector<32x512xf32>
    %117 = vector.broadcast %48 : vector<32x1xf32> to vector<32x512xf32>
    %118 = arith.addf %116, %117 : vector<32x512xf32>
    %119 = vector.extract_strided_slice %46 {offsets = [32, 0], sizes = [32, 512], strides = [1, 1]} : vector<96x512xf32> to vector<32x512xf32>
    %c192 = arith.constant 192 : index
    %c0_56 = arith.constant 0 : index
    %120 = vector.load %arg2[%c192, %c0_56] : memref<672x1xf32, #tpu.memory_space<vmem>>, vector<32x1xf32>
    %c4_57 = arith.constant 4 : index
    %c32_58 = arith.constant 32 : index
    %c0_59 = arith.constant 0 : index
    %121 = vector.load %arg3[%c4_57, %c32_58, %c0_59] : memref<9x224x1xf32, #tpu.memory_space<vmem>>, vector<1x32x1xf32>
    %122 = vector.shape_cast %121 : vector<1x32x1xf32> to vector<32x1xf32>
    %123 = vector.broadcast %122 : vector<32x1xf32> to vector<32x512xf32>
    %124 = arith.mulf %119, %123 : vector<32x512xf32>
    %c17_i32_60 = arith.constant 17 : i32
    %125 = tpu.dynamic_rotate %119 by %c17_i32_60 dim 1 : vector<32x512xf32>, i32 -> vector<32x512xf32>
    %126 = vector.broadcast %2 : vector<1x512xf32> to vector<32x512xf32>
    %127 = arith.mulf %125, %126 : vector<32x512xf32>
    %c0_61 = arith.constant 0 : index
    %c32_62 = arith.constant 32 : index
    %c0_63 = arith.constant 0 : index
    %128 = vector.load %arg3[%c0_61, %c32_62, %c0_63] : memref<9x224x1xf32, #tpu.memory_space<vmem>>, vector<1x32x1xf32>
    %129 = vector.shape_cast %128 : vector<1x32x1xf32> to vector<32x1xf32>
    %130 = vector.broadcast %129 : vector<32x1xf32> to vector<32x512xf32>
    %131 = arith.mulf %127, %130 : vector<32x512xf32>
    %132 = arith.addf %124, %131 : vector<32x512xf32>
    %c16_i32_64 = arith.constant 16 : i32
    %133 = tpu.dynamic_rotate %119 by %c16_i32_64 dim 1 : vector<32x512xf32>, i32 -> vector<32x512xf32>
    %134 = vector.broadcast %4 : vector<1x512xf32> to vector<32x512xf32>
    %135 = arith.mulf %133, %134 : vector<32x512xf32>
    %c1_65 = arith.constant 1 : index
    %c32_66 = arith.constant 32 : index
    %c0_67 = arith.constant 0 : index
    %136 = vector.load %arg3[%c1_65, %c32_66, %c0_67] : memref<9x224x1xf32, #tpu.memory_space<vmem>>, vector<1x32x1xf32>
    %137 = vector.shape_cast %136 : vector<1x32x1xf32> to vector<32x1xf32>
    %138 = vector.broadcast %137 : vector<32x1xf32> to vector<32x512xf32>
    %139 = arith.mulf %135, %138 : vector<32x512xf32>
    %140 = arith.addf %132, %139 : vector<32x512xf32>
    %c15_i32_68 = arith.constant 15 : i32
    %141 = tpu.dynamic_rotate %119 by %c15_i32_68 dim 1 : vector<32x512xf32>, i32 -> vector<32x512xf32>
    %142 = vector.broadcast %6 : vector<1x512xf32> to vector<32x512xf32>
    %143 = arith.mulf %141, %142 : vector<32x512xf32>
    %c2_69 = arith.constant 2 : index
    %c32_70 = arith.constant 32 : index
    %c0_71 = arith.constant 0 : index
    %144 = vector.load %arg3[%c2_69, %c32_70, %c0_71] : memref<9x224x1xf32, #tpu.memory_space<vmem>>, vector<1x32x1xf32>
    %145 = vector.shape_cast %144 : vector<1x32x1xf32> to vector<32x1xf32>
    %146 = vector.broadcast %145 : vector<32x1xf32> to vector<32x512xf32>
    %147 = arith.mulf %143, %146 : vector<32x512xf32>
    %148 = arith.addf %140, %147 : vector<32x512xf32>
    %c1_i32_72 = arith.constant 1 : i32
    %149 = tpu.dynamic_rotate %119 by %c1_i32_72 dim 1 : vector<32x512xf32>, i32 -> vector<32x512xf32>
    %150 = vector.broadcast %8 : vector<1x512xf32> to vector<32x512xf32>
    %151 = arith.mulf %149, %150 : vector<32x512xf32>
    %c3_73 = arith.constant 3 : index
    %c32_74 = arith.constant 32 : index
    %c0_75 = arith.constant 0 : index
    %152 = vector.load %arg3[%c3_73, %c32_74, %c0_75] : memref<9x224x1xf32, #tpu.memory_space<vmem>>, vector<1x32x1xf32>
    %153 = vector.shape_cast %152 : vector<1x32x1xf32> to vector<32x1xf32>
    %154 = vector.broadcast %153 : vector<32x1xf32> to vector<32x512xf32>
    %155 = arith.mulf %151, %154 : vector<32x512xf32>
    %156 = arith.addf %148, %155 : vector<32x512xf32>
    %c511_i32_76 = arith.constant 511 : i32
    %157 = tpu.dynamic_rotate %119 by %c511_i32_76 dim 1 : vector<32x512xf32>, i32 -> vector<32x512xf32>
    %158 = vector.broadcast %10 : vector<1x512xf32> to vector<32x512xf32>
    %159 = arith.mulf %157, %158 : vector<32x512xf32>
    %c5_77 = arith.constant 5 : index
    %c32_78 = arith.constant 32 : index
    %c0_79 = arith.constant 0 : index
    %160 = vector.load %arg3[%c5_77, %c32_78, %c0_79] : memref<9x224x1xf32, #tpu.memory_space<vmem>>, vector<1x32x1xf32>
    %161 = vector.shape_cast %160 : vector<1x32x1xf32> to vector<32x1xf32>
    %162 = vector.broadcast %161 : vector<32x1xf32> to vector<32x512xf32>
    %163 = arith.mulf %159, %162 : vector<32x512xf32>
    %164 = arith.addf %156, %163 : vector<32x512xf32>
    %c497_i32_80 = arith.constant 497 : i32
    %165 = tpu.dynamic_rotate %119 by %c497_i32_80 dim 1 : vector<32x512xf32>, i32 -> vector<32x512xf32>
    %166 = vector.broadcast %12 : vector<1x512xf32> to vector<32x512xf32>
    %167 = arith.mulf %165, %166 : vector<32x512xf32>
    %c6_81 = arith.constant 6 : index
    %c32_82 = arith.constant 32 : index
    %c0_83 = arith.constant 0 : index
    %168 = vector.load %arg3[%c6_81, %c32_82, %c0_83] : memref<9x224x1xf32, #tpu.memory_space<vmem>>, vector<1x32x1xf32>
    %169 = vector.shape_cast %168 : vector<1x32x1xf32> to vector<32x1xf32>
    %170 = vector.broadcast %169 : vector<32x1xf32> to vector<32x512xf32>
    %171 = arith.mulf %167, %170 : vector<32x512xf32>
    %172 = arith.addf %164, %171 : vector<32x512xf32>
    %c496_i32_84 = arith.constant 496 : i32
    %173 = tpu.dynamic_rotate %119 by %c496_i32_84 dim 1 : vector<32x512xf32>, i32 -> vector<32x512xf32>
    %174 = vector.broadcast %14 : vector<1x512xf32> to vector<32x512xf32>
    %175 = arith.mulf %173, %174 : vector<32x512xf32>
    %c7_85 = arith.constant 7 : index
    %c32_86 = arith.constant 32 : index
    %c0_87 = arith.constant 0 : index
    %176 = vector.load %arg3[%c7_85, %c32_86, %c0_87] : memref<9x224x1xf32, #tpu.memory_space<vmem>>, vector<1x32x1xf32>
    %177 = vector.shape_cast %176 : vector<1x32x1xf32> to vector<32x1xf32>
    %178 = vector.broadcast %177 : vector<32x1xf32> to vector<32x512xf32>
    %179 = arith.mulf %175, %178 : vector<32x512xf32>
    %180 = arith.addf %172, %179 : vector<32x512xf32>
    %c495_i32_88 = arith.constant 495 : i32
    %181 = tpu.dynamic_rotate %119 by %c495_i32_88 dim 1 : vector<32x512xf32>, i32 -> vector<32x512xf32>
    %182 = vector.broadcast %16 : vector<1x512xf32> to vector<32x512xf32>
    %183 = arith.mulf %181, %182 : vector<32x512xf32>
    %c8_89 = arith.constant 8 : index
    %c32_90 = arith.constant 32 : index
    %c0_91 = arith.constant 0 : index
    %184 = vector.load %arg3[%c8_89, %c32_90, %c0_91] : memref<9x224x1xf32, #tpu.memory_space<vmem>>, vector<1x32x1xf32>
    %185 = vector.shape_cast %184 : vector<1x32x1xf32> to vector<32x1xf32>
    %186 = vector.broadcast %185 : vector<32x1xf32> to vector<32x512xf32>
    %187 = arith.mulf %183, %186 : vector<32x512xf32>
    %188 = arith.addf %180, %187 : vector<32x512xf32>
    %189 = vector.broadcast %120 : vector<32x1xf32> to vector<32x512xf32>
    %190 = arith.addf %188, %189 : vector<32x512xf32>
    %191 = vector.extract_strided_slice %46 {offsets = [64, 0], sizes = [32, 512], strides = [1, 1]} : vector<96x512xf32> to vector<32x512xf32>
    %c224 = arith.constant 224 : index
    %c0_92 = arith.constant 0 : index
    %192 = vector.load %arg2[%c224, %c0_92] : memref<672x1xf32, #tpu.memory_space<vmem>>, vector<32x1xf32>
    %c4_93 = arith.constant 4 : index
    %c64_94 = arith.constant 64 : index
    %c0_95 = arith.constant 0 : index
    %193 = vector.load %arg3[%c4_93, %c64_94, %c0_95] : memref<9x224x1xf32, #tpu.memory_space<vmem>>, vector<1x32x1xf32>
    %194 = vector.shape_cast %193 : vector<1x32x1xf32> to vector<32x1xf32>
    %195 = vector.broadcast %194 : vector<32x1xf32> to vector<32x512xf32>
    %196 = arith.mulf %191, %195 : vector<32x512xf32>
    %c17_i32_96 = arith.constant 17 : i32
    %197 = tpu.dynamic_rotate %191 by %c17_i32_96 dim 1 : vector<32x512xf32>, i32 -> vector<32x512xf32>
    %198 = vector.broadcast %2 : vector<1x512xf32> to vector<32x512xf32>
    %199 = arith.mulf %197, %198 : vector<32x512xf32>
    %c0_97 = arith.constant 0 : index
    %c64_98 = arith.constant 64 : index
    %c0_99 = arith.constant 0 : index
    %200 = vector.load %arg3[%c0_97, %c64_98, %c0_99] : memref<9x224x1xf32, #tpu.memory_space<vmem>>, vector<1x32x1xf32>
    %201 = vector.shape_cast %200 : vector<1x32x1xf32> to vector<32x1xf32>
    %202 = vector.broadcast %201 : vector<32x1xf32> to vector<32x512xf32>
    %203 = arith.mulf %199, %202 : vector<32x512xf32>
    %204 = arith.addf %196, %203 : vector<32x512xf32>
    %c16_i32_100 = arith.constant 16 : i32
    %205 = tpu.dynamic_rotate %191 by %c16_i32_100 dim 1 : vector<32x512xf32>, i32 -> vector<32x512xf32>
    %206 = vector.broadcast %4 : vector<1x512xf32> to vector<32x512xf32>
    %207 = arith.mulf %205, %206 : vector<32x512xf32>
    %c1_101 = arith.constant 1 : index
    %c64_102 = arith.constant 64 : index
    %c0_103 = arith.constant 0 : index
    %208 = vector.load %arg3[%c1_101, %c64_102, %c0_103] : memref<9x224x1xf32, #tpu.memory_space<vmem>>, vector<1x32x1xf32>
    %209 = vector.shape_cast %208 : vector<1x32x1xf32> to vector<32x1xf32>
    %210 = vector.broadcast %209 : vector<32x1xf32> to vector<32x512xf32>
    %211 = arith.mulf %207, %210 : vector<32x512xf32>
    %212 = arith.addf %204, %211 : vector<32x512xf32>
    %c15_i32_104 = arith.constant 15 : i32
    %213 = tpu.dynamic_rotate %191 by %c15_i32_104 dim 1 : vector<32x512xf32>, i32 -> vector<32x512xf32>
    %214 = vector.broadcast %6 : vector<1x512xf32> to vector<32x512xf32>
    %215 = arith.mulf %213, %214 : vector<32x512xf32>
    %c2_105 = arith.constant 2 : index
    %c64_106 = arith.constant 64 : index
    %c0_107 = arith.constant 0 : index
    %216 = vector.load %arg3[%c2_105, %c64_106, %c0_107] : memref<9x224x1xf32, #tpu.memory_space<vmem>>, vector<1x32x1xf32>
    %217 = vector.shape_cast %216 : vector<1x32x1xf32> to vector<32x1xf32>
    %218 = vector.broadcast %217 : vector<32x1xf32> to vector<32x512xf32>
    %219 = arith.mulf %215, %218 : vector<32x512xf32>
    %220 = arith.addf %212, %219 : vector<32x512xf32>
    %c1_i32_108 = arith.constant 1 : i32
    %221 = tpu.dynamic_rotate %191 by %c1_i32_108 dim 1 : vector<32x512xf32>, i32 -> vector<32x512xf32>
    %222 = vector.broadcast %8 : vector<1x512xf32> to vector<32x512xf32>
    %223 = arith.mulf %221, %222 : vector<32x512xf32>
    %c3_109 = arith.constant 3 : index
    %c64_110 = arith.constant 64 : index
    %c0_111 = arith.constant 0 : index
    %224 = vector.load %arg3[%c3_109, %c64_110, %c0_111] : memref<9x224x1xf32, #tpu.memory_space<vmem>>, vector<1x32x1xf32>
    %225 = vector.shape_cast %224 : vector<1x32x1xf32> to vector<32x1xf32>
    %226 = vector.broadcast %225 : vector<32x1xf32> to vector<32x512xf32>
    %227 = arith.mulf %223, %226 : vector<32x512xf32>
    %228 = arith.addf %220, %227 : vector<32x512xf32>
    %c511_i32_112 = arith.constant 511 : i32
    %229 = tpu.dynamic_rotate %191 by %c511_i32_112 dim 1 : vector<32x512xf32>, i32 -> vector<32x512xf32>
    %230 = vector.broadcast %10 : vector<1x512xf32> to vector<32x512xf32>
    %231 = arith.mulf %229, %230 : vector<32x512xf32>
    %c5_113 = arith.constant 5 : index
    %c64_114 = arith.constant 64 : index
    %c0_115 = arith.constant 0 : index
    %232 = vector.load %arg3[%c5_113, %c64_114, %c0_115] : memref<9x224x1xf32, #tpu.memory_space<vmem>>, vector<1x32x1xf32>
    %233 = vector.shape_cast %232 : vector<1x32x1xf32> to vector<32x1xf32>
    %234 = vector.broadcast %233 : vector<32x1xf32> to vector<32x512xf32>
    %235 = arith.mulf %231, %234 : vector<32x512xf32>
    %236 = arith.addf %228, %235 : vector<32x512xf32>
    %c497_i32_116 = arith.constant 497 : i32
    %237 = tpu.dynamic_rotate %191 by %c497_i32_116 dim 1 : vector<32x512xf32>, i32 -> vector<32x512xf32>
    %238 = vector.broadcast %12 : vector<1x512xf32> to vector<32x512xf32>
    %239 = arith.mulf %237, %238 : vector<32x512xf32>
    %c6_117 = arith.constant 6 : index
    %c64_118 = arith.constant 64 : index
    %c0_119 = arith.constant 0 : index
    %240 = vector.load %arg3[%c6_117, %c64_118, %c0_119] : memref<9x224x1xf32, #tpu.memory_space<vmem>>, vector<1x32x1xf32>
    %241 = vector.shape_cast %240 : vector<1x32x1xf32> to vector<32x1xf32>
    %242 = vector.broadcast %241 : vector<32x1xf32> to vector<32x512xf32>
    %243 = arith.mulf %239, %242 : vector<32x512xf32>
    %244 = arith.addf %236, %243 : vector<32x512xf32>
    %c496_i32_120 = arith.constant 496 : i32
    %245 = tpu.dynamic_rotate %191 by %c496_i32_120 dim 1 : vector<32x512xf32>, i32 -> vector<32x512xf32>
    %246 = vector.broadcast %14 : vector<1x512xf32> to vector<32x512xf32>
    %247 = arith.mulf %245, %246 : vector<32x512xf32>
    %c7_121 = arith.constant 7 : index
    %c64_122 = arith.constant 64 : index
    %c0_123 = arith.constant 0 : index
    %248 = vector.load %arg3[%c7_121, %c64_122, %c0_123] : memref<9x224x1xf32, #tpu.memory_space<vmem>>, vector<1x32x1xf32>
    %249 = vector.shape_cast %248 : vector<1x32x1xf32> to vector<32x1xf32>
    %250 = vector.broadcast %249 : vector<32x1xf32> to vector<32x512xf32>
    %251 = arith.mulf %247, %250 : vector<32x512xf32>
    %252 = arith.addf %244, %251 : vector<32x512xf32>
    %c495_i32_124 = arith.constant 495 : i32
    %253 = tpu.dynamic_rotate %191 by %c495_i32_124 dim 1 : vector<32x512xf32>, i32 -> vector<32x512xf32>
    %254 = vector.broadcast %16 : vector<1x512xf32> to vector<32x512xf32>
    %255 = arith.mulf %253, %254 : vector<32x512xf32>
    %c8_125 = arith.constant 8 : index
    %c64_126 = arith.constant 64 : index
    %c0_127 = arith.constant 0 : index
    %256 = vector.load %arg3[%c8_125, %c64_126, %c0_127] : memref<9x224x1xf32, #tpu.memory_space<vmem>>, vector<1x32x1xf32>
    %257 = vector.shape_cast %256 : vector<1x32x1xf32> to vector<32x1xf32>
    %258 = vector.broadcast %257 : vector<32x1xf32> to vector<32x512xf32>
    %259 = arith.mulf %255, %258 : vector<32x512xf32>
    %260 = arith.addf %252, %259 : vector<32x512xf32>
    %261 = vector.broadcast %192 : vector<32x1xf32> to vector<32x512xf32>
    %262 = arith.addf %260, %261 : vector<32x512xf32>
    %c256 = arith.constant 256 : index
    %c0_128 = arith.constant 0 : index
    %263 = vector.load %arg2[%c256, %c0_128] : memref<672x1xf32, #tpu.memory_space<vmem>>, vector<32x1xf32>
    %c0_129 = arith.constant 0 : index
    %c0_130 = arith.constant 0 : index
    %264 = vector.load %arg5[%c0_129, %c0_130] : memref<32x32xf32, #tpu.memory_space<vmem>>, vector<32x32xf32>
    %265 = vector.extract_strided_slice %118 {offsets = [0, 0], sizes = [32, 256], strides = [1, 1]} : vector<32x512xf32> to vector<32x256xf32>
    %266 = arith.mulf %265, %265 : vector<32x256xf32>
    %cst_131 = arith.constant dense<0.000000e+00> : vector<32xf32>
    %267 = vector.multi_reduction <add>, %266, %cst_131 [1] : vector<32x256xf32> to vector<32xf32>
    %268 = vector.shape_cast %267 : vector<32xf32> to vector<32x1xf32>
    %cst_132 = arith.constant 1.000000e-24 : f32
    %269 = vector.broadcast %cst_132 : f32 to vector<32x1xf32>
    %270 = arith.maximumf %268, %269 : vector<32x1xf32>
    %271 = math.rsqrt %270 : vector<32x1xf32>
    %272 = vector.broadcast %271 : vector<32x1xf32> to vector<32x256xf32>
    %273 = arith.mulf %265, %272 : vector<32x256xf32>
    %274 = arith.truncf %273 : vector<32x256xf32> to vector<32x256xbf16>
    %275 = vector.extract_strided_slice %190 {offsets = [0, 0], sizes = [32, 256], strides = [1, 1]} : vector<32x512xf32> to vector<32x256xf32>
    %276 = arith.mulf %275, %275 : vector<32x256xf32>
    %cst_133 = arith.constant dense<0.000000e+00> : vector<32xf32>
    %277 = vector.multi_reduction <add>, %276, %cst_133 [1] : vector<32x256xf32> to vector<32xf32>
    %278 = vector.shape_cast %277 : vector<32xf32> to vector<32x1xf32>
    %cst_134 = arith.constant 1.000000e-24 : f32
    %279 = vector.broadcast %cst_134 : f32 to vector<32x1xf32>
    %280 = arith.maximumf %278, %279 : vector<32x1xf32>
    %281 = math.rsqrt %280 : vector<32x1xf32>
    %282 = vector.broadcast %281 : vector<32x1xf32> to vector<32x256xf32>
    %283 = arith.mulf %275, %282 : vector<32x256xf32>
    %284 = arith.truncf %283 : vector<32x256xf32> to vector<32x256xbf16>
    %285 = vector.extract_strided_slice %262 {offsets = [0, 0], sizes = [32, 256], strides = [1, 1]} : vector<32x512xf32> to vector<32x256xf32>
    %286 = arith.truncf %285 : vector<32x256xf32> to vector<32x256xbf16>
    %cst_135 = arith.constant dense<0.000000e+00> : vector<32x32xf32>
    %287 = tpu.matmul %274, %284, %cst_135 {dimension_numbers = #tpu.dot_dimension_numbers<[1], [1], [0], [0], [0, 0, 1, 0], [], []>} : vector<32x256xbf16>, vector<32x256xbf16>, vector<32x32xf32> -> vector<32x32xf32>
    %288 = vector.broadcast %263 : vector<32x1xf32> to vector<32x32xf32>
    %289 = arith.mulf %287, %288 : vector<32x32xf32>
    %290 = arith.addf %289, %264 : vector<32x32xf32>
    %cst_136 = arith.constant dense<0xFF800000> : vector<32xf32>
    %291 = vector.multi_reduction <maximumf>, %290, %cst_136 [1] : vector<32x32xf32> to vector<32xf32>
    %292 = vector.shape_cast %291 : vector<32xf32> to vector<32x1xf32>
    %293 = vector.broadcast %292 : vector<32x1xf32> to vector<32x32xf32>
    %294 = arith.subf %290, %293 : vector<32x32xf32>
    %295 = math.exp %294 : vector<32x32xf32>
    %cst_137 = arith.constant dense<0.000000e+00> : vector<32xf32>
    %296 = vector.multi_reduction <add>, %295, %cst_137 [1] : vector<32x32xf32> to vector<32xf32>
    %297 = vector.shape_cast %296 : vector<32xf32> to vector<32x1xf32>
    %298 = tpu.reciprocal %297 {approx = true} : vector<32x1xf32> -> vector<32x1xf32>
    %299 = vector.broadcast %298 : vector<32x1xf32> to vector<32x32xf32>
    %300 = arith.mulf %295, %299 : vector<32x32xf32>
    %301 = arith.truncf %300 : vector<32x32xf32> to vector<32x32xbf16>
    %cst_138 = arith.constant dense<0.000000e+00> : vector<32x256xf32>
    %302 = tpu.matmul %301, %286, %cst_138 {dimension_numbers = #tpu.dot_dimension_numbers<[1], [0], [0], [1], [0, 0, 1, 1], [], []>} : vector<32x32xbf16>, vector<32x256xbf16>, vector<32x256xf32> -> vector<32x256xf32>
    %303 = vector.extract_strided_slice %118 {offsets = [0, 256], sizes = [32, 256], strides = [1, 1]} : vector<32x512xf32> to vector<32x256xf32>
    %304 = arith.mulf %303, %303 : vector<32x256xf32>
    %cst_139 = arith.constant dense<0.000000e+00> : vector<32xf32>
    %305 = vector.multi_reduction <add>, %304, %cst_139 [1] : vector<32x256xf32> to vector<32xf32>
    %306 = vector.shape_cast %305 : vector<32xf32> to vector<32x1xf32>
    %cst_140 = arith.constant 1.000000e-24 : f32
    %307 = vector.broadcast %cst_140 : f32 to vector<32x1xf32>
    %308 = arith.maximumf %306, %307 : vector<32x1xf32>
    %309 = math.rsqrt %308 : vector<32x1xf32>
    %310 = vector.broadcast %309 : vector<32x1xf32> to vector<32x256xf32>
    %311 = arith.mulf %303, %310 : vector<32x256xf32>
    %312 = arith.truncf %311 : vector<32x256xf32> to vector<32x256xbf16>
    %313 = vector.extract_strided_slice %190 {offsets = [0, 256], sizes = [32, 256], strides = [1, 1]} : vector<32x512xf32> to vector<32x256xf32>
    %314 = arith.mulf %313, %313 : vector<32x256xf32>
    %cst_141 = arith.constant dense<0.000000e+00> : vector<32xf32>
    %315 = vector.multi_reduction <add>, %314, %cst_141 [1] : vector<32x256xf32> to vector<32xf32>
    %316 = vector.shape_cast %315 : vector<32xf32> to vector<32x1xf32>
    %cst_142 = arith.constant 1.000000e-24 : f32
    %317 = vector.broadcast %cst_142 : f32 to vector<32x1xf32>
    %318 = arith.maximumf %316, %317 : vector<32x1xf32>
    %319 = math.rsqrt %318 : vector<32x1xf32>
    %320 = vector.broadcast %319 : vector<32x1xf32> to vector<32x256xf32>
    %321 = arith.mulf %313, %320 : vector<32x256xf32>
    %322 = arith.truncf %321 : vector<32x256xf32> to vector<32x256xbf16>
    %323 = vector.extract_strided_slice %262 {offsets = [0, 256], sizes = [32, 256], strides = [1, 1]} : vector<32x512xf32> to vector<32x256xf32>
    %324 = arith.truncf %323 : vector<32x256xf32> to vector<32x256xbf16>
    %cst_143 = arith.constant dense<0.000000e+00> : vector<32x32xf32>
    %325 = tpu.matmul %312, %322, %cst_143 {dimension_numbers = #tpu.dot_dimension_numbers<[1], [1], [0], [0], [0, 0, 1, 0], [], []>} : vector<32x256xbf16>, vector<32x256xbf16>, vector<32x32xf32> -> vector<32x32xf32>
    %326 = vector.broadcast %263 : vector<32x1xf32> to vector<32x32xf32>
    %327 = arith.mulf %325, %326 : vector<32x32xf32>
    %328 = arith.addf %327, %264 : vector<32x32xf32>
    %cst_144 = arith.constant dense<0xFF800000> : vector<32xf32>
    %329 = vector.multi_reduction <maximumf>, %328, %cst_144 [1] : vector<32x32xf32> to vector<32xf32>
    %330 = vector.shape_cast %329 : vector<32xf32> to vector<32x1xf32>
    %331 = vector.broadcast %330 : vector<32x1xf32> to vector<32x32xf32>
    %332 = arith.subf %328, %331 : vector<32x32xf32>
    %333 = math.exp %332 : vector<32x32xf32>
    %cst_145 = arith.constant dense<0.000000e+00> : vector<32xf32>
    %334 = vector.multi_reduction <add>, %333, %cst_145 [1] : vector<32x32xf32> to vector<32xf32>
    %335 = vector.shape_cast %334 : vector<32xf32> to vector<32x1xf32>
    %336 = tpu.reciprocal %335 {approx = true} : vector<32x1xf32> -> vector<32x1xf32>
    %337 = vector.broadcast %336 : vector<32x1xf32> to vector<32x32xf32>
    %338 = arith.mulf %333, %337 : vector<32x32xf32>
    %339 = arith.truncf %338 : vector<32x32xf32> to vector<32x32xbf16>
    %cst_146 = arith.constant dense<0.000000e+00> : vector<32x256xf32>
    %340 = tpu.matmul %339, %324, %cst_146 {dimension_numbers = #tpu.dot_dimension_numbers<[1], [0], [0], [1], [0, 0, 1, 1], [], []>} : vector<32x32xbf16>, vector<32x256xbf16>, vector<32x256xf32> -> vector<32x256xf32>
    %341 = tpu.concatenate %302, %340 in 1 : vector<32x256xf32>, vector<32x256xf32> -> vector<32x512xf32>
    %c96 = arith.constant 96 : index
    %c0_147 = arith.constant 0 : index
    %342 = vector.load %arg6[%c96, %c0_147] : memref<256x32xbf16, #tpu.memory_space<vmem>>, vector<32x32xbf16>
    %343 = arith.truncf %341 : vector<32x512xf32> to vector<32x512xbf16>
    %cst_148 = arith.constant dense<0.000000e+00> : vector<32x512xf32>
    %344 = tpu.matmul %342, %343, %cst_148 {dimension_numbers = #tpu.dot_dimension_numbers<[1], [0], [0], [1], [0, 0, 1, 1], [], []>} : vector<32x32xbf16>, vector<32x512xbf16>, vector<32x512xf32> -> vector<32x512xf32>
    %c288 = arith.constant 288 : index
    %c0_149 = arith.constant 0 : index
    %345 = vector.load %arg2[%c288, %c0_149] : memref<672x1xf32, #tpu.memory_space<vmem>>, vector<32x1xf32>
    %346 = vector.broadcast %345 : vector<32x1xf32> to vector<32x512xf32>
    %347 = arith.addf %344, %346 : vector<32x512xf32>
    %348 = arith.addf %0, %347 : vector<32x512xf32>
    %c320 = arith.constant 320 : index
    %c0_150 = arith.constant 0 : index
    %349 = vector.load %arg2[%c320, %c0_150] : memref<672x1xf32, #tpu.memory_space<vmem>>, vector<32x1xf32>
    %c352 = arith.constant 352 : index
    %c0_151 = arith.constant 0 : index
    %350 = vector.load %arg2[%c352, %c0_151] : memref<672x1xf32, #tpu.memory_space<vmem>>, vector<32x1xf32>
    %cst_152 = arith.constant dense<0.000000e+00> : vector<512xf32>
    %351 = vector.multi_reduction <add>, %348, %cst_152 [0] : vector<32x512xf32> to vector<512xf32>
    %352 = vector.shape_cast %351 : vector<512xf32> to vector<1x512xf32>
    %cst_153 = arith.constant 3.200000e+01 : f32
    %353 = vector.broadcast %cst_153 : f32 to vector<1x512xf32>
    %354 = arith.divf %352, %353 : vector<1x512xf32>
    %355 = vector.broadcast %354 : vector<1x512xf32> to vector<32x512xf32>
    %356 = arith.subf %348, %355 : vector<32x512xf32>
    %357 = arith.mulf %356, %356 : vector<32x512xf32>
    %cst_154 = arith.constant dense<0.000000e+00> : vector<512xf32>
    %358 = vector.multi_reduction <add>, %357, %cst_154 [0] : vector<32x512xf32> to vector<512xf32>
    %359 = vector.shape_cast %358 : vector<512xf32> to vector<1x512xf32>
    %cst_155 = arith.constant 3.200000e+01 : f32
    %360 = vector.broadcast %cst_155 : f32 to vector<1x512xf32>
    %361 = arith.divf %359, %360 : vector<1x512xf32>
    %362 = vector.broadcast %354 : vector<1x512xf32> to vector<32x512xf32>
    %363 = arith.subf %348, %362 : vector<32x512xf32>
    %cst_156 = arith.constant 9.99999974E-6 : f32
    %364 = vector.broadcast %cst_156 : f32 to vector<1x512xf32>
    %365 = arith.addf %361, %364 : vector<1x512xf32>
    %366 = math.rsqrt %365 : vector<1x512xf32>
    %367 = vector.broadcast %366 : vector<1x512xf32> to vector<32x512xf32>
    %368 = arith.mulf %363, %367 : vector<32x512xf32>
    %369 = vector.broadcast %349 : vector<32x1xf32> to vector<32x512xf32>
    %370 = arith.mulf %368, %369 : vector<32x512xf32>
    %371 = vector.broadcast %350 : vector<32x1xf32> to vector<32x512xf32>
    %372 = arith.addf %370, %371 : vector<32x512xf32>
    %c128 = arith.constant 128 : index
    %c0_157 = arith.constant 0 : index
    %373 = vector.load %arg6[%c128, %c0_157] : memref<256x32xbf16, #tpu.memory_space<vmem>>, vector<128x32xbf16>
    %374 = arith.truncf %372 : vector<32x512xf32> to vector<32x512xbf16>
    %cst_158 = arith.constant dense<0.000000e+00> : vector<128x512xf32>
    %375 = tpu.matmul %373, %374, %cst_158 {dimension_numbers = #tpu.dot_dimension_numbers<[1], [0], [0], [1], [0, 0, 1, 1], [], []>} : vector<128x32xbf16>, vector<32x512xbf16>, vector<128x512xf32> -> vector<128x512xf32>
    %c384 = arith.constant 384 : index
    %c0_159 = arith.constant 0 : index
    %376 = vector.load %arg2[%c384, %c0_159] : memref<672x1xf32, #tpu.memory_space<vmem>>, vector<128x1xf32>
    %377 = vector.broadcast %376 : vector<128x1xf32> to vector<128x512xf32>
    %378 = arith.addf %375, %377 : vector<128x512xf32>
    %379 = vector.extract_strided_slice %378 {offsets = [0, 0], sizes = [32, 512], strides = [1, 1]} : vector<128x512xf32> to vector<32x512xf32>
    %c512 = arith.constant 512 : index
    %c0_160 = arith.constant 0 : index
    %380 = vector.load %arg2[%c512, %c0_160] : memref<672x1xf32, #tpu.memory_space<vmem>>, vector<32x1xf32>
    %c4_161 = arith.constant 4 : index
    %c96_162 = arith.constant 96 : index
    %c0_163 = arith.constant 0 : index
    %381 = vector.load %arg3[%c4_161, %c96_162, %c0_163] : memref<9x224x1xf32, #tpu.memory_space<vmem>>, vector<1x32x1xf32>
    %382 = vector.shape_cast %381 : vector<1x32x1xf32> to vector<32x1xf32>
    %383 = vector.broadcast %382 : vector<32x1xf32> to vector<32x512xf32>
    %384 = arith.mulf %379, %383 : vector<32x512xf32>
    %c17_i32_164 = arith.constant 17 : i32
    %385 = tpu.dynamic_rotate %379 by %c17_i32_164 dim 1 : vector<32x512xf32>, i32 -> vector<32x512xf32>
    %386 = vector.broadcast %2 : vector<1x512xf32> to vector<32x512xf32>
    %387 = arith.mulf %385, %386 : vector<32x512xf32>
    %c0_165 = arith.constant 0 : index
    %c96_166 = arith.constant 96 : index
    %c0_167 = arith.constant 0 : index
    %388 = vector.load %arg3[%c0_165, %c96_166, %c0_167] : memref<9x224x1xf32, #tpu.memory_space<vmem>>, vector<1x32x1xf32>
    %389 = vector.shape_cast %388 : vector<1x32x1xf32> to vector<32x1xf32>
    %390 = vector.broadcast %389 : vector<32x1xf32> to vector<32x512xf32>
    %391 = arith.mulf %387, %390 : vector<32x512xf32>
    %392 = arith.addf %384, %391 : vector<32x512xf32>
    %c16_i32_168 = arith.constant 16 : i32
    %393 = tpu.dynamic_rotate %379 by %c16_i32_168 dim 1 : vector<32x512xf32>, i32 -> vector<32x512xf32>
    %394 = vector.broadcast %4 : vector<1x512xf32> to vector<32x512xf32>
    %395 = arith.mulf %393, %394 : vector<32x512xf32>
    %c1_169 = arith.constant 1 : index
    %c96_170 = arith.constant 96 : index
    %c0_171 = arith.constant 0 : index
    %396 = vector.load %arg3[%c1_169, %c96_170, %c0_171] : memref<9x224x1xf32, #tpu.memory_space<vmem>>, vector<1x32x1xf32>
    %397 = vector.shape_cast %396 : vector<1x32x1xf32> to vector<32x1xf32>
    %398 = vector.broadcast %397 : vector<32x1xf32> to vector<32x512xf32>
    %399 = arith.mulf %395, %398 : vector<32x512xf32>
    %400 = arith.addf %392, %399 : vector<32x512xf32>
    %c15_i32_172 = arith.constant 15 : i32
    %401 = tpu.dynamic_rotate %379 by %c15_i32_172 dim 1 : vector<32x512xf32>, i32 -> vector<32x512xf32>
    %402 = vector.broadcast %6 : vector<1x512xf32> to vector<32x512xf32>
    %403 = arith.mulf %401, %402 : vector<32x512xf32>
    %c2_173 = arith.constant 2 : index
    %c96_174 = arith.constant 96 : index
    %c0_175 = arith.constant 0 : index
    %404 = vector.load %arg3[%c2_173, %c96_174, %c0_175] : memref<9x224x1xf32, #tpu.memory_space<vmem>>, vector<1x32x1xf32>
    %405 = vector.shape_cast %404 : vector<1x32x1xf32> to vector<32x1xf32>
    %406 = vector.broadcast %405 : vector<32x1xf32> to vector<32x512xf32>
    %407 = arith.mulf %403, %406 : vector<32x512xf32>
    %408 = arith.addf %400, %407 : vector<32x512xf32>
    %c1_i32_176 = arith.constant 1 : i32
    %409 = tpu.dynamic_rotate %379 by %c1_i32_176 dim 1 : vector<32x512xf32>, i32 -> vector<32x512xf32>
    %410 = vector.broadcast %8 : vector<1x512xf32> to vector<32x512xf32>
    %411 = arith.mulf %409, %410 : vector<32x512xf32>
    %c3_177 = arith.constant 3 : index
    %c96_178 = arith.constant 96 : index
    %c0_179 = arith.constant 0 : index
    %412 = vector.load %arg3[%c3_177, %c96_178, %c0_179] : memref<9x224x1xf32, #tpu.memory_space<vmem>>, vector<1x32x1xf32>
    %413 = vector.shape_cast %412 : vector<1x32x1xf32> to vector<32x1xf32>
    %414 = vector.broadcast %413 : vector<32x1xf32> to vector<32x512xf32>
    %415 = arith.mulf %411, %414 : vector<32x512xf32>
    %416 = arith.addf %408, %415 : vector<32x512xf32>
    %c511_i32_180 = arith.constant 511 : i32
    %417 = tpu.dynamic_rotate %379 by %c511_i32_180 dim 1 : vector<32x512xf32>, i32 -> vector<32x512xf32>
    %418 = vector.broadcast %10 : vector<1x512xf32> to vector<32x512xf32>
    %419 = arith.mulf %417, %418 : vector<32x512xf32>
    %c5_181 = arith.constant 5 : index
    %c96_182 = arith.constant 96 : index
    %c0_183 = arith.constant 0 : index
    %420 = vector.load %arg3[%c5_181, %c96_182, %c0_183] : memref<9x224x1xf32, #tpu.memory_space<vmem>>, vector<1x32x1xf32>
    %421 = vector.shape_cast %420 : vector<1x32x1xf32> to vector<32x1xf32>
    %422 = vector.broadcast %421 : vector<32x1xf32> to vector<32x512xf32>
    %423 = arith.mulf %419, %422 : vector<32x512xf32>
    %424 = arith.addf %416, %423 : vector<32x512xf32>
    %c497_i32_184 = arith.constant 497 : i32
    %425 = tpu.dynamic_rotate %379 by %c497_i32_184 dim 1 : vector<32x512xf32>, i32 -> vector<32x512xf32>
    %426 = vector.broadcast %12 : vector<1x512xf32> to vector<32x512xf32>
    %427 = arith.mulf %425, %426 : vector<32x512xf32>
    %c6_185 = arith.constant 6 : index
    %c96_186 = arith.constant 96 : index
    %c0_187 = arith.constant 0 : index
    %428 = vector.load %arg3[%c6_185, %c96_186, %c0_187] : memref<9x224x1xf32, #tpu.memory_space<vmem>>, vector<1x32x1xf32>
    %429 = vector.shape_cast %428 : vector<1x32x1xf32> to vector<32x1xf32>
    %430 = vector.broadcast %429 : vector<32x1xf32> to vector<32x512xf32>
    %431 = arith.mulf %427, %430 : vector<32x512xf32>
    %432 = arith.addf %424, %431 : vector<32x512xf32>
    %c496_i32_188 = arith.constant 496 : i32
    %433 = tpu.dynamic_rotate %379 by %c496_i32_188 dim 1 : vector<32x512xf32>, i32 -> vector<32x512xf32>
    %434 = vector.broadcast %14 : vector<1x512xf32> to vector<32x512xf32>
    %435 = arith.mulf %433, %434 : vector<32x512xf32>
    %c7_189 = arith.constant 7 : index
    %c96_190 = arith.constant 96 : index
    %c0_191 = arith.constant 0 : index
    %436 = vector.load %arg3[%c7_189, %c96_190, %c0_191] : memref<9x224x1xf32, #tpu.memory_space<vmem>>, vector<1x32x1xf32>
    %437 = vector.shape_cast %436 : vector<1x32x1xf32> to vector<32x1xf32>
    %438 = vector.broadcast %437 : vector<32x1xf32> to vector<32x512xf32>
    %439 = arith.mulf %435, %438 : vector<32x512xf32>
    %440 = arith.addf %432, %439 : vector<32x512xf32>
    %c495_i32_192 = arith.constant 495 : i32
    %441 = tpu.dynamic_rotate %379 by %c495_i32_192 dim 1 : vector<32x512xf32>, i32 -> vector<32x512xf32>
    %442 = vector.broadcast %16 : vector<1x512xf32> to vector<32x512xf32>
    %443 = arith.mulf %441, %442 : vector<32x512xf32>
    %c8_193 = arith.constant 8 : index
    %c96_194 = arith.constant 96 : index
    %c0_195 = arith.constant 0 : index
    %444 = vector.load %arg3[%c8_193, %c96_194, %c0_195] : memref<9x224x1xf32, #tpu.memory_space<vmem>>, vector<1x32x1xf32>
    %445 = vector.shape_cast %444 : vector<1x32x1xf32> to vector<32x1xf32>
    %446 = vector.broadcast %445 : vector<32x1xf32> to vector<32x512xf32>
    %447 = arith.mulf %443, %446 : vector<32x512xf32>
    %448 = arith.addf %440, %447 : vector<32x512xf32>
    %449 = vector.broadcast %380 : vector<32x1xf32> to vector<32x512xf32>
    %450 = arith.addf %448, %449 : vector<32x512xf32>
    %451 = vector.extract_strided_slice %378 {offsets = [32, 0], sizes = [32, 512], strides = [1, 1]} : vector<128x512xf32> to vector<32x512xf32>
    %c544 = arith.constant 544 : index
    %c0_196 = arith.constant 0 : index
    %452 = vector.load %arg2[%c544, %c0_196] : memref<672x1xf32, #tpu.memory_space<vmem>>, vector<32x1xf32>
    %c4_197 = arith.constant 4 : index
    %c128_198 = arith.constant 128 : index
    %c0_199 = arith.constant 0 : index
    %453 = vector.load %arg3[%c4_197, %c128_198, %c0_199] : memref<9x224x1xf32, #tpu.memory_space<vmem>>, vector<1x32x1xf32>
    %454 = vector.shape_cast %453 : vector<1x32x1xf32> to vector<32x1xf32>
    %455 = vector.broadcast %454 : vector<32x1xf32> to vector<32x512xf32>
    %456 = arith.mulf %451, %455 : vector<32x512xf32>
    %c17_i32_200 = arith.constant 17 : i32
    %457 = tpu.dynamic_rotate %451 by %c17_i32_200 dim 1 : vector<32x512xf32>, i32 -> vector<32x512xf32>
    %458 = vector.broadcast %2 : vector<1x512xf32> to vector<32x512xf32>
    %459 = arith.mulf %457, %458 : vector<32x512xf32>
    %c0_201 = arith.constant 0 : index
    %c128_202 = arith.constant 128 : index
    %c0_203 = arith.constant 0 : index
    %460 = vector.load %arg3[%c0_201, %c128_202, %c0_203] : memref<9x224x1xf32, #tpu.memory_space<vmem>>, vector<1x32x1xf32>
    %461 = vector.shape_cast %460 : vector<1x32x1xf32> to vector<32x1xf32>
    %462 = vector.broadcast %461 : vector<32x1xf32> to vector<32x512xf32>
    %463 = arith.mulf %459, %462 : vector<32x512xf32>
    %464 = arith.addf %456, %463 : vector<32x512xf32>
    %c16_i32_204 = arith.constant 16 : i32
    %465 = tpu.dynamic_rotate %451 by %c16_i32_204 dim 1 : vector<32x512xf32>, i32 -> vector<32x512xf32>
    %466 = vector.broadcast %4 : vector<1x512xf32> to vector<32x512xf32>
    %467 = arith.mulf %465, %466 : vector<32x512xf32>
    %c1_205 = arith.constant 1 : index
    %c128_206 = arith.constant 128 : index
    %c0_207 = arith.constant 0 : index
    %468 = vector.load %arg3[%c1_205, %c128_206, %c0_207] : memref<9x224x1xf32, #tpu.memory_space<vmem>>, vector<1x32x1xf32>
    %469 = vector.shape_cast %468 : vector<1x32x1xf32> to vector<32x1xf32>
    %470 = vector.broadcast %469 : vector<32x1xf32> to vector<32x512xf32>
    %471 = arith.mulf %467, %470 : vector<32x512xf32>
    %472 = arith.addf %464, %471 : vector<32x512xf32>
    %c15_i32_208 = arith.constant 15 : i32
    %473 = tpu.dynamic_rotate %451 by %c15_i32_208 dim 1 : vector<32x512xf32>, i32 -> vector<32x512xf32>
    %474 = vector.broadcast %6 : vector<1x512xf32> to vector<32x512xf32>
    %475 = arith.mulf %473, %474 : vector<32x512xf32>
    %c2_209 = arith.constant 2 : index
    %c128_210 = arith.constant 128 : index
    %c0_211 = arith.constant 0 : index
    %476 = vector.load %arg3[%c2_209, %c128_210, %c0_211] : memref<9x224x1xf32, #tpu.memory_space<vmem>>, vector<1x32x1xf32>
    %477 = vector.shape_cast %476 : vector<1x32x1xf32> to vector<32x1xf32>
    %478 = vector.broadcast %477 : vector<32x1xf32> to vector<32x512xf32>
    %479 = arith.mulf %475, %478 : vector<32x512xf32>
    %480 = arith.addf %472, %479 : vector<32x512xf32>
    %c1_i32_212 = arith.constant 1 : i32
    %481 = tpu.dynamic_rotate %451 by %c1_i32_212 dim 1 : vector<32x512xf32>, i32 -> vector<32x512xf32>
    %482 = vector.broadcast %8 : vector<1x512xf32> to vector<32x512xf32>
    %483 = arith.mulf %481, %482 : vector<32x512xf32>
    %c3_213 = arith.constant 3 : index
    %c128_214 = arith.constant 128 : index
    %c0_215 = arith.constant 0 : index
    %484 = vector.load %arg3[%c3_213, %c128_214, %c0_215] : memref<9x224x1xf32, #tpu.memory_space<vmem>>, vector<1x32x1xf32>
    %485 = vector.shape_cast %484 : vector<1x32x1xf32> to vector<32x1xf32>
    %486 = vector.broadcast %485 : vector<32x1xf32> to vector<32x512xf32>
    %487 = arith.mulf %483, %486 : vector<32x512xf32>
    %488 = arith.addf %480, %487 : vector<32x512xf32>
    %c511_i32_216 = arith.constant 511 : i32
    %489 = tpu.dynamic_rotate %451 by %c511_i32_216 dim 1 : vector<32x512xf32>, i32 -> vector<32x512xf32>
    %490 = vector.broadcast %10 : vector<1x512xf32> to vector<32x512xf32>
    %491 = arith.mulf %489, %490 : vector<32x512xf32>
    %c5_217 = arith.constant 5 : index
    %c128_218 = arith.constant 128 : index
    %c0_219 = arith.constant 0 : index
    %492 = vector.load %arg3[%c5_217, %c128_218, %c0_219] : memref<9x224x1xf32, #tpu.memory_space<vmem>>, vector<1x32x1xf32>
    %493 = vector.shape_cast %492 : vector<1x32x1xf32> to vector<32x1xf32>
    %494 = vector.broadcast %493 : vector<32x1xf32> to vector<32x512xf32>
    %495 = arith.mulf %491, %494 : vector<32x512xf32>
    %496 = arith.addf %488, %495 : vector<32x512xf32>
    %c497_i32_220 = arith.constant 497 : i32
    %497 = tpu.dynamic_rotate %451 by %c497_i32_220 dim 1 : vector<32x512xf32>, i32 -> vector<32x512xf32>
    %498 = vector.broadcast %12 : vector<1x512xf32> to vector<32x512xf32>
    %499 = arith.mulf %497, %498 : vector<32x512xf32>
    %c6_221 = arith.constant 6 : index
    %c128_222 = arith.constant 128 : index
    %c0_223 = arith.constant 0 : index
    %500 = vector.load %arg3[%c6_221, %c128_222, %c0_223] : memref<9x224x1xf32, #tpu.memory_space<vmem>>, vector<1x32x1xf32>
    %501 = vector.shape_cast %500 : vector<1x32x1xf32> to vector<32x1xf32>
    %502 = vector.broadcast %501 : vector<32x1xf32> to vector<32x512xf32>
    %503 = arith.mulf %499, %502 : vector<32x512xf32>
    %504 = arith.addf %496, %503 : vector<32x512xf32>
    %c496_i32_224 = arith.constant 496 : i32
    %505 = tpu.dynamic_rotate %451 by %c496_i32_224 dim 1 : vector<32x512xf32>, i32 -> vector<32x512xf32>
    %506 = vector.broadcast %14 : vector<1x512xf32> to vector<32x512xf32>
    %507 = arith.mulf %505, %506 : vector<32x512xf32>
    %c7_225 = arith.constant 7 : index
    %c128_226 = arith.constant 128 : index
    %c0_227 = arith.constant 0 : index
    %508 = vector.load %arg3[%c7_225, %c128_226, %c0_227] : memref<9x224x1xf32, #tpu.memory_space<vmem>>, vector<1x32x1xf32>
    %509 = vector.shape_cast %508 : vector<1x32x1xf32> to vector<32x1xf32>
    %510 = vector.broadcast %509 : vector<32x1xf32> to vector<32x512xf32>
    %511 = arith.mulf %507, %510 : vector<32x512xf32>
    %512 = arith.addf %504, %511 : vector<32x512xf32>
    %c495_i32_228 = arith.constant 495 : i32
    %513 = tpu.dynamic_rotate %451 by %c495_i32_228 dim 1 : vector<32x512xf32>, i32 -> vector<32x512xf32>
    %514 = vector.broadcast %16 : vector<1x512xf32> to vector<32x512xf32>
    %515 = arith.mulf %513, %514 : vector<32x512xf32>
    %c8_229 = arith.constant 8 : index
    %c128_230 = arith.constant 128 : index
    %c0_231 = arith.constant 0 : index
    %516 = vector.load %arg3[%c8_229, %c128_230, %c0_231] : memref<9x224x1xf32, #tpu.memory_space<vmem>>, vector<1x32x1xf32>
    %517 = vector.shape_cast %516 : vector<1x32x1xf32> to vector<32x1xf32>
    %518 = vector.broadcast %517 : vector<32x1xf32> to vector<32x512xf32>
    %519 = arith.mulf %515, %518 : vector<32x512xf32>
    %520 = arith.addf %512, %519 : vector<32x512xf32>
    %521 = vector.broadcast %452 : vector<32x1xf32> to vector<32x512xf32>
    %522 = arith.addf %520, %521 : vector<32x512xf32>
    %523 = vector.extract_strided_slice %378 {offsets = [64, 0], sizes = [32, 512], strides = [1, 1]} : vector<128x512xf32> to vector<32x512xf32>
    %c576 = arith.constant 576 : index
    %c0_232 = arith.constant 0 : index
    %524 = vector.load %arg2[%c576, %c0_232] : memref<672x1xf32, #tpu.memory_space<vmem>>, vector<32x1xf32>
    %c4_233 = arith.constant 4 : index
    %c160_234 = arith.constant 160 : index
    %c0_235 = arith.constant 0 : index
    %525 = vector.load %arg3[%c4_233, %c160_234, %c0_235] : memref<9x224x1xf32, #tpu.memory_space<vmem>>, vector<1x32x1xf32>
    %526 = vector.shape_cast %525 : vector<1x32x1xf32> to vector<32x1xf32>
    %527 = vector.broadcast %526 : vector<32x1xf32> to vector<32x512xf32>
    %528 = arith.mulf %523, %527 : vector<32x512xf32>
    %c17_i32_236 = arith.constant 17 : i32
    %529 = tpu.dynamic_rotate %523 by %c17_i32_236 dim 1 : vector<32x512xf32>, i32 -> vector<32x512xf32>
    %530 = vector.broadcast %2 : vector<1x512xf32> to vector<32x512xf32>
    %531 = arith.mulf %529, %530 : vector<32x512xf32>
    %c0_237 = arith.constant 0 : index
    %c160_238 = arith.constant 160 : index
    %c0_239 = arith.constant 0 : index
    %532 = vector.load %arg3[%c0_237, %c160_238, %c0_239] : memref<9x224x1xf32, #tpu.memory_space<vmem>>, vector<1x32x1xf32>
    %533 = vector.shape_cast %532 : vector<1x32x1xf32> to vector<32x1xf32>
    %534 = vector.broadcast %533 : vector<32x1xf32> to vector<32x512xf32>
    %535 = arith.mulf %531, %534 : vector<32x512xf32>
    %536 = arith.addf %528, %535 : vector<32x512xf32>
    %c16_i32_240 = arith.constant 16 : i32
    %537 = tpu.dynamic_rotate %523 by %c16_i32_240 dim 1 : vector<32x512xf32>, i32 -> vector<32x512xf32>
    %538 = vector.broadcast %4 : vector<1x512xf32> to vector<32x512xf32>
    %539 = arith.mulf %537, %538 : vector<32x512xf32>
    %c1_241 = arith.constant 1 : index
    %c160_242 = arith.constant 160 : index
    %c0_243 = arith.constant 0 : index
    %540 = vector.load %arg3[%c1_241, %c160_242, %c0_243] : memref<9x224x1xf32, #tpu.memory_space<vmem>>, vector<1x32x1xf32>
    %541 = vector.shape_cast %540 : vector<1x32x1xf32> to vector<32x1xf32>
    %542 = vector.broadcast %541 : vector<32x1xf32> to vector<32x512xf32>
    %543 = arith.mulf %539, %542 : vector<32x512xf32>
    %544 = arith.addf %536, %543 : vector<32x512xf32>
    %c15_i32_244 = arith.constant 15 : i32
    %545 = tpu.dynamic_rotate %523 by %c15_i32_244 dim 1 : vector<32x512xf32>, i32 -> vector<32x512xf32>
    %546 = vector.broadcast %6 : vector<1x512xf32> to vector<32x512xf32>
    %547 = arith.mulf %545, %546 : vector<32x512xf32>
    %c2_245 = arith.constant 2 : index
    %c160_246 = arith.constant 160 : index
    %c0_247 = arith.constant 0 : index
    %548 = vector.load %arg3[%c2_245, %c160_246, %c0_247] : memref<9x224x1xf32, #tpu.memory_space<vmem>>, vector<1x32x1xf32>
    %549 = vector.shape_cast %548 : vector<1x32x1xf32> to vector<32x1xf32>
    %550 = vector.broadcast %549 : vector<32x1xf32> to vector<32x512xf32>
    %551 = arith.mulf %547, %550 : vector<32x512xf32>
    %552 = arith.addf %544, %551 : vector<32x512xf32>
    %c1_i32_248 = arith.constant 1 : i32
    %553 = tpu.dynamic_rotate %523 by %c1_i32_248 dim 1 : vector<32x512xf32>, i32 -> vector<32x512xf32>
    %554 = vector.broadcast %8 : vector<1x512xf32> to vector<32x512xf32>
    %555 = arith.mulf %553, %554 : vector<32x512xf32>
    %c3_249 = arith.constant 3 : index
    %c160_250 = arith.constant 160 : index
    %c0_251 = arith.constant 0 : index
    %556 = vector.load %arg3[%c3_249, %c160_250, %c0_251] : memref<9x224x1xf32, #tpu.memory_space<vmem>>, vector<1x32x1xf32>
    %557 = vector.shape_cast %556 : vector<1x32x1xf32> to vector<32x1xf32>
    %558 = vector.broadcast %557 : vector<32x1xf32> to vector<32x512xf32>
    %559 = arith.mulf %555, %558 : vector<32x512xf32>
    %560 = arith.addf %552, %559 : vector<32x512xf32>
    %c511_i32_252 = arith.constant 511 : i32
    %561 = tpu.dynamic_rotate %523 by %c511_i32_252 dim 1 : vector<32x512xf32>, i32 -> vector<32x512xf32>
    %562 = vector.broadcast %10 : vector<1x512xf32> to vector<32x512xf32>
    %563 = arith.mulf %561, %562 : vector<32x512xf32>
    %c5_253 = arith.constant 5 : index
    %c160_254 = arith.constant 160 : index
    %c0_255 = arith.constant 0 : index
    %564 = vector.load %arg3[%c5_253, %c160_254, %c0_255] : memref<9x224x1xf32, #tpu.memory_space<vmem>>, vector<1x32x1xf32>
    %565 = vector.shape_cast %564 : vector<1x32x1xf32> to vector<32x1xf32>
    %566 = vector.broadcast %565 : vector<32x1xf32> to vector<32x512xf32>
    %567 = arith.mulf %563, %566 : vector<32x512xf32>
    %568 = arith.addf %560, %567 : vector<32x512xf32>
    %c497_i32_256 = arith.constant 497 : i32
    %569 = tpu.dynamic_rotate %523 by %c497_i32_256 dim 1 : vector<32x512xf32>, i32 -> vector<32x512xf32>
    %570 = vector.broadcast %12 : vector<1x512xf32> to vector<32x512xf32>
    %571 = arith.mulf %569, %570 : vector<32x512xf32>
    %c6_257 = arith.constant 6 : index
    %c160_258 = arith.constant 160 : index
    %c0_259 = arith.constant 0 : index
    %572 = vector.load %arg3[%c6_257, %c160_258, %c0_259] : memref<9x224x1xf32, #tpu.memory_space<vmem>>, vector<1x32x1xf32>
    %573 = vector.shape_cast %572 : vector<1x32x1xf32> to vector<32x1xf32>
    %574 = vector.broadcast %573 : vector<32x1xf32> to vector<32x512xf32>
    %575 = arith.mulf %571, %574 : vector<32x512xf32>
    %576 = arith.addf %568, %575 : vector<32x512xf32>
    %c496_i32_260 = arith.constant 496 : i32
    %577 = tpu.dynamic_rotate %523 by %c496_i32_260 dim 1 : vector<32x512xf32>, i32 -> vector<32x512xf32>
    %578 = vector.broadcast %14 : vector<1x512xf32> to vector<32x512xf32>
    %579 = arith.mulf %577, %578 : vector<32x512xf32>
    %c7_261 = arith.constant 7 : index
    %c160_262 = arith.constant 160 : index
    %c0_263 = arith.constant 0 : index
    %580 = vector.load %arg3[%c7_261, %c160_262, %c0_263] : memref<9x224x1xf32, #tpu.memory_space<vmem>>, vector<1x32x1xf32>
    %581 = vector.shape_cast %580 : vector<1x32x1xf32> to vector<32x1xf32>
    %582 = vector.broadcast %581 : vector<32x1xf32> to vector<32x512xf32>
    %583 = arith.mulf %579, %582 : vector<32x512xf32>
    %584 = arith.addf %576, %583 : vector<32x512xf32>
    %c495_i32_264 = arith.constant 495 : i32
    %585 = tpu.dynamic_rotate %523 by %c495_i32_264 dim 1 : vector<32x512xf32>, i32 -> vector<32x512xf32>
    %586 = vector.broadcast %16 : vector<1x512xf32> to vector<32x512xf32>
    %587 = arith.mulf %585, %586 : vector<32x512xf32>
    %c8_265 = arith.constant 8 : index
    %c160_266 = arith.constant 160 : index
    %c0_267 = arith.constant 0 : index
    %588 = vector.load %arg3[%c8_265, %c160_266, %c0_267] : memref<9x224x1xf32, #tpu.memory_space<vmem>>, vector<1x32x1xf32>
    %589 = vector.shape_cast %588 : vector<1x32x1xf32> to vector<32x1xf32>
    %590 = vector.broadcast %589 : vector<32x1xf32> to vector<32x512xf32>
    %591 = arith.mulf %587, %590 : vector<32x512xf32>
    %592 = arith.addf %584, %591 : vector<32x512xf32>
    %593 = vector.broadcast %524 : vector<32x1xf32> to vector<32x512xf32>
    %594 = arith.addf %592, %593 : vector<32x512xf32>
    %595 = vector.extract_strided_slice %378 {offsets = [96, 0], sizes = [32, 512], strides = [1, 1]} : vector<128x512xf32> to vector<32x512xf32>
    %c608 = arith.constant 608 : index
    %c0_268 = arith.constant 0 : index
    %596 = vector.load %arg2[%c608, %c0_268] : memref<672x1xf32, #tpu.memory_space<vmem>>, vector<32x1xf32>
    %c4_269 = arith.constant 4 : index
    %c192_270 = arith.constant 192 : index
    %c0_271 = arith.constant 0 : index
    %597 = vector.load %arg3[%c4_269, %c192_270, %c0_271] : memref<9x224x1xf32, #tpu.memory_space<vmem>>, vector<1x32x1xf32>
    %598 = vector.shape_cast %597 : vector<1x32x1xf32> to vector<32x1xf32>
    %599 = vector.broadcast %598 : vector<32x1xf32> to vector<32x512xf32>
    %600 = arith.mulf %595, %599 : vector<32x512xf32>
    %c17_i32_272 = arith.constant 17 : i32
    %601 = tpu.dynamic_rotate %595 by %c17_i32_272 dim 1 : vector<32x512xf32>, i32 -> vector<32x512xf32>
    %602 = vector.broadcast %2 : vector<1x512xf32> to vector<32x512xf32>
    %603 = arith.mulf %601, %602 : vector<32x512xf32>
    %c0_273 = arith.constant 0 : index
    %c192_274 = arith.constant 192 : index
    %c0_275 = arith.constant 0 : index
    %604 = vector.load %arg3[%c0_273, %c192_274, %c0_275] : memref<9x224x1xf32, #tpu.memory_space<vmem>>, vector<1x32x1xf32>
    %605 = vector.shape_cast %604 : vector<1x32x1xf32> to vector<32x1xf32>
    %606 = vector.broadcast %605 : vector<32x1xf32> to vector<32x512xf32>
    %607 = arith.mulf %603, %606 : vector<32x512xf32>
    %608 = arith.addf %600, %607 : vector<32x512xf32>
    %c16_i32_276 = arith.constant 16 : i32
    %609 = tpu.dynamic_rotate %595 by %c16_i32_276 dim 1 : vector<32x512xf32>, i32 -> vector<32x512xf32>
    %610 = vector.broadcast %4 : vector<1x512xf32> to vector<32x512xf32>
    %611 = arith.mulf %609, %610 : vector<32x512xf32>
    %c1_277 = arith.constant 1 : index
    %c192_278 = arith.constant 192 : index
    %c0_279 = arith.constant 0 : index
    %612 = vector.load %arg3[%c1_277, %c192_278, %c0_279] : memref<9x224x1xf32, #tpu.memory_space<vmem>>, vector<1x32x1xf32>
    %613 = vector.shape_cast %612 : vector<1x32x1xf32> to vector<32x1xf32>
    %614 = vector.broadcast %613 : vector<32x1xf32> to vector<32x512xf32>
    %615 = arith.mulf %611, %614 : vector<32x512xf32>
    %616 = arith.addf %608, %615 : vector<32x512xf32>
    %c15_i32_280 = arith.constant 15 : i32
    %617 = tpu.dynamic_rotate %595 by %c15_i32_280 dim 1 : vector<32x512xf32>, i32 -> vector<32x512xf32>
    %618 = vector.broadcast %6 : vector<1x512xf32> to vector<32x512xf32>
    %619 = arith.mulf %617, %618 : vector<32x512xf32>
    %c2_281 = arith.constant 2 : index
    %c192_282 = arith.constant 192 : index
    %c0_283 = arith.constant 0 : index
    %620 = vector.load %arg3[%c2_281, %c192_282, %c0_283] : memref<9x224x1xf32, #tpu.memory_space<vmem>>, vector<1x32x1xf32>
    %621 = vector.shape_cast %620 : vector<1x32x1xf32> to vector<32x1xf32>
    %622 = vector.broadcast %621 : vector<32x1xf32> to vector<32x512xf32>
    %623 = arith.mulf %619, %622 : vector<32x512xf32>
    %624 = arith.addf %616, %623 : vector<32x512xf32>
    %c1_i32_284 = arith.constant 1 : i32
    %625 = tpu.dynamic_rotate %595 by %c1_i32_284 dim 1 : vector<32x512xf32>, i32 -> vector<32x512xf32>
    %626 = vector.broadcast %8 : vector<1x512xf32> to vector<32x512xf32>
    %627 = arith.mulf %625, %626 : vector<32x512xf32>
    %c3_285 = arith.constant 3 : index
    %c192_286 = arith.constant 192 : index
    %c0_287 = arith.constant 0 : index
    %628 = vector.load %arg3[%c3_285, %c192_286, %c0_287] : memref<9x224x1xf32, #tpu.memory_space<vmem>>, vector<1x32x1xf32>
    %629 = vector.shape_cast %628 : vector<1x32x1xf32> to vector<32x1xf32>
    %630 = vector.broadcast %629 : vector<32x1xf32> to vector<32x512xf32>
    %631 = arith.mulf %627, %630 : vector<32x512xf32>
    %632 = arith.addf %624, %631 : vector<32x512xf32>
    %c511_i32_288 = arith.constant 511 : i32
    %633 = tpu.dynamic_rotate %595 by %c511_i32_288 dim 1 : vector<32x512xf32>, i32 -> vector<32x512xf32>
    %634 = vector.broadcast %10 : vector<1x512xf32> to vector<32x512xf32>
    %635 = arith.mulf %633, %634 : vector<32x512xf32>
    %c5_289 = arith.constant 5 : index
    %c192_290 = arith.constant 192 : index
    %c0_291 = arith.constant 0 : index
    %636 = vector.load %arg3[%c5_289, %c192_290, %c0_291] : memref<9x224x1xf32, #tpu.memory_space<vmem>>, vector<1x32x1xf32>
    %637 = vector.shape_cast %636 : vector<1x32x1xf32> to vector<32x1xf32>
    %638 = vector.broadcast %637 : vector<32x1xf32> to vector<32x512xf32>
    %639 = arith.mulf %635, %638 : vector<32x512xf32>
    %640 = arith.addf %632, %639 : vector<32x512xf32>
    %c497_i32_292 = arith.constant 497 : i32
    %641 = tpu.dynamic_rotate %595 by %c497_i32_292 dim 1 : vector<32x512xf32>, i32 -> vector<32x512xf32>
    %642 = vector.broadcast %12 : vector<1x512xf32> to vector<32x512xf32>
    %643 = arith.mulf %641, %642 : vector<32x512xf32>
    %c6_293 = arith.constant 6 : index
    %c192_294 = arith.constant 192 : index
    %c0_295 = arith.constant 0 : index
    %644 = vector.load %arg3[%c6_293, %c192_294, %c0_295] : memref<9x224x1xf32, #tpu.memory_space<vmem>>, vector<1x32x1xf32>
    %645 = vector.shape_cast %644 : vector<1x32x1xf32> to vector<32x1xf32>
    %646 = vector.broadcast %645 : vector<32x1xf32> to vector<32x512xf32>
    %647 = arith.mulf %643, %646 : vector<32x512xf32>
    %648 = arith.addf %640, %647 : vector<32x512xf32>
    %c496_i32_296 = arith.constant 496 : i32
    %649 = tpu.dynamic_rotate %595 by %c496_i32_296 dim 1 : vector<32x512xf32>, i32 -> vector<32x512xf32>
    %650 = vector.broadcast %14 : vector<1x512xf32> to vector<32x512xf32>
    %651 = arith.mulf %649, %650 : vector<32x512xf32>
    %c7_297 = arith.constant 7 : index
    %c192_298 = arith.constant 192 : index
    %c0_299 = arith.constant 0 : index
    %652 = vector.load %arg3[%c7_297, %c192_298, %c0_299] : memref<9x224x1xf32, #tpu.memory_space<vmem>>, vector<1x32x1xf32>
    %653 = vector.shape_cast %652 : vector<1x32x1xf32> to vector<32x1xf32>
    %654 = vector.broadcast %653 : vector<32x1xf32> to vector<32x512xf32>
    %655 = arith.mulf %651, %654 : vector<32x512xf32>
    %656 = arith.addf %648, %655 : vector<32x512xf32>
    %c495_i32_300 = arith.constant 495 : i32
    %657 = tpu.dynamic_rotate %595 by %c495_i32_300 dim 1 : vector<32x512xf32>, i32 -> vector<32x512xf32>
    %658 = vector.broadcast %16 : vector<1x512xf32> to vector<32x512xf32>
    %659 = arith.mulf %657, %658 : vector<32x512xf32>
    %c8_301 = arith.constant 8 : index
    %c192_302 = arith.constant 192 : index
    %c0_303 = arith.constant 0 : index
    %660 = vector.load %arg3[%c8_301, %c192_302, %c0_303] : memref<9x224x1xf32, #tpu.memory_space<vmem>>, vector<1x32x1xf32>
    %661 = vector.shape_cast %660 : vector<1x32x1xf32> to vector<32x1xf32>
    %662 = vector.broadcast %661 : vector<32x1xf32> to vector<32x512xf32>
    %663 = arith.mulf %659, %662 : vector<32x512xf32>
    %664 = arith.addf %656, %663 : vector<32x512xf32>
    %665 = vector.broadcast %596 : vector<32x1xf32> to vector<32x512xf32>
    %666 = arith.addf %664, %665 : vector<32x512xf32>
    %667 = tpu.concatenate %450, %522 in 0 : vector<32x512xf32>, vector<32x512xf32> -> vector<64x512xf32>
    %668 = tpu.concatenate %594, %666 in 0 : vector<32x512xf32>, vector<32x512xf32> -> vector<64x512xf32>
    %669 = arith.mulf %667, %667 : vector<64x512xf32>
    %670 = arith.mulf %669, %667 : vector<64x512xf32>
    %cst_304 = arith.constant 4.471500e-02 : f32
    %671 = vector.broadcast %cst_304 : f32 to vector<64x512xf32>
    %672 = arith.mulf %671, %670 : vector<64x512xf32>
    %673 = arith.addf %667, %672 : vector<64x512xf32>
    %cst_305 = arith.constant 0.797884583 : f32
    %674 = vector.broadcast %cst_305 : f32 to vector<64x512xf32>
    %675 = arith.mulf %674, %673 : vector<64x512xf32>
    %676 = math.tanh %675 : vector<64x512xf32>
    %cst_306 = arith.constant 1.000000e+00 : f32
    %677 = vector.broadcast %cst_306 : f32 to vector<64x512xf32>
    %678 = arith.addf %677, %676 : vector<64x512xf32>
    %679 = arith.mulf %667, %678 : vector<64x512xf32>
    %680 = arith.mulf %679, %668 : vector<64x512xf32>
    %c0_307 = arith.constant 0 : index
    %c0_308 = arith.constant 0 : index
    %681 = vector.load %arg7[%c0_307, %c0_308] : memref<32x64xbf16, #tpu.memory_space<vmem>>, vector<32x64xbf16>
    %682 = arith.truncf %680 : vector<64x512xf32> to vector<64x512xbf16>
    %cst_309 = arith.constant dense<0.000000e+00> : vector<32x512xf32>
    %683 = tpu.matmul %681, %682, %cst_309 {dimension_numbers = #tpu.dot_dimension_numbers<[1], [0], [0], [1], [0, 0, 1, 1], [], []>} : vector<32x64xbf16>, vector<64x512xbf16>, vector<32x512xf32> -> vector<32x512xf32>
    %c640 = arith.constant 640 : index
    %c0_310 = arith.constant 0 : index
    %684 = vector.load %arg2[%c640, %c0_310] : memref<672x1xf32, #tpu.memory_space<vmem>>, vector<32x1xf32>
    %685 = vector.broadcast %684 : vector<32x1xf32> to vector<32x512xf32>
    %686 = arith.addf %683, %685 : vector<32x512xf32>
    %687 = arith.addf %348, %686 : vector<32x512xf32>
    %c0_311 = arith.constant 0 : index
    %c0_312 = arith.constant 0 : index
    %688 = vector.load %arg8[%c0_311, %c0_312] : memref<32x512xf32, #tpu.memory_space<vmem>>, vector<32x512xf32>
    tpu.vector_store %arg8[%c0_311, %c0_312], %687 {strides = array<i32>} : memref<32x512xf32, #tpu.memory_space<vmem>>, vector<32x512xf32>,
    return
  }
  func.func @transform_0(%arg0: i32) -> (i32, i32) {
    %c0_i32 = arith.constant 0 : i32
    %c0_i32_0 = arith.constant 0 : i32
    %c0_i32_1 = arith.constant 0 : i32
    return %c0_i32, %c0_i32_0 : i32, i32
  }
  func.func @transform_1(%arg0: i32) -> (i32, i32) {
    %c0_i32 = arith.constant 0 : i32
    %c0_i32_0 = arith.constant 0 : i32
    %c0_i32_1 = arith.constant 0 : i32
    return %c0_i32, %c0_i32_0 : i32, i32
  }
  func.func @transform_2(%arg0: i32) -> (i32, i32, i32) {
    %c0_i32 = arith.constant 0 : i32
    %c0_i32_0 = arith.constant 0 : i32
    %c0_i32_1 = arith.constant 0 : i32
    %c0_i32_2 = arith.constant 0 : i32
    return %c0_i32, %c0_i32_0, %c0_i32_1 : i32, i32, i32
  }
  func.func @transform_3(%arg0: i32) -> (i32, i32, i32) {
    %c0_i32 = arith.constant 0 : i32
    %c0_i32_0 = arith.constant 0 : i32
    %c0_i32_1 = arith.constant 0 : i32
    %c0_i32_2 = arith.constant 0 : i32
    return %c0_i32, %c0_i32_0, %c0_i32_1 : i32, i32, i32
  }
  func.func @transform_4(%arg0: i32) -> (i32, i32) {
    %c0_i32 = arith.constant 0 : i32
    %c0_i32_0 = arith.constant 0 : i32
    %c0_i32_1 = arith.constant 0 : i32
    return %c0_i32, %c0_i32_0 : i32, i32
  }
  func.func @transform_5(%arg0: i32) -> (i32, i32) {
    %c0_i32 = arith.constant 0 : i32
    %c0_i32_0 = arith.constant 0 : i32
    %c0_i32_1 = arith.constant 0 : i32
    return %c0_i32, %c0_i32_0 : i32, i32
  }
  func.func @transform_6(%arg0: i32) -> (i32, i32) {
    %c0_i32 = arith.constant 0 : i32
    %c0_i32_0 = arith.constant 0 : i32
    %c0_i32_1 = arith.constant 0 : i32
    return %c0_i32, %c0_i32_0 : i32, i32
  }
  func.func @transform_7(%arg0: i32) -> (i32, i32) {
    %c0_i32 = arith.constant 0 : i32
    %c0_i32_0 = arith.constant 0 : i32
    %c0_i32_1 = arith.constant 0 : i32
    return %c0_i32, %c0_i32_0 : i32, i32
  }
}

</mosaic_0001>

<llo_original>
// kernel: transformer_block.1
$region0: #{transformer_block.1}
  #allocation0 [shape = 'u32[]', space=smem, size = 0x4, offset = 0x4, fixed_abs, tag = 'smem constant byte address 0x4 - core index']
  #allocation1 [shape = 'u32[144,128]{1,0:T(1,128)}', space=vmem, size = 0x12000, scoped, tag = 'internal scratch']
  %s0 = inlined_call_operand.vmem [shape: f32[32,512], index: 0, kind: input, shape index: {}]
  %s1 = inlined_call_operand.vmem [shape: f32[672,1], index: 1, kind: input, shape index: {}]
  %s2 = inlined_call_operand.vmem [shape: f32[9,224,1], index: 2, kind: input, shape index: {}]
  %s3 = inlined_call_operand.vmem [shape: f32[9,1,512], index: 3, kind: input, shape index: {}]
  %s4 = inlined_call_operand.vmem [shape: f32[32,32], index: 4, kind: input, shape index: {}]
  %s5 = inlined_call_operand.vmem [shape: bf16[256,32], index: 5, kind: input, shape index: {}]
  %s6 = inlined_call_operand.vmem [shape: bf16[32,64], index: 6, kind: input, shape index: {}]
  %s7 = inlined_call_operand.vmem [shape: f32[32,512], index: 7, kind: output, shape index: {}]
  %s8 = sld [smem:[#allocation0]]
  $region38: #{transformer_block.1} parent=0
    _
  %s10 = ssub.s32 1, %s8
  %s11 = scalar_select 0, %s10, %s8
  // Predicated region
  $region2: #{transformer_block.1} parent=0 // pred_check
    _
  $region3: #{transformer_block.1} parent=0 // pred_check_branch
    %13 = sbr.rel (0) target = $region5
  $region4: #{transformer_block.1} parent=0 // pred_region
    _
  $region5: #{transformer_block.1} parent=0 // pred_fallthru
    _
  // Predicated region
  $region6: #{transformer_block.1} parent=0 // pred_check
    _
  $region7: #{transformer_block.1} parent=0 // pred_check_branch
    %15 = sbr.rel (0) target = $region9
  $region8: #{transformer_block.1} parent=0 // pred_region
    _
  $region9: #{transformer_block.1} parent=0 // pred_fallthru
    _
  // Predicated region
  $region10: #{transformer_block.1} parent=0 // pred_check
    _
  $region11: #{transformer_block.1} parent=0 // pred_check_branch
    %17 = sbr.rel (0) target = $region13
  $region12: #{transformer_block.1} parent=0 // pred_region
    _
  $region13: #{transformer_block.1} parent=0 // pred_fallthru
    _
  // Predicated region
  $region14: #{transformer_block.1} parent=0 // pred_check
    _
  $region15: #{transformer_block.1} parent=0 // pred_check_branch
    %19 = sbr.rel (0) target = $region17
  $region16: #{transformer_block.1} parent=0 // pred_region
    _
  $region17: #{transformer_block.1} parent=0 // pred_fallthru
    _
  // Predicated region
  $region18: #{transformer_block.1} parent=0 // pred_check
    _
  $region19: #{transformer_block.1} parent=0 // pred_check_branch
    %21 = sbr.rel (0) target = $region21
  $region20: #{transformer_block.1} parent=0 // pred_region
    _
  $region21: #{transformer_block.1} parent=0 // pred_fallthru
    _
  // Predicated region
  $region22: #{transformer_block.1} parent=0 // pred_check
    _
  $region23: #{transformer_block.1} parent=0 // pred_check_branch
    %23 = sbr.rel (0) target = $region25
  $region24: #{transformer_block.1} parent=0 // pred_region
    _
  $region25: #{transformer_block.1} parent=0 // pred_fallthru
    _
  // Predicated region
  $region26: #{transformer_block.1} parent=0 // pred_check
    _
  $region27: #{transformer_block.1} parent=0 // pred_check_branch
    %25 = sbr.rel (0) target = $region29
  $region28: #{transformer_block.1} parent=0 // pred_region
    _
  $region29: #{transformer_block.1} parent=0 // pred_fallthru
    _
  %v27 = vld [vmem:[%s0] sm:$0xff]
  %v28 = vld [vmem:[%s0 + $0x8] sm:$0xff]
  %v29 = vld [vmem:[%s0 + $0x10] sm:$0xff]
  %v30 = vld [vmem:[%s0 + $0x18] sm:$0xff]
  %v31 = vld [vmem:[%s0 + $0x20] sm:$0xff]
  %v32 = vld [vmem:[%s0 + $0x28] sm:$0xff]
  %v33 = vld [vmem:[%s0 + $0x30] sm:$0xff]
  %v34 = vld [vmem:[%s0 + $0x38] sm:$0xff]
  %v35 = vld [vmem:[%s0 + $0x40] sm:$0xff]
  %v36 = vld [vmem:[%s0 + $0x48] sm:$0xff]
  %v37 = vld [vmem:[%s0 + $0x50] sm:$0xff]
  %v38 = vld [vmem:[%s0 + $0x58] sm:$0xff]
  %v39 = vld [vmem:[%s0 + $0x60] sm:$0xff]
  %v40 = vld [vmem:[%s0 + $0x68] sm:$0xff]
  %v41 = vld [vmem:[%s0 + $0x70] sm:$0xff]
  %v42 = vld [vmem:[%s0 + $0x78] sm:$0xff]
  %v43 = vld [vmem:[%s3] sm:$0xf]
  %s44 = scalar_lea.vmem %s3, 4
  %v45 = vld [vmem:[%s44] sm:$0xf]
  %s46 = scalar_lea.vmem %s3, 8
  %v47 = vld [vmem:[%s46] sm:$0xf]
  %s48 = scalar_lea.vmem %s3, 12
  %v49 = vld [vmem:[%s48] sm:$0xf]
  %s50 = scalar_lea.vmem %s3, 20
  %v51 = vld [vmem:[%s50] sm:$0xf]
  %s52 = scalar_lea.vmem %s3, 24
  %v53 = vld [vmem:[%s52] sm:$0xf]
  %s54 = scalar_lea.vmem %s3, 28
  %v55 = vld [vmem:[%s54] sm:$0xf]
  %s56 = scalar_lea.vmem %s3, 32
  %v57 = vld [vmem:[%s56] sm:$0xf]
  %v58 = vld [vmem:[%s1] sm:$0xff]
  %v59 = vld [vmem:[%s1 + $0x8] sm:$0xff]
  %v60 = vld [vmem:[%s1 + $0x10] sm:$0xff]
  %v61 = vld [vmem:[%s1 + $0x18] sm:$0xff]
  %v62 = vld [vmem:[%s1 + $0x20] sm:$0xff]
  %v63 = vld [vmem:[%s1 + $0x28] sm:$0xff]
  %v64 = vld [vmem:[%s1 + $0x30] sm:$0xff]
  %v65 = vld [vmem:[%s1 + $0x38] sm:$0xff]
  %v66 = vadd.f32 %v27, %v31
  %v67 = vadd.f32 %v66, %v35
  %v68 = vadd.f32 %v67, %v39
  %v69 = vrot.slane %v68, 4
  %v70 = vadd.f32 %v68, %v69
  %v71 = vrot.slane %v70, 2
  %v72 = vadd.f32 %v70, %v71
  %v73 = vrot.slane %v72, 1
  %v74 = vadd.f32 %v72, %v73
  %v75 = vadd.f32 %v28, %v32
  %v76 = vadd.f32 %v75, %v36
  %v77 = vadd.f32 %v76, %v40
  %v78 = vrot.slane %v77, 4
  %v79 = vadd.f32 %v77, %v78
  %v80 = vrot.slane %v79, 2
  %v81 = vadd.f32 %v79, %v80
  %v82 = vrot.slane %v81, 1
  %v83 = vadd.f32 %v81, %v82
  %v84 = vadd.f32 %v29, %v33
  %v85 = vadd.f32 %v84, %v37
  %v86 = vadd.f32 %v85, %v41
  %v87 = vrot.slane %v86, 4
  %v88 = vadd.f32 %v86, %v87
  %v89 = vrot.slane %v88, 2
  %v90 = vadd.f32 %v88, %v89
  %v91 = vrot.slane %v90, 1
  %v92 = vadd.f32 %v90, %v91
  %v93 = vadd.f32 %v30, %v34
  %v94 = vadd.f32 %v93, %v38
  %v95 = vadd.f32 %v94, %v42
  %v96 = vrot.slane %v95, 4
  %v97 = vadd.f32 %v95, %v96
  %v98 = vrot.slane %v97, 2
  %v99 = vadd.f32 %v97, %v98
  %v100 = vrot.slane %v99, 1
  %v101 = vadd.f32 %v99, %v100
  %v102 = vrcp.pop 32.0
  %v103 = vmul.f32 %v74, %v102
  %v104 = vmul.f32 %v83, %v102
  %v105 = vmul.f32 %v92, %v102
  %v106 = vmul.f32 %v101, %v102
  %v107 = vsub.f32 %v27, %v103
  %v108 = vsub.f32 %v28, %v104
  %v109 = vsub.f32 %v29, %v105
  %v110 = vsub.f32 %v30, %v106
  %v111 = vsub.f32 %v31, %v103
  %v112 = vsub.f32 %v32, %v104
  %v113 = vsub.f32 %v33, %v105
  %v114 = vsub.f32 %v34, %v106
  %v115 = vsub.f32 %v35, %v103
  %v116 = vsub.f32 %v36, %v104
  %v117 = vsub.f32 %v37, %v105
  %v118 = vsub.f32 %v38, %v106
  %v119 = vsub.f32 %v39, %v103
  %v120 = vsub.f32 %v40, %v104
  %v121 = vsub.f32 %v41, %v105
  %v122 = vsub.f32 %v42, %v106
  %v123 = vmul.f32 %v107, %v107
  %v124 = vmul.f32 %v108, %v108
  %v125 = vmul.f32 %v109, %v109
  %v126 = vmul.f32 %v110, %v110
  %v127 = vmul.f32 %v111, %v111
  %v128 = vmul.f32 %v112, %v112
  %v129 = vmul.f32 %v113, %v113
  %v130 = vmul.f32 %v114, %v114
  %v131 = vmul.f32 %v115, %v115
  %v132 = vmul.f32 %v116, %v116
  %v133 = vmul.f32 %v117, %v117
  %v134 = vmul.f32 %v118, %v118
  %v135 = vmul.f32 %v119, %v119
  %v136 = vmul.f32 %v120, %v120
  %v137 = vmul.f32 %v121, %v121
  %v138 = vmul.f32 %v122, %v122
  %v139 = vadd.f32 %v123, %v127
  %v140 = vadd.f32 %v139, %v131
  %v141 = vadd.f32 %v140, %v135
  %v142 = vrot.slane %v141, 4
  %v143 = vadd.f32 %v141, %v142
  %v144 = vrot.slane %v143, 2
  %v145 = vadd.f32 %v143, %v144
  %v146 = vrot.slane %v145, 1
  %v147 = vadd.f32 %v145, %v146
  %v148 = vadd.f32 %v124, %v128
  %v149 = vadd.f32 %v148, %v132
  %v150 = vadd.f32 %v149, %v136
  %v151 = vrot.slane %v150, 4
  %v152 = vadd.f32 %v150, %v151
  %v153 = vrot.slane %v152, 2
  %v154 = vadd.f32 %v152, %v153
  %v155 = vrot.slane %v154, 1
  %v156 = vadd.f32 %v154, %v155
  %v157 = vadd.f32 %v125, %v129
  %v158 = vadd.f32 %v157, %v133
  %v159 = vadd.f32 %v158, %v137
  %v160 = vrot.slane %v159, 4
  %v161 = vadd.f32 %v159, %v160
  %v162 = vrot.slane %v161, 2
  %v163 = vadd.f32 %v161, %v162
  %v164 = vrot.slane %v163, 1
  %v165 = vadd.f32 %v163, %v164
  %v166 = vadd.f32 %v126, %v130
  %v167 = vadd.f32 %v166, %v134
  %v168 = vadd.f32 %v167, %v138
  %v169 = vrot.slane %v168, 4
  %v170 = vadd.f32 %v168, %v169
  %v171 = vrot.slane %v170, 2
  %v172 = vadd.f32 %v170, %v171
  %v173 = vrot.slane %v172, 1
  %v174 = vadd.f32 %v172, %v173
  %v175 = vmul.f32 %v147, %v102
  %v176 = vmul.f32 %v156, %v102
  %v177 = vmul.f32 %v165, %v102
  %v178 = vmul.f32 %v174, %v102
  %v179 = vadd.f32 %v175, 1e-05
  %v180 = vadd.f32 %v176, 1e-05
  %v181 = vadd.f32 %v177, 1e-05
  %v182 = vadd.f32 %v178, 1e-05
  %v183 = vrsqrt.pop %v179
  %v184 = vrsqrt.pop %v180
  %v185 = vrsqrt.pop %v181
  %v186 = vrsqrt.pop %v182
  %v187 = vmul.f32 %v107, %v183
  %v188 = vmul.f32 %v108, %v184
  %v189 = vmul.f32 %v109, %v185
  %v190 = vmul.f32 %v110, %v186
  %v191 = vmul.f32 %v111, %v183
  %v192 = vmul.f32 %v112, %v184
  %v193 = vmul.f32 %v113, %v185
  %v194 = vmul.f32 %v114, %v186
  %v195 = vmul.f32 %v115, %v183
  %v196 = vmul.f32 %v116, %v184
  %v197 = vmul.f32 %v117, %v185
  %v198 = vmul.f32 %v118, %v186
  %v199 = vmul.f32 %v119, %v183
  %v200 = vmul.f32 %v120, %v184
  %v201 = vmul.f32 %v121, %v185
  %v202 = vmul.f32 %v122, %v186
  %204 = vset.pattern.permute.xlu0 0
  %205 = vperm.xlu0 %204, %v58
  %v206 = vpop.permute.xlu0 %205
  %209 = vset.pattern.permute.xlu0 0
  %210 = vperm.xlu0 %209, %v59
  %v211 = vpop.permute.xlu0 %210
  %214 = vset.pattern.permute.xlu0 0
  %215 = vperm.xlu0 %214, %v60
  %v216 = vpop.permute.xlu0 %215
  %219 = vset.pattern.permute.xlu0 0
  %220 = vperm.xlu0 %219, %v61
  %v221 = vpop.permute.xlu0 %220
  %v223 = vmul.f32 %v187, %v206
  %v224 = vmul.f32 %v188, %v206
  %v225 = vmul.f32 %v189, %v206
  %v226 = vmul.f32 %v190, %v206
  %v227 = vmul.f32 %v191, %v211
  %v228 = vmul.f32 %v192, %v211
  %v229 = vmul.f32 %v193, %v211
  %v230 = vmul.f32 %v194, %v211
  %v231 = vmul.f32 %v195, %v216
  %v232 = vmul.f32 %v196, %v216
  %v233 = vmul.f32 %v197, %v216
  %v234 = vmul.f32 %v198, %v216
  %v235 = vmul.f32 %v199, %v221
  %v236 = vmul.f32 %v200, %v221
  %v237 = vmul.f32 %v201, %v221
  %v238 = vmul.f32 %v202, %v221
  %240 = vset.pattern.permute.xlu0 0
  %241 = vperm.xlu0 %240, %v62
  %v242 = vpop.permute.xlu0 %241
  %245 = vset.pattern.permute.xlu0 0
  %246 = vperm.xlu0 %245, %v63
  %v247 = vpop.permute.xlu0 %246
  %250 = vset.pattern.permute.xlu0 0
  %251 = vperm.xlu0 %250, %v64
  %v252 = vpop.permute.xlu0 %251
  %255 = vset.pattern.permute.xlu0 0
  %256 = vperm.xlu0 %255, %v65
  %v257 = vpop.permute.xlu0 %256
  %v259 = vadd.f32 %v223, %v242
  %v260 = vadd.f32 %v224, %v242
  %v261 = vadd.f32 %v225, %v242
  %v262 = vadd.f32 %v226, %v242
  %v263 = vadd.f32 %v227, %v247
  %v264 = vadd.f32 %v228, %v247
  %v265 = vadd.f32 %v229, %v247
  %v266 = vadd.f32 %v230, %v247
  %v267 = vadd.f32 %v231, %v252
  %v268 = vadd.f32 %v232, %v252
  %v269 = vadd.f32 %v233, %v252
  %v270 = vadd.f32 %v234, %v252
  %v271 = vadd.f32 %v235, %v257
  %v272 = vadd.f32 %v236, %v257
  %v273 = vadd.f32 %v237, %v257
  %v274 = vadd.f32 %v238, %v257
  %v275 = vld [vmem:[%s5] sm:$0xf]
  %v276 = vld [vmem:[%s5 + $0x4] sm:$0xf]
  %v277 = vld [vmem:[%s5 + $0x8] sm:$0xf]
  %v278 = vld [vmem:[%s5 + $0xc] sm:$0xf]
  %v279 = vld [vmem:[%s5 + $0x10] sm:$0xf]
  %v280 = vld [vmem:[%s5 + $0x14] sm:$0xf]
  %v281 = vld [vmem:[%s5 + $0x18] sm:$0xf]
  %v282 = vld [vmem:[%s5 + $0x1c] sm:$0xf]
  %v283 = vld [vmem:[%s5 + $0x20] sm:$0xf]
  %v284 = vld [vmem:[%s5 + $0x24] sm:$0xf]
  %v285 = vld [vmem:[%s5 + $0x28] sm:$0xf]
  %v286 = vld [vmem:[%s5 + $0x2c] sm:$0xf]
  %v287 = vpack.c.bf16 %v263, %v259
  %v288 = vpack.c.bf16 %v264, %v260
  %v289 = vpack.c.bf16 %v265, %v261
  %v290 = vpack.c.bf16 %v266, %v262
  %v291 = vpack.c.bf16 %v271, %v267
  %v292 = vpack.c.bf16 %v272, %v268
  %v293 = vpack.c.bf16 %v273, %v269
  %v294 = vpack.c.bf16 %v274, %v270
  %v295 = vld [vmem:[%s1 + $0x40] sm:$0xff]
  %v296 = vld [vmem:[%s1 + $0x48] sm:$0xff]
  %v297 = vld [vmem:[%s1 + $0x50] sm:$0xff]
  %v298 = vld [vmem:[%s1 + $0x58] sm:$0xff]
  %v299 = vld [vmem:[%s1 + $0x60] sm:$0xff]
  %v300 = vld [vmem:[%s1 + $0x68] sm:$0xff]
  %v301 = vld [vmem:[%s1 + $0x70] sm:$0xff]
  %v302 = vld [vmem:[%s1 + $0x78] sm:$0xff]
  %v303 = vld [vmem:[%s1 + $0x80] sm:$0xff]
  %v304 = vld [vmem:[%s1 + $0x88] sm:$0xff]
  %v305 = vld [vmem:[%s1 + $0x90] sm:$0xff]
  %v306 = vld [vmem:[%s1 + $0x98] sm:$0xff]
  %308 = vset.pattern.permute.xlu0 0
  %309 = vperm.xlu0 %308, %v295
  %v310 = vpop.permute.xlu0 %309
  %313 = vset.pattern.permute.xlu0 0
  %314 = vperm.xlu0 %313, %v296
  %v315 = vpop.permute.xlu0 %314
  %318 = vset.pattern.permute.xlu0 0
  %319 = vperm.xlu0 %318, %v297
  %v320 = vpop.permute.xlu0 %319
  %323 = vset.pattern.permute.xlu0 0
  %324 = vperm.xlu0 %323, %v298
  %v325 = vpop.permute.xlu0 %324
  %328 = vset.pattern.permute.xlu0 0
  %329 = vperm.xlu0 %328, %v299
  %v330 = vpop.permute.xlu0 %329
  %333 = vset.pattern.permute.xlu0 0
  %334 = vperm.xlu0 %333, %v300
  %v335 = vpop.permute.xlu0 %334
  %338 = vset.pattern.permute.xlu0 0
  %339 = vperm.xlu0 %338, %v301
  %v340 = vpop.permute.xlu0 %339
  %343 = vset.pattern.permute.xlu0 0
  %344 = vperm.xlu0 %343, %v302
  %v345 = vpop.permute.xlu0 %344
  %348 = vset.pattern.permute.xlu0 0
  %349 = vperm.xlu0 %348, %v303
  %v350 = vpop.permute.xlu0 %349
  %353 = vset.pattern.permute.xlu0 0
  %354 = vperm.xlu0 %353, %v304
  %v355 = vpop.permute.xlu0 %354
  %358 = vset.pattern.permute.xlu0 0
  %359 = vperm.xlu0 %358, %v305
  %v360 = vpop.permute.xlu0 %359
  %363 = vset.pattern.permute.xlu0 0
  %364 = vperm.xlu0 %363, %v306
  %v365 = vpop.permute.xlu0 %364
  %v379 = vunpack.c.l.b16 %v275
  %v380 = vunpack.c.l.b16 %v276
  %v381 = vunpack.c.l.b16 %v277
  %v382 = vunpack.c.l.b16 %v278
  %v383 = vunpack.c.l.b16 %v279
  %v384 = vunpack.c.l.b16 %v280
  %v385 = vunpack.c.l.b16 %v281
  %v386 = vunpack.c.l.b16 %v282
  %v387 = vunpack.c.l.b16 %v283
  %v388 = vunpack.c.l.b16 %v284
  %v389 = vunpack.c.l.b16 %v285
  %v390 = vunpack.c.l.b16 %v286
  %v391 = vpack.c.b16 %v380, %v379
  %v392 = vpack.c.b16 %v382, %v381
  %v393 = vpack.c.b16 %v384, %v383
  %v394 = vpack.c.b16 %v386, %v385
  %v395 = vpack.c.b16 %v388, %v387
  %v396 = vpack.c.b16 %v390, %v389
  %vm397 = vcmask 261120
  %v399 = vsel %vm397, %v391, 0
  %v402 = vsel %vm397, %v392, 0
  %v405 = vsel %vm397, %v393, 0
  %v408 = vsel %vm397, %v394, 0
  %v411 = vsel %vm397, %v395, 0
  %v414 = vsel %vm397, %v396, 0
  %416 = vmatprep.subr.bf16.mxu0 0
  %417 = vmatpush1.bf16.msra.mxu0 0
  %418 = vmatprep.subr.bf16.mxu0 0
  %419 = vmatpush1.bf16.msra.mxu0 0
  %420 = vmatprep.subr.bf16.mxu0 0
  %421 = vmatpush1.bf16.msra.mxu0 0
  %422 = vmatprep.subr.bf16.mxu0 0
  %423 = vmatpush1.bf16.msra.mxu0 0
  %424 = vmatprep.subr.bf16.mxu0 0
  %425 = vmatpush1.bf16.msra.mxu0 0
  %426 = vmatprep.subr.bf16.mxu0 0
  %427 = vmatpush1.bf16.msra.mxu0 0
  %428 = vmatprep.subr.bf16.mxu0 %v292
  %429 = vmatpush1.bf16.msra.mxu0 %v291
  %430 = vmatprep.subr.bf16.mxu0 %v288
  %431 = vmatpush1.bf16.msra.mxu0 %v287
  %432 = vmatprep.subr.bf16.mxu0 0
  %433 = vmatpush2.bf16.msra.mxu0 0
  %434 = vmatprep.subr.bf16.mxu0 0
  %435 = vmatpush2.bf16.msra.mxu0 0
  %436 = vmatprep.subr.bf16.mxu0 0
  %437 = vmatpush2.bf16.msra.mxu0 0
  %438 = vmatprep.subr.bf16.mxu0 0
  %439 = vmatpush2.bf16.msra.mxu0 0
  %440 = vmatprep.subr.bf16.mxu0 0
  %441 = vmatpush2.bf16.msra.mxu0 0
  %442 = vmatprep.subr.bf16.mxu0 0
  %443 = vmatpush2.bf16.msra.mxu0 0
  %444 = vmatprep.subr.bf16.mxu0 0
  %445 = vmatpush2.bf16.msra.mxu0 0
  %446 = vmatprep.subr.bf16.mxu0 0
  %447 = vmatpush2.bf16.msra.mxu0 0
  %448 = vmatprep.mubr.bf16.mxu0 0
  %449 = vmatmul.mubr.bf16.gmra.mxu0 %v399
  %v450 = vpop.f32.mrf.mxu0
  %v451 = vadd.f32 %v310, %v450
  %v452 = vpop.f32.mrf.mxu0
  %v453 = vadd.f32 %v310, %v452
  %v454 = vpop.f32.mrf.mxu0
  %v455 = vadd.f32 %v315, %v454
  %v456 = vpop.f32.mrf.mxu0
  %v457 = vadd.f32 %v315, %v456
  %458 = vmatprep.mubr.bf16.mxu0 0
  %459 = vmatmul.mubr.bf16.gmra.mxu0 %v402
  %v460 = vpop.f32.mrf.mxu0
  %v461 = vadd.f32 %v320, %v460
  %v462 = vpop.f32.mrf.mxu0
  %v463 = vadd.f32 %v320, %v462
  %v464 = vpop.f32.mrf.mxu0
  %v465 = vadd.f32 %v325, %v464
  %v466 = vpop.f32.mrf.mxu0
  %v467 = vadd.f32 %v325, %v466
  %468 = vmatprep.mubr.bf16.mxu0 0
  %469 = vmatmul.mubr.bf16.gmra.mxu0 %v405
  %v470 = vpop.f32.mrf.mxu0
  %v471 = vadd.f32 %v330, %v470
  %v472 = vpop.f32.mrf.mxu0
  %v473 = vadd.f32 %v330, %v472
  %v474 = vpop.f32.mrf.mxu0
  %v475 = vadd.f32 %v335, %v474
  %v476 = vpop.f32.mrf.mxu0
  %v477 = vadd.f32 %v335, %v476
  %478 = vmatprep.mubr.bf16.mxu0 0
  %479 = vmatmul.mubr.bf16.gmra.mxu0 %v408
  %v480 = vpop.f32.mrf.mxu0
  %v481 = vadd.f32 %v340, %v480
  %v482 = vpop.f32.mrf.mxu0
  %v483 = vadd.f32 %v340, %v482
  %v484 = vpop.f32.mrf.mxu0
  %v485 = vadd.f32 %v345, %v484
  %v486 = vpop.f32.mrf.mxu0
  %v487 = vadd.f32 %v345, %v486
  %488 = vmatprep.mubr.bf16.mxu0 0
  %489 = vmatmul.mubr.bf16.gmra.mxu0 %v411
  %v490 = vpop.f32.mrf.mxu0
  %v491 = vadd.f32 %v350, %v490
  %v492 = vpop.f32.mrf.mxu0
  %v493 = vadd.f32 %v350, %v492
  %v494 = vpop.f32.mrf.mxu0
  %v495 = vadd.f32 %v355, %v494
  %v496 = vpop.f32.mrf.mxu0
  %v497 = vadd.f32 %v355, %v496
  %498 = vmatprep.mubr.bf16.mxu0 0
  %499 = vmatmul.mubr.bf16.gmra.mxu0 %v414
  %v500 = vpop.f32.mrf.mxu0
  %v501 = vadd.f32 %v360, %v500
  %v502 = vpop.f32.mrf.mxu0
  %v503 = vadd.f32 %v360, %v502
  %v504 = vpop.f32.mrf.mxu0
  %v505 = vadd.f32 %v365, %v504
  %v506 = vpop.f32.mrf.mxu0
  %v507 = vadd.f32 %v365, %v506
  %508 = vdwg.mxu0
  %509 = vmatprep.subr.bf16.mxu0 0
  %510 = vmatpush1.bf16.msra.mxu0 0
  %511 = vmatprep.subr.bf16.mxu0 0
  %512 = vmatpush1.bf16.msra.mxu0 0
  %513 = vmatprep.subr.bf16.mxu0 0
  %514 = vmatpush1.bf16.msra.mxu0 0
  %515 = vmatprep.subr.bf16.mxu0 0
  %516 = vmatpush1.bf16.msra.mxu0 0
  %517 = vmatprep.subr.bf16.mxu0 0
  %518 = vmatpush1.bf16.msra.mxu0 0
  %519 = vmatprep.subr.bf16.mxu0 0
  %520 = vmatpush1.bf16.msra.mxu0 0
  %521 = vmatprep.subr.bf16.mxu0 %v294
  %522 = vmatpush1.bf16.msra.mxu0 %v293
  %523 = vmatprep.subr.bf16.mxu0 %v290
  %524 = vmatpush1.bf16.msra.mxu0 %v289
  %525 = vmatprep.subr.bf16.mxu0 0
  %526 = vmatpush2.bf16.msra.mxu0 0
  %527 = vmatprep.subr.bf16.mxu0 0
  %528 = vmatpush2.bf16.msra.mxu0 0
  %529 = vmatprep.subr.bf16.mxu0 0
  %530 = vmatpush2.bf16.msra.mxu0 0
  %531 = vmatprep.subr.bf16.mxu0 0
  %532 = vmatpush2.bf16.msra.mxu0 0
  %533 = vmatprep.subr.bf16.mxu0 0
  %534 = vmatpush2.bf16.msra.mxu0 0
  %535 = vmatprep.subr.bf16.mxu0 0
  %536 = vmatpush2.bf16.msra.mxu0 0
  %537 = vmatprep.subr.bf16.mxu0 0
  %538 = vmatpush2.bf16.msra.mxu0 0
  %539 = vmatprep.subr.bf16.mxu0 0
  %540 = vmatpush2.bf16.msra.mxu0 0
  %541 = vmatprep.mubr.bf16.mxu0 0
  %542 = vmatmul.mubr.bf16.gmra.mxu0 %v399
  %v543 = vpop.f32.mrf.mxu0
  %v544 = vadd.f32 %v310, %v543
  %v545 = vpop.f32.mrf.mxu0
  %v546 = vadd.f32 %v310, %v545
  %v547 = vpop.f32.mrf.mxu0
  %v548 = vadd.f32 %v315, %v547
  %v549 = vpop.f32.mrf.mxu0
  %v550 = vadd.f32 %v315, %v549
  %551 = vmatprep.mubr.bf16.mxu0 0
  %552 = vmatmul.mubr.bf16.gmra.mxu0 %v402
  %v553 = vpop.f32.mrf.mxu0
  %v554 = vadd.f32 %v320, %v553
  %v555 = vpop.f32.mrf.mxu0
  %v556 = vadd.f32 %v320, %v555
  %v557 = vpop.f32.mrf.mxu0
  %v558 = vadd.f32 %v325, %v557
  %v559 = vpop.f32.mrf.mxu0
  %v560 = vadd.f32 %v325, %v559
  %561 = vmatprep.mubr.bf16.mxu0 0
  %562 = vmatmul.mubr.bf16.gmra.mxu0 %v405
  %v563 = vpop.f32.mrf.mxu0
  %v564 = vadd.f32 %v330, %v563
  %v565 = vpop.f32.mrf.mxu0
  %v566 = vadd.f32 %v330, %v565
  %v567 = vpop.f32.mrf.mxu0
  %v568 = vadd.f32 %v335, %v567
  %v569 = vpop.f32.mrf.mxu0
  %v570 = vadd.f32 %v335, %v569
  %571 = vmatprep.mubr.bf16.mxu0 0
  %572 = vmatmul.mubr.bf16.gmra.mxu0 %v408
  %v573 = vpop.f32.mrf.mxu0
  %v574 = vadd.f32 %v340, %v573
  %v575 = vpop.f32.mrf.mxu0
  %v576 = vadd.f32 %v340, %v575
  %v577 = vpop.f32.mrf.mxu0
  %v578 = vadd.f32 %v345, %v577
  %v579 = vpop.f32.mrf.mxu0
  %v580 = vadd.f32 %v345, %v579
  %581 = vmatprep.mubr.bf16.mxu0 0
  %582 = vmatmul.mubr.bf16.gmra.mxu0 %v411
  %v583 = vpop.f32.mrf.mxu0
  %v584 = vadd.f32 %v350, %v583
  %v585 = vpop.f32.mrf.mxu0
  %v586 = vadd.f32 %v350, %v585
  %v587 = vpop.f32.mrf.mxu0
  %v588 = vadd.f32 %v355, %v587
  %v589 = vpop.f32.mrf.mxu0
  %v590 = vadd.f32 %v355, %v589
  %591 = vmatprep.mubr.bf16.mxu0 0
  %592 = vmatmul.mubr.bf16.gmra.mxu0 %v414
  %v593 = vpop.f32.mrf.mxu0
  %v594 = vadd.f32 %v360, %v593
  %v595 = vpop.f32.mrf.mxu0
  %v596 = vadd.f32 %v360, %v595
  %v597 = vpop.f32.mrf.mxu0
  %v598 = vadd.f32 %v365, %v597
  %v599 = vpop.f32.mrf.mxu0
  %v600 = vadd.f32 %v365, %v599
  %601 = vdwg.mxu0
  %v602 = vld [vmem:[%s1 + $0xa0] sm:$0xff]
  %v603 = vld [vmem:[%s1 + $0xa8] sm:$0xff]
  %v604 = vld [vmem:[%s1 + $0xb0] sm:$0xff]
  %v605 = vld [vmem:[%s1 + $0xb8] sm:$0xff]
  %s606 = scalar_lea.vmem %s2, 896
  %v607 = vld [vmem:[%s606] sm:$0xff]
  %v608 = vld [vmem:[%s606 + $0x8] sm:$0xff]
  %v609 = vld [vmem:[%s606 + $0x10] sm:$0xff]
  %v610 = vld [vmem:[%s606 + $0x18] sm:$0xff]
  %612 = vset.pattern.permute.xlu0 0
  %613 = vperm.xlu0 %612, %v607
  %v614 = vpop.permute.xlu0 %613
  %617 = vset.pattern.permute.xlu0 0
  %618 = vperm.xlu0 %617, %v608
  %v619 = vpop.permute.xlu0 %618
  %622 = vset.pattern.permute.xlu0 0
  %623 = vperm.xlu0 %622, %v609
  %v624 = vpop.permute.xlu0 %623
  %627 = vset.pattern.permute.xlu0 0
  %628 = vperm.xlu0 %627, %v610
  %v629 = vpop.permute.xlu0 %628
  %v631 = vmul.f32 %v451, %v614
  %v632 = vmul.f32 %v453, %v614
  %v633 = vmul.f32 %v544, %v614
  %v634 = vmul.f32 %v546, %v614
  %v635 = vmul.f32 %v455, %v619
  %v636 = vmul.f32 %v457, %v619
  %v637 = vmul.f32 %v548, %v619
  %v638 = vmul.f32 %v550, %v619
  %v639 = vmul.f32 %v461, %v624
  %v640 = vmul.f32 %v463, %v624
  %v641 = vmul.f32 %v554, %v624
  %v642 = vmul.f32 %v556, %v624
  %v643 = vmul.f32 %v465, %v629
  %v644 = vmul.f32 %v467, %v629
  %v645 = vmul.f32 %v558, %v629
  %v646 = vmul.f32 %v560, %v629
  %647 = vrot.lane.b32.xlu0 %v451, 17
  %v648 = vpop.permute.xlu0 %647
  %649 = vrot.lane.b32.xlu0 %v455, 17
  %v650 = vpop.permute.xlu0 %649
  %651 = vrot.lane.b32.xlu0 %v461, 17
  %v652 = vpop.permute.xlu0 %651
  %653 = vrot.lane.b32.xlu0 %v465, 17
  %v654 = vpop.permute.xlu0 %653
  %655 = vrot.lane.b32.xlu0 %v453, 17
  %v656 = vpop.permute.xlu0 %655
  %657 = vrot.lane.b32.xlu0 %v457, 17
  %v658 = vpop.permute.xlu0 %657
  %659 = vrot.lane.b32.xlu0 %v463, 17
  %v660 = vpop.permute.xlu0 %659
  %661 = vrot.lane.b32.xlu0 %v467, 17
  %v662 = vpop.permute.xlu0 %661
  %663 = vrot.lane.b32.xlu0 %v544, 17
  %v664 = vpop.permute.xlu0 %663
  %665 = vrot.lane.b32.xlu0 %v548, 17
  %v666 = vpop.permute.xlu0 %665
  %667 = vrot.lane.b32.xlu0 %v554, 17
  %v668 = vpop.permute.xlu0 %667
  %669 = vrot.lane.b32.xlu0 %v558, 17
  %v670 = vpop.permute.xlu0 %669
  %671 = vrot.lane.b32.xlu0 %v546, 17
  %v672 = vpop.permute.xlu0 %671
  %673 = vrot.lane.b32.xlu0 %v550, 17
  %v674 = vpop.permute.xlu0 %673
  %675 = vrot.lane.b32.xlu0 %v556, 17
  %v676 = vpop.permute.xlu0 %675
  %677 = vrot.lane.b32.xlu0 %v560, 17
  %v678 = vpop.permute.xlu0 %677
  %v679 = vlaneseq
  %v680 = vand.u32 %v679, 127
  %vm681 = vcmp.lt.s32.totalorder %v680, 17
  %v682 = vsel %vm681, %v664, %v672
  %v683 = vsel %vm681, %v666, %v674
  %v684 = vsel %vm681, %v668, %v676
  %v685 = vsel %vm681, %v670, %v678
  %v686 = vsel %vm681, %v656, %v664
  %v687 = vsel %vm681, %v658, %v666
  %v688 = vsel %vm681, %v660, %v668
  %v689 = vsel %vm681, %v662, %v670
  %v690 = vsel %vm681, %v648, %v656
  %v691 = vsel %vm681, %v650, %v658
  %v692 = vsel %vm681, %v652, %v660
  %v693 = vsel %vm681, %v654, %v662
  %v694 = vsel %vm681, %v672, %v648
  %v695 = vsel %vm681, %v674, %v650
  %v696 = vsel %vm681, %v676, %v652
  %v697 = vsel %vm681, %v678, %v654
  %v699 = vlaneseq
  %v700 = vshrl.u32 %v699, 7
  %v701 = vsub.s32 0, %v700
  %v702 = vrot.slane %v43, %v701
  %v703 = vlaneseq
  %v704 = vshrl.u32 %v703, 7
  %v705 = vsub.s32 1, %v704
  %v706 = vrot.slane %v43, %v705
  %v707 = vlaneseq
  %v708 = vshrl.u32 %v707, 7
  %v709 = vsub.s32 2, %v708
  %v710 = vrot.slane %v43, %v709
  %v711 = vlaneseq
  %v712 = vshrl.u32 %v711, 7
  %v713 = vsub.s32 3, %v712
  %v714 = vrot.slane %v43, %v713
  %v719 = vmul.f32 %v694, %v702
  %v720 = vmul.f32 %v690, %v706
  %v721 = vmul.f32 %v686, %v710
  %v722 = vmul.f32 %v682, %v714
  %v723 = vmul.f32 %v695, %v702
  %v724 = vmul.f32 %v691, %v706
  %v725 = vmul.f32 %v687, %v710
  %v726 = vmul.f32 %v683, %v714
  %v727 = vmul.f32 %v696, %v702
  %v728 = vmul.f32 %v692, %v706
  %v729 = vmul.f32 %v688, %v710
  %v730 = vmul.f32 %v684, %v714
  %v731 = vmul.f32 %v697, %v702
  %v732 = vmul.f32 %v693, %v706
  %v733 = vmul.f32 %v689, %v710
  %v734 = vmul.f32 %v685, %v714
  %v735 = vld [vmem:[%s2] sm:$0xff]
  %v736 = vld [vmem:[%s2 + $0x8] sm:$0xff]
  %v737 = vld [vmem:[%s2 + $0x10] sm:$0xff]
  %v738 = vld [vmem:[%s2 + $0x18] sm:$0xff]
  %740 = vset.pattern.permute.xlu0 0
  %741 = vperm.xlu0 %740, %v735
  %v742 = vpop.permute.xlu0 %741
  %745 = vset.pattern.permute.xlu0 0
  %746 = vperm.xlu0 %745, %v736
  %v747 = vpop.permute.xlu0 %746
  %750 = vset.pattern.permute.xlu0 0
  %751 = vperm.xlu0 %750, %v737
  %v752 = vpop.permute.xlu0 %751
  %755 = vset.pattern.permute.xlu0 0
  %756 = vperm.xlu0 %755, %v738
  %v757 = vpop.permute.xlu0 %756
  %v759 = vmul.f32 %v719, %v742
  %v760 = vmul.f32 %v720, %v742
  %v761 = vmul.f32 %v721, %v742
  %v762 = vmul.f32 %v722, %v742
  %v763 = vmul.f32 %v723, %v747
  %v764 = vmul.f32 %v724, %v747
  %v765 = vmul.f32 %v725, %v747
  %v766 = vmul.f32 %v726, %v747
  %v767 = vmul.f32 %v727, %v752
  %v768 = vmul.f32 %v728, %v752
  %v769 = vmul.f32 %v729, %v752
  %v770 = vmul.f32 %v730, %v752
  %v771 = vmul.f32 %v731, %v757
  %v772 = vmul.f32 %v732, %v757
  %v773 = vmul.f32 %v733, %v757
  %v774 = vmul.f32 %v734, %v757
  %v775 = vadd.f32 %v631, %v759
  %v776 = vadd.f32 %v632, %v760
  %v777 = vadd.f32 %v633, %v761
  %v778 = vadd.f32 %v634, %v762
  %v779 = vadd.f32 %v635, %v763
  %v780 = vadd.f32 %v636, %v764
  %v781 = vadd.f32 %v637, %v765
  %v782 = vadd.f32 %v638, %v766
  %v783 = vadd.f32 %v639, %v767
  %v784 = vadd.f32 %v640, %v768
  %v785 = vadd.f32 %v641, %v769
  %v786 = vadd.f32 %v642, %v770
  %v787 = vadd.f32 %v643, %v771
  %v788 = vadd.f32 %v644, %v772
  %v789 = vadd.f32 %v645, %v773
  %v790 = vadd.f32 %v646, %v774
  %791 = vrot.lane.b32.xlu0 %v451, 16
  %v792 = vpop.permute.xlu0 %791
  %793 = vrot.lane.b32.xlu0 %v455, 16
  %v794 = vpop.permute.xlu0 %793
  %795 = vrot.lane.b32.xlu0 %v461, 16
  %v796 = vpop.permute.xlu0 %795
  %797 = vrot.lane.b32.xlu0 %v465, 16
  %v798 = vpop.permute.xlu0 %797
  %799 = vrot.lane.b32.xlu0 %v453, 16
  %v800 = vpop.permute.xlu0 %799
  %801 = vrot.lane.b32.xlu0 %v457, 16
  %v802 = vpop.permute.xlu0 %801
  %803 = vrot.lane.b32.xlu0 %v463, 16
  %v804 = vpop.permute.xlu0 %803
  %805 = vrot.lane.b32.xlu0 %v467, 16
  %v806 = vpop.permute.xlu0 %805
  %807 = vrot.lane.b32.xlu0 %v544, 16
  %v808 = vpop.permute.xlu0 %807
  %809 = vrot.lane.b32.xlu0 %v548, 16
  %v810 = vpop.permute.xlu0 %809
  %811 = vrot.lane.b32.xlu0 %v554, 16
  %v812 = vpop.permute.xlu0 %811
  %813 = vrot.lane.b32.xlu0 %v558, 16
  %v814 = vpop.permute.xlu0 %813
  %815 = vrot.lane.b32.xlu0 %v546, 16
  %v816 = vpop.permute.xlu0 %815
  %817 = vrot.lane.b32.xlu0 %v550, 16
  %v818 = vpop.permute.xlu0 %817
  %819 = vrot.lane.b32.xlu0 %v556, 16
  %v820 = vpop.permute.xlu0 %819
  %821 = vrot.lane.b32.xlu0 %v560, 16
  %v822 = vpop.permute.xlu0 %821
  %vm823 = vcmp.lt.s32.totalorder %v680, 16
  %v824 = vsel %vm823, %v808, %v816
  %v825 = vsel %vm823, %v810, %v818
  %v826 = vsel %vm823, %v812, %v820
  %v827 = vsel %vm823, %v814, %v822
  %v828 = vsel %vm823, %v800, %v808
  %v829 = vsel %vm823, %v802, %v810
  %v830 = vsel %vm823, %v804, %v812
  %v831 = vsel %vm823, %v806, %v814
  %v832 = vsel %vm823, %v792, %v800
  %v833 = vsel %vm823, %v794, %v802
  %v834 = vsel %vm823, %v796, %v804
  %v835 = vsel %vm823, %v798, %v806
  %v836 = vsel %vm823, %v816, %v792
  %v837 = vsel %vm823, %v818, %v794
  %v838 = vsel %vm823, %v820, %v796
  %v839 = vsel %vm823, %v822, %v798
  %v841 = vlaneseq
  %v842 = vshrl.u32 %v841, 7
  %v843 = vsub.s32 0, %v842
  %v844 = vrot.slane %v45, %v843
  %v845 = vlaneseq
  %v846 = vshrl.u32 %v845, 7
  %v847 = vsub.s32 1, %v846
  %v848 = vrot.slane %v45, %v847
  %v849 = vlaneseq
  %v850 = vshrl.u32 %v849, 7
  %v851 = vsub.s32 2, %v850
  %v852 = vrot.slane %v45, %v851
  %v853 = vlaneseq
  %v854 = vshrl.u32 %v853, 7
  %v855 = vsub.s32 3, %v854
  %v856 = vrot.slane %v45, %v855
  %v861 = vmul.f32 %v836, %v844
  %v862 = vmul.f32 %v832, %v848
  %v863 = vmul.f32 %v828, %v852
  %v864 = vmul.f32 %v824, %v856
  %v865 = vmul.f32 %v837, %v844
  %v866 = vmul.f32 %v833, %v848
  %v867 = vmul.f32 %v829, %v852
  %v868 = vmul.f32 %v825, %v856
  %v869 = vmul.f32 %v838, %v844
  %v870 = vmul.f32 %v834, %v848
  %v871 = vmul.f32 %v830, %v852
  %v872 = vmul.f32 %v826, %v856
  %v873 = vmul.f32 %v839, %v844
  %v874 = vmul.f32 %v835, %v848
  %v875 = vmul.f32 %v831, %v852
  %v876 = vmul.f32 %v827, %v856
  %s877 = scalar_lea.vmem %s2, 224
  %v878 = vld [vmem:[%s877] sm:$0xff]
  %v879 = vld [vmem:[%s877 + $0x8] sm:$0xff]
  %v880 = vld [vmem:[%s877 + $0x10] sm:$0xff]
  %v881 = vld [vmem:[%s877 + $0x18] sm:$0xff]
  %883 = vset.pattern.permute.xlu0 0
  %884 = vperm.xlu0 %883, %v878
  %v885 = vpop.permute.xlu0 %884
  %888 = vset.pattern.permute.xlu0 0
  %889 = vperm.xlu0 %888, %v879
  %v890 = vpop.permute.xlu0 %889
  %893 = vset.pattern.permute.xlu0 0
  %894 = vperm.xlu0 %893, %v880
  %v895 = vpop.permute.xlu0 %894
  %898 = vset.pattern.permute.xlu0 0
  %899 = vperm.xlu0 %898, %v881
  %v900 = vpop.permute.xlu0 %899
  %v902 = vmul.f32 %v861, %v885
  %v903 = vmul.f32 %v862, %v885
  %v904 = vmul.f32 %v863, %v885
  %v905 = vmul.f32 %v864, %v885
  %v906 = vmul.f32 %v865, %v890
  %v907 = vmul.f32 %v866, %v890
  %v908 = vmul.f32 %v867, %v890
  %v909 = vmul.f32 %v868, %v890
  %v910 = vmul.f32 %v869, %v895
  %v911 = vmul.f32 %v870, %v895
  %v912 = vmul.f32 %v871, %v895
  %v913 = vmul.f32 %v872, %v895
  %v914 = vmul.f32 %v873, %v900
  %v915 = vmul.f32 %v874, %v900
  %v916 = vmul.f32 %v875, %v900
  %v917 = vmul.f32 %v876, %v900
  %v918 = vadd.f32 %v775, %v902
  %v919 = vadd.f32 %v776, %v903
  %v920 = vadd.f32 %v777, %v904
  %v921 = vadd.f32 %v778, %v905
  %v922 = vadd.f32 %v779, %v906
  %v923 = vadd.f32 %v780, %v907
  %v924 = vadd.f32 %v781, %v908
  %v925 = vadd.f32 %v782, %v909
  %v926 = vadd.f32 %v783, %v910
  %v927 = vadd.f32 %v784, %v911
  %v928 = vadd.f32 %v785, %v912
  %v929 = vadd.f32 %v786, %v913
  %v930 = vadd.f32 %v787, %v914
  %v931 = vadd.f32 %v788, %v915
  %v932 = vadd.f32 %v789, %v916
  %v933 = vadd.f32 %v790, %v917
  %934 = vrot.lane.b32.xlu0 %v451, 15
  %v935 = vpop.permute.xlu0 %934
  %936 = vrot.lane.b32.xlu0 %v455, 15
  %v937 = vpop.permute.xlu0 %936
  %938 = vrot.lane.b32.xlu0 %v461, 15
  %v939 = vpop.permute.xlu0 %938
  %940 = vrot.lane.b32.xlu0 %v465, 15
  %v941 = vpop.permute.xlu0 %940
  %942 = vrot.lane.b32.xlu0 %v453, 15
  %v943 = vpop.permute.xlu0 %942
  %944 = vrot.lane.b32.xlu0 %v457, 15
  %v945 = vpop.permute.xlu0 %944
  %946 = vrot.lane.b32.xlu0 %v463, 15
  %v947 = vpop.permute.xlu0 %946
  %948 = vrot.lane.b32.xlu0 %v467, 15
  %v949 = vpop.permute.xlu0 %948
  %950 = vrot.lane.b32.xlu0 %v544, 15
  %v951 = vpop.permute.xlu0 %950
  %952 = vrot.lane.b32.xlu0 %v548, 15
  %v953 = vpop.permute.xlu0 %952
  %954 = vrot.lane.b32.xlu0 %v554, 15
  %v955 = vpop.permute.xlu0 %954
  %956 = vrot.lane.b32.xlu0 %v558, 15
  %v957 = vpop.permute.xlu0 %956
  %958 = vrot.lane.b32.xlu0 %v546, 15
  %v959 = vpop.permute.xlu0 %958
  %960 = vrot.lane.b32.xlu0 %v550, 15
  %v961 = vpop.permute.xlu0 %960
  %962 = vrot.lane.b32.xlu0 %v556, 15
  %v963 = vpop.permute.xlu0 %962
  %964 = vrot.lane.b32.xlu0 %v560, 15
  %v965 = vpop.permute.xlu0 %964
  %vm966 = vcmp.lt.s32.totalorder %v680, 15
  %v967 = vsel %vm966, %v951, %v959
  %v968 = vsel %vm966, %v953, %v961
  %v969 = vsel %vm966, %v955, %v963
  %v970 = vsel %vm966, %v957, %v965
  %v971 = vsel %vm966, %v943, %v951
  %v972 = vsel %vm966, %v945, %v953
  %v973 = vsel %vm966, %v947, %v955
  %v974 = vsel %vm966, %v949, %v957
  %v975 = vsel %vm966, %v935, %v943
  %v976 = vsel %vm966, %v937, %v945
  %v977 = vsel %vm966, %v939, %v947
  %v978 = vsel %vm966, %v941, %v949
  %v979 = vsel %vm966, %v959, %v935
  %v980 = vsel %vm966, %v961, %v937
  %v981 = vsel %vm966, %v963, %v939
  %v982 = vsel %vm966, %v965, %v941
  %v984 = vlaneseq
  %v985 = vshrl.u32 %v984, 7
  %v986 = vsub.s32 0, %v985
  %v987 = vrot.slane %v47, %v986
  %v988 = vlaneseq
  %v989 = vshrl.u32 %v988, 7
  %v990 = vsub.s32 1, %v989
  %v991 = vrot.slane %v47, %v990
  %v992 = vlaneseq
  %v993 = vshrl.u32 %v992, 7
  %v994 = vsub.s32 2, %v993
  %v995 = vrot.slane %v47, %v994
  %v996 = vlaneseq
  %v997 = vshrl.u32 %v996, 7
  %v998 = vsub.s32 3, %v997
  %v999 = vrot.slane %v47, %v998
  %v1004 = vmul.f32 %v979, %v987
  %v1005 = vmul.f32 %v975, %v991
  %v1006 = vmul.f32 %v971, %v995
  %v1007 = vmul.f32 %v967, %v999
  %v1008 = vmul.f32 %v980, %v987
  %v1009 = vmul.f32 %v976, %v991
  %v1010 = vmul.f32 %v972, %v995
  %v1011 = vmul.f32 %v968, %v999
  %v1012 = vmul.f32 %v981, %v987
  %v1013 = vmul.f32 %v977, %v991
  %v1014 = vmul.f32 %v973, %v995
  %v1015 = vmul.f32 %v969, %v999
  %v1016 = vmul.f32 %v982, %v987
  %v1017 = vmul.f32 %v978, %v991
  %v1018 = vmul.f32 %v974, %v995
  %v1019 = vmul.f32 %v970, %v999
  %s1020 = scalar_lea.vmem %s2, 448
  %v1021 = vld [vmem:[%s1020] sm:$0xff]
  %v1022 = vld [vmem:[%s1020 + $0x8] sm:$0xff]
  %v1023 = vld [vmem:[%s1020 + $0x10] sm:$0xff]
  %v1024 = vld [vmem:[%s1020 + $0x18] sm:$0xff]
  %1026 = vset.pattern.permute.xlu0 0
  %1027 = vperm.xlu0 %1026, %v1021
  %v1028 = vpop.permute.xlu0 %1027
  %1031 = vset.pattern.permute.xlu0 0
  %1032 = vperm.xlu0 %1031, %v1022
  %v1033 = vpop.permute.xlu0 %1032
  %1036 = vset.pattern.permute.xlu0 0
  %1037 = vperm.xlu0 %1036, %v1023
  %v1038 = vpop.permute.xlu0 %1037
  %1041 = vset.pattern.permute.xlu0 0
  %1042 = vperm.xlu0 %1041, %v1024
  %v1043 = vpop.permute.xlu0 %1042
  %v1045 = vmul.f32 %v1004, %v1028
  %v1046 = vmul.f32 %v1005, %v1028
  %v1047 = vmul.f32 %v1006, %v1028
  %v1048 = vmul.f32 %v1007, %v1028
  %v1049 = vmul.f32 %v1008, %v1033
  %v1050 = vmul.f32 %v1009, %v1033
  %v1051 = vmul.f32 %v1010, %v1033
  %v1052 = vmul.f32 %v1011, %v1033
  %v1053 = vmul.f32 %v1012, %v1038
  %v1054 = vmul.f32 %v1013, %v1038
  %v1055 = vmul.f32 %v1014, %v1038
  %v1056 = vmul.f32 %v1015, %v1038
  %v1057 = vmul.f32 %v1016, %v1043
  %v1058 = vmul.f32 %v1017, %v1043
  %v1059 = vmul.f32 %v1018, %v1043
  %v1060 = vmul.f32 %v1019, %v1043
  %v1061 = vadd.f32 %v918, %v1045
  %v1062 = vadd.f32 %v919, %v1046
  %v1063 = vadd.f32 %v920, %v1047
  %v1064 = vadd.f32 %v921, %v1048
  %v1065 = vadd.f32 %v922, %v1049
  %v1066 = vadd.f32 %v923, %v1050
  %v1067 = vadd.f32 %v924, %v1051
  %v1068 = vadd.f32 %v925, %v1052
  %v1069 = vadd.f32 %v926, %v1053
  %v1070 = vadd.f32 %v927, %v1054
  %v1071 = vadd.f32 %v928, %v1055
  %v1072 = vadd.f32 %v929, %v1056
  %v1073 = vadd.f32 %v930, %v1057
  %v1074 = vadd.f32 %v931, %v1058
  %v1075 = vadd.f32 %v932, %v1059
  %v1076 = vadd.f32 %v933, %v1060
  %1077 = vrot.lane.b32.xlu0 %v451, 1
  %v1078 = vpop.permute.xlu0 %1077
  %1079 = vrot.lane.b32.xlu0 %v455, 1
  %v1080 = vpop.permute.xlu0 %1079
  %1081 = vrot.lane.b32.xlu0 %v461, 1
  %v1082 = vpop.permute.xlu0 %1081
  %1083 = vrot.lane.b32.xlu0 %v465, 1
  %v1084 = vpop.permute.xlu0 %1083
  %1085 = vrot.lane.b32.xlu0 %v453, 1
  %v1086 = vpop.permute.xlu0 %1085
  %1087 = vrot.lane.b32.xlu0 %v457, 1
  %v1088 = vpop.permute.xlu0 %1087
  %1089 = vrot.lane.b32.xlu0 %v463, 1
  %v1090 = vpop.permute.xlu0 %1089
  %1091 = vrot.lane.b32.xlu0 %v467, 1
  %v1092 = vpop.permute.xlu0 %1091
  %1093 = vrot.lane.b32.xlu0 %v544, 1
  %v1094 = vpop.permute.xlu0 %1093
  %1095 = vrot.lane.b32.xlu0 %v548, 1
  %v1096 = vpop.permute.xlu0 %1095
  %1097 = vrot.lane.b32.xlu0 %v554, 1
  %v1098 = vpop.permute.xlu0 %1097
  %1099 = vrot.lane.b32.xlu0 %v558, 1
  %v1100 = vpop.permute.xlu0 %1099
  %1101 = vrot.lane.b32.xlu0 %v546, 1
  %v1102 = vpop.permute.xlu0 %1101
  %1103 = vrot.lane.b32.xlu0 %v550, 1
  %v1104 = vpop.permute.xlu0 %1103
  %1105 = vrot.lane.b32.xlu0 %v556, 1
  %v1106 = vpop.permute.xlu0 %1105
  %1107 = vrot.lane.b32.xlu0 %v560, 1
  %v1108 = vpop.permute.xlu0 %1107
  %vm1109 = vcmp.lt.s32.totalorder %v680, 1
  %v1110 = vsel %vm1109, %v1094, %v1102
  %v1111 = vsel %vm1109, %v1096, %v1104
  %v1112 = vsel %vm1109, %v1098, %v1106
  %v1113 = vsel %vm1109, %v1100, %v1108
  %v1114 = vsel %vm1109, %v1086, %v1094
  %v1115 = vsel %vm1109, %v1088, %v1096
  %v1116 = vsel %vm1109, %v1090, %v1098
  %v1117 = vsel %vm1109, %v1092, %v1100
  %v1118 = vsel %vm1109, %v1078, %v1086
  %v1119 = vsel %vm1109, %v1080, %v1088
  %v1120 = vsel %vm1109, %v1082, %v1090
  %v1121 = vsel %vm1109, %v1084, %v1092
  %v1122 = vsel %vm1109, %v1102, %v1078
  %v1123 = vsel %vm1109, %v1104, %v1080
  %v1124 = vsel %vm1109, %v1106, %v1082
  %v1125 = vsel %vm1109, %v1108, %v1084
  %v1127 = vlaneseq
  %v1128 = vshrl.u32 %v1127, 7
  %v1129 = vsub.s32 0, %v1128
  %v1130 = vrot.slane %v49, %v1129
  %v1131 = vlaneseq
  %v1132 = vshrl.u32 %v1131, 7
  %v1133 = vsub.s32 1, %v1132
  %v1134 = vrot.slane %v49, %v1133
  %v1135 = vlaneseq
  %v1136 = vshrl.u32 %v1135, 7
  %v1137 = vsub.s32 2, %v1136
  %v1138 = vrot.slane %v49, %v1137
  %v1139 = vlaneseq
  %v1140 = vshrl.u32 %v1139, 7
  %v1141 = vsub.s32 3, %v1140
  %v1142 = vrot.slane %v49, %v1141
  %v1147 = vmul.f32 %v1122, %v1130
  %v1148 = vmul.f32 %v1118, %v1134
  %v1149 = vmul.f32 %v1114, %v1138
  %v1150 = vmul.f32 %v1110, %v1142
  %v1151 = vmul.f32 %v1123, %v1130
  %v1152 = vmul.f32 %v1119, %v1134
  %v1153 = vmul.f32 %v1115, %v1138
  %v1154 = vmul.f32 %v1111, %v1142
  %v1155 = vmul.f32 %v1124, %v1130
  %v1156 = vmul.f32 %v1120, %v1134
  %v1157 = vmul.f32 %v1116, %v1138
  %v1158 = vmul.f32 %v1112, %v1142
  %v1159 = vmul.f32 %v1125, %v1130
  %v1160 = vmul.f32 %v1121, %v1134
  %v1161 = vmul.f32 %v1117, %v1138
  %v1162 = vmul.f32 %v1113, %v1142
  %s1163 = scalar_lea.vmem %s2, 672
  %v1164 = vld [vmem:[%s1163] sm:$0xff]
  %v1165 = vld [vmem:[%s1163 + $0x8] sm:$0xff]
  %v1166 = vld [vmem:[%s1163 + $0x10] sm:$0xff]
  %v1167 = vld [vmem:[%s1163 + $0x18] sm:$0xff]
  %1169 = vset.pattern.permute.xlu0 0
  %1170 = vperm.xlu0 %1169, %v1164
  %v1171 = vpop.permute.xlu0 %1170
  %1174 = vset.pattern.permute.xlu0 0
  %1175 = vperm.xlu0 %1174, %v1165
  %v1176 = vpop.permute.xlu0 %1175
  %1179 = vset.pattern.permute.xlu0 0
  %1180 = vperm.xlu0 %1179, %v1166
  %v1181 = vpop.permute.xlu0 %1180
  %1184 = vset.pattern.permute.xlu0 0
  %1185 = vperm.xlu0 %1184, %v1167
  %v1186 = vpop.permute.xlu0 %1185
  %v1188 = vmul.f32 %v1147, %v1171
  %v1189 = vmul.f32 %v1148, %v1171
  %v1190 = vmul.f32 %v1149, %v1171
  %v1191 = vmul.f32 %v1150, %v1171
  %v1192 = vmul.f32 %v1151, %v1176
  %v1193 = vmul.f32 %v1152, %v1176
  %v1194 = vmul.f32 %v1153, %v1176
  %v1195 = vmul.f32 %v1154, %v1176
  %v1196 = vmul.f32 %v1155, %v1181
  %v1197 = vmul.f32 %v1156, %v1181
  %v1198 = vmul.f32 %v1157, %v1181
  %v1199 = vmul.f32 %v1158, %v1181
  %v1200 = vmul.f32 %v1159, %v1186
  %v1201 = vmul.f32 %v1160, %v1186
  %v1202 = vmul.f32 %v1161, %v1186
  %v1203 = vmul.f32 %v1162, %v1186
  %v1204 = vadd.f32 %v1061, %v1188
  %v1205 = vadd.f32 %v1062, %v1189
  %v1206 = vadd.f32 %v1063, %v1190
  %v1207 = vadd.f32 %v1064, %v1191
  %v1208 = vadd.f32 %v1065, %v1192
  %v1209 = vadd.f32 %v1066, %v1193
  %v1210 = vadd.f32 %v1067, %v1194
  %v1211 = vadd.f32 %v1068, %v1195
  %v1212 = vadd.f32 %v1069, %v1196
  %v1213 = vadd.f32 %v1070, %v1197
  %v1214 = vadd.f32 %v1071, %v1198
  %v1215 = vadd.f32 %v1072, %v1199
  %v1216 = vadd.f32 %v1073, %v1200
  %v1217 = vadd.f32 %v1074, %v1201
  %v1218 = vadd.f32 %v1075, %v1202
  %v1219 = vadd.f32 %v1076, %v1203
  %1220 = vrot.lane.b32.xlu0 %v451, 127
  %v1221 = vpop.permute.xlu0 %1220
  %1222 = vrot.lane.b32.xlu0 %v455, 127
  %v1223 = vpop.permute.xlu0 %1222
  %1224 = vrot.lane.b32.xlu0 %v461, 127
  %v1225 = vpop.permute.xlu0 %1224
  %1226 = vrot.lane.b32.xlu0 %v465, 127
  %v1227 = vpop.permute.xlu0 %1226
  %1228 = vrot.lane.b32.xlu0 %v453, 127
  %v1229 = vpop.permute.xlu0 %1228
  %1230 = vrot.lane.b32.xlu0 %v457, 127
  %v1231 = vpop.permute.xlu0 %1230
  %1232 = vrot.lane.b32.xlu0 %v463, 127
  %v1233 = vpop.permute.xlu0 %1232
  %1234 = vrot.lane.b32.xlu0 %v467, 127
  %v1235 = vpop.permute.xlu0 %1234
  %1236 = vrot.lane.b32.xlu0 %v544, 127
  %v1237 = vpop.permute.xlu0 %1236
  %1238 = vrot.lane.b32.xlu0 %v548, 127
  %v1239 = vpop.permute.xlu0 %1238
  %1240 = vrot.lane.b32.xlu0 %v554, 127
  %v1241 = vpop.permute.xlu0 %1240
  %1242 = vrot.lane.b32.xlu0 %v558, 127
  %v1243 = vpop.permute.xlu0 %1242
  %1244 = vrot.lane.b32.xlu0 %v546, 127
  %v1245 = vpop.permute.xlu0 %1244
  %1246 = vrot.lane.b32.xlu0 %v550, 127
  %v1247 = vpop.permute.xlu0 %1246
  %1248 = vrot.lane.b32.xlu0 %v556, 127
  %v1249 = vpop.permute.xlu0 %1248
  %1250 = vrot.lane.b32.xlu0 %v560, 127
  %v1251 = vpop.permute.xlu0 %1250
  %vm1252 = vcmp.lt.s32.totalorder %v680, 127
  %v1253 = vsel %vm1252, %v1237, %v1245
  %v1254 = vsel %vm1252, %v1239, %v1247
  %v1255 = vsel %vm1252, %v1241, %v1249
  %v1256 = vsel %vm1252, %v1243, %v1251
  %v1257 = vsel %vm1252, %v1229, %v1237
  %v1258 = vsel %vm1252, %v1231, %v1239
  %v1259 = vsel %vm1252, %v1233, %v1241
  %v1260 = vsel %vm1252, %v1235, %v1243
  %v1261 = vsel %vm1252, %v1221, %v1229
  %v1262 = vsel %vm1252, %v1223, %v1231
  %v1263 = vsel %vm1252, %v1225, %v1233
  %v1264 = vsel %vm1252, %v1227, %v1235
  %v1265 = vsel %vm1252, %v1245, %v1221
  %v1266 = vsel %vm1252, %v1247, %v1223
  %v1267 = vsel %vm1252, %v1249, %v1225
  %v1268 = vsel %vm1252, %v1251, %v1227
  %v1270 = vlaneseq
  %v1271 = vshrl.u32 %v1270, 7
  %v1272 = vsub.s32 0, %v1271
  %v1273 = vrot.slane %v51, %v1272
  %v1274 = vlaneseq
  %v1275 = vshrl.u32 %v1274, 7
  %v1276 = vsub.s32 1, %v1275
  %v1277 = vrot.slane %v51, %v1276
  %v1278 = vlaneseq
  %v1279 = vshrl.u32 %v1278, 7
  %v1280 = vsub.s32 2, %v1279
  %v1281 = vrot.slane %v51, %v1280
  %v1282 = vlaneseq
  %v1283 = vshrl.u32 %v1282, 7
  %v1284 = vsub.s32 3, %v1283
  %v1285 = vrot.slane %v51, %v1284
  %v1290 = vmul.f32 %v1261, %v1273
  %v1291 = vmul.f32 %v1257, %v1277
  %v1292 = vmul.f32 %v1253, %v1281
  %v1293 = vmul.f32 %v1265, %v1285
  %v1294 = vmul.f32 %v1262, %v1273
  %v1295 = vmul.f32 %v1258, %v1277
  %v1296 = vmul.f32 %v1254, %v1281
  %v1297 = vmul.f32 %v1266, %v1285
  %v1298 = vmul.f32 %v1263, %v1273
  %v1299 = vmul.f32 %v1259, %v1277
  %v1300 = vmul.f32 %v1255, %v1281
  %v1301 = vmul.f32 %v1267, %v1285
  %v1302 = vmul.f32 %v1264, %v1273
  %v1303 = vmul.f32 %v1260, %v1277
  %v1304 = vmul.f32 %v1256, %v1281
  %v1305 = vmul.f32 %v1268, %v1285
  %s1306 = scalar_lea.vmem %s2, 1120
  %v1307 = vld [vmem:[%s1306] sm:$0xff]
  %v1308 = vld [vmem:[%s1306 + $0x8] sm:$0xff]
  %v1309 = vld [vmem:[%s1306 + $0x10] sm:$0xff]
  %v1310 = vld [vmem:[%s1306 + $0x18] sm:$0xff]
  %1312 = vset.pattern.permute.xlu0 0
  %1313 = vperm.xlu0 %1312, %v1307
  %v1314 = vpop.permute.xlu0 %1313
  %1317 = vset.pattern.permute.xlu0 0
  %1318 = vperm.xlu0 %1317, %v1308
  %v1319 = vpop.permute.xlu0 %1318
  %1322 = vset.pattern.permute.xlu0 0
  %1323 = vperm.xlu0 %1322, %v1309
  %v1324 = vpop.permute.xlu0 %1323
  %1327 = vset.pattern.permute.xlu0 0
  %1328 = vperm.xlu0 %1327, %v1310
  %v1329 = vpop.permute.xlu0 %1328
  %v1331 = vmul.f32 %v1290, %v1314
  %v1332 = vmul.f32 %v1291, %v1314
  %v1333 = vmul.f32 %v1292, %v1314
  %v1334 = vmul.f32 %v1293, %v1314
  %v1335 = vmul.f32 %v1294, %v1319
  %v1336 = vmul.f32 %v1295, %v1319
  %v1337 = vmul.f32 %v1296, %v1319
  %v1338 = vmul.f32 %v1297, %v1319
  %v1339 = vmul.f32 %v1298, %v1324
  %v1340 = vmul.f32 %v1299, %v1324
  %v1341 = vmul.f32 %v1300, %v1324
  %v1342 = vmul.f32 %v1301, %v1324
  %v1343 = vmul.f32 %v1302, %v1329
  %v1344 = vmul.f32 %v1303, %v1329
  %v1345 = vmul.f32 %v1304, %v1329
  %v1346 = vmul.f32 %v1305, %v1329
  %v1347 = vadd.f32 %v1204, %v1331
  %v1348 = vadd.f32 %v1205, %v1332
  %v1349 = vadd.f32 %v1206, %v1333
  %v1350 = vadd.f32 %v1207, %v1334
  %v1351 = vadd.f32 %v1208, %v1335
  %v1352 = vadd.f32 %v1209, %v1336
  %v1353 = vadd.f32 %v1210, %v1337
  %v1354 = vadd.f32 %v1211, %v1338
  %v1355 = vadd.f32 %v1212, %v1339
  %v1356 = vadd.f32 %v1213, %v1340
  %v1357 = vadd.f32 %v1214, %v1341
  %v1358 = vadd.f32 %v1215, %v1342
  %v1359 = vadd.f32 %v1216, %v1343
  %v1360 = vadd.f32 %v1217, %v1344
  %v1361 = vadd.f32 %v1218, %v1345
  %v1362 = vadd.f32 %v1219, %v1346
  %1363 = vrot.lane.b32.xlu0 %v451, 113
  %v1364 = vpop.permute.xlu0 %1363
  %1365 = vrot.lane.b32.xlu0 %v455, 113
  %v1366 = vpop.permute.xlu0 %1365
  %1367 = vrot.lane.b32.xlu0 %v461, 113
  %v1368 = vpop.permute.xlu0 %1367
  %1369 = vrot.lane.b32.xlu0 %v465, 113
  %v1370 = vpop.permute.xlu0 %1369
  %1371 = vrot.lane.b32.xlu0 %v453, 113
  %v1372 = vpop.permute.xlu0 %1371
  %1373 = vrot.lane.b32.xlu0 %v457, 113
  %v1374 = vpop.permute.xlu0 %1373
  %1375 = vrot.lane.b32.xlu0 %v463, 113
  %v1376 = vpop.permute.xlu0 %1375
  %1377 = vrot.lane.b32.xlu0 %v467, 113
  %v1378 = vpop.permute.xlu0 %1377
  %1379 = vrot.lane.b32.xlu0 %v544, 113
  %v1380 = vpop.permute.xlu0 %1379
  %1381 = vrot.lane.b32.xlu0 %v548, 113
  %v1382 = vpop.permute.xlu0 %1381
  %1383 = vrot.lane.b32.xlu0 %v554, 113
  %v1384 = vpop.permute.xlu0 %1383
  %1385 = vrot.lane.b32.xlu0 %v558, 113
  %v1386 = vpop.permute.xlu0 %1385
  %1387 = vrot.lane.b32.xlu0 %v546, 113
  %v1388 = vpop.permute.xlu0 %1387
  %1389 = vrot.lane.b32.xlu0 %v550, 113
  %v1390 = vpop.permute.xlu0 %1389
  %1391 = vrot.lane.b32.xlu0 %v556, 113
  %v1392 = vpop.permute.xlu0 %1391
  %1393 = vrot.lane.b32.xlu0 %v560, 113
  %v1394 = vpop.permute.xlu0 %1393
  %vm1395 = vcmp.lt.s32.totalorder %v680, 113
  %v1396 = vsel %vm1395, %v1380, %v1388
  %v1397 = vsel %vm1395, %v1382, %v1390
  %v1398 = vsel %vm1395, %v1384, %v1392
  %v1399 = vsel %vm1395, %v1386, %v1394
  %v1400 = vsel %vm1395, %v1372, %v1380
  %v1401 = vsel %vm1395, %v1374, %v1382
  %v1402 = vsel %vm1395, %v1376, %v1384
  %v1403 = vsel %vm1395, %v1378, %v1386
  %v1404 = vsel %vm1395, %v1364, %v1372
  %v1405 = vsel %vm1395, %v1366, %v1374
  %v1406 = vsel %vm1395, %v1368, %v1376
  %v1407 = vsel %vm1395, %v1370, %v1378
  %v1408 = vsel %vm1395, %v1388, %v1364
  %v1409 = vsel %vm1395, %v1390, %v1366
  %v1410 = vsel %vm1395, %v1392, %v1368
  %v1411 = vsel %vm1395, %v1394, %v1370
  %v1413 = vlaneseq
  %v1414 = vshrl.u32 %v1413, 7
  %v1415 = vsub.s32 0, %v1414
  %v1416 = vrot.slane %v53, %v1415
  %v1417 = vlaneseq
  %v1418 = vshrl.u32 %v1417, 7
  %v1419 = vsub.s32 1, %v1418
  %v1420 = vrot.slane %v53, %v1419
  %v1421 = vlaneseq
  %v1422 = vshrl.u32 %v1421, 7
  %v1423 = vsub.s32 2, %v1422
  %v1424 = vrot.slane %v53, %v1423
  %v1425 = vlaneseq
  %v1426 = vshrl.u32 %v1425, 7
  %v1427 = vsub.s32 3, %v1426
  %v1428 = vrot.slane %v53, %v1427
  %v1433 = vmul.f32 %v1404, %v1416
  %v1434 = vmul.f32 %v1400, %v1420
  %v1435 = vmul.f32 %v1396, %v1424
  %v1436 = vmul.f32 %v1408, %v1428
  %v1437 = vmul.f32 %v1405, %v1416
  %v1438 = vmul.f32 %v1401, %v1420
  %v1439 = vmul.f32 %v1397, %v1424
  %v1440 = vmul.f32 %v1409, %v1428
  %v1441 = vmul.f32 %v1406, %v1416
  %v1442 = vmul.f32 %v1402, %v1420
  %v1443 = vmul.f32 %v1398, %v1424
  %v1444 = vmul.f32 %v1410, %v1428
  %v1445 = vmul.f32 %v1407, %v1416
  %v1446 = vmul.f32 %v1403, %v1420
  %v1447 = vmul.f32 %v1399, %v1424
  %v1448 = vmul.f32 %v1411, %v1428
  %s1449 = scalar_lea.vmem %s2, 1344
  %v1450 = vld [vmem:[%s1449] sm:$0xff]
  %v1451 = vld [vmem:[%s1449 + $0x8] sm:$0xff]
  %v1452 = vld [vmem:[%s1449 + $0x10] sm:$0xff]
  %v1453 = vld [vmem:[%s1449 + $0x18] sm:$0xff]
  %1455 = vset.pattern.permute.xlu0 0
  %1456 = vperm.xlu0 %1455, %v1450
  %v1457 = vpop.permute.xlu0 %1456
  %1460 = vset.pattern.permute.xlu0 0
  %1461 = vperm.xlu0 %1460, %v1451
  %v1462 = vpop.permute.xlu0 %1461
  %1465 = vset.pattern.permute.xlu0 0
  %1466 = vperm.xlu0 %1465, %v1452
  %v1467 = vpop.permute.xlu0 %1466
  %1470 = vset.pattern.permute.xlu0 0
  %1471 = vperm.xlu0 %1470, %v1453
  %v1472 = vpop.permute.xlu0 %1471
  %v1474 = vmul.f32 %v1433, %v1457
  %v1475 = vmul.f32 %v1434, %v1457
  %v1476 = vmul.f32 %v1435, %v1457
  %v1477 = vmul.f32 %v1436, %v1457
  %v1478 = vmul.f32 %v1437, %v1462
  %v1479 = vmul.f32 %v1438, %v1462
  %v1480 = vmul.f32 %v1439, %v1462
  %v1481 = vmul.f32 %v1440, %v1462
  %v1482 = vmul.f32 %v1441, %v1467
  %v1483 = vmul.f32 %v1442, %v1467
  %v1484 = vmul.f32 %v1443, %v1467
  %v1485 = vmul.f32 %v1444, %v1467
  %v1486 = vmul.f32 %v1445, %v1472
  %v1487 = vmul.f32 %v1446, %v1472
  %v1488 = vmul.f32 %v1447, %v1472
  %v1489 = vmul.f32 %v1448, %v1472
  %v1490 = vadd.f32 %v1347, %v1474
  %v1491 = vadd.f32 %v1348, %v1475
  %v1492 = vadd.f32 %v1349, %v1476
  %v1493 = vadd.f32 %v1350, %v1477
  %v1494 = vadd.f32 %v1351, %v1478
  %v1495 = vadd.f32 %v1352, %v1479
  %v1496 = vadd.f32 %v1353, %v1480
  %v1497 = vadd.f32 %v1354, %v1481
  %v1498 = vadd.f32 %v1355, %v1482
  %v1499 = vadd.f32 %v1356, %v1483
  %v1500 = vadd.f32 %v1357, %v1484
  %v1501 = vadd.f32 %v1358, %v1485
  %v1502 = vadd.f32 %v1359, %v1486
  %v1503 = vadd.f32 %v1360, %v1487
  %v1504 = vadd.f32 %v1361, %v1488
  %v1505 = vadd.f32 %v1362, %v1489
  %1506 = vrot.lane.b32.xlu0 %v451, 112
  %v1507 = vpop.permute.xlu0 %1506
  %1508 = vrot.lane.b32.xlu0 %v455, 112
  %v1509 = vpop.permute.xlu0 %1508
  %1510 = vrot.lane.b32.xlu0 %v461, 112
  %v1511 = vpop.permute.xlu0 %1510
  %1512 = vrot.lane.b32.xlu0 %v465, 112
  %v1513 = vpop.permute.xlu0 %1512
  %1514 = vrot.lane.b32.xlu0 %v453, 112
  %v1515 = vpop.permute.xlu0 %1514
  %1516 = vrot.lane.b32.xlu0 %v457, 112
  %v1517 = vpop.permute.xlu0 %1516
  %1518 = vrot.lane.b32.xlu0 %v463, 112
  %v1519 = vpop.permute.xlu0 %1518
  %1520 = vrot.lane.b32.xlu0 %v467, 112
  %v1521 = vpop.permute.xlu0 %1520
  %1522 = vrot.lane.b32.xlu0 %v544, 112
  %v1523 = vpop.permute.xlu0 %1522
  %1524 = vrot.lane.b32.xlu0 %v548, 112
  %v1525 = vpop.permute.xlu0 %1524
  %1526 = vrot.lane.b32.xlu0 %v554, 112
  %v1527 = vpop.permute.xlu0 %1526
  %1528 = vrot.lane.b32.xlu0 %v558, 112
  %v1529 = vpop.permute.xlu0 %1528
  %1530 = vrot.lane.b32.xlu0 %v546, 112
  %v1531 = vpop.permute.xlu0 %1530
  %1532 = vrot.lane.b32.xlu0 %v550, 112
  %v1533 = vpop.permute.xlu0 %1532
  %1534 = vrot.lane.b32.xlu0 %v556, 112
  %v1535 = vpop.permute.xlu0 %1534
  %1536 = vrot.lane.b32.xlu0 %v560, 112
  %v1537 = vpop.permute.xlu0 %1536
  %vm1538 = vcmp.lt.s32.totalorder %v680, 112
  %v1539 = vsel %vm1538, %v1523, %v1531
  %v1540 = vsel %vm1538, %v1525, %v1533
  %v1541 = vsel %vm1538, %v1527, %v1535
  %v1542 = vsel %vm1538, %v1529, %v1537
  %v1543 = vsel %vm1538, %v1515, %v1523
  %v1544 = vsel %vm1538, %v1517, %v1525
  %v1545 = vsel %vm1538, %v1519, %v1527
  %v1546 = vsel %vm1538, %v1521, %v1529
  %v1547 = vsel %vm1538, %v1507, %v1515
  %v1548 = vsel %vm1538, %v1509, %v1517
  %v1549 = vsel %vm1538, %v1511, %v1519
  %v1550 = vsel %vm1538, %v1513, %v1521
  %v1551 = vsel %vm1538, %v1531, %v1507
  %v1552 = vsel %vm1538, %v1533, %v1509
  %v1553 = vsel %vm1538, %v1535, %v1511
  %v1554 = vsel %vm1538, %v1537, %v1513
  %v1556 = vlaneseq
  %v1557 = vshrl.u32 %v1556, 7
  %v1558 = vsub.s32 0, %v1557
  %v1559 = vrot.slane %v55, %v1558
  %v1560 = vlaneseq
  %v1561 = vshrl.u32 %v1560, 7
  %v1562 = vsub.s32 1, %v1561
  %v1563 = vrot.slane %v55, %v1562
  %v1564 = vlaneseq
  %v1565 = vshrl.u32 %v1564, 7
  %v1566 = vsub.s32 2, %v1565
  %v1567 = vrot.slane %v55, %v1566
  %v1568 = vlaneseq
  %v1569 = vshrl.u32 %v1568, 7
  %v1570 = vsub.s32 3, %v1569
  %v1571 = vrot.slane %v55, %v1570
  %v1576 = vmul.f32 %v1547, %v1559
  %v1577 = vmul.f32 %v1543, %v1563
  %v1578 = vmul.f32 %v1539, %v1567
  %v1579 = vmul.f32 %v1551, %v1571
  %v1580 = vmul.f32 %v1548, %v1559
  %v1581 = vmul.f32 %v1544, %v1563
  %v1582 = vmul.f32 %v1540, %v1567
  %v1583 = vmul.f32 %v1552, %v1571
  %v1584 = vmul.f32 %v1549, %v1559
  %v1585 = vmul.f32 %v1545, %v1563
  %v1586 = vmul.f32 %v1541, %v1567
  %v1587 = vmul.f32 %v1553, %v1571
  %v1588 = vmul.f32 %v1550, %v1559
  %v1589 = vmul.f32 %v1546, %v1563
  %v1590 = vmul.f32 %v1542, %v1567
  %v1591 = vmul.f32 %v1554, %v1571
  %s1592 = scalar_lea.vmem %s2, 1568
  %v1593 = vld [vmem:[%s1592] sm:$0xff]
  %v1594 = vld [vmem:[%s1592 + $0x8] sm:$0xff]
  %v1595 = vld [vmem:[%s1592 + $0x10] sm:$0xff]
  %v1596 = vld [vmem:[%s1592 + $0x18] sm:$0xff]
  %1598 = vset.pattern.permute.xlu0 0
  %1599 = vperm.xlu0 %1598, %v1593
  %v1600 = vpop.permute.xlu0 %1599
  %1603 = vset.pattern.permute.xlu0 0
  %1604 = vperm.xlu0 %1603, %v1594
  %v1605 = vpop.permute.xlu0 %1604
  %1608 = vset.pattern.permute.xlu0 0
  %1609 = vperm.xlu0 %1608, %v1595
  %v1610 = vpop.permute.xlu0 %1609
  %1613 = vset.pattern.permute.xlu0 0
  %1614 = vperm.xlu0 %1613, %v1596
  %v1615 = vpop.permute.xlu0 %1614
  %v1617 = vmul.f32 %v1576, %v1600
  %v1618 = vmul.f32 %v1577, %v1600
  %v1619 = vmul.f32 %v1578, %v1600
  %v1620 = vmul.f32 %v1579, %v1600
  %v1621 = vmul.f32 %v1580, %v1605
  %v1622 = vmul.f32 %v1581, %v1605
  %v1623 = vmul.f32 %v1582, %v1605
  %v1624 = vmul.f32 %v1583, %v1605
  %v1625 = vmul.f32 %v1584, %v1610
  %v1626 = vmul.f32 %v1585, %v1610
  %v1627 = vmul.f32 %v1586, %v1610
  %v1628 = vmul.f32 %v1587, %v1610
  %v1629 = vmul.f32 %v1588, %v1615
  %v1630 = vmul.f32 %v1589, %v1615
  %v1631 = vmul.f32 %v1590, %v1615
  %v1632 = vmul.f32 %v1591, %v1615
  %v1633 = vadd.f32 %v1490, %v1617
  %v1634 = vadd.f32 %v1491, %v1618
  %v1635 = vadd.f32 %v1492, %v1619
  %v1636 = vadd.f32 %v1493, %v1620
  %v1637 = vadd.f32 %v1494, %v1621
  %v1638 = vadd.f32 %v1495, %v1622
  %v1639 = vadd.f32 %v1496, %v1623
  %v1640 = vadd.f32 %v1497, %v1624
  %v1641 = vadd.f32 %v1498, %v1625
  %v1642 = vadd.f32 %v1499, %v1626
  %v1643 = vadd.f32 %v1500, %v1627
  %v1644 = vadd.f32 %v1501, %v1628
  %v1645 = vadd.f32 %v1502, %v1629
  %v1646 = vadd.f32 %v1503, %v1630
  %v1647 = vadd.f32 %v1504, %v1631
  %v1648 = vadd.f32 %v1505, %v1632
  %1649 = vrot.lane.b32.xlu0 %v451, 111
  %v1650 = vpop.permute.xlu0 %1649
  %1651 = vrot.lane.b32.xlu0 %v455, 111
  %v1652 = vpop.permute.xlu0 %1651
  %1653 = vrot.lane.b32.xlu0 %v461, 111
  %v1654 = vpop.permute.xlu0 %1653
  %1655 = vrot.lane.b32.xlu0 %v465, 111
  %v1656 = vpop.permute.xlu0 %1655
  %1657 = vrot.lane.b32.xlu0 %v453, 111
  %v1658 = vpop.permute.xlu0 %1657
  %1659 = vrot.lane.b32.xlu0 %v457, 111
  %v1660 = vpop.permute.xlu0 %1659
  %1661 = vrot.lane.b32.xlu0 %v463, 111
  %v1662 = vpop.permute.xlu0 %1661
  %1663 = vrot.lane.b32.xlu0 %v467, 111
  %v1664 = vpop.permute.xlu0 %1663
  %1665 = vrot.lane.b32.xlu0 %v544, 111
  %v1666 = vpop.permute.xlu0 %1665
  %1667 = vrot.lane.b32.xlu0 %v548, 111
  %v1668 = vpop.permute.xlu0 %1667
  %1669 = vrot.lane.b32.xlu0 %v554, 111
  %v1670 = vpop.permute.xlu0 %1669
  %1671 = vrot.lane.b32.xlu0 %v558, 111
  %v1672 = vpop.permute.xlu0 %1671
  %1673 = vrot.lane.b32.xlu0 %v546, 111
  %v1674 = vpop.permute.xlu0 %1673
  %1675 = vrot.lane.b32.xlu0 %v550, 111
  %v1676 = vpop.permute.xlu0 %1675
  %1677 = vrot.lane.b32.xlu0 %v556, 111
  %v1678 = vpop.permute.xlu0 %1677
  %1679 = vrot.lane.b32.xlu0 %v560, 111
  %v1680 = vpop.permute.xlu0 %1679
  %vm1681 = vcmp.lt.s32.totalorder %v680, 111
  %v1682 = vsel %vm1681, %v1666, %v1674
  %v1683 = vsel %vm1681, %v1668, %v1676
  %v1684 = vsel %vm1681, %v1670, %v1678
  %v1685 = vsel %vm1681, %v1672, %v1680
  %v1686 = vsel %vm1681, %v1658, %v1666
  %v1687 = vsel %vm1681, %v1660, %v1668
  %v1688 = vsel %vm1681, %v1662, %v1670
  %v1689 = vsel %vm1681, %v1664, %v1672
  %v1690 = vsel %vm1681, %v1650, %v1658
  %v1691 = vsel %vm1681, %v1652, %v1660
  %v1692 = vsel %vm1681, %v1654, %v1662
  %v1693 = vsel %vm1681, %v1656, %v1664
  %v1694 = vsel %vm1681, %v1674, %v1650
  %v1695 = vsel %vm1681, %v1676, %v1652
  %v1696 = vsel %vm1681, %v1678, %v1654
  %v1697 = vsel %vm1681, %v1680, %v1656
  %v1699 = vlaneseq
  %v1700 = vshrl.u32 %v1699, 7
  %v1701 = vsub.s32 0, %v1700
  %v1702 = vrot.slane %v57, %v1701
  %v1703 = vlaneseq
  %v1704 = vshrl.u32 %v1703, 7
  %v1705 = vsub.s32 1, %v1704
  %v1706 = vrot.slane %v57, %v1705
  %v1707 = vlaneseq
  %v1708 = vshrl.u32 %v1707, 7
  %v1709 = vsub.s32 2, %v1708
  %v1710 = vrot.slane %v57, %v1709
  %v1711 = vlaneseq
  %v1712 = vshrl.u32 %v1711, 7
  %v1713 = vsub.s32 3, %v1712
  %v1714 = vrot.slane %v57, %v1713
  %v1719 = vmul.f32 %v1690, %v1702
  %v1720 = vmul.f32 %v1686, %v1706
  %v1721 = vmul.f32 %v1682, %v1710
  %v1722 = vmul.f32 %v1694, %v1714
  %v1723 = vmul.f32 %v1691, %v1702
  %v1724 = vmul.f32 %v1687, %v1706
  %v1725 = vmul.f32 %v1683, %v1710
  %v1726 = vmul.f32 %v1695, %v1714
  %v1727 = vmul.f32 %v1692, %v1702
  %v1728 = vmul.f32 %v1688, %v1706
  %v1729 = vmul.f32 %v1684, %v1710
  %v1730 = vmul.f32 %v1696, %v1714
  %v1731 = vmul.f32 %v1693, %v1702
  %v1732 = vmul.f32 %v1689, %v1706
  %v1733 = vmul.f32 %v1685, %v1710
  %v1734 = vmul.f32 %v1697, %v1714
  %s1735 = scalar_lea.vmem %s2, 1792
  %v1736 = vld [vmem:[%s1735] sm:$0xff]
  %v1737 = vld [vmem:[%s1735 + $0x8] sm:$0xff]
  %v1738 = vld [vmem:[%s1735 + $0x10] sm:$0xff]
  %v1739 = vld [vmem:[%s1735 + $0x18] sm:$0xff]
  %1741 = vset.pattern.permute.xlu0 0
  %1742 = vperm.xlu0 %1741, %v1736
  %v1743 = vpop.permute.xlu0 %1742
  %1746 = vset.pattern.permute.xlu0 0
  %1747 = vperm.xlu0 %1746, %v1737
  %v1748 = vpop.permute.xlu0 %1747
  %1751 = vset.pattern.permute.xlu0 0
  %1752 = vperm.xlu0 %1751, %v1738
  %v1753 = vpop.permute.xlu0 %1752
  %1756 = vset.pattern.permute.xlu0 0
  %1757 = vperm.xlu0 %1756, %v1739
  %v1758 = vpop.permute.xlu0 %1757
  %v1760 = vmul.f32 %v1719, %v1743
  %v1761 = vmul.f32 %v1720, %v1743
  %v1762 = vmul.f32 %v1721, %v1743
  %v1763 = vmul.f32 %v1722, %v1743
  %v1764 = vmul.f32 %v1723, %v1748
  %v1765 = vmul.f32 %v1724, %v1748
  %v1766 = vmul.f32 %v1725, %v1748
  %v1767 = vmul.f32 %v1726, %v1748
  %v1768 = vmul.f32 %v1727, %v1753
  %v1769 = vmul.f32 %v1728, %v1753
  %v1770 = vmul.f32 %v1729, %v1753
  %v1771 = vmul.f32 %v1730, %v1753
  %v1772 = vmul.f32 %v1731, %v1758
  %v1773 = vmul.f32 %v1732, %v1758
  %v1774 = vmul.f32 %v1733, %v1758
  %v1775 = vmul.f32 %v1734, %v1758
  %v1776 = vadd.f32 %v1633, %v1760
  %v1777 = vadd.f32 %v1634, %v1761
  %v1778 = vadd.f32 %v1635, %v1762
  %v1779 = vadd.f32 %v1636, %v1763
  %v1780 = vadd.f32 %v1637, %v1764
  %v1781 = vadd.f32 %v1638, %v1765
  %v1782 = vadd.f32 %v1639, %v1766
  %v1783 = vadd.f32 %v1640, %v1767
  %v1784 = vadd.f32 %v1641, %v1768
  %v1785 = vadd.f32 %v1642, %v1769
  %v1786 = vadd.f32 %v1643, %v1770
  %v1787 = vadd.f32 %v1644, %v1771
  %v1788 = vadd.f32 %v1645, %v1772
  %v1789 = vadd.f32 %v1646, %v1773
  %v1790 = vadd.f32 %v1647, %v1774
  %v1791 = vadd.f32 %v1648, %v1775
  %1793 = vset.pattern.permute.xlu0 0
  %1794 = vperm.xlu0 %1793, %v602
  %v1795 = vpop.permute.xlu0 %1794
  %1798 = vset.pattern.permute.xlu0 0
  %1799 = vperm.xlu0 %1798, %v603
  %v1800 = vpop.permute.xlu0 %1799
  %1803 = vset.pattern.permute.xlu0 0
  %1804 = vperm.xlu0 %1803, %v604
  %v1805 = vpop.permute.xlu0 %1804
  %1808 = vset.pattern.permute.xlu0 0
  %1809 = vperm.xlu0 %1808, %v605
  %v1810 = vpop.permute.xlu0 %1809
  %v1812 = vadd.f32 %v1776, %v1795
  %v1813 = vadd.f32 %v1777, %v1795
  %v1814 = vadd.f32 %v1778, %v1795
  %v1815 = vadd.f32 %v1779, %v1795
  %v1816 = vadd.f32 %v1780, %v1800
  %v1817 = vadd.f32 %v1781, %v1800
  %v1818 = vadd.f32 %v1782, %v1800
  %v1819 = vadd.f32 %v1783, %v1800
  %v1820 = vadd.f32 %v1784, %v1805
  %v1821 = vadd.f32 %v1785, %v1805
  %v1822 = vadd.f32 %v1786, %v1805
  %v1823 = vadd.f32 %v1787, %v1805
  %v1824 = vadd.f32 %v1788, %v1810
  %v1825 = vadd.f32 %v1789, %v1810
  %v1826 = vadd.f32 %v1790, %v1810
  %v1827 = vadd.f32 %v1791, %v1810
  %v1828 = vld [vmem:[%s1 + $0xc0] sm:$0xff]
  %v1829 = vld [vmem:[%s1 + $0xc8] sm:$0xff]
  %v1830 = vld [vmem:[%s1 + $0xd0] sm:$0xff]
  %v1831 = vld [vmem:[%s1 + $0xd8] sm:$0xff]
  %v1832 = vld [vmem:[%s606 + $0x20] sm:$0xff]
  %v1833 = vld [vmem:[%s606 + $0x28] sm:$0xff]
  %v1834 = vld [vmem:[%s606 + $0x30] sm:$0xff]
  %v1835 = vld [vmem:[%s606 + $0x38] sm:$0xff]
  %1837 = vset.pattern.permute.xlu0 0
  %1838 = vperm.xlu0 %1837, %v1832
  %v1839 = vpop.permute.xlu0 %1838
  %1842 = vset.pattern.permute.xlu0 0
  %1843 = vperm.xlu0 %1842, %v1833
  %v1844 = vpop.permute.xlu0 %1843
  %1847 = vset.pattern.permute.xlu0 0
  %1848 = vperm.xlu0 %1847, %v1834
  %v1849 = vpop.permute.xlu0 %1848
  %1852 = vset.pattern.permute.xlu0 0
  %1853 = vperm.xlu0 %1852, %v1835
  %v1854 = vpop.permute.xlu0 %1853
  %v1856 = vmul.f32 %v471, %v1839
  %v1857 = vmul.f32 %v473, %v1839
  %v1858 = vmul.f32 %v564, %v1839
  %v1859 = vmul.f32 %v566, %v1839
  %v1860 = vmul.f32 %v475, %v1844
  %v1861 = vmul.f32 %v477, %v1844
  %v1862 = vmul.f32 %v568, %v1844
  %v1863 = vmul.f32 %v570, %v1844
  %v1864 = vmul.f32 %v481, %v1849
  %v1865 = vmul.f32 %v483, %v1849
  %v1866 = vmul.f32 %v574, %v1849
  %v1867 = vmul.f32 %v576, %v1849
  %v1868 = vmul.f32 %v485, %v1854
  %v1869 = vmul.f32 %v487, %v1854
  %v1870 = vmul.f32 %v578, %v1854
  %v1871 = vmul.f32 %v580, %v1854
  %1872 = vrot.lane.b32.xlu0 %v471, 17
  %v1873 = vpop.permute.xlu0 %1872
  %1874 = vrot.lane.b32.xlu0 %v475, 17
  %v1875 = vpop.permute.xlu0 %1874
  %1876 = vrot.lane.b32.xlu0 %v481, 17
  %v1877 = vpop.permute.xlu0 %1876
  %1878 = vrot.lane.b32.xlu0 %v485, 17
  %v1879 = vpop.permute.xlu0 %1878
  %1880 = vrot.lane.b32.xlu0 %v473, 17
  %v1881 = vpop.permute.xlu0 %1880
  %1882 = vrot.lane.b32.xlu0 %v477, 17
  %v1883 = vpop.permute.xlu0 %1882
  %1884 = vrot.lane.b32.xlu0 %v483, 17
  %v1885 = vpop.permute.xlu0 %1884
  %1886 = vrot.lane.b32.xlu0 %v487, 17
  %v1887 = vpop.permute.xlu0 %1886
  %1888 = vrot.lane.b32.xlu0 %v564, 17
  %v1889 = vpop.permute.xlu0 %1888
  %1890 = vrot.lane.b32.xlu0 %v568, 17
  %v1891 = vpop.permute.xlu0 %1890
  %1892 = vrot.lane.b32.xlu0 %v574, 17
  %v1893 = vpop.permute.xlu0 %1892
  %1894 = vrot.lane.b32.xlu0 %v578, 17
  %v1895 = vpop.permute.xlu0 %1894
  %1896 = vrot.lane.b32.xlu0 %v566, 17
  %v1897 = vpop.permute.xlu0 %1896
  %1898 = vrot.lane.b32.xlu0 %v570, 17
  %v1899 = vpop.permute.xlu0 %1898
  %1900 = vrot.lane.b32.xlu0 %v576, 17
  %v1901 = vpop.permute.xlu0 %1900
  %1902 = vrot.lane.b32.xlu0 %v580, 17
  %v1903 = vpop.permute.xlu0 %1902
  %v1904 = vsel %vm681, %v1889, %v1897
  %v1905 = vsel %vm681, %v1891, %v1899
  %v1906 = vsel %vm681, %v1893, %v1901
  %v1907 = vsel %vm681, %v1895, %v1903
  %v1908 = vsel %vm681, %v1881, %v1889
  %v1909 = vsel %vm681, %v1883, %v1891
  %v1910 = vsel %vm681, %v1885, %v1893
  %v1911 = vsel %vm681, %v1887, %v1895
  %v1912 = vsel %vm681, %v1873, %v1881
  %v1913 = vsel %vm681, %v1875, %v1883
  %v1914 = vsel %vm681, %v1877, %v1885
  %v1915 = vsel %vm681, %v1879, %v1887
  %v1916 = vsel %vm681, %v1897, %v1873
  %v1917 = vsel %vm681, %v1899, %v1875
  %v1918 = vsel %vm681, %v1901, %v1877
  %v1919 = vsel %vm681, %v1903, %v1879
  %v1920 = vmul.f32 %v1916, %v702
  %v1921 = vmul.f32 %v1912, %v706
  %v1922 = vmul.f32 %v1908, %v710
  %v1923 = vmul.f32 %v1904, %v714
  %v1924 = vmul.f32 %v1917, %v702
  %v1925 = vmul.f32 %v1913, %v706
  %v1926 = vmul.f32 %v1909, %v710
  %v1927 = vmul.f32 %v1905, %v714
  %v1928 = vmul.f32 %v1918, %v702
  %v1929 = vmul.f32 %v1914, %v706
  %v1930 = vmul.f32 %v1910, %v710
  %v1931 = vmul.f32 %v1906, %v714
  %v1932 = vmul.f32 %v1919, %v702
  %v1933 = vmul.f32 %v1915, %v706
  %v1934 = vmul.f32 %v1911, %v710
  %v1935 = vmul.f32 %v1907, %v714
  %v1936 = vld [vmem:[%s2 + $0x20] sm:$0xff]
  %v1937 = vld [vmem:[%s2 + $0x28] sm:$0xff]
  %v1938 = vld [vmem:[%s2 + $0x30] sm:$0xff]
  %v1939 = vld [vmem:[%s2 + $0x38] sm:$0xff]
  %1941 = vset.pattern.permute.xlu0 0
  %1942 = vperm.xlu0 %1941, %v1936
  %v1943 = vpop.permute.xlu0 %1942
  %1946 = vset.pattern.permute.xlu0 0
  %1947 = vperm.xlu0 %1946, %v1937
  %v1948 = vpop.permute.xlu0 %1947
  %1951 = vset.pattern.permute.xlu0 0
  %1952 = vperm.xlu0 %1951, %v1938
  %v1953 = vpop.permute.xlu0 %1952
  %1956 = vset.pattern.permute.xlu0 0
  %1957 = vperm.xlu0 %1956, %v1939
  %v1958 = vpop.permute.xlu0 %1957
  %v1960 = vmul.f32 %v1920, %v1943
  %v1961 = vmul.f32 %v1921, %v1943
  %v1962 = vmul.f32 %v1922, %v1943
  %v1963 = vmul.f32 %v1923, %v1943
  %v1964 = vmul.f32 %v1924, %v1948
  %v1965 = vmul.f32 %v1925, %v1948
  %v1966 = vmul.f32 %v1926, %v1948
  %v1967 = vmul.f32 %v1927, %v1948
  %v1968 = vmul.f32 %v1928, %v1953
  %v1969 = vmul.f32 %v1929, %v1953
  %v1970 = vmul.f32 %v1930, %v1953
  %v1971 = vmul.f32 %v1931, %v1953
  %v1972 = vmul.f32 %v1932, %v1958
  %v1973 = vmul.f32 %v1933, %v1958
  %v1974 = vmul.f32 %v1934, %v1958
  %v1975 = vmul.f32 %v1935, %v1958
  %v1976 = vadd.f32 %v1856, %v1960
  %v1977 = vadd.f32 %v1857, %v1961
  %v1978 = vadd.f32 %v1858, %v1962
  %v1979 = vadd.f32 %v1859, %v1963
  %v1980 = vadd.f32 %v1860, %v1964
  %v1981 = vadd.f32 %v1861, %v1965
  %v1982 = vadd.f32 %v1862, %v1966
  %v1983 = vadd.f32 %v1863, %v1967
  %v1984 = vadd.f32 %v1864, %v1968
  %v1985 = vadd.f32 %v1865, %v1969
  %v1986 = vadd.f32 %v1866, %v1970
  %v1987 = vadd.f32 %v1867, %v1971
  %v1988 = vadd.f32 %v1868, %v1972
  %v1989 = vadd.f32 %v1869, %v1973
  %v1990 = vadd.f32 %v1870, %v1974
  %v1991 = vadd.f32 %v1871, %v1975
  %1992 = vrot.lane.b32.xlu0 %v471, 16
  %v1993 = vpop.permute.xlu0 %1992
  %1994 = vrot.lane.b32.xlu0 %v475, 16
  %v1995 = vpop.permute.xlu0 %1994
  %1996 = vrot.lane.b32.xlu0 %v481, 16
  %v1997 = vpop.permute.xlu0 %1996
  %1998 = vrot.lane.b32.xlu0 %v485, 16
  %v1999 = vpop.permute.xlu0 %1998
  %2000 = vrot.lane.b32.xlu0 %v473, 16
  %v2001 = vpop.permute.xlu0 %2000
  %2002 = vrot.lane.b32.xlu0 %v477, 16
  %v2003 = vpop.permute.xlu0 %2002
  %2004 = vrot.lane.b32.xlu0 %v483, 16
  %v2005 = vpop.permute.xlu0 %2004
  %2006 = vrot.lane.b32.xlu0 %v487, 16
  %v2007 = vpop.permute.xlu0 %2006
  %2008 = vrot.lane.b32.xlu0 %v564, 16
  %v2009 = vpop.permute.xlu0 %2008
  %2010 = vrot.lane.b32.xlu0 %v568, 16
  %v2011 = vpop.permute.xlu0 %2010
  %2012 = vrot.lane.b32.xlu0 %v574, 16
  %v2013 = vpop.permute.xlu0 %2012
  %2014 = vrot.lane.b32.xlu0 %v578, 16
  %v2015 = vpop.permute.xlu0 %2014
  %2016 = vrot.lane.b32.xlu0 %v566, 16
  %v2017 = vpop.permute.xlu0 %2016
  %2018 = vrot.lane.b32.xlu0 %v570, 16
  %v2019 = vpop.permute.xlu0 %2018
  %2020 = vrot.lane.b32.xlu0 %v576, 16
  %v2021 = vpop.permute.xlu0 %2020
  %2022 = vrot.lane.b32.xlu0 %v580, 16
  %v2023 = vpop.permute.xlu0 %2022
  %v2024 = vsel %vm823, %v2009, %v2017
  %v2025 = vsel %vm823, %v2011, %v2019
  %v2026 = vsel %vm823, %v2013, %v2021
  %v2027 = vsel %vm823, %v2015, %v2023
  %v2028 = vsel %vm823, %v2001, %v2009
  %v2029 = vsel %vm823, %v2003, %v2011
  %v2030 = vsel %vm823, %v2005, %v2013
  %v2031 = vsel %vm823, %v2007, %v2015
  %v2032 = vsel %vm823, %v1993, %v2001
  %v2033 = vsel %vm823, %v1995, %v2003
  %v2034 = vsel %vm823, %v1997, %v2005
  %v2035 = vsel %vm823, %v1999, %v2007
  %v2036 = vsel %vm823, %v2017, %v1993
  %v2037 = vsel %vm823, %v2019, %v1995
  %v2038 = vsel %vm823, %v2021, %v1997
  %v2039 = vsel %vm823, %v2023, %v1999
  %v2040 = vmul.f32 %v2036, %v844
  %v2041 = vmul.f32 %v2032, %v848
  %v2042 = vmul.f32 %v2028, %v852
  %v2043 = vmul.f32 %v2024, %v856
  %v2044 = vmul.f32 %v2037, %v844
  %v2045 = vmul.f32 %v2033, %v848
  %v2046 = vmul.f32 %v2029, %v852
  %v2047 = vmul.f32 %v2025, %v856
  %v2048 = vmul.f32 %v2038, %v844
  %v2049 = vmul.f32 %v2034, %v848
  %v2050 = vmul.f32 %v2030, %v852
  %v2051 = vmul.f32 %v2026, %v856
  %v2052 = vmul.f32 %v2039, %v844
  %v2053 = vmul.f32 %v2035, %v848
  %v2054 = vmul.f32 %v2031, %v852
  %v2055 = vmul.f32 %v2027, %v856
  %v2056 = vld [vmem:[%s877 + $0x20] sm:$0xff]
  %v2057 = vld [vmem:[%s877 + $0x28] sm:$0xff]
  %v2058 = vld [vmem:[%s877 + $0x30] sm:$0xff]
  %v2059 = vld [vmem:[%s877 + $0x38] sm:$0xff]
  %2061 = vset.pattern.permute.xlu0 0
  %2062 = vperm.xlu0 %2061, %v2056
  %v2063 = vpop.permute.xlu0 %2062
  %2066 = vset.pattern.permute.xlu0 0
  %2067 = vperm.xlu0 %2066, %v2057
  %v2068 = vpop.permute.xlu0 %2067
  %2071 = vset.pattern.permute.xlu0 0
  %2072 = vperm.xlu0 %2071, %v2058
  %v2073 = vpop.permute.xlu0 %2072
  %2076 = vset.pattern.permute.xlu0 0
  %2077 = vperm.xlu0 %2076, %v2059
  %v2078 = vpop.permute.xlu0 %2077
  %v2080 = vmul.f32 %v2040, %v2063
  %v2081 = vmul.f32 %v2041, %v2063
  %v2082 = vmul.f32 %v2042, %v2063
  %v2083 = vmul.f32 %v2043, %v2063
  %v2084 = vmul.f32 %v2044, %v2068
  %v2085 = vmul.f32 %v2045, %v2068
  %v2086 = vmul.f32 %v2046, %v2068
  %v2087 = vmul.f32 %v2047, %v2068
  %v2088 = vmul.f32 %v2048, %v2073
  %v2089 = vmul.f32 %v2049, %v2073
  %v2090 = vmul.f32 %v2050, %v2073
  %v2091 = vmul.f32 %v2051, %v2073
  %v2092 = vmul.f32 %v2052, %v2078
  %v2093 = vmul.f32 %v2053, %v2078
  %v2094 = vmul.f32 %v2054, %v2078
  %v2095 = vmul.f32 %v2055, %v2078
  %v2096 = vadd.f32 %v1976, %v2080
  %v2097 = vadd.f32 %v1977, %v2081
  %v2098 = vadd.f32 %v1978, %v2082
  %v2099 = vadd.f32 %v1979, %v2083
  %v2100 = vadd.f32 %v1980, %v2084
  %v2101 = vadd.f32 %v1981, %v2085
  %v2102 = vadd.f32 %v1982, %v2086
  %v2103 = vadd.f32 %v1983, %v2087
  %v2104 = vadd.f32 %v1984, %v2088
  %v2105 = vadd.f32 %v1985, %v2089
  %v2106 = vadd.f32 %v1986, %v2090
  %v2107 = vadd.f32 %v1987, %v2091
  %v2108 = vadd.f32 %v1988, %v2092
  %v2109 = vadd.f32 %v1989, %v2093
  %v2110 = vadd.f32 %v1990, %v2094
  %v2111 = vadd.f32 %v1991, %v2095
  %2112 = vrot.lane.b32.xlu0 %v471, 15
  %v2113 = vpop.permute.xlu0 %2112
  %2114 = vrot.lane.b32.xlu0 %v475, 15
  %v2115 = vpop.permute.xlu0 %2114
  %2116 = vrot.lane.b32.xlu0 %v481, 15
  %v2117 = vpop.permute.xlu0 %2116
  %2118 = vrot.lane.b32.xlu0 %v485, 15
  %v2119 = vpop.permute.xlu0 %2118
  %2120 = vrot.lane.b32.xlu0 %v473, 15
  %v2121 = vpop.permute.xlu0 %2120
  %2122 = vrot.lane.b32.xlu0 %v477, 15
  %v2123 = vpop.permute.xlu0 %2122
  %2124 = vrot.lane.b32.xlu0 %v483, 15
  %v2125 = vpop.permute.xlu0 %2124
  %2126 = vrot.lane.b32.xlu0 %v487, 15
  %v2127 = vpop.permute.xlu0 %2126
  %2128 = vrot.lane.b32.xlu0 %v564, 15
  %v2129 = vpop.permute.xlu0 %2128
  %2130 = vrot.lane.b32.xlu0 %v568, 15
  %v2131 = vpop.permute.xlu0 %2130
  %2132 = vrot.lane.b32.xlu0 %v574, 15
  %v2133 = vpop.permute.xlu0 %2132
  %2134 = vrot.lane.b32.xlu0 %v578, 15
  %v2135 = vpop.permute.xlu0 %2134
  %2136 = vrot.lane.b32.xlu0 %v566, 15
  %v2137 = vpop.permute.xlu0 %2136
  %2138 = vrot.lane.b32.xlu0 %v570, 15
  %v2139 = vpop.permute.xlu0 %2138
  %2140 = vrot.lane.b32.xlu0 %v576, 15
  %v2141 = vpop.permute.xlu0 %2140
  %2142 = vrot.lane.b32.xlu0 %v580, 15
  %v2143 = vpop.permute.xlu0 %2142
  %v2144 = vsel %vm966, %v2129, %v2137
  %v2145 = vsel %vm966, %v2131, %v2139
  %v2146 = vsel %vm966, %v2133, %v2141
  %v2147 = vsel %vm966, %v2135, %v2143
  %v2148 = vsel %vm966, %v2121, %v2129
  %v2149 = vsel %vm966, %v2123, %v2131
  %v2150 = vsel %vm966, %v2125, %v2133
  %v2151 = vsel %vm966, %v2127, %v2135
  %v2152 = vsel %vm966, %v2113, %v2121
  %v2153 = vsel %vm966, %v2115, %v2123
  %v2154 = vsel %vm966, %v2117, %v2125
  %v2155 = vsel %vm966, %v2119, %v2127
  %v2156 = vsel %vm966, %v2137, %v2113
  %v2157 = vsel %vm966, %v2139, %v2115
  %v2158 = vsel %vm966, %v2141, %v2117
  %v2159 = vsel %vm966, %v2143, %v2119
  %v2160 = vmul.f32 %v2156, %v987
  %v2161 = vmul.f32 %v2152, %v991
  %v2162 = vmul.f32 %v2148, %v995
  %v2163 = vmul.f32 %v2144, %v999
  %v2164 = vmul.f32 %v2157, %v987
  %v2165 = vmul.f32 %v2153, %v991
  %v2166 = vmul.f32 %v2149, %v995
  %v2167 = vmul.f32 %v2145, %v999
  %v2168 = vmul.f32 %v2158, %v987
  %v2169 = vmul.f32 %v2154, %v991
  %v2170 = vmul.f32 %v2150, %v995
  %v2171 = vmul.f32 %v2146, %v999
  %v2172 = vmul.f32 %v2159, %v987
  %v2173 = vmul.f32 %v2155, %v991
  %v2174 = vmul.f32 %v2151, %v995
  %v2175 = vmul.f32 %v2147, %v999
  %v2176 = vld [vmem:[%s1020 + $0x20] sm:$0xff]
  %v2177 = vld [vmem:[%s1020 + $0x28] sm:$0xff]
  %v2178 = vld [vmem:[%s1020 + $0x30] sm:$0xff]
  %v2179 = vld [vmem:[%s1020 + $0x38] sm:$0xff]
  %2181 = vset.pattern.permute.xlu0 0
  %2182 = vperm.xlu0 %2181, %v2176
  %v2183 = vpop.permute.xlu0 %2182
  %2186 = vset.pattern.permute.xlu0 0
  %2187 = vperm.xlu0 %2186, %v2177
  %v2188 = vpop.permute.xlu0 %2187
  %2191 = vset.pattern.permute.xlu0 0
  %2192 = vperm.xlu0 %2191, %v2178
  %v2193 = vpop.permute.xlu0 %2192
  %2196 = vset.pattern.permute.xlu0 0
  %2197 = vperm.xlu0 %2196, %v2179
  %v2198 = vpop.permute.xlu0 %2197
  %v2200 = vmul.f32 %v2160, %v2183
  %v2201 = vmul.f32 %v2161, %v2183
  %v2202 = vmul.f32 %v2162, %v2183
  %v2203 = vmul.f32 %v2163, %v2183
  %v2204 = vmul.f32 %v2164, %v2188
  %v2205 = vmul.f32 %v2165, %v2188
  %v2206 = vmul.f32 %v2166, %v2188
  %v2207 = vmul.f32 %v2167, %v2188
  %v2208 = vmul.f32 %v2168, %v2193
  %v2209 = vmul.f32 %v2169, %v2193
  %v2210 = vmul.f32 %v2170, %v2193
  %v2211 = vmul.f32 %v2171, %v2193
  %v2212 = vmul.f32 %v2172, %v2198
  %v2213 = vmul.f32 %v2173, %v2198
  %v2214 = vmul.f32 %v2174, %v2198
  %v2215 = vmul.f32 %v2175, %v2198
  %v2216 = vadd.f32 %v2096, %v2200
  %v2217 = vadd.f32 %v2097, %v2201
  %v2218 = vadd.f32 %v2098, %v2202
  %v2219 = vadd.f32 %v2099, %v2203
  %v2220 = vadd.f32 %v2100, %v2204
  %v2221 = vadd.f32 %v2101, %v2205
  %v2222 = vadd.f32 %v2102, %v2206
  %v2223 = vadd.f32 %v2103, %v2207
  %v2224 = vadd.f32 %v2104, %v2208
  %v2225 = vadd.f32 %v2105, %v2209
  %v2226 = vadd.f32 %v2106, %v2210
  %v2227 = vadd.f32 %v2107, %v2211
  %v2228 = vadd.f32 %v2108, %v2212
  %v2229 = vadd.f32 %v2109, %v2213
  %v2230 = vadd.f32 %v2110, %v2214
  %v2231 = vadd.f32 %v2111, %v2215
  %2232 = vrot.lane.b32.xlu0 %v471, 1
  %v2233 = vpop.permute.xlu0 %2232
  %2234 = vrot.lane.b32.xlu0 %v475, 1
  %v2235 = vpop.permute.xlu0 %2234
  %2236 = vrot.lane.b32.xlu0 %v481, 1
  %v2237 = vpop.permute.xlu0 %2236
  %2238 = vrot.lane.b32.xlu0 %v485, 1
  %v2239 = vpop.permute.xlu0 %2238
  %2240 = vrot.lane.b32.xlu0 %v473, 1
  %v2241 = vpop.permute.xlu0 %2240
  %2242 = vrot.lane.b32.xlu0 %v477, 1
  %v2243 = vpop.permute.xlu0 %2242
  %2244 = vrot.lane.b32.xlu0 %v483, 1
  %v2245 = vpop.permute.xlu0 %2244
  %2246 = vrot.lane.b32.xlu0 %v487, 1
  %v2247 = vpop.permute.xlu0 %2246
  %2248 = vrot.lane.b32.xlu0 %v564, 1
  %v2249 = vpop.permute.xlu0 %2248
  %2250 = vrot.lane.b32.xlu0 %v568, 1
  %v2251 = vpop.permute.xlu0 %2250
  %2252 = vrot.lane.b32.xlu0 %v574, 1
  %v2253 = vpop.permute.xlu0 %2252
  %2254 = vrot.lane.b32.xlu0 %v578, 1
  %v2255 = vpop.permute.xlu0 %2254
  %2256 = vrot.lane.b32.xlu0 %v566, 1
  %v2257 = vpop.permute.xlu0 %2256
  %2258 = vrot.lane.b32.xlu0 %v570, 1
  %v2259 = vpop.permute.xlu0 %2258
  %2260 = vrot.lane.b32.xlu0 %v576, 1
  %v2261 = vpop.permute.xlu0 %2260
  %2262 = vrot.lane.b32.xlu0 %v580, 1
  %v2263 = vpop.permute.xlu0 %2262
  %v2264 = vsel %vm1109, %v2249, %v2257
  %v2265 = vsel %vm1109, %v2251, %v2259
  %v2266 = vsel %vm1109, %v2253, %v2261
  %v2267 = vsel %vm1109, %v2255, %v2263
  %v2268 = vsel %vm1109, %v2241, %v2249
  %v2269 = vsel %vm1109, %v2243, %v2251
  %v2270 = vsel %vm1109, %v2245, %v2253
  %v2271 = vsel %vm1109, %v2247, %v2255
  %v2272 = vsel %vm1109, %v2233, %v2241
  %v2273 = vsel %vm1109, %v2235, %v2243
  %v2274 = vsel %vm1109, %v2237, %v2245
  %v2275 = vsel %vm1109, %v2239, %v2247
  %v2276 = vsel %vm1109, %v2257, %v2233
  %v2277 = vsel %vm1109, %v2259, %v2235
  %v2278 = vsel %vm1109, %v2261, %v2237
  %v2279 = vsel %vm1109, %v2263, %v2239
  %v2280 = vmul.f32 %v2276, %v1130
  %v2281 = vmul.f32 %v2272, %v1134
  %v2282 = vmul.f32 %v2268, %v1138
  %v2283 = vmul.f32 %v2264, %v1142
  %v2284 = vmul.f32 %v2277, %v1130
  %v2285 = vmul.f32 %v2273, %v1134
  %v2286 = vmul.f32 %v2269, %v1138
  %v2287 = vmul.f32 %v2265, %v1142
  %v2288 = vmul.f32 %v2278, %v1130
  %v2289 = vmul.f32 %v2274, %v1134
  %v2290 = vmul.f32 %v2270, %v1138
  %v2291 = vmul.f32 %v2266, %v1142
  %v2292 = vmul.f32 %v2279, %v1130
  %v2293 = vmul.f32 %v2275, %v1134
  %v2294 = vmul.f32 %v2271, %v1138
  %v2295 = vmul.f32 %v2267, %v1142
  %v2296 = vld [vmem:[%s1163 + $0x20] sm:$0xff]
  %v2297 = vld [vmem:[%s1163 + $0x28] sm:$0xff]
  %v2298 = vld [vmem:[%s1163 + $0x30] sm:$0xff]
  %v2299 = vld [vmem:[%s1163 + $0x38] sm:$0xff]
  %2301 = vset.pattern.permute.xlu0 0
  %2302 = vperm.xlu0 %2301, %v2296
  %v2303 = vpop.permute.xlu0 %2302
  %2306 = vset.pattern.permute.xlu0 0
  %2307 = vperm.xlu0 %2306, %v2297
  %v2308 = vpop.permute.xlu0 %2307
  %2311 = vset.pattern.permute.xlu0 0
  %2312 = vperm.xlu0 %2311, %v2298
  %v2313 = vpop.permute.xlu0 %2312
  %2316 = vset.pattern.permute.xlu0 0
  %2317 = vperm.xlu0 %2316, %v2299
  %v2318 = vpop.permute.xlu0 %2317
  %v2320 = vmul.f32 %v2280, %v2303
  %v2321 = vmul.f32 %v2281, %v2303
  %v2322 = vmul.f32 %v2282, %v2303
  %v2323 = vmul.f32 %v2283, %v2303
  %v2324 = vmul.f32 %v2284, %v2308
  %v2325 = vmul.f32 %v2285, %v2308
  %v2326 = vmul.f32 %v2286, %v2308
  %v2327 = vmul.f32 %v2287, %v2308
  %v2328 = vmul.f32 %v2288, %v2313
  %v2329 = vmul.f32 %v2289, %v2313
  %v2330 = vmul.f32 %v2290, %v2313
  %v2331 = vmul.f32 %v2291, %v2313
  %v2332 = vmul.f32 %v2292, %v2318
  %v2333 = vmul.f32 %v2293, %v2318
  %v2334 = vmul.f32 %v2294, %v2318
  %v2335 = vmul.f32 %v2295, %v2318
  %v2336 = vadd.f32 %v2216, %v2320
  %v2337 = vadd.f32 %v2217, %v2321
  %v2338 = vadd.f32 %v2218, %v2322
  %v2339 = vadd.f32 %v2219, %v2323
  %v2340 = vadd.f32 %v2220, %v2324
  %v2341 = vadd.f32 %v2221, %v2325
  %v2342 = vadd.f32 %v2222, %v2326
  %v2343 = vadd.f32 %v2223, %v2327
  %v2344 = vadd.f32 %v2224, %v2328
  %v2345 = vadd.f32 %v2225, %v2329
  %v2346 = vadd.f32 %v2226, %v2330
  %v2347 = vadd.f32 %v2227, %v2331
  %v2348 = vadd.f32 %v2228, %v2332
  %v2349 = vadd.f32 %v2229, %v2333
  %v2350 = vadd.f32 %v2230, %v2334
  %v2351 = vadd.f32 %v2231, %v2335
  %2352 = vrot.lane.b32.xlu0 %v471, 127
  %v2353 = vpop.permute.xlu0 %2352
  %2354 = vrot.lane.b32.xlu0 %v475, 127
  %v2355 = vpop.permute.xlu0 %2354
  %2356 = vrot.lane.b32.xlu0 %v481, 127
  %v2357 = vpop.permute.xlu0 %2356
  %2358 = vrot.lane.b32.xlu0 %v485, 127
  %v2359 = vpop.permute.xlu0 %2358
  %2360 = vrot.lane.b32.xlu0 %v473, 127
  %v2361 = vpop.permute.xlu0 %2360
  %2362 = vrot.lane.b32.xlu0 %v477, 127
  %v2363 = vpop.permute.xlu0 %2362
  %2364 = vrot.lane.b32.xlu0 %v483, 127
  %v2365 = vpop.permute.xlu0 %2364
  %2366 = vrot.lane.b32.xlu0 %v487, 127
  %v2367 = vpop.permute.xlu0 %2366
  %2368 = vrot.lane.b32.xlu0 %v564, 127
  %v2369 = vpop.permute.xlu0 %2368
  %2370 = vrot.lane.b32.xlu0 %v568, 127
  %v2371 = vpop.permute.xlu0 %2370
  %2372 = vrot.lane.b32.xlu0 %v574, 127
  %v2373 = vpop.permute.xlu0 %2372
  %2374 = vrot.lane.b32.xlu0 %v578, 127
  %v2375 = vpop.permute.xlu0 %2374
  %2376 = vrot.lane.b32.xlu0 %v566, 127
  %v2377 = vpop.permute.xlu0 %2376
  %2378 = vrot.lane.b32.xlu0 %v570, 127
  %v2379 = vpop.permute.xlu0 %2378
  %2380 = vrot.lane.b32.xlu0 %v576, 127
  %v2381 = vpop.permute.xlu0 %2380
  %2382 = vrot.lane.b32.xlu0 %v580, 127
  %v2383 = vpop.permute.xlu0 %2382
  %v2384 = vsel %vm1252, %v2369, %v2377
  %v2385 = vsel %vm1252, %v2371, %v2379
  %v2386 = vsel %vm1252, %v2373, %v2381
  %v2387 = vsel %vm1252, %v2375, %v2383
  %v2388 = vsel %vm1252, %v2361, %v2369
  %v2389 = vsel %vm1252, %v2363, %v2371
  %v2390 = vsel %vm1252, %v2365, %v2373
  %v2391 = vsel %vm1252, %v2367, %v2375
  %v2392 = vsel %vm1252, %v2353, %v2361
  %v2393 = vsel %vm1252, %v2355, %v2363
  %v2394 = vsel %vm1252, %v2357, %v2365
  %v2395 = vsel %vm1252, %v2359, %v2367
  %v2396 = vsel %vm1252, %v2377, %v2353
  %v2397 = vsel %vm1252, %v2379, %v2355
  %v2398 = vsel %vm1252, %v2381, %v2357
  %v2399 = vsel %vm1252, %v2383, %v2359
  %v2400 = vmul.f32 %v2392, %v1273
  %v2401 = vmul.f32 %v2388, %v1277
  %v2402 = vmul.f32 %v2384, %v1281
  %v2403 = vmul.f32 %v2396, %v1285
  %v2404 = vmul.f32 %v2393, %v1273
  %v2405 = vmul.f32 %v2389, %v1277
  %v2406 = vmul.f32 %v2385, %v1281
  %v2407 = vmul.f32 %v2397, %v1285
  %v2408 = vmul.f32 %v2394, %v1273
  %v2409 = vmul.f32 %v2390, %v1277
  %v2410 = vmul.f32 %v2386, %v1281
  %v2411 = vmul.f32 %v2398, %v1285
  %v2412 = vmul.f32 %v2395, %v1273
  %v2413 = vmul.f32 %v2391, %v1277
  %v2414 = vmul.f32 %v2387, %v1281
  %v2415 = vmul.f32 %v2399, %v1285
  %v2416 = vld [vmem:[%s1306 + $0x20] sm:$0xff]
  %v2417 = vld [vmem:[%s1306 + $0x28] sm:$0xff]
  %v2418 = vld [vmem:[%s1306 + $0x30] sm:$0xff]
  %v2419 = vld [vmem:[%s1306 + $0x38] sm:$0xff]
  %2421 = vset.pattern.permute.xlu0 0
  %2422 = vperm.xlu0 %2421, %v2416
  %v2423 = vpop.permute.xlu0 %2422
  %2426 = vset.pattern.permute.xlu0 0
  %2427 = vperm.xlu0 %2426, %v2417
  %v2428 = vpop.permute.xlu0 %2427
  %2431 = vset.pattern.permute.xlu0 0
  %2432 = vperm.xlu0 %2431, %v2418
  %v2433 = vpop.permute.xlu0 %2432
  %2436 = vset.pattern.permute.xlu0 0
  %2437 = vperm.xlu0 %2436, %v2419
  %v2438 = vpop.permute.xlu0 %2437
  %v2440 = vmul.f32 %v2400, %v2423
  %v2441 = vmul.f32 %v2401, %v2423
  %v2442 = vmul.f32 %v2402, %v2423
  %v2443 = vmul.f32 %v2403, %v2423
  %v2444 = vmul.f32 %v2404, %v2428
  %v2445 = vmul.f32 %v2405, %v2428
  %v2446 = vmul.f32 %v2406, %v2428
  %v2447 = vmul.f32 %v2407, %v2428
  %v2448 = vmul.f32 %v2408, %v2433
  %v2449 = vmul.f32 %v2409, %v2433
  %v2450 = vmul.f32 %v2410, %v2433
  %v2451 = vmul.f32 %v2411, %v2433
  %v2452 = vmul.f32 %v2412, %v2438
  %v2453 = vmul.f32 %v2413, %v2438
  %v2454 = vmul.f32 %v2414, %v2438
  %v2455 = vmul.f32 %v2415, %v2438
  %v2456 = vadd.f32 %v2336, %v2440
  %v2457 = vadd.f32 %v2337, %v2441
  %v2458 = vadd.f32 %v2338, %v2442
  %v2459 = vadd.f32 %v2339, %v2443
  %v2460 = vadd.f32 %v2340, %v2444
  %v2461 = vadd.f32 %v2341, %v2445
  %v2462 = vadd.f32 %v2342, %v2446
  %v2463 = vadd.f32 %v2343, %v2447
  %v2464 = vadd.f32 %v2344, %v2448
  %v2465 = vadd.f32 %v2345, %v2449
  %v2466 = vadd.f32 %v2346, %v2450
  %v2467 = vadd.f32 %v2347, %v2451
  %v2468 = vadd.f32 %v2348, %v2452
  %v2469 = vadd.f32 %v2349, %v2453
  %v2470 = vadd.f32 %v2350, %v2454
  %v2471 = vadd.f32 %v2351, %v2455
  %2472 = vrot.lane.b32.xlu0 %v471, 113
  %v2473 = vpop.permute.xlu0 %2472
  %2474 = vrot.lane.b32.xlu0 %v475, 113
  %v2475 = vpop.permute.xlu0 %2474
  %2476 = vrot.lane.b32.xlu0 %v481, 113
  %v2477 = vpop.permute.xlu0 %2476
  %2478 = vrot.lane.b32.xlu0 %v485, 113
  %v2479 = vpop.permute.xlu0 %2478
  %2480 = vrot.lane.b32.xlu0 %v473, 113
  %v2481 = vpop.permute.xlu0 %2480
  %2482 = vrot.lane.b32.xlu0 %v477, 113
  %v2483 = vpop.permute.xlu0 %2482
  %2484 = vrot.lane.b32.xlu0 %v483, 113
  %v2485 = vpop.permute.xlu0 %2484
  %2486 = vrot.lane.b32.xlu0 %v487, 113
  %v2487 = vpop.permute.xlu0 %2486
  %2488 = vrot.lane.b32.xlu0 %v564, 113
  %v2489 = vpop.permute.xlu0 %2488
  %2490 = vrot.lane.b32.xlu0 %v568, 113
  %v2491 = vpop.permute.xlu0 %2490
  %2492 = vrot.lane.b32.xlu0 %v574, 113
  %v2493 = vpop.permute.xlu0 %2492
  %2494 = vrot.lane.b32.xlu0 %v578, 113
  %v2495 = vpop.permute.xlu0 %2494
  %2496 = vrot.lane.b32.xlu0 %v566, 113
  %v2497 = vpop.permute.xlu0 %2496
  %2498 = vrot.lane.b32.xlu0 %v570, 113
  %v2499 = vpop.permute.xlu0 %2498
  %2500 = vrot.lane.b32.xlu0 %v576, 113
  %v2501 = vpop.permute.xlu0 %2500
  %2502 = vrot.lane.b32.xlu0 %v580, 113
  %v2503 = vpop.permute.xlu0 %2502
  %v2504 = vsel %vm1395, %v2489, %v2497
  %v2505 = vsel %vm1395, %v2491, %v2499
  %v2506 = vsel %vm1395, %v2493, %v2501
  %v2507 = vsel %vm1395, %v2495, %v2503
  %v2508 = vsel %vm1395, %v2481, %v2489
  %v2509 = vsel %vm1395, %v2483, %v2491
  %v2510 = vsel %vm1395, %v2485, %v2493
  %v2511 = vsel %vm1395, %v2487, %v2495
  %v2512 = vsel %vm1395, %v2473, %v2481
  %v2513 = vsel %vm1395, %v2475, %v2483
  %v2514 = vsel %vm1395, %v2477, %v2485
  %v2515 = vsel %vm1395, %v2479, %v2487
  %v2516 = vsel %vm1395, %v2497, %v2473
  %v2517 = vsel %vm1395, %v2499, %v2475
  %v2518 = vsel %vm1395, %v2501, %v2477
  %v2519 = vsel %vm1395, %v2503, %v2479
  %v2520 = vmul.f32 %v2512, %v1416
  %v2521 = vmul.f32 %v2508, %v1420
  %v2522 = vmul.f32 %v2504, %v1424
  %v2523 = vmul.f32 %v2516, %v1428
  %v2524 = vmul.f32 %v2513, %v1416
  %v2525 = vmul.f32 %v2509, %v1420
  %v2526 = vmul.f32 %v2505, %v1424
  %v2527 = vmul.f32 %v2517, %v1428
  %v2528 = vmul.f32 %v2514, %v1416
  %v2529 = vmul.f32 %v2510, %v1420
  %v2530 = vmul.f32 %v2506, %v1424
  %v2531 = vmul.f32 %v2518, %v1428
  %v2532 = vmul.f32 %v2515, %v1416
  %v2533 = vmul.f32 %v2511, %v1420
  %v2534 = vmul.f32 %v2507, %v1424
  %v2535 = vmul.f32 %v2519, %v1428
  %v2536 = vld [vmem:[%s1449 + $0x20] sm:$0xff]
  %v2537 = vld [vmem:[%s1449 + $0x28] sm:$0xff]
  %v2538 = vld [vmem:[%s1449 + $0x30] sm:$0xff]
  %v2539 = vld [vmem:[%s1449 + $0x38] sm:$0xff]
  %2541 = vset.pattern.permute.xlu0 0
  %2542 = vperm.xlu0 %2541, %v2536
  %v2543 = vpop.permute.xlu0 %2542
  %2546 = vset.pattern.permute.xlu0 0
  %2547 = vperm.xlu0 %2546, %v2537
  %v2548 = vpop.permute.xlu0 %2547
  %2551 = vset.pattern.permute.xlu0 0
  %2552 = vperm.xlu0 %2551, %v2538
  %v2553 = vpop.permute.xlu0 %2552
  %2556 = vset.pattern.permute.xlu0 0
  %2557 = vperm.xlu0 %2556, %v2539
  %v2558 = vpop.permute.xlu0 %2557
  %v2560 = vmul.f32 %v2520, %v2543
  %v2561 = vmul.f32 %v2521, %v2543
  %v2562 = vmul.f32 %v2522, %v2543
  %v2563 = vmul.f32 %v2523, %v2543
  %v2564 = vmul.f32 %v2524, %v2548
  %v2565 = vmul.f32 %v2525, %v2548
  %v2566 = vmul.f32 %v2526, %v2548
  %v2567 = vmul.f32 %v2527, %v2548
  %v2568 = vmul.f32 %v2528, %v2553
  %v2569 = vmul.f32 %v2529, %v2553
  %v2570 = vmul.f32 %v2530, %v2553
  %v2571 = vmul.f32 %v2531, %v2553
  %v2572 = vmul.f32 %v2532, %v2558
  %v2573 = vmul.f32 %v2533, %v2558
  %v2574 = vmul.f32 %v2534, %v2558
  %v2575 = vmul.f32 %v2535, %v2558
  %v2576 = vadd.f32 %v2456, %v2560
  %v2577 = vadd.f32 %v2457, %v2561
  %v2578 = vadd.f32 %v2458, %v2562
  %v2579 = vadd.f32 %v2459, %v2563
  %v2580 = vadd.f32 %v2460, %v2564
  %v2581 = vadd.f32 %v2461, %v2565
  %v2582 = vadd.f32 %v2462, %v2566
  %v2583 = vadd.f32 %v2463, %v2567
  %v2584 = vadd.f32 %v2464, %v2568
  %v2585 = vadd.f32 %v2465, %v2569
  %v2586 = vadd.f32 %v2466, %v2570
  %v2587 = vadd.f32 %v2467, %v2571
  %v2588 = vadd.f32 %v2468, %v2572
  %v2589 = vadd.f32 %v2469, %v2573
  %v2590 = vadd.f32 %v2470, %v2574
  %v2591 = vadd.f32 %v2471, %v2575
  %2592 = vrot.lane.b32.xlu0 %v471, 112
  %v2593 = vpop.permute.xlu0 %2592
  %2594 = vrot.lane.b32.xlu0 %v475, 112
  %v2595 = vpop.permute.xlu0 %2594
  %2596 = vrot.lane.b32.xlu0 %v481, 112
  %v2597 = vpop.permute.xlu0 %2596
  %2598 = vrot.lane.b32.xlu0 %v485, 112
  %v2599 = vpop.permute.xlu0 %2598
  %2600 = vrot.lane.b32.xlu0 %v473, 112
  %v2601 = vpop.permute.xlu0 %2600
  %2602 = vrot.lane.b32.xlu0 %v477, 112
  %v2603 = vpop.permute.xlu0 %2602
  %2604 = vrot.lane.b32.xlu0 %v483, 112
  %v2605 = vpop.permute.xlu0 %2604
  %2606 = vrot.lane.b32.xlu0 %v487, 112
  %v2607 = vpop.permute.xlu0 %2606
  %2608 = vrot.lane.b32.xlu0 %v564, 112
  %v2609 = vpop.permute.xlu0 %2608
  %2610 = vrot.lane.b32.xlu0 %v568, 112
  %v2611 = vpop.permute.xlu0 %2610
  %2612 = vrot.lane.b32.xlu0 %v574, 112
  %v2613 = vpop.permute.xlu0 %2612
  %2614 = vrot.lane.b32.xlu0 %v578, 112
  %v2615 = vpop.permute.xlu0 %2614
  %2616 = vrot.lane.b32.xlu0 %v566, 112
  %v2617 = vpop.permute.xlu0 %2616
  %2618 = vrot.lane.b32.xlu0 %v570, 112
  %v2619 = vpop.permute.xlu0 %2618
  %2620 = vrot.lane.b32.xlu0 %v576, 112
  %v2621 = vpop.permute.xlu0 %2620
  %2622 = vrot.lane.b32.xlu0 %v580, 112
  %v2623 = vpop.permute.xlu0 %2622
  %v2624 = vsel %vm1538, %v2609, %v2617
  %v2625 = vsel %vm1538, %v2611, %v2619
  %v2626 = vsel %vm1538, %v2613, %v2621
  %v2627 = vsel %vm1538, %v2615, %v2623
  %v2628 = vsel %vm1538, %v2601, %v2609
  %v2629 = vsel %vm1538, %v2603, %v2611
  %v2630 = vsel %vm1538, %v2605, %v2613
  %v2631 = vsel %vm1538, %v2607, %v2615
  %v2632 = vsel %vm1538, %v2593, %v2601
  %v2633 = vsel %vm1538, %v2595, %v2603
  %v2634 = vsel %vm1538, %v2597, %v2605
  %v2635 = vsel %vm1538, %v2599, %v2607
  %v2636 = vsel %vm1538, %v2617, %v2593
  %v2637 = vsel %vm1538, %v2619, %v2595
  %v2638 = vsel %vm1538, %v2621, %v2597
  %v2639 = vsel %vm1538, %v2623, %v2599
  %v2640 = vmul.f32 %v2632, %v1559
  %v2641 = vmul.f32 %v2628, %v1563
  %v2642 = vmul.f32 %v2624, %v1567
  %v2643 = vmul.f32 %v2636, %v1571
  %v2644 = vmul.f32 %v2633, %v1559
  %v2645 = vmul.f32 %v2629, %v1563
  %v2646 = vmul.f32 %v2625, %v1567
  %v2647 = vmul.f32 %v2637, %v1571
  %v2648 = vmul.f32 %v2634, %v1559
  %v2649 = vmul.f32 %v2630, %v1563
  %v2650 = vmul.f32 %v2626, %v1567
  %v2651 = vmul.f32 %v2638, %v1571
  %v2652 = vmul.f32 %v2635, %v1559
  %v2653 = vmul.f32 %v2631, %v1563
  %v2654 = vmul.f32 %v2627, %v1567
  %v2655 = vmul.f32 %v2639, %v1571
  %v2656 = vld [vmem:[%s1592 + $0x20] sm:$0xff]
  %v2657 = vld [vmem:[%s1592 + $0x28] sm:$0xff]
  %v2658 = vld [vmem:[%s1592 + $0x30] sm:$0xff]
  %v2659 = vld [vmem:[%s1592 + $0x38] sm:$0xff]
  %2661 = vset.pattern.permute.xlu0 0
  %2662 = vperm.xlu0 %2661, %v2656
  %v2663 = vpop.permute.xlu0 %2662
  %2666 = vset.pattern.permute.xlu0 0
  %2667 = vperm.xlu0 %2666, %v2657
  %v2668 = vpop.permute.xlu0 %2667
  %2671 = vset.pattern.permute.xlu0 0
  %2672 = vperm.xlu0 %2671, %v2658
  %v2673 = vpop.permute.xlu0 %2672
  %2676 = vset.pattern.permute.xlu0 0
  %2677 = vperm.xlu0 %2676, %v2659
  %v2678 = vpop.permute.xlu0 %2677
  %v2680 = vmul.f32 %v2640, %v2663
  %v2681 = vmul.f32 %v2641, %v2663
  %v2682 = vmul.f32 %v2642, %v2663
  %v2683 = vmul.f32 %v2643, %v2663
  %v2684 = vmul.f32 %v2644, %v2668
  %v2685 = vmul.f32 %v2645, %v2668
  %v2686 = vmul.f32 %v2646, %v2668
  %v2687 = vmul.f32 %v2647, %v2668
  %v2688 = vmul.f32 %v2648, %v2673
  %v2689 = vmul.f32 %v2649, %v2673
  %v2690 = vmul.f32 %v2650, %v2673
  %v2691 = vmul.f32 %v2651, %v2673
  %v2692 = vmul.f32 %v2652, %v2678
  %v2693 = vmul.f32 %v2653, %v2678
  %v2694 = vmul.f32 %v2654, %v2678
  %v2695 = vmul.f32 %v2655, %v2678
  %v2696 = vadd.f32 %v2576, %v2680
  %v2697 = vadd.f32 %v2577, %v2681
  %v2698 = vadd.f32 %v2578, %v2682
  %v2699 = vadd.f32 %v2579, %v2683
  %v2700 = vadd.f32 %v2580, %v2684
  %v2701 = vadd.f32 %v2581, %v2685
  %v2702 = vadd.f32 %v2582, %v2686
  %v2703 = vadd.f32 %v2583, %v2687
  %v2704 = vadd.f32 %v2584, %v2688
  %v2705 = vadd.f32 %v2585, %v2689
  %v2706 = vadd.f32 %v2586, %v2690
  %v2707 = vadd.f32 %v2587, %v2691
  %v2708 = vadd.f32 %v2588, %v2692
  %v2709 = vadd.f32 %v2589, %v2693
  %v2710 = vadd.f32 %v2590, %v2694
  %v2711 = vadd.f32 %v2591, %v2695
  %2712 = vrot.lane.b32.xlu0 %v471, 111
  %v2713 = vpop.permute.xlu0 %2712
  %2714 = vrot.lane.b32.xlu0 %v475, 111
  %v2715 = vpop.permute.xlu0 %2714
  %2716 = vrot.lane.b32.xlu0 %v481, 111
  %v2717 = vpop.permute.xlu0 %2716
  %2718 = vrot.lane.b32.xlu0 %v485, 111
  %v2719 = vpop.permute.xlu0 %2718
  %2720 = vrot.lane.b32.xlu0 %v473, 111
  %v2721 = vpop.permute.xlu0 %2720
  %2722 = vrot.lane.b32.xlu0 %v477, 111
  %v2723 = vpop.permute.xlu0 %2722
  %2724 = vrot.lane.b32.xlu0 %v483, 111
  %v2725 = vpop.permute.xlu0 %2724
  %2726 = vrot.lane.b32.xlu0 %v487, 111
  %v2727 = vpop.permute.xlu0 %2726
  %2728 = vrot.lane.b32.xlu0 %v564, 111
  %v2729 = vpop.permute.xlu0 %2728
  %2730 = vrot.lane.b32.xlu0 %v568, 111
  %v2731 = vpop.permute.xlu0 %2730
  %2732 = vrot.lane.b32.xlu0 %v574, 111
  %v2733 = vpop.permute.xlu0 %2732
  %2734 = vrot.lane.b32.xlu0 %v578, 111
  %v2735 = vpop.permute.xlu0 %2734
  %2736 = vrot.lane.b32.xlu0 %v566, 111
  %v2737 = vpop.permute.xlu0 %2736
  %2738 = vrot.lane.b32.xlu0 %v570, 111
  %v2739 = vpop.permute.xlu0 %2738
  %2740 = vrot.lane.b32.xlu0 %v576, 111
  %v2741 = vpop.permute.xlu0 %2740
  %2742 = vrot.lane.b32.xlu0 %v580, 111
  %v2743 = vpop.permute.xlu0 %2742
  %v2744 = vsel %vm1681, %v2729, %v2737
  %v2745 = vsel %vm1681, %v2731, %v2739
  %v2746 = vsel %vm1681, %v2733, %v2741
  %v2747 = vsel %vm1681, %v2735, %v2743
  %v2748 = vsel %vm1681, %v2721, %v2729
  %v2749 = vsel %vm1681, %v2723, %v2731
  %v2750 = vsel %vm1681, %v2725, %v2733
  %v2751 = vsel %vm1681, %v2727, %v2735
  %v2752 = vsel %vm1681, %v2713, %v2721
  %v2753 = vsel %vm1681, %v2715, %v2723
  %v2754 = vsel %vm1681, %v2717, %v2725
  %v2755 = vsel %vm1681, %v2719, %v2727
  %v2756 = vsel %vm1681, %v2737, %v2713
  %v2757 = vsel %vm1681, %v2739, %v2715
  %v2758 = vsel %vm1681, %v2741, %v2717
  %v2759 = vsel %vm1681, %v2743, %v2719
  %v2760 = vmul.f32 %v2752, %v1702
  %v2761 = vmul.f32 %v2748, %v1706
  %v2762 = vmul.f32 %v2744, %v1710
  %v2763 = vmul.f32 %v2756, %v1714
  %v2764 = vmul.f32 %v2753, %v1702
  %v2765 = vmul.f32 %v2749, %v1706
  %v2766 = vmul.f32 %v2745, %v1710
  %v2767 = vmul.f32 %v2757, %v1714
  %v2768 = vmul.f32 %v2754, %v1702
  %v2769 = vmul.f32 %v2750, %v1706
  %v2770 = vmul.f32 %v2746, %v1710
  %v2771 = vmul.f32 %v2758, %v1714
  %v2772 = vmul.f32 %v2755, %v1702
  %v2773 = vmul.f32 %v2751, %v1706
  %v2774 = vmul.f32 %v2747, %v1710
  %v2775 = vmul.f32 %v2759, %v1714
  %v2776 = vld [vmem:[%s1735 + $0x20] sm:$0xff]
  %v2777 = vld [vmem:[%s1735 + $0x28] sm:$0xff]
  %v2778 = vld [vmem:[%s1735 + $0x30] sm:$0xff]
  %v2779 = vld [vmem:[%s1735 + $0x38] sm:$0xff]
  %2781 = vset.pattern.permute.xlu0 0
  %2782 = vperm.xlu0 %2781, %v2776
  %v2783 = vpop.permute.xlu0 %2782
  %2786 = vset.pattern.permute.xlu0 0
  %2787 = vperm.xlu0 %2786, %v2777
  %v2788 = vpop.permute.xlu0 %2787
  %2791 = vset.pattern.permute.xlu0 0
  %2792 = vperm.xlu0 %2791, %v2778
  %v2793 = vpop.permute.xlu0 %2792
  %2796 = vset.pattern.permute.xlu0 0
  %2797 = vperm.xlu0 %2796, %v2779
  %v2798 = vpop.permute.xlu0 %2797
  %v2800 = vmul.f32 %v2760, %v2783
  %v2801 = vmul.f32 %v2761, %v2783
  %v2802 = vmul.f32 %v2762, %v2783
  %v2803 = vmul.f32 %v2763, %v2783
  %v2804 = vmul.f32 %v2764, %v2788
  %v2805 = vmul.f32 %v2765, %v2788
  %v2806 = vmul.f32 %v2766, %v2788
  %v2807 = vmul.f32 %v2767, %v2788
  %v2808 = vmul.f32 %v2768, %v2793
  %v2809 = vmul.f32 %v2769, %v2793
  %v2810 = vmul.f32 %v2770, %v2793
  %v2811 = vmul.f32 %v2771, %v2793
  %v2812 = vmul.f32 %v2772, %v2798
  %v2813 = vmul.f32 %v2773, %v2798
  %v2814 = vmul.f32 %v2774, %v2798
  %v2815 = vmul.f32 %v2775, %v2798
  %v2816 = vadd.f32 %v2696, %v2800
  %v2817 = vadd.f32 %v2697, %v2801
  %v2818 = vadd.f32 %v2698, %v2802
  %v2819 = vadd.f32 %v2699, %v2803
  %v2820 = vadd.f32 %v2700, %v2804
  %v2821 = vadd.f32 %v2701, %v2805
  %v2822 = vadd.f32 %v2702, %v2806
  %v2823 = vadd.f32 %v2703, %v2807
  %v2824 = vadd.f32 %v2704, %v2808
  %v2825 = vadd.f32 %v2705, %v2809
  %v2826 = vadd.f32 %v2706, %v2810
  %v2827 = vadd.f32 %v2707, %v2811
  %v2828 = vadd.f32 %v2708, %v2812
  %v2829 = vadd.f32 %v2709, %v2813
  %v2830 = vadd.f32 %v2710, %v2814
  %v2831 = vadd.f32 %v2711, %v2815
  %2833 = vset.pattern.permute.xlu0 0
  %2834 = vperm.xlu0 %2833, %v1828
  %v2835 = vpop.permute.xlu0 %2834
  %2838 = vset.pattern.permute.xlu0 0
  %2839 = vperm.xlu0 %2838, %v1829
  %v2840 = vpop.permute.xlu0 %2839
  %2843 = vset.pattern.permute.xlu0 0
  %2844 = vperm.xlu0 %2843, %v1830
  %v2845 = vpop.permute.xlu0 %2844
  %2848 = vset.pattern.permute.xlu0 0
  %2849 = vperm.xlu0 %2848, %v1831
  %v2850 = vpop.permute.xlu0 %2849
  %v2852 = vadd.f32 %v2816, %v2835
  %v2853 = vadd.f32 %v2817, %v2835
  %v2854 = vadd.f32 %v2818, %v2835
  %v2855 = vadd.f32 %v2819, %v2835
  %v2856 = vadd.f32 %v2820, %v2840
  %v2857 = vadd.f32 %v2821, %v2840
  %v2858 = vadd.f32 %v2822, %v2840
  %v2859 = vadd.f32 %v2823, %v2840
  %v2860 = vadd.f32 %v2824, %v2845
  %v2861 = vadd.f32 %v2825, %v2845
  %v2862 = vadd.f32 %v2826, %v2845
  %v2863 = vadd.f32 %v2827, %v2845
  %v2864 = vadd.f32 %v2828, %v2850
  %v2865 = vadd.f32 %v2829, %v2850
  %v2866 = vadd.f32 %v2830, %v2850
  %v2867 = vadd.f32 %v2831, %v2850
  %v2868 = vld [vmem:[%s1 + $0xe0] sm:$0xff]
  %v2869 = vld [vmem:[%s1 + $0xe8] sm:$0xff]
  %v2870 = vld [vmem:[%s1 + $0xf0] sm:$0xff]
  %v2871 = vld [vmem:[%s1 + $0xf8] sm:$0xff]
  %v2872 = vld [vmem:[%s606 + $0x40] sm:$0xff]
  %v2873 = vld [vmem:[%s606 + $0x48] sm:$0xff]
  %v2874 = vld [vmem:[%s606 + $0x50] sm:$0xff]
  %v2875 = vld [vmem:[%s606 + $0x58] sm:$0xff]
  %2877 = vset.pattern.permute.xlu0 0
  %2878 = vperm.xlu0 %2877, %v2872
  %v2879 = vpop.permute.xlu0 %2878
  %2882 = vset.pattern.permute.xlu0 0
  %2883 = vperm.xlu0 %2882, %v2873
  %v2884 = vpop.permute.xlu0 %2883
  %2887 = vset.pattern.permute.xlu0 0
  %2888 = vperm.xlu0 %2887, %v2874
  %v2889 = vpop.permute.xlu0 %2888
  %2892 = vset.pattern.permute.xlu0 0
  %2893 = vperm.xlu0 %2892, %v2875
  %v2894 = vpop.permute.xlu0 %2893
  %v2896 = vmul.f32 %v491, %v2879
  %v2897 = vmul.f32 %v493, %v2879
  %v2898 = vmul.f32 %v584, %v2879
  %v2899 = vmul.f32 %v586, %v2879
  %v2900 = vmul.f32 %v495, %v2884
  %v2901 = vmul.f32 %v497, %v2884
  %v2902 = vmul.f32 %v588, %v2884
  %v2903 = vmul.f32 %v590, %v2884
  %v2904 = vmul.f32 %v501, %v2889
  %v2905 = vmul.f32 %v503, %v2889
  %v2906 = vmul.f32 %v594, %v2889
  %v2907 = vmul.f32 %v596, %v2889
  %v2908 = vmul.f32 %v505, %v2894
  %v2909 = vmul.f32 %v507, %v2894
  %v2910 = vmul.f32 %v598, %v2894
  %v2911 = vmul.f32 %v600, %v2894
  %2912 = vrot.lane.b32.xlu0 %v491, 17
  %v2913 = vpop.permute.xlu0 %2912
  %2914 = vrot.lane.b32.xlu0 %v495, 17
  %v2915 = vpop.permute.xlu0 %2914
  %2916 = vrot.lane.b32.xlu0 %v501, 17
  %v2917 = vpop.permute.xlu0 %2916
  %2918 = vrot.lane.b32.xlu0 %v505, 17
  %v2919 = vpop.permute.xlu0 %2918
  %2920 = vrot.lane.b32.xlu0 %v493, 17
  %v2921 = vpop.permute.xlu0 %2920
  %2922 = vrot.lane.b32.xlu0 %v497, 17
  %v2923 = vpop.permute.xlu0 %2922
  %2924 = vrot.lane.b32.xlu0 %v503, 17
  %v2925 = vpop.permute.xlu0 %2924
  %2926 = vrot.lane.b32.xlu0 %v507, 17
  %v2927 = vpop.permute.xlu0 %2926
  %2928 = vrot.lane.b32.xlu0 %v584, 17
  %v2929 = vpop.permute.xlu0 %2928
  %2930 = vrot.lane.b32.xlu0 %v588, 17
  %v2931 = vpop.permute.xlu0 %2930
  %2932 = vrot.lane.b32.xlu0 %v594, 17
  %v2933 = vpop.permute.xlu0 %2932
  %2934 = vrot.lane.b32.xlu0 %v598, 17
  %v2935 = vpop.permute.xlu0 %2934
  %2936 = vrot.lane.b32.xlu0 %v586, 17
  %v2937 = vpop.permute.xlu0 %2936
  %2938 = vrot.lane.b32.xlu0 %v590, 17
  %v2939 = vpop.permute.xlu0 %2938
  %2940 = vrot.lane.b32.xlu0 %v596, 17
  %v2941 = vpop.permute.xlu0 %2940
  %2942 = vrot.lane.b32.xlu0 %v600, 17
  %v2943 = vpop.permute.xlu0 %2942
  %v2944 = vsel %vm681, %v2929, %v2937
  %v2945 = vsel %vm681, %v2931, %v2939
  %v2946 = vsel %vm681, %v2933, %v2941
  %v2947 = vsel %vm681, %v2935, %v2943
  %v2948 = vsel %vm681, %v2921, %v2929
  %v2949 = vsel %vm681, %v2923, %v2931
  %v2950 = vsel %vm681, %v2925, %v2933
  %v2951 = vsel %vm681, %v2927, %v2935
  %v2952 = vsel %vm681, %v2913, %v2921
  %v2953 = vsel %vm681, %v2915, %v2923
  %v2954 = vsel %vm681, %v2917, %v2925
  %v2955 = vsel %vm681, %v2919, %v2927
  %v2956 = vsel %vm681, %v2937, %v2913
  %v2957 = vsel %vm681, %v2939, %v2915
  %v2958 = vsel %vm681, %v2941, %v2917
  %v2959 = vsel %vm681, %v2943, %v2919
  %v2960 = vmul.f32 %v2956, %v702
  %v2961 = vmul.f32 %v2952, %v706
  %v2962 = vmul.f32 %v2948, %v710
  %v2963 = vmul.f32 %v2944, %v714
  %v2964 = vmul.f32 %v2957, %v702
  %v2965 = vmul.f32 %v2953, %v706
  %v2966 = vmul.f32 %v2949, %v710
  %v2967 = vmul.f32 %v2945, %v714
  %v2968 = vmul.f32 %v2958, %v702
  %v2969 = vmul.f32 %v2954, %v706
  %v2970 = vmul.f32 %v2950, %v710
  %v2971 = vmul.f32 %v2946, %v714
  %v2972 = vmul.f32 %v2959, %v702
  %v2973 = vmul.f32 %v2955, %v706
  %v2974 = vmul.f32 %v2951, %v710
  %v2975 = vmul.f32 %v2947, %v714
  %v2976 = vld [vmem:[%s2 + $0x40] sm:$0xff]
  %v2977 = vld [vmem:[%s2 + $0x48] sm:$0xff]
  %v2978 = vld [vmem:[%s2 + $0x50] sm:$0xff]
  %v2979 = vld [vmem:[%s2 + $0x58] sm:$0xff]
  %2981 = vset.pattern.permute.xlu0 0
  %2982 = vperm.xlu0 %2981, %v2976
  %v2983 = vpop.permute.xlu0 %2982
  %2986 = vset.pattern.permute.xlu0 0
  %2987 = vperm.xlu0 %2986, %v2977
  %v2988 = vpop.permute.xlu0 %2987
  %2991 = vset.pattern.permute.xlu0 0
  %2992 = vperm.xlu0 %2991, %v2978
  %v2993 = vpop.permute.xlu0 %2992
  %2996 = vset.pattern.permute.xlu0 0
  %2997 = vperm.xlu0 %2996, %v2979
  %v2998 = vpop.permute.xlu0 %2997
  %v3000 = vmul.f32 %v2960, %v2983
  %v3001 = vmul.f32 %v2961, %v2983
  %v3002 = vmul.f32 %v2962, %v2983
  %v3003 = vmul.f32 %v2963, %v2983
  %v3004 = vmul.f32 %v2964, %v2988
  %v3005 = vmul.f32 %v2965, %v2988
  %v3006 = vmul.f32 %v2966, %v2988
  %v3007 = vmul.f32 %v2967, %v2988
  %v3008 = vmul.f32 %v2968, %v2993
  %v3009 = vmul.f32 %v2969, %v2993
  %v3010 = vmul.f32 %v2970, %v2993
  %v3011 = vmul.f32 %v2971, %v2993
  %v3012 = vmul.f32 %v2972, %v2998
  %v3013 = vmul.f32 %v2973, %v2998
  %v3014 = vmul.f32 %v2974, %v2998
  %v3015 = vmul.f32 %v2975, %v2998
  %v3016 = vadd.f32 %v2896, %v3000
  %v3017 = vadd.f32 %v2897, %v3001
  %v3018 = vadd.f32 %v2898, %v3002
  %v3019 = vadd.f32 %v2899, %v3003
  %v3020 = vadd.f32 %v2900, %v3004
  %v3021 = vadd.f32 %v2901, %v3005
  %v3022 = vadd.f32 %v2902, %v3006
  %v3023 = vadd.f32 %v2903, %v3007
  %v3024 = vadd.f32 %v2904, %v3008
  %v3025 = vadd.f32 %v2905, %v3009
  %v3026 = vadd.f32 %v2906, %v3010
  %v3027 = vadd.f32 %v2907, %v3011
  %v3028 = vadd.f32 %v2908, %v3012
  %v3029 = vadd.f32 %v2909, %v3013
  %v3030 = vadd.f32 %v2910, %v3014
  %v3031 = vadd.f32 %v2911, %v3015
  %3032 = vrot.lane.b32.xlu0 %v491, 16
  %v3033 = vpop.permute.xlu0 %3032
  %3034 = vrot.lane.b32.xlu0 %v495, 16
  %v3035 = vpop.permute.xlu0 %3034
  %3036 = vrot.lane.b32.xlu0 %v501, 16
  %v3037 = vpop.permute.xlu0 %3036
  %3038 = vrot.lane.b32.xlu0 %v505, 16
  %v3039 = vpop.permute.xlu0 %3038
  %3040 = vrot.lane.b32.xlu0 %v493, 16
  %v3041 = vpop.permute.xlu0 %3040
  %3042 = vrot.lane.b32.xlu0 %v497, 16
  %v3043 = vpop.permute.xlu0 %3042
  %3044 = vrot.lane.b32.xlu0 %v503, 16
  %v3045 = vpop.permute.xlu0 %3044
  %3046 = vrot.lane.b32.xlu0 %v507, 16
  %v3047 = vpop.permute.xlu0 %3046
  %3048 = vrot.lane.b32.xlu0 %v584, 16
  %v3049 = vpop.permute.xlu0 %3048
  %3050 = vrot.lane.b32.xlu0 %v588, 16
  %v3051 = vpop.permute.xlu0 %3050
  %3052 = vrot.lane.b32.xlu0 %v594, 16
  %v3053 = vpop.permute.xlu0 %3052
  %3054 = vrot.lane.b32.xlu0 %v598, 16
  %v3055 = vpop.permute.xlu0 %3054
  %3056 = vrot.lane.b32.xlu0 %v586, 16
  %v3057 = vpop.permute.xlu0 %3056
  %3058 = vrot.lane.b32.xlu0 %v590, 16
  %v3059 = vpop.permute.xlu0 %3058
  %3060 = vrot.lane.b32.xlu0 %v596, 16
  %v3061 = vpop.permute.xlu0 %3060
  %3062 = vrot.lane.b32.xlu0 %v600, 16
  %v3063 = vpop.permute.xlu0 %3062
  %v3064 = vsel %vm823, %v3049, %v3057
  %v3065 = vsel %vm823, %v3051, %v3059
  %v3066 = vsel %vm823, %v3053, %v3061
  %v3067 = vsel %vm823, %v3055, %v3063
  %v3068 = vsel %vm823, %v3041, %v3049
  %v3069 = vsel %vm823, %v3043, %v3051
  %v3070 = vsel %vm823, %v3045, %v3053
  %v3071 = vsel %vm823, %v3047, %v3055
  %v3072 = vsel %vm823, %v3033, %v3041
  %v3073 = vsel %vm823, %v3035, %v3043
  %v3074 = vsel %vm823, %v3037, %v3045
  %v3075 = vsel %vm823, %v3039, %v3047
  %v3076 = vsel %vm823, %v3057, %v3033
  %v3077 = vsel %vm823, %v3059, %v3035
  %v3078 = vsel %vm823, %v3061, %v3037
  %v3079 = vsel %vm823, %v3063, %v3039
  %v3080 = vmul.f32 %v3076, %v844
  %v3081 = vmul.f32 %v3072, %v848
  %v3082 = vmul.f32 %v3068, %v852
  %v3083 = vmul.f32 %v3064, %v856
  %v3084 = vmul.f32 %v3077, %v844
  %v3085 = vmul.f32 %v3073, %v848
  %v3086 = vmul.f32 %v3069, %v852
  %v3087 = vmul.f32 %v3065, %v856
  %v3088 = vmul.f32 %v3078, %v844
  %v3089 = vmul.f32 %v3074, %v848
  %v3090 = vmul.f32 %v3070, %v852
  %v3091 = vmul.f32 %v3066, %v856
  %v3092 = vmul.f32 %v3079, %v844
  %v3093 = vmul.f32 %v3075, %v848
  %v3094 = vmul.f32 %v3071, %v852
  %v3095 = vmul.f32 %v3067, %v856
  %v3096 = vld [vmem:[%s877 + $0x40] sm:$0xff]
  %v3097 = vld [vmem:[%s877 + $0x48] sm:$0xff]
  %v3098 = vld [vmem:[%s877 + $0x50] sm:$0xff]
  %v3099 = vld [vmem:[%s877 + $0x58] sm:$0xff]
  %3101 = vset.pattern.permute.xlu0 0
  %3102 = vperm.xlu0 %3101, %v3096
  %v3103 = vpop.permute.xlu0 %3102
  %3106 = vset.pattern.permute.xlu0 0
  %3107 = vperm.xlu0 %3106, %v3097
  %v3108 = vpop.permute.xlu0 %3107
  %3111 = vset.pattern.permute.xlu0 0
  %3112 = vperm.xlu0 %3111, %v3098
  %v3113 = vpop.permute.xlu0 %3112
  %3116 = vset.pattern.permute.xlu0 0
  %3117 = vperm.xlu0 %3116, %v3099
  %v3118 = vpop.permute.xlu0 %3117
  %v3120 = vmul.f32 %v3080, %v3103
  %v3121 = vmul.f32 %v3081, %v3103
  %v3122 = vmul.f32 %v3082, %v3103
  %v3123 = vmul.f32 %v3083, %v3103
  %v3124 = vmul.f32 %v3084, %v3108
  %v3125 = vmul.f32 %v3085, %v3108
  %v3126 = vmul.f32 %v3086, %v3108
  %v3127 = vmul.f32 %v3087, %v3108
  %v3128 = vmul.f32 %v3088, %v3113
  %v3129 = vmul.f32 %v3089, %v3113
  %v3130 = vmul.f32 %v3090, %v3113
  %v3131 = vmul.f32 %v3091, %v3113
  %v3132 = vmul.f32 %v3092, %v3118
  %v3133 = vmul.f32 %v3093, %v3118
  %v3134 = vmul.f32 %v3094, %v3118
  %v3135 = vmul.f32 %v3095, %v3118
  %v3136 = vadd.f32 %v3016, %v3120
  %v3137 = vadd.f32 %v3017, %v3121
  %v3138 = vadd.f32 %v3018, %v3122
  %v3139 = vadd.f32 %v3019, %v3123
  %v3140 = vadd.f32 %v3020, %v3124
  %v3141 = vadd.f32 %v3021, %v3125
  %v3142 = vadd.f32 %v3022, %v3126
  %v3143 = vadd.f32 %v3023, %v3127
  %v3144 = vadd.f32 %v3024, %v3128
  %v3145 = vadd.f32 %v3025, %v3129
  %v3146 = vadd.f32 %v3026, %v3130
  %v3147 = vadd.f32 %v3027, %v3131
  %v3148 = vadd.f32 %v3028, %v3132
  %v3149 = vadd.f32 %v3029, %v3133
  %v3150 = vadd.f32 %v3030, %v3134
  %v3151 = vadd.f32 %v3031, %v3135
  %3152 = vrot.lane.b32.xlu0 %v491, 15
  %v3153 = vpop.permute.xlu0 %3152
  %3154 = vrot.lane.b32.xlu0 %v495, 15
  %v3155 = vpop.permute.xlu0 %3154
  %3156 = vrot.lane.b32.xlu0 %v501, 15
  %v3157 = vpop.permute.xlu0 %3156
  %3158 = vrot.lane.b32.xlu0 %v505, 15
  %v3159 = vpop.permute.xlu0 %3158
  %3160 = vrot.lane.b32.xlu0 %v493, 15
  %v3161 = vpop.permute.xlu0 %3160
  %3162 = vrot.lane.b32.xlu0 %v497, 15
  %v3163 = vpop.permute.xlu0 %3162
  %3164 = vrot.lane.b32.xlu0 %v503, 15
  %v3165 = vpop.permute.xlu0 %3164
  %3166 = vrot.lane.b32.xlu0 %v507, 15
  %v3167 = vpop.permute.xlu0 %3166
  %3168 = vrot.lane.b32.xlu0 %v584, 15
  %v3169 = vpop.permute.xlu0 %3168
  %3170 = vrot.lane.b32.xlu0 %v588, 15
  %v3171 = vpop.permute.xlu0 %3170
  %3172 = vrot.lane.b32.xlu0 %v594, 15
  %v3173 = vpop.permute.xlu0 %3172
  %3174 = vrot.lane.b32.xlu0 %v598, 15
  %v3175 = vpop.permute.xlu0 %3174
  %3176 = vrot.lane.b32.xlu0 %v586, 15
  %v3177 = vpop.permute.xlu0 %3176
  %3178 = vrot.lane.b32.xlu0 %v590, 15
  %v3179 = vpop.permute.xlu0 %3178
  %3180 = vrot.lane.b32.xlu0 %v596, 15
  %v3181 = vpop.permute.xlu0 %3180
  %3182 = vrot.lane.b32.xlu0 %v600, 15
  %v3183 = vpop.permute.xlu0 %3182
  %v3184 = vsel %vm966, %v3169, %v3177
  %v3185 = vsel %vm966, %v3171, %v3179
  %v3186 = vsel %vm966, %v3173, %v3181
  %v3187 = vsel %vm966, %v3175, %v3183
  %v3188 = vsel %vm966, %v3161, %v3169
  %v3189 = vsel %vm966, %v3163, %v3171
  %v3190 = vsel %vm966, %v3165, %v3173
  %v3191 = vsel %vm966, %v3167, %v3175
  %v3192 = vsel %vm966, %v3153, %v3161
  %v3193 = vsel %vm966, %v3155, %v3163
  %v3194 = vsel %vm966, %v3157, %v3165
  %v3195 = vsel %vm966, %v3159, %v3167
  %v3196 = vsel %vm966, %v3177, %v3153
  %v3197 = vsel %vm966, %v3179, %v3155
  %v3198 = vsel %vm966, %v3181, %v3157
  %v3199 = vsel %vm966, %v3183, %v3159
  %v3200 = vmul.f32 %v3196, %v987
  %v3201 = vmul.f32 %v3192, %v991
  %v3202 = vmul.f32 %v3188, %v995
  %v3203 = vmul.f32 %v3184, %v999
  %v3204 = vmul.f32 %v3197, %v987
  %v3205 = vmul.f32 %v3193, %v991
  %v3206 = vmul.f32 %v3189, %v995
  %v3207 = vmul.f32 %v3185, %v999
  %v3208 = vmul.f32 %v3198, %v987
  %v3209 = vmul.f32 %v3194, %v991
  %v3210 = vmul.f32 %v3190, %v995
  %v3211 = vmul.f32 %v3186, %v999
  %v3212 = vmul.f32 %v3199, %v987
  %v3213 = vmul.f32 %v3195, %v991
  %v3214 = vmul.f32 %v3191, %v995
  %v3215 = vmul.f32 %v3187, %v999
  %v3216 = vld [vmem:[%s1020 + $0x40] sm:$0xff]
  %v3217 = vld [vmem:[%s1020 + $0x48] sm:$0xff]
  %v3218 = vld [vmem:[%s1020 + $0x50] sm:$0xff]
  %v3219 = vld [vmem:[%s1020 + $0x58] sm:$0xff]
  %3221 = vset.pattern.permute.xlu0 0
  %3222 = vperm.xlu0 %3221, %v3216
  %v3223 = vpop.permute.xlu0 %3222
  %3226 = vset.pattern.permute.xlu0 0
  %3227 = vperm.xlu0 %3226, %v3217
  %v3228 = vpop.permute.xlu0 %3227
  %3231 = vset.pattern.permute.xlu0 0
  %3232 = vperm.xlu0 %3231, %v3218
  %v3233 = vpop.permute.xlu0 %3232
  %3236 = vset.pattern.permute.xlu0 0
  %3237 = vperm.xlu0 %3236, %v3219
  %v3238 = vpop.permute.xlu0 %3237
  %v3240 = vmul.f32 %v3200, %v3223
  %v3241 = vmul.f32 %v3201, %v3223
  %v3242 = vmul.f32 %v3202, %v3223
  %v3243 = vmul.f32 %v3203, %v3223
  %v3244 = vmul.f32 %v3204, %v3228
  %v3245 = vmul.f32 %v3205, %v3228
  %v3246 = vmul.f32 %v3206, %v3228
  %v3247 = vmul.f32 %v3207, %v3228
  %v3248 = vmul.f32 %v3208, %v3233
  %v3249 = vmul.f32 %v3209, %v3233
  %v3250 = vmul.f32 %v3210, %v3233
  %v3251 = vmul.f32 %v3211, %v3233
  %v3252 = vmul.f32 %v3212, %v3238
  %v3253 = vmul.f32 %v3213, %v3238
  %v3254 = vmul.f32 %v3214, %v3238
  %v3255 = vmul.f32 %v3215, %v3238
  %v3256 = vadd.f32 %v3136, %v3240
  %v3257 = vadd.f32 %v3137, %v3241
  %v3258 = vadd.f32 %v3138, %v3242
  %v3259 = vadd.f32 %v3139, %v3243
  %v3260 = vadd.f32 %v3140, %v3244
  %v3261 = vadd.f32 %v3141, %v3245
  %v3262 = vadd.f32 %v3142, %v3246
  %v3263 = vadd.f32 %v3143, %v3247
  %v3264 = vadd.f32 %v3144, %v3248
  %v3265 = vadd.f32 %v3145, %v3249
  %v3266 = vadd.f32 %v3146, %v3250
  %v3267 = vadd.f32 %v3147, %v3251
  %v3268 = vadd.f32 %v3148, %v3252
  %v3269 = vadd.f32 %v3149, %v3253
  %v3270 = vadd.f32 %v3150, %v3254
  %v3271 = vadd.f32 %v3151, %v3255
  %3272 = vrot.lane.b32.xlu0 %v491, 1
  %v3273 = vpop.permute.xlu0 %3272
  %3274 = vrot.lane.b32.xlu0 %v495, 1
  %v3275 = vpop.permute.xlu0 %3274
  %3276 = vrot.lane.b32.xlu0 %v501, 1
  %v3277 = vpop.permute.xlu0 %3276
  %3278 = vrot.lane.b32.xlu0 %v505, 1
  %v3279 = vpop.permute.xlu0 %3278
  %3280 = vrot.lane.b32.xlu0 %v493, 1
  %v3281 = vpop.permute.xlu0 %3280
  %3282 = vrot.lane.b32.xlu0 %v497, 1
  %v3283 = vpop.permute.xlu0 %3282
  %3284 = vrot.lane.b32.xlu0 %v503, 1
  %v3285 = vpop.permute.xlu0 %3284
  %3286 = vrot.lane.b32.xlu0 %v507, 1
  %v3287 = vpop.permute.xlu0 %3286
  %3288 = vrot.lane.b32.xlu0 %v584, 1
  %v3289 = vpop.permute.xlu0 %3288
  %3290 = vrot.lane.b32.xlu0 %v588, 1
  %v3291 = vpop.permute.xlu0 %3290
  %3292 = vrot.lane.b32.xlu0 %v594, 1
  %v3293 = vpop.permute.xlu0 %3292
  %3294 = vrot.lane.b32.xlu0 %v598, 1
  %v3295 = vpop.permute.xlu0 %3294
  %3296 = vrot.lane.b32.xlu0 %v586, 1
  %v3297 = vpop.permute.xlu0 %3296
  %3298 = vrot.lane.b32.xlu0 %v590, 1
  %v3299 = vpop.permute.xlu0 %3298
  %3300 = vrot.lane.b32.xlu0 %v596, 1
  %v3301 = vpop.permute.xlu0 %3300
  %3302 = vrot.lane.b32.xlu0 %v600, 1
  %v3303 = vpop.permute.xlu0 %3302
  %v3304 = vsel %vm1109, %v3289, %v3297
  %v3305 = vsel %vm1109, %v3291, %v3299
  %v3306 = vsel %vm1109, %v3293, %v3301
  %v3307 = vsel %vm1109, %v3295, %v3303
  %v3308 = vsel %vm1109, %v3281, %v3289
  %v3309 = vsel %vm1109, %v3283, %v3291
  %v3310 = vsel %vm1109, %v3285, %v3293
  %v3311 = vsel %vm1109, %v3287, %v3295
  %v3312 = vsel %vm1109, %v3273, %v3281
  %v3313 = vsel %vm1109, %v3275, %v3283
  %v3314 = vsel %vm1109, %v3277, %v3285
  %v3315 = vsel %vm1109, %v3279, %v3287
  %v3316 = vsel %vm1109, %v3297, %v3273
  %v3317 = vsel %vm1109, %v3299, %v3275
  %v3318 = vsel %vm1109, %v3301, %v3277
  %v3319 = vsel %vm1109, %v3303, %v3279
  %v3320 = vmul.f32 %v3316, %v1130
  %v3321 = vmul.f32 %v3312, %v1134
  %v3322 = vmul.f32 %v3308, %v1138
  %v3323 = vmul.f32 %v3304, %v1142
  %v3324 = vmul.f32 %v3317, %v1130
  %v3325 = vmul.f32 %v3313, %v1134
  %v3326 = vmul.f32 %v3309, %v1138
  %v3327 = vmul.f32 %v3305, %v1142
  %v3328 = vmul.f32 %v3318, %v1130
  %v3329 = vmul.f32 %v3314, %v1134
  %v3330 = vmul.f32 %v3310, %v1138
  %v3331 = vmul.f32 %v3306, %v1142
  %v3332 = vmul.f32 %v3319, %v1130
  %v3333 = vmul.f32 %v3315, %v1134
  %v3334 = vmul.f32 %v3311, %v1138
  %v3335 = vmul.f32 %v3307, %v1142
  %v3336 = vld [vmem:[%s1163 + $0x40] sm:$0xff]
  %v3337 = vld [vmem:[%s1163 + $0x48] sm:$0xff]
  %v3338 = vld [vmem:[%s1163 + $0x50] sm:$0xff]
  %v3339 = vld [vmem:[%s1163 + $0x58] sm:$0xff]
  %3341 = vset.pattern.permute.xlu0 0
  %3342 = vperm.xlu0 %3341, %v3336
  %v3343 = vpop.permute.xlu0 %3342
  %3346 = vset.pattern.permute.xlu0 0
  %3347 = vperm.xlu0 %3346, %v3337
  %v3348 = vpop.permute.xlu0 %3347
  %3351 = vset.pattern.permute.xlu0 0
  %3352 = vperm.xlu0 %3351, %v3338
  %v3353 = vpop.permute.xlu0 %3352
  %3356 = vset.pattern.permute.xlu0 0
  %3357 = vperm.xlu0 %3356, %v3339
  %v3358 = vpop.permute.xlu0 %3357
  %v3360 = vmul.f32 %v3320, %v3343
  %v3361 = vmul.f32 %v3321, %v3343
  %v3362 = vmul.f32 %v3322, %v3343
  %v3363 = vmul.f32 %v3323, %v3343
  %v3364 = vmul.f32 %v3324, %v3348
  %v3365 = vmul.f32 %v3325, %v3348
  %v3366 = vmul.f32 %v3326, %v3348
  %v3367 = vmul.f32 %v3327, %v3348
  %v3368 = vmul.f32 %v3328, %v3353
  %v3369 = vmul.f32 %v3329, %v3353
  %v3370 = vmul.f32 %v3330, %v3353
  %v3371 = vmul.f32 %v3331, %v3353
  %v3372 = vmul.f32 %v3332, %v3358
  %v3373 = vmul.f32 %v3333, %v3358
  %v3374 = vmul.f32 %v3334, %v3358
  %v3375 = vmul.f32 %v3335, %v3358
  %v3376 = vadd.f32 %v3256, %v3360
  %v3377 = vadd.f32 %v3257, %v3361
  %v3378 = vadd.f32 %v3258, %v3362
  %v3379 = vadd.f32 %v3259, %v3363
  %v3380 = vadd.f32 %v3260, %v3364
  %v3381 = vadd.f32 %v3261, %v3365
  %v3382 = vadd.f32 %v3262, %v3366
  %v3383 = vadd.f32 %v3263, %v3367
  %v3384 = vadd.f32 %v3264, %v3368
  %v3385 = vadd.f32 %v3265, %v3369
  %v3386 = vadd.f32 %v3266, %v3370
  %v3387 = vadd.f32 %v3267, %v3371
  %v3388 = vadd.f32 %v3268, %v3372
  %v3389 = vadd.f32 %v3269, %v3373
  %v3390 = vadd.f32 %v3270, %v3374
  %v3391 = vadd.f32 %v3271, %v3375
  %3392 = vrot.lane.b32.xlu0 %v491, 127
  %v3393 = vpop.permute.xlu0 %3392
  %3394 = vrot.lane.b32.xlu0 %v495, 127
  %v3395 = vpop.permute.xlu0 %3394
  %3396 = vrot.lane.b32.xlu0 %v501, 127
  %v3397 = vpop.permute.xlu0 %3396
  %3398 = vrot.lane.b32.xlu0 %v505, 127
  %v3399 = vpop.permute.xlu0 %3398
  %3400 = vrot.lane.b32.xlu0 %v493, 127
  %v3401 = vpop.permute.xlu0 %3400
  %3402 = vrot.lane.b32.xlu0 %v497, 127
  %v3403 = vpop.permute.xlu0 %3402
  %3404 = vrot.lane.b32.xlu0 %v503, 127
  %v3405 = vpop.permute.xlu0 %3404
  %3406 = vrot.lane.b32.xlu0 %v507, 127
  %v3407 = vpop.permute.xlu0 %3406
  %3408 = vrot.lane.b32.xlu0 %v584, 127
  %v3409 = vpop.permute.xlu0 %3408
  %3410 = vrot.lane.b32.xlu0 %v588, 127
  %v3411 = vpop.permute.xlu0 %3410
  %3412 = vrot.lane.b32.xlu0 %v594, 127
  %v3413 = vpop.permute.xlu0 %3412
  %3414 = vrot.lane.b32.xlu0 %v598, 127
  %v3415 = vpop.permute.xlu0 %3414
  %3416 = vrot.lane.b32.xlu0 %v586, 127
  %v3417 = vpop.permute.xlu0 %3416
  %3418 = vrot.lane.b32.xlu0 %v590, 127
  %v3419 = vpop.permute.xlu0 %3418
  %3420 = vrot.lane.b32.xlu0 %v596, 127
  %v3421 = vpop.permute.xlu0 %3420
  %3422 = vrot.lane.b32.xlu0 %v600, 127
  %v3423 = vpop.permute.xlu0 %3422
  %v3424 = vsel %vm1252, %v3409, %v3417
  %v3425 = vsel %vm1252, %v3411, %v3419
  %v3426 = vsel %vm1252, %v3413, %v3421
  %v3427 = vsel %vm1252, %v3415, %v3423
  %v3428 = vsel %vm1252, %v3401, %v3409
  %v3429 = vsel %vm1252, %v3403, %v3411
  %v3430 = vsel %vm1252, %v3405, %v3413
  %v3431 = vsel %vm1252, %v3407, %v3415
  %v3432 = vsel %vm1252, %v3393, %v3401
  %v3433 = vsel %vm1252, %v3395, %v3403
  %v3434 = vsel %vm1252, %v3397, %v3405
  %v3435 = vsel %vm1252, %v3399, %v3407
  %v3436 = vsel %vm1252, %v3417, %v3393
  %v3437 = vsel %vm1252, %v3419, %v3395
  %v3438 = vsel %vm1252, %v3421, %v3397
  %v3439 = vsel %vm1252, %v3423, %v3399
  %v3440 = vmul.f32 %v3432, %v1273
  %v3441 = vmul.f32 %v3428, %v1277
  %v3442 = vmul.f32 %v3424, %v1281
  %v3443 = vmul.f32 %v3436, %v1285
  %v3444 = vmul.f32 %v3433, %v1273
  %v3445 = vmul.f32 %v3429, %v1277
  %v3446 = vmul.f32 %v3425, %v1281
  %v3447 = vmul.f32 %v3437, %v1285
  %v3448 = vmul.f32 %v3434, %v1273
  %v3449 = vmul.f32 %v3430, %v1277
  %v3450 = vmul.f32 %v3426, %v1281
  %v3451 = vmul.f32 %v3438, %v1285
  %v3452 = vmul.f32 %v3435, %v1273
  %v3453 = vmul.f32 %v3431, %v1277
  %v3454 = vmul.f32 %v3427, %v1281
  %v3455 = vmul.f32 %v3439, %v1285
  %v3456 = vld [vmem:[%s1306 + $0x40] sm:$0xff]
  %v3457 = vld [vmem:[%s1306 + $0x48] sm:$0xff]
  %v3458 = vld [vmem:[%s1306 + $0x50] sm:$0xff]
  %v3459 = vld [vmem:[%s1306 + $0x58] sm:$0xff]
  %3461 = vset.pattern.permute.xlu0 0
  %3462 = vperm.xlu0 %3461, %v3456
  %v3463 = vpop.permute.xlu0 %3462
  %3466 = vset.pattern.permute.xlu0 0
  %3467 = vperm.xlu0 %3466, %v3457
  %v3468 = vpop.permute.xlu0 %3467
  %3471 = vset.pattern.permute.xlu0 0
  %3472 = vperm.xlu0 %3471, %v3458
  %v3473 = vpop.permute.xlu0 %3472
  %3476 = vset.pattern.permute.xlu0 0
  %3477 = vperm.xlu0 %3476, %v3459
  %v3478 = vpop.permute.xlu0 %3477
  %v3480 = vmul.f32 %v3440, %v3463
  %v3481 = vmul.f32 %v3441, %v3463
  %v3482 = vmul.f32 %v3442, %v3463
  %v3483 = vmul.f32 %v3443, %v3463
  %v3484 = vmul.f32 %v3444, %v3468
  %v3485 = vmul.f32 %v3445, %v3468
  %v3486 = vmul.f32 %v3446, %v3468
  %v3487 = vmul.f32 %v3447, %v3468
  %v3488 = vmul.f32 %v3448, %v3473
  %v3489 = vmul.f32 %v3449, %v3473
  %v3490 = vmul.f32 %v3450, %v3473
  %v3491 = vmul.f32 %v3451, %v3473
  %v3492 = vmul.f32 %v3452, %v3478
  %v3493 = vmul.f32 %v3453, %v3478
  %v3494 = vmul.f32 %v3454, %v3478
  %v3495 = vmul.f32 %v3455, %v3478
  %v3496 = vadd.f32 %v3376, %v3480
  %v3497 = vadd.f32 %v3377, %v3481
  %v3498 = vadd.f32 %v3378, %v3482
  %v3499 = vadd.f32 %v3379, %v3483
  %v3500 = vadd.f32 %v3380, %v3484
  %v3501 = vadd.f32 %v3381, %v3485
  %v3502 = vadd.f32 %v3382, %v3486
  %v3503 = vadd.f32 %v3383, %v3487
  %v3504 = vadd.f32 %v3384, %v3488
  %v3505 = vadd.f32 %v3385, %v3489
  %v3506 = vadd.f32 %v3386, %v3490
  %v3507 = vadd.f32 %v3387, %v3491
  %v3508 = vadd.f32 %v3388, %v3492
  %v3509 = vadd.f32 %v3389, %v3493
  %v3510 = vadd.f32 %v3390, %v3494
  %v3511 = vadd.f32 %v3391, %v3495
  %3512 = vrot.lane.b32.xlu0 %v491, 113
  %v3513 = vpop.permute.xlu0 %3512
  %3514 = vrot.lane.b32.xlu0 %v495, 113
  %v3515 = vpop.permute.xlu0 %3514
  %3516 = vrot.lane.b32.xlu0 %v501, 113
  %v3517 = vpop.permute.xlu0 %3516
  %3518 = vrot.lane.b32.xlu0 %v505, 113
  %v3519 = vpop.permute.xlu0 %3518
  %3520 = vrot.lane.b32.xlu0 %v493, 113
  %v3521 = vpop.permute.xlu0 %3520
  %3522 = vrot.lane.b32.xlu0 %v497, 113
  %v3523 = vpop.permute.xlu0 %3522
  %3524 = vrot.lane.b32.xlu0 %v503, 113
  %v3525 = vpop.permute.xlu0 %3524
  %3526 = vrot.lane.b32.xlu0 %v507, 113
  %v3527 = vpop.permute.xlu0 %3526
  %3528 = vrot.lane.b32.xlu0 %v584, 113
  %v3529 = vpop.permute.xlu0 %3528
  %3530 = vrot.lane.b32.xlu0 %v588, 113
  %v3531 = vpop.permute.xlu0 %3530
  %3532 = vrot.lane.b32.xlu0 %v594, 113
  %v3533 = vpop.permute.xlu0 %3532
  %3534 = vrot.lane.b32.xlu0 %v598, 113
  %v3535 = vpop.permute.xlu0 %3534
  %3536 = vrot.lane.b32.xlu0 %v586, 113
  %v3537 = vpop.permute.xlu0 %3536
  %3538 = vrot.lane.b32.xlu0 %v590, 113
  %v3539 = vpop.permute.xlu0 %3538
  %3540 = vrot.lane.b32.xlu0 %v596, 113
  %v3541 = vpop.permute.xlu0 %3540
  %3542 = vrot.lane.b32.xlu0 %v600, 113
  %v3543 = vpop.permute.xlu0 %3542
  %v3544 = vsel %vm1395, %v3529, %v3537
  %v3545 = vsel %vm1395, %v3531, %v3539
  %v3546 = vsel %vm1395, %v3533, %v3541
  %v3547 = vsel %vm1395, %v3535, %v3543
  %v3548 = vsel %vm1395, %v3521, %v3529
  %v3549 = vsel %vm1395, %v3523, %v3531
  %v3550 = vsel %vm1395, %v3525, %v3533
  %v3551 = vsel %vm1395, %v3527, %v3535
  %v3552 = vsel %vm1395, %v3513, %v3521
  %v3553 = vsel %vm1395, %v3515, %v3523
  %v3554 = vsel %vm1395, %v3517, %v3525
  %v3555 = vsel %vm1395, %v3519, %v3527
  %v3556 = vsel %vm1395, %v3537, %v3513
  %v3557 = vsel %vm1395, %v3539, %v3515
  %v3558 = vsel %vm1395, %v3541, %v3517
  %v3559 = vsel %vm1395, %v3543, %v3519
  %v3560 = vmul.f32 %v3552, %v1416
  %v3561 = vmul.f32 %v3548, %v1420
  %v3562 = vmul.f32 %v3544, %v1424
  %v3563 = vmul.f32 %v3556, %v1428
  %v3564 = vmul.f32 %v3553, %v1416
  %v3565 = vmul.f32 %v3549, %v1420
  %v3566 = vmul.f32 %v3545, %v1424
  %v3567 = vmul.f32 %v3557, %v1428
  %v3568 = vmul.f32 %v3554, %v1416
  %v3569 = vmul.f32 %v3550, %v1420
  %v3570 = vmul.f32 %v3546, %v1424
  %v3571 = vmul.f32 %v3558, %v1428
  %v3572 = vmul.f32 %v3555, %v1416
  %v3573 = vmul.f32 %v3551, %v1420
  %v3574 = vmul.f32 %v3547, %v1424
  %v3575 = vmul.f32 %v3559, %v1428
  %v3576 = vld [vmem:[%s1449 + $0x40] sm:$0xff]
  %v3577 = vld [vmem:[%s1449 + $0x48] sm:$0xff]
  %v3578 = vld [vmem:[%s1449 + $0x50] sm:$0xff]
  %v3579 = vld [vmem:[%s1449 + $0x58] sm:$0xff]
  %3581 = vset.pattern.permute.xlu0 0
  %3582 = vperm.xlu0 %3581, %v3576
  %v3583 = vpop.permute.xlu0 %3582
  %3586 = vset.pattern.permute.xlu0 0
  %3587 = vperm.xlu0 %3586, %v3577
  %v3588 = vpop.permute.xlu0 %3587
  %3591 = vset.pattern.permute.xlu0 0
  %3592 = vperm.xlu0 %3591, %v3578
  %v3593 = vpop.permute.xlu0 %3592
  %3596 = vset.pattern.permute.xlu0 0
  %3597 = vperm.xlu0 %3596, %v3579
  %v3598 = vpop.permute.xlu0 %3597
  %v3600 = vmul.f32 %v3560, %v3583
  %v3601 = vmul.f32 %v3561, %v3583
  %v3602 = vmul.f32 %v3562, %v3583
  %v3603 = vmul.f32 %v3563, %v3583
  %v3604 = vmul.f32 %v3564, %v3588
  %v3605 = vmul.f32 %v3565, %v3588
  %v3606 = vmul.f32 %v3566, %v3588
  %v3607 = vmul.f32 %v3567, %v3588
  %v3608 = vmul.f32 %v3568, %v3593
  %v3609 = vmul.f32 %v3569, %v3593
  %v3610 = vmul.f32 %v3570, %v3593
  %v3611 = vmul.f32 %v3571, %v3593
  %v3612 = vmul.f32 %v3572, %v3598
  %v3613 = vmul.f32 %v3573, %v3598
  %v3614 = vmul.f32 %v3574, %v3598
  %v3615 = vmul.f32 %v3575, %v3598
  %v3616 = vadd.f32 %v3496, %v3600
  %v3617 = vadd.f32 %v3497, %v3601
  %v3618 = vadd.f32 %v3498, %v3602
  %v3619 = vadd.f32 %v3499, %v3603
  %v3620 = vadd.f32 %v3500, %v3604
  %v3621 = vadd.f32 %v3501, %v3605
  %v3622 = vadd.f32 %v3502, %v3606
  %v3623 = vadd.f32 %v3503, %v3607
  %v3624 = vadd.f32 %v3504, %v3608
  %v3625 = vadd.f32 %v3505, %v3609
  %v3626 = vadd.f32 %v3506, %v3610
  %v3627 = vadd.f32 %v3507, %v3611
  %v3628 = vadd.f32 %v3508, %v3612
  %v3629 = vadd.f32 %v3509, %v3613
  %v3630 = vadd.f32 %v3510, %v3614
  %v3631 = vadd.f32 %v3511, %v3615
  %3632 = vrot.lane.b32.xlu0 %v491, 112
  %v3633 = vpop.permute.xlu0 %3632
  %3634 = vrot.lane.b32.xlu0 %v495, 112
  %v3635 = vpop.permute.xlu0 %3634
  %3636 = vrot.lane.b32.xlu0 %v501, 112
  %v3637 = vpop.permute.xlu0 %3636
  %3638 = vrot.lane.b32.xlu0 %v505, 112
  %v3639 = vpop.permute.xlu0 %3638
  %3640 = vrot.lane.b32.xlu0 %v493, 112
  %v3641 = vpop.permute.xlu0 %3640
  %3642 = vrot.lane.b32.xlu0 %v497, 112
  %v3643 = vpop.permute.xlu0 %3642
  %3644 = vrot.lane.b32.xlu0 %v503, 112
  %v3645 = vpop.permute.xlu0 %3644
  %3646 = vrot.lane.b32.xlu0 %v507, 112
  %v3647 = vpop.permute.xlu0 %3646
  %3648 = vrot.lane.b32.xlu0 %v584, 112
  %v3649 = vpop.permute.xlu0 %3648
  %3650 = vrot.lane.b32.xlu0 %v588, 112
  %v3651 = vpop.permute.xlu0 %3650
  %3652 = vrot.lane.b32.xlu0 %v594, 112
  %v3653 = vpop.permute.xlu0 %3652
  %3654 = vrot.lane.b32.xlu0 %v598, 112
  %v3655 = vpop.permute.xlu0 %3654
  %3656 = vrot.lane.b32.xlu0 %v586, 112
  %v3657 = vpop.permute.xlu0 %3656
  %3658 = vrot.lane.b32.xlu0 %v590, 112
  %v3659 = vpop.permute.xlu0 %3658
  %3660 = vrot.lane.b32.xlu0 %v596, 112
  %v3661 = vpop.permute.xlu0 %3660
  %3662 = vrot.lane.b32.xlu0 %v600, 112
  %v3663 = vpop.permute.xlu0 %3662
  %v3664 = vsel %vm1538, %v3649, %v3657
  %v3665 = vsel %vm1538, %v3651, %v3659
  %v3666 = vsel %vm1538, %v3653, %v3661
  %v3667 = vsel %vm1538, %v3655, %v3663
  %v3668 = vsel %vm1538, %v3641, %v3649
  %v3669 = vsel %vm1538, %v3643, %v3651
  %v3670 = vsel %vm1538, %v3645, %v3653
  %v3671 = vsel %vm1538, %v3647, %v3655
  %v3672 = vsel %vm1538, %v3633, %v3641
  %v3673 = vsel %vm1538, %v3635, %v3643
  %v3674 = vsel %vm1538, %v3637, %v3645
  %v3675 = vsel %vm1538, %v3639, %v3647
  %v3676 = vsel %vm1538, %v3657, %v3633
  %v3677 = vsel %vm1538, %v3659, %v3635
  %v3678 = vsel %vm1538, %v3661, %v3637
  %v3679 = vsel %vm1538, %v3663, %v3639
  %v3680 = vmul.f32 %v3672, %v1559
  %v3681 = vmul.f32 %v3668, %v1563
  %v3682 = vmul.f32 %v3664, %v1567
  %v3683 = vmul.f32 %v3676, %v1571
  %v3684 = vmul.f32 %v3673, %v1559
  %v3685 = vmul.f32 %v3669, %v1563
  %v3686 = vmul.f32 %v3665, %v1567
  %v3687 = vmul.f32 %v3677, %v1571
  %v3688 = vmul.f32 %v3674, %v1559
  %v3689 = vmul.f32 %v3670, %v1563
  %v3690 = vmul.f32 %v3666, %v1567
  %v3691 = vmul.f32 %v3678, %v1571
  %v3692 = vmul.f32 %v3675, %v1559
  %v3693 = vmul.f32 %v3671, %v1563
  %v3694 = vmul.f32 %v3667, %v1567
  %v3695 = vmul.f32 %v3679, %v1571
  %v3696 = vld [vmem:[%s1592 + $0x40] sm:$0xff]
  %v3697 = vld [vmem:[%s1592 + $0x48] sm:$0xff]
  %v3698 = vld [vmem:[%s1592 + $0x50] sm:$0xff]
  %v3699 = vld [vmem:[%s1592 + $0x58] sm:$0xff]
  %3701 = vset.pattern.permute.xlu0 0
  %3702 = vperm.xlu0 %3701, %v3696
  %v3703 = vpop.permute.xlu0 %3702
  %3706 = vset.pattern.permute.xlu0 0
  %3707 = vperm.xlu0 %3706, %v3697
  %v3708 = vpop.permute.xlu0 %3707
  %3711 = vset.pattern.permute.xlu0 0
  %3712 = vperm.xlu0 %3711, %v3698
  %v3713 = vpop.permute.xlu0 %3712
  %3716 = vset.pattern.permute.xlu0 0
  %3717 = vperm.xlu0 %3716, %v3699
  %v3718 = vpop.permute.xlu0 %3717
  %v3720 = vmul.f32 %v3680, %v3703
  %v3721 = vmul.f32 %v3681, %v3703
  %v3722 = vmul.f32 %v3682, %v3703
  %v3723 = vmul.f32 %v3683, %v3703
  %v3724 = vmul.f32 %v3684, %v3708
  %v3725 = vmul.f32 %v3685, %v3708
  %v3726 = vmul.f32 %v3686, %v3708
  %v3727 = vmul.f32 %v3687, %v3708
  %v3728 = vmul.f32 %v3688, %v3713
  %v3729 = vmul.f32 %v3689, %v3713
  %v3730 = vmul.f32 %v3690, %v3713
  %v3731 = vmul.f32 %v3691, %v3713
  %v3732 = vmul.f32 %v3692, %v3718
  %v3733 = vmul.f32 %v3693, %v3718
  %v3734 = vmul.f32 %v3694, %v3718
  %v3735 = vmul.f32 %v3695, %v3718
  %v3736 = vadd.f32 %v3616, %v3720
  %v3737 = vadd.f32 %v3617, %v3721
  %v3738 = vadd.f32 %v3618, %v3722
  %v3739 = vadd.f32 %v3619, %v3723
  %v3740 = vadd.f32 %v3620, %v3724
  %v3741 = vadd.f32 %v3621, %v3725
  %v3742 = vadd.f32 %v3622, %v3726
  %v3743 = vadd.f32 %v3623, %v3727
  %v3744 = vadd.f32 %v3624, %v3728
  %v3745 = vadd.f32 %v3625, %v3729
  %v3746 = vadd.f32 %v3626, %v3730
  %v3747 = vadd.f32 %v3627, %v3731
  %v3748 = vadd.f32 %v3628, %v3732
  %v3749 = vadd.f32 %v3629, %v3733
  %v3750 = vadd.f32 %v3630, %v3734
  %v3751 = vadd.f32 %v3631, %v3735
  %3752 = vrot.lane.b32.xlu0 %v491, 111
  %v3753 = vpop.permute.xlu0 %3752
  %3754 = vrot.lane.b32.xlu0 %v495, 111
  %v3755 = vpop.permute.xlu0 %3754
  %3756 = vrot.lane.b32.xlu0 %v501, 111
  %v3757 = vpop.permute.xlu0 %3756
  %3758 = vrot.lane.b32.xlu0 %v505, 111
  %v3759 = vpop.permute.xlu0 %3758
  %3760 = vrot.lane.b32.xlu0 %v493, 111
  %v3761 = vpop.permute.xlu0 %3760
  %3762 = vrot.lane.b32.xlu0 %v497, 111
  %v3763 = vpop.permute.xlu0 %3762
  %3764 = vrot.lane.b32.xlu0 %v503, 111
  %v3765 = vpop.permute.xlu0 %3764
  %3766 = vrot.lane.b32.xlu0 %v507, 111
  %v3767 = vpop.permute.xlu0 %3766
  %3768 = vrot.lane.b32.xlu0 %v584, 111
  %v3769 = vpop.permute.xlu0 %3768
  %3770 = vrot.lane.b32.xlu0 %v588, 111
  %v3771 = vpop.permute.xlu0 %3770
  %3772 = vrot.lane.b32.xlu0 %v594, 111
  %v3773 = vpop.permute.xlu0 %3772
  %3774 = vrot.lane.b32.xlu0 %v598, 111
  %v3775 = vpop.permute.xlu0 %3774
  %3776 = vrot.lane.b32.xlu0 %v586, 111
  %v3777 = vpop.permute.xlu0 %3776
  %3778 = vrot.lane.b32.xlu0 %v590, 111
  %v3779 = vpop.permute.xlu0 %3778
  %3780 = vrot.lane.b32.xlu0 %v596, 111
  %v3781 = vpop.permute.xlu0 %3780
  %3782 = vrot.lane.b32.xlu0 %v600, 111
  %v3783 = vpop.permute.xlu0 %3782
  %v3784 = vsel %vm1681, %v3769, %v3777
  %v3785 = vsel %vm1681, %v3771, %v3779
  %v3786 = vsel %vm1681, %v3773, %v3781
  %v3787 = vsel %vm1681, %v3775, %v3783
  %v3788 = vsel %vm1681, %v3761, %v3769
  %v3789 = vsel %vm1681, %v3763, %v3771
  %v3790 = vsel %vm1681, %v3765, %v3773
  %v3791 = vsel %vm1681, %v3767, %v3775
  %v3792 = vsel %vm1681, %v3753, %v3761
  %v3793 = vsel %vm1681, %v3755, %v3763
  %v3794 = vsel %vm1681, %v3757, %v3765
  %v3795 = vsel %vm1681, %v3759, %v3767
  %v3796 = vsel %vm1681, %v3777, %v3753
  %v3797 = vsel %vm1681, %v3779, %v3755
  %v3798 = vsel %vm1681, %v3781, %v3757
  %v3799 = vsel %vm1681, %v3783, %v3759
  %v3800 = vmul.f32 %v3792, %v1702
  %v3801 = vmul.f32 %v3788, %v1706
  %v3802 = vmul.f32 %v3784, %v1710
  %v3803 = vmul.f32 %v3796, %v1714
  %v3804 = vmul.f32 %v3793, %v1702
  %v3805 = vmul.f32 %v3789, %v1706
  %v3806 = vmul.f32 %v3785, %v1710
  %v3807 = vmul.f32 %v3797, %v1714
  %v3808 = vmul.f32 %v3794, %v1702
  %v3809 = vmul.f32 %v3790, %v1706
  %v3810 = vmul.f32 %v3786, %v1710
  %v3811 = vmul.f32 %v3798, %v1714
  %v3812 = vmul.f32 %v3795, %v1702
  %v3813 = vmul.f32 %v3791, %v1706
  %v3814 = vmul.f32 %v3787, %v1710
  %v3815 = vmul.f32 %v3799, %v1714
  %v3816 = vld [vmem:[%s1735 + $0x40] sm:$0xff]
  %v3817 = vld [vmem:[%s1735 + $0x48] sm:$0xff]
  %v3818 = vld [vmem:[%s1735 + $0x50] sm:$0xff]
  %v3819 = vld [vmem:[%s1735 + $0x58] sm:$0xff]
  %3821 = vset.pattern.permute.xlu0 0
  %3822 = vperm.xlu0 %3821, %v3816
  %v3823 = vpop.permute.xlu0 %3822
  %3826 = vset.pattern.permute.xlu0 0
  %3827 = vperm.xlu0 %3826, %v3817
  %v3828 = vpop.permute.xlu0 %3827
  %3831 = vset.pattern.permute.xlu0 0
  %3832 = vperm.xlu0 %3831, %v3818
  %v3833 = vpop.permute.xlu0 %3832
  %3836 = vset.pattern.permute.xlu0 0
  %3837 = vperm.xlu0 %3836, %v3819
  %v3838 = vpop.permute.xlu0 %3837
  %v3840 = vmul.f32 %v3800, %v3823
  %v3841 = vmul.f32 %v3801, %v3823
  %v3842 = vmul.f32 %v3802, %v3823
  %v3843 = vmul.f32 %v3803, %v3823
  %v3844 = vmul.f32 %v3804, %v3828
  %v3845 = vmul.f32 %v3805, %v3828
  %v3846 = vmul.f32 %v3806, %v3828
  %v3847 = vmul.f32 %v3807, %v3828
  %v3848 = vmul.f32 %v3808, %v3833
  %v3849 = vmul.f32 %v3809, %v3833
  %v3850 = vmul.f32 %v3810, %v3833
  %v3851 = vmul.f32 %v3811, %v3833
  %v3852 = vmul.f32 %v3812, %v3838
  %v3853 = vmul.f32 %v3813, %v3838
  %v3854 = vmul.f32 %v3814, %v3838
  %v3855 = vmul.f32 %v3815, %v3838
  %v3856 = vadd.f32 %v3736, %v3840
  %v3857 = vadd.f32 %v3737, %v3841
  %v3858 = vadd.f32 %v3738, %v3842
  %v3859 = vadd.f32 %v3739, %v3843
  %v3860 = vadd.f32 %v3740, %v3844
  %v3861 = vadd.f32 %v3741, %v3845
  %v3862 = vadd.f32 %v3742, %v3846
  %v3863 = vadd.f32 %v3743, %v3847
  %v3864 = vadd.f32 %v3744, %v3848
  %v3865 = vadd.f32 %v3745, %v3849
  %v3866 = vadd.f32 %v3746, %v3850
  %v3867 = vadd.f32 %v3747, %v3851
  %v3868 = vadd.f32 %v3748, %v3852
  %v3869 = vadd.f32 %v3749, %v3853
  %v3870 = vadd.f32 %v3750, %v3854
  %v3871 = vadd.f32 %v3751, %v3855
  %3873 = vset.pattern.permute.xlu0 0
  %3874 = vperm.xlu0 %3873, %v2868
  %v3875 = vpop.permute.xlu0 %3874
  %3878 = vset.pattern.permute.xlu0 0
  %3879 = vperm.xlu0 %3878, %v2869
  %v3880 = vpop.permute.xlu0 %3879
  %3883 = vset.pattern.permute.xlu0 0
  %3884 = vperm.xlu0 %3883, %v2870
  %v3885 = vpop.permute.xlu0 %3884
  %3888 = vset.pattern.permute.xlu0 0
  %3889 = vperm.xlu0 %3888, %v2871
  %v3890 = vpop.permute.xlu0 %3889
  %v3892 = vadd.f32 %v3856, %v3875
  %v3893 = vadd.f32 %v3857, %v3875
  %v3894 = vadd.f32 %v3858, %v3875
  %v3895 = vadd.f32 %v3859, %v3875
  %v3896 = vadd.f32 %v3860, %v3880
  %v3897 = vadd.f32 %v3861, %v3880
  %v3898 = vadd.f32 %v3862, %v3880
  %v3899 = vadd.f32 %v3863, %v3880
  %v3900 = vadd.f32 %v3864, %v3885
  %v3901 = vadd.f32 %v3865, %v3885
  %v3902 = vadd.f32 %v3866, %v3885
  %v3903 = vadd.f32 %v3867, %v3885
  %v3904 = vadd.f32 %v3868, %v3890
  %v3905 = vadd.f32 %v3869, %v3890
  %v3906 = vadd.f32 %v3870, %v3890
  %v3907 = vadd.f32 %v3871, %v3890
  %v3908 = vld [vmem:[%s1 + $0x100] sm:$0xff]
  %v3909 = vld [vmem:[%s1 + $0x108] sm:$0xff]
  %v3910 = vld [vmem:[%s1 + $0x110] sm:$0xff]
  %v3911 = vld [vmem:[%s1 + $0x118] sm:$0xff]
  %v3912 = vld [vmem:[%s4] sm:$0xff]
  %v3913 = vld [vmem:[%s4 + $0x8] sm:$0xff]
  %v3914 = vld [vmem:[%s4 + $0x10] sm:$0xff]
  %v3915 = vld [vmem:[%s4 + $0x18] sm:$0xff]
  %v3916 = vmul.f32 %v1812, %v1812
  %v3917 = vmul.f32 %v1813, %v1813
  %v3918 = vmul.f32 %v1816, %v1816
  %v3919 = vmul.f32 %v1817, %v1817
  %v3920 = vmul.f32 %v1820, %v1820
  %v3921 = vmul.f32 %v1821, %v1821
  %v3922 = vmul.f32 %v1824, %v1824
  %v3923 = vmul.f32 %v1825, %v1825
  %v3924 = vadd.f32 %v3916, %v3917
  %3925 = vadd.xlane.f32.xlu0 %v3924
  %v3926 = vpop.xlane.xlu0 %3925
  %v3927 = vadd.f32 %v3918, %v3919
  %3928 = vadd.xlane.f32.xlu0 %v3927
  %v3929 = vpop.xlane.xlu0 %3928
  %v3930 = vadd.f32 %v3920, %v3921
  %3931 = vadd.xlane.f32.xlu0 %v3930
  %v3932 = vpop.xlane.xlu0 %3931
  %v3933 = vadd.f32 %v3922, %v3923
  %3934 = vadd.xlane.f32.xlu0 %v3933
  %v3935 = vpop.xlane.xlu0 %3934
  %v3936 = vmax.f32 %v3926, 1e-24
  %v3937 = vmax.f32 %v3929, 1e-24
  %v3938 = vmax.f32 %v3932, 1e-24
  %v3939 = vmax.f32 %v3935, 1e-24
  %v3940 = vrsqrt.pop %v3936
  %v3941 = vrsqrt.pop %v3937
  %v3942 = vrsqrt.pop %v3938
  %v3943 = vrsqrt.pop %v3939
  %v3944 = vmul.f32 %v1812, %v3940
  %v3945 = vmul.f32 %v1813, %v3940
  %v3946 = vmul.f32 %v1816, %v3941
  %v3947 = vmul.f32 %v1817, %v3941
  %v3948 = vmul.f32 %v1820, %v3942
  %v3949 = vmul.f32 %v1821, %v3942
  %v3950 = vmul.f32 %v1824, %v3943
  %v3951 = vmul.f32 %v1825, %v3943
  %v3952 = vpack.c.bf16 %v3946, %v3944
  %v3953 = vpack.c.bf16 %v3947, %v3945
  %v3954 = vpack.c.bf16 %v3950, %v3948
  %v3955 = vpack.c.bf16 %v3951, %v3949
  %v3956 = vmul.f32 %v2852, %v2852
  %v3957 = vmul.f32 %v2853, %v2853
  %v3958 = vmul.f32 %v2856, %v2856
  %v3959 = vmul.f32 %v2857, %v2857
  %v3960 = vmul.f32 %v2860, %v2860
  %v3961 = vmul.f32 %v2861, %v2861
  %v3962 = vmul.f32 %v2864, %v2864
  %v3963 = vmul.f32 %v2865, %v2865
  %v3964 = vadd.f32 %v3956, %v3957
  %3965 = vadd.xlane.f32.xlu0 %v3964
  %v3966 = vpop.xlane.xlu0 %3965
  %v3967 = vadd.f32 %v3958, %v3959
  %3968 = vadd.xlane.f32.xlu0 %v3967
  %v3969 = vpop.xlane.xlu0 %3968
  %v3970 = vadd.f32 %v3960, %v3961
  %3971 = vadd.xlane.f32.xlu0 %v3970
  %v3972 = vpop.xlane.xlu0 %3971
  %v3973 = vadd.f32 %v3962, %v3963
  %3974 = vadd.xlane.f32.xlu0 %v3973
  %v3975 = vpop.xlane.xlu0 %3974
  %v3976 = vmax.f32 %v3966, 1e-24
  %v3977 = vmax.f32 %v3969, 1e-24
  %v3978 = vmax.f32 %v3972, 1e-24
  %v3979 = vmax.f32 %v3975, 1e-24
  %v3980 = vrsqrt.pop %v3976
  %v3981 = vrsqrt.pop %v3977
  %v3982 = vrsqrt.pop %v3978
  %v3983 = vrsqrt.pop %v3979
  %v3984 = vmul.f32 %v2852, %v3980
  %v3985 = vmul.f32 %v2853, %v3980
  %v3986 = vmul.f32 %v2856, %v3981
  %v3987 = vmul.f32 %v2857, %v3981
  %v3988 = vmul.f32 %v2860, %v3982
  %v3989 = vmul.f32 %v2861, %v3982
  %v3990 = vmul.f32 %v2864, %v3983
  %v3991 = vmul.f32 %v2865, %v3983
  %v3992 = vpack.c.bf16 %v3986, %v3984
  %v3993 = vpack.c.bf16 %v3987, %v3985
  %v3994 = vpack.c.bf16 %v3990, %v3988
  %v3995 = vpack.c.bf16 %v3991, %v3989
  %v3996 = vpack.c.bf16 %v3896, %v3892
  %v3997 = vpack.c.bf16 %v3897, %v3893
  %v3998 = vpack.c.bf16 %v3904, %v3900
  %v3999 = vpack.c.bf16 %v3905, %v3901
  %4000 = vmatprep.subr.bf16.mxu0 0
  %4001 = vmatpush1.bf16.xpose.msra.mxu0 0
  %4002 = vmatprep.subr.bf16.mxu0 0
  %4003 = vmatpush1.bf16.xpose.msra.mxu0 0
  %4004 = vmatprep.subr.bf16.mxu0 0
  %4005 = vmatpush1.bf16.xpose.msra.mxu0 0
  %4006 = vmatprep.subr.bf16.mxu0 0
  %4007 = vmatpush1.bf16.xpose.msra.mxu0 0
  %4008 = vmatprep.subr.bf16.mxu0 0
  %4009 = vmatpush1.bf16.xpose.msra.mxu0 0
  %4010 = vmatprep.subr.bf16.mxu0 0
  %4011 = vmatpush1.bf16.xpose.msra.mxu0 0
  %4012 = vmatprep.subr.bf16.mxu0 %v3995
  %4013 = vmatpush1.bf16.xpose.msra.mxu0 %v3994
  %4014 = vmatprep.subr.bf16.mxu0 %v3993
  %4015 = vmatpush1.bf16.xpose.msra.mxu0 %v3992
  %4016 = vmatprep.subr.bf16.mxu0 0
  %4017 = vmatpush2.bf16.xpose.msra.mxu0 0
  %4018 = vmatprep.subr.bf16.mxu0 0
  %4019 = vmatpush2.bf16.xpose.msra.mxu0 0
  %4020 = vmatprep.subr.bf16.mxu0 0
  %4021 = vmatpush2.bf16.xpose.msra.mxu0 0
  %4022 = vmatprep.subr.bf16.mxu0 0
  %4023 = vmatpush2.bf16.xpose.msra.mxu0 0
  %4024 = vmatprep.subr.bf16.mxu0 0
  %4025 = vmatpush2.bf16.xpose.msra.mxu0 0
  %4026 = vmatprep.subr.bf16.mxu0 0
  %4027 = vmatpush2.bf16.xpose.msra.mxu0 0
  %4028 = vmatprep.subr.bf16.mxu0 0
  %4029 = vmatpush2.bf16.xpose.msra.mxu0 0
  %4030 = vmatprep.subr.bf16.mxu0 0
  %4031 = vmatpush2.bf16.xpose.msra.mxu0 0
  %4032 = vmatprep.mubr.bf16.mxu0 %v3953
  %4033 = vmatmul.mubr.bf16.gmra.mxu0 %v3952
  %v4034 = vpop.f32.mrf.mxu0
  %v4035 = vadd.f32 0.0, %v4034
  %v4036 = vpop.f32.mrf.mxu0
  %v4037 = vpop.f32.mrf.mxu0
  %v4038 = vadd.f32 0.0, %v4037
  %v4039 = vpop.f32.mrf.mxu0
  %4040 = vmatprep.mubr.bf16.mxu0 %v3955
  %4041 = vmatmul.mubr.bf16.gmra.mxu0 %v3954
  %v4042 = vpop.f32.mrf.mxu0
  %v4043 = vadd.f32 0.0, %v4042
  %v4044 = vpop.f32.mrf.mxu0
  %v4045 = vpop.f32.mrf.mxu0
  %v4046 = vadd.f32 0.0, %v4045
  %v4047 = vpop.f32.mrf.mxu0
  %4048 = vdwg.mxu0
  %4050 = vset.pattern.permute.xlu0 0
  %4051 = vperm.xlu0 %4050, %v3908
  %v4052 = vpop.permute.xlu0 %4051
  %4055 = vset.pattern.permute.xlu0 0
  %4056 = vperm.xlu0 %4055, %v3909
  %v4057 = vpop.permute.xlu0 %4056
  %4060 = vset.pattern.permute.xlu0 0
  %4061 = vperm.xlu0 %4060, %v3910
  %v4062 = vpop.permute.xlu0 %4061
  %4065 = vset.pattern.permute.xlu0 0
  %4066 = vperm.xlu0 %4065, %v3911
  %v4067 = vpop.permute.xlu0 %4066
  %v4069 = vmul.f32 %v4035, %v4052
  %v4070 = vmul.f32 %v4038, %v4057
  %v4071 = vmul.f32 %v4043, %v4062
  %v4072 = vmul.f32 %v4046, %v4067
  %v4073 = vadd.f32 %v4069, %v3912
  %v4074 = vadd.f32 %v4070, %v3913
  %v4075 = vadd.f32 %v4071, %v3914
  %v4076 = vadd.f32 %v4072, %v3915
  %v4077 = vsel %vm397, %v4073, -inf
  %4078 = vmax.xlane.f32.xlu0 %v4077
  %v4079 = vpop.xlane.xlu0 %4078
  %v4080 = vsel %vm397, %v4074, -inf
  %4081 = vmax.xlane.f32.xlu0 %v4080
  %v4082 = vpop.xlane.xlu0 %4081
  %v4083 = vsel %vm397, %v4075, -inf
  %4084 = vmax.xlane.f32.xlu0 %v4083
  %v4085 = vpop.xlane.xlu0 %4084
  %v4086 = vsel %vm397, %v4076, -inf
  %4087 = vmax.xlane.f32.xlu0 %v4086
  %v4088 = vpop.xlane.xlu0 %4087
  %v4089 = vsub.f32 %v4073, %v4079
  %v4090 = vsub.f32 %v4074, %v4082
  %v4091 = vsub.f32 %v4075, %v4085
  %v4092 = vsub.f32 %v4076, %v4088
  %v4093 = vmul.f32 %v4089, 1.442695
  %v4094 = vpow.pop %v4093
  %v4095 = vmul.f32 %v4090, 1.442695
  %v4096 = vpow.pop %v4095
  %v4097 = vmul.f32 %v4091, 1.442695
  %v4098 = vpow.pop %v4097
  %v4099 = vmul.f32 %v4092, 1.442695
  %v4100 = vpow.pop %v4099
  %v4101 = vsel %vm397, %v4094, 0.0
  %4102 = vadd.xlane.f32.xlu0 %v4101
  %v4103 = vpop.xlane.xlu0 %4102
  %v4104 = vsel %vm397, %v4096, 0.0
  %4105 = vadd.xlane.f32.xlu0 %v4104
  %v4106 = vpop.xlane.xlu0 %4105
  %v4107 = vsel %vm397, %v4098, 0.0
  %4108 = vadd.xlane.f32.xlu0 %v4107
  %v4109 = vpop.xlane.xlu0 %4108
  %v4110 = vsel %vm397, %v4100, 0.0
  %4111 = vadd.xlane.f32.xlu0 %v4110
  %v4112 = vpop.xlane.xlu0 %4111
  %v4113 = vrcp.pop %v4103
  %v4114 = vrcp.pop %v4106
  %v4115 = vrcp.pop %v4109
  %v4116 = vrcp.pop %v4112
  %v4117 = vmul.f32 %v4094, %v4113
  %v4118 = vmul.f32 %v4096, %v4114
  %v4119 = vmul.f32 %v4098, %v4115
  %v4120 = vmul.f32 %v4100, %v4116
  %v4121 = vpack.c.bf16 %v4118, %v4117
  %v4122 = vpack.c.bf16 %v4120, %v4119
  %v4124 = vsel %vm397, %v4121, 0
  %v4127 = vsel %vm397, %v4122, 0
  %4129 = vmatprep.subr.bf16.mxu0 0
  %4130 = vmatpush1.bf16.msra.mxu0 0
  %4131 = vmatprep.subr.bf16.mxu0 0
  %4132 = vmatpush1.bf16.msra.mxu0 0
  %4133 = vmatprep.subr.bf16.mxu0 0
  %4134 = vmatpush1.bf16.msra.mxu0 0
  %4135 = vmatprep.subr.bf16.mxu0 0
  %4136 = vmatpush1.bf16.msra.mxu0 0
  %4137 = vmatprep.subr.bf16.mxu0 0
  %4138 = vmatpush1.bf16.msra.mxu0 0
  %4139 = vmatprep.subr.bf16.mxu0 0
  %4140 = vmatpush1.bf16.msra.mxu0 0
  %4141 = vmatprep.subr.bf16.mxu0 %v3999
  %4142 = vmatpush1.bf16.msra.mxu0 %v3998
  %4143 = vmatprep.subr.bf16.mxu0 %v3997
  %4144 = vmatpush1.bf16.msra.mxu0 %v3996
  %4145 = vmatprep.subr.bf16.mxu0 0
  %4146 = vmatpush2.bf16.msra.mxu0 0
  %4147 = vmatprep.subr.bf16.mxu0 0
  %4148 = vmatpush2.bf16.msra.mxu0 0
  %4149 = vmatprep.subr.bf16.mxu0 0
  %4150 = vmatpush2.bf16.msra.mxu0 0
  %4151 = vmatprep.subr.bf16.mxu0 0
  %4152 = vmatpush2.bf16.msra.mxu0 0
  %4153 = vmatprep.subr.bf16.mxu0 0
  %4154 = vmatpush2.bf16.msra.mxu0 0
  %4155 = vmatprep.subr.bf16.mxu0 0
  %4156 = vmatpush2.bf16.msra.mxu0 0
  %4157 = vmatprep.subr.bf16.mxu0 0
  %4158 = vmatpush2.bf16.msra.mxu0 0
  %4159 = vmatprep.subr.bf16.mxu0 0
  %4160 = vmatpush2.bf16.msra.mxu0 0
  %4161 = vmatprep.mubr.bf16.mxu0 0
  %4162 = vmatmul.mubr.bf16.gmra.mxu0 %v4124
  %v4163 = vpop.f32.mrf.mxu0
  %v4164 = vadd.f32 0.0, %v4163
  %v4165 = vpop.f32.mrf.mxu0
  %v4166 = vadd.f32 0.0, %v4165
  %v4167 = vpop.f32.mrf.mxu0
  %v4168 = vadd.f32 0.0, %v4167
  %v4169 = vpop.f32.mrf.mxu0
  %v4170 = vadd.f32 0.0, %v4169
  %4171 = vmatprep.mubr.bf16.mxu0 0
  %4172 = vmatmul.mubr.bf16.gmra.mxu0 %v4127
  %v4173 = vpop.f32.mrf.mxu0
  %v4174 = vadd.f32 0.0, %v4173
  %v4175 = vpop.f32.mrf.mxu0
  %v4176 = vadd.f32 0.0, %v4175
  %v4177 = vpop.f32.mrf.mxu0
  %v4178 = vadd.f32 0.0, %v4177
  %v4179 = vpop.f32.mrf.mxu0
  %v4180 = vadd.f32 0.0, %v4179
  %4181 = vdwg.mxu0
  %v4182 = vmul.f32 %v1814, %v1814
  %v4183 = vmul.f32 %v1815, %v1815
  %v4184 = vmul.f32 %v1818, %v1818
  %v4185 = vmul.f32 %v1819, %v1819
  %v4186 = vmul.f32 %v1822, %v1822
  %v4187 = vmul.f32 %v1823, %v1823
  %v4188 = vmul.f32 %v1826, %v1826
  %v4189 = vmul.f32 %v1827, %v1827
  %v4190 = vadd.f32 %v4182, %v4183
  %4191 = vadd.xlane.f32.xlu0 %v4190
  %v4192 = vpop.xlane.xlu0 %4191
  %v4193 = vadd.f32 %v4184, %v4185
  %4194 = vadd.xlane.f32.xlu0 %v4193
  %v4195 = vpop.xlane.xlu0 %4194
  %v4196 = vadd.f32 %v4186, %v4187
  %4197 = vadd.xlane.f32.xlu0 %v4196
  %v4198 = vpop.xlane.xlu0 %4197
  %v4199 = vadd.f32 %v4188, %v4189
  %4200 = vadd.xlane.f32.xlu0 %v4199
  %v4201 = vpop.xlane.xlu0 %4200
  %v4202 = vmax.f32 %v4192, 1e-24
  %v4203 = vmax.f32 %v4195, 1e-24
  %v4204 = vmax.f32 %v4198, 1e-24
  %v4205 = vmax.f32 %v4201, 1e-24
  %v4206 = vrsqrt.pop %v4202
  %v4207 = vrsqrt.pop %v4203
  %v4208 = vrsqrt.pop %v4204
  %v4209 = vrsqrt.pop %v4205
  %v4210 = vmul.f32 %v1814, %v4206
  %v4211 = vmul.f32 %v1815, %v4206
  %v4212 = vmul.f32 %v1818, %v4207
  %v4213 = vmul.f32 %v1819, %v4207
  %v4214 = vmul.f32 %v1822, %v4208
  %v4215 = vmul.f32 %v1823, %v4208
  %v4216 = vmul.f32 %v1826, %v4209
  %v4217 = vmul.f32 %v1827, %v4209
  %v4218 = vpack.c.bf16 %v4212, %v4210
  %v4219 = vpack.c.bf16 %v4213, %v4211
  %v4220 = vpack.c.bf16 %v4216, %v4214
  %v4221 = vpack.c.bf16 %v4217, %v4215
  %v4222 = vmul.f32 %v2854, %v2854
  %v4223 = vmul.f32 %v2855, %v2855
  %v4224 = vmul.f32 %v2858, %v2858
  %v4225 = vmul.f32 %v2859, %v2859
  %v4226 = vmul.f32 %v2862, %v2862
  %v4227 = vmul.f32 %v2863, %v2863
  %v4228 = vmul.f32 %v2866, %v2866
  %v4229 = vmul.f32 %v2867, %v2867
  %v4230 = vadd.f32 %v4222, %v4223
  %4231 = vadd.xlane.f32.xlu0 %v4230
  %v4232 = vpop.xlane.xlu0 %4231
  %v4233 = vadd.f32 %v4224, %v4225
  %4234 = vadd.xlane.f32.xlu0 %v4233
  %v4235 = vpop.xlane.xlu0 %4234
  %v4236 = vadd.f32 %v4226, %v4227
  %4237 = vadd.xlane.f32.xlu0 %v4236
  %v4238 = vpop.xlane.xlu0 %4237
  %v4239 = vadd.f32 %v4228, %v4229
  %4240 = vadd.xlane.f32.xlu0 %v4239
  %v4241 = vpop.xlane.xlu0 %4240
  %v4242 = vmax.f32 %v4232, 1e-24
  %v4243 = vmax.f32 %v4235, 1e-24
  %v4244 = vmax.f32 %v4238, 1e-24
  %v4245 = vmax.f32 %v4241, 1e-24
  %v4246 = vrsqrt.pop %v4242
  %v4247 = vrsqrt.pop %v4243
  %v4248 = vrsqrt.pop %v4244
  %v4249 = vrsqrt.pop %v4245
  %v4250 = vmul.f32 %v2854, %v4246
  %v4251 = vmul.f32 %v2855, %v4246
  %v4252 = vmul.f32 %v2858, %v4247
  %v4253 = vmul.f32 %v2859, %v4247
  %v4254 = vmul.f32 %v2862, %v4248
  %v4255 = vmul.f32 %v2863, %v4248
  %v4256 = vmul.f32 %v2866, %v4249
  %v4257 = vmul.f32 %v2867, %v4249
  %v4258 = vpack.c.bf16 %v4252, %v4250
  %v4259 = vpack.c.bf16 %v4253, %v4251
  %v4260 = vpack.c.bf16 %v4256, %v4254
  %v4261 = vpack.c.bf16 %v4257, %v4255
  %v4262 = vpack.c.bf16 %v3898, %v3894
  %v4263 = vpack.c.bf16 %v3899, %v3895
  %v4264 = vpack.c.bf16 %v3906, %v3902
  %v4265 = vpack.c.bf16 %v3907, %v3903
  %4266 = vmatprep.subr.bf16.mxu0 0
  %4267 = vmatpush1.bf16.xpose.msra.mxu0 0
  %4268 = vmatprep.subr.bf16.mxu0 0
  %4269 = vmatpush1.bf16.xpose.msra.mxu0 0
  %4270 = vmatprep.subr.bf16.mxu0 0
  %4271 = vmatpush1.bf16.xpose.msra.mxu0 0
  %4272 = vmatprep.subr.bf16.mxu0 0
  %4273 = vmatpush1.bf16.xpose.msra.mxu0 0
  %4274 = vmatprep.subr.bf16.mxu0 0
  %4275 = vmatpush1.bf16.xpose.msra.mxu0 0
  %4276 = vmatprep.subr.bf16.mxu0 0
  %4277 = vmatpush1.bf16.xpose.msra.mxu0 0
  %4278 = vmatprep.subr.bf16.mxu0 %v4261
  %4279 = vmatpush1.bf16.xpose.msra.mxu0 %v4260
  %4280 = vmatprep.subr.bf16.mxu0 %v4259
  %4281 = vmatpush1.bf16.xpose.msra.mxu0 %v4258
  %4282 = vmatprep.subr.bf16.mxu0 0
  %4283 = vmatpush2.bf16.xpose.msra.mxu0 0
  %4284 = vmatprep.subr.bf16.mxu0 0
  %4285 = vmatpush2.bf16.xpose.msra.mxu0 0
  %4286 = vmatprep.subr.bf16.mxu0 0
  %4287 = vmatpush2.bf16.xpose.msra.mxu0 0
  %4288 = vmatprep.subr.bf16.mxu0 0
  %4289 = vmatpush2.bf16.xpose.msra.mxu0 0
  %4290 = vmatprep.subr.bf16.mxu0 0
  %4291 = vmatpush2.bf16.xpose.msra.mxu0 0
  %4292 = vmatprep.subr.bf16.mxu0 0
  %4293 = vmatpush2.bf16.xpose.msra.mxu0 0
  %4294 = vmatprep.subr.bf16.mxu0 0
  %4295 = vmatpush2.bf16.xpose.msra.mxu0 0
  %4296 = vmatprep.subr.bf16.mxu0 0
  %4297 = vmatpush2.bf16.xpose.msra.mxu0 0
  %4298 = vmatprep.mubr.bf16.mxu0 %v4219
  %4299 = vmatmul.mubr.bf16.gmra.mxu0 %v4218
  %v4300 = vpop.f32.mrf.mxu0
  %v4301 = vadd.f32 0.0, %v4300
  %v4302 = vpop.f32.mrf.mxu0
  %v4303 = vpop.f32.mrf.mxu0
  %v4304 = vadd.f32 0.0, %v4303
  %v4305 = vpop.f32.mrf.mxu0
  %4306 = vmatprep.mubr.bf16.mxu0 %v4221
  %4307 = vmatmul.mubr.bf16.gmra.mxu0 %v4220
  %v4308 = vpop.f32.mrf.mxu0
  %v4309 = vadd.f32 0.0, %v4308
  %v4310 = vpop.f32.mrf.mxu0
  %v4311 = vpop.f32.mrf.mxu0
  %v4312 = vadd.f32 0.0, %v4311
  %v4313 = vpop.f32.mrf.mxu0
  %4314 = vdwg.mxu0
  %v4315 = vmul.f32 %v4301, %v4052
  %v4316 = vmul.f32 %v4304, %v4057
  %v4317 = vmul.f32 %v4309, %v4062
  %v4318 = vmul.f32 %v4312, %v4067
  %v4319 = vadd.f32 %v4315, %v3912
  %v4320 = vadd.f32 %v4316, %v3913
  %v4321 = vadd.f32 %v4317, %v3914
  %v4322 = vadd.f32 %v4318, %v3915
  %v4323 = vsel %vm397, %v4319, -inf
  %4324 = vmax.xlane.f32.xlu0 %v4323
  %v4325 = vpop.xlane.xlu0 %4324
  %v4326 = vsel %vm397, %v4320, -inf
  %4327 = vmax.xlane.f32.xlu0 %v4326
  %v4328 = vpop.xlane.xlu0 %4327
  %v4329 = vsel %vm397, %v4321, -inf
  %4330 = vmax.xlane.f32.xlu0 %v4329
  %v4331 = vpop.xlane.xlu0 %4330
  %v4332 = vsel %vm397, %v4322, -inf
  %4333 = vmax.xlane.f32.xlu0 %v4332
  %v4334 = vpop.xlane.xlu0 %4333
  %v4335 = vsub.f32 %v4319, %v4325
  %v4336 = vsub.f32 %v4320, %v4328
  %v4337 = vsub.f32 %v4321, %v4331
  %v4338 = vsub.f32 %v4322, %v4334
  %v4339 = vmul.f32 %v4335, 1.442695
  %v4340 = vpow.pop %v4339
  %v4341 = vmul.f32 %v4336, 1.442695
  %v4342 = vpow.pop %v4341
  %v4343 = vmul.f32 %v4337, 1.442695
  %v4344 = vpow.pop %v4343
  %v4345 = vmul.f32 %v4338, 1.442695
  %v4346 = vpow.pop %v4345
  %v4347 = vsel %vm397, %v4340, 0.0
  %4348 = vadd.xlane.f32.xlu0 %v4347
  %v4349 = vpop.xlane.xlu0 %4348
  %v4350 = vsel %vm397, %v4342, 0.0
  %4351 = vadd.xlane.f32.xlu0 %v4350
  %v4352 = vpop.xlane.xlu0 %4351
  %v4353 = vsel %vm397, %v4344, 0.0
  %4354 = vadd.xlane.f32.xlu0 %v4353
  %v4355 = vpop.xlane.xlu0 %4354
  %v4356 = vsel %vm397, %v4346, 0.0
  %4357 = vadd.xlane.f32.xlu0 %v4356
  %v4358 = vpop.xlane.xlu0 %4357
  %v4359 = vrcp.pop %v4349
  %v4360 = vrcp.pop %v4352
  %v4361 = vrcp.pop %v4355
  %v4362 = vrcp.pop %v4358
  %v4363 = vmul.f32 %v4340, %v4359
  %v4364 = vmul.f32 %v4342, %v4360
  %v4365 = vmul.f32 %v4344, %v4361
  %v4366 = vmul.f32 %v4346, %v4362
  %v4367 = vpack.c.bf16 %v4364, %v4363
  %v4368 = vpack.c.bf16 %v4366, %v4365
  %v4370 = vsel %vm397, %v4367, 0
  %v4373 = vsel %vm397, %v4368, 0
  %4375 = vmatprep.subr.bf16.mxu0 0
  %4376 = vmatpush1.bf16.msra.mxu0 0
  %4377 = vmatprep.subr.bf16.mxu0 0
  %4378 = vmatpush1.bf16.msra.mxu0 0
  %4379 = vmatprep.subr.bf16.mxu0 0
  %4380 = vmatpush1.bf16.msra.mxu0 0
  %4381 = vmatprep.subr.bf16.mxu0 0
  %4382 = vmatpush1.bf16.msra.mxu0 0
  %4383 = vmatprep.subr.bf16.mxu0 0
  %4384 = vmatpush1.bf16.msra.mxu0 0
  %4385 = vmatprep.subr.bf16.mxu0 0
  %4386 = vmatpush1.bf16.msra.mxu0 0
  %4387 = vmatprep.subr.bf16.mxu0 %v4265
  %4388 = vmatpush1.bf16.msra.mxu0 %v4264
  %4389 = vmatprep.subr.bf16.mxu0 %v4263
  %4390 = vmatpush1.bf16.msra.mxu0 %v4262
  %4391 = vmatprep.subr.bf16.mxu0 0
  %4392 = vmatpush2.bf16.msra.mxu0 0
  %4393 = vmatprep.subr.bf16.mxu0 0
  %4394 = vmatpush2.bf16.msra.mxu0 0
  %4395 = vmatprep.subr.bf16.mxu0 0
  %4396 = vmatpush2.bf16.msra.mxu0 0
  %4397 = vmatprep.subr.bf16.mxu0 0
  %4398 = vmatpush2.bf16.msra.mxu0 0
  %4399 = vmatprep.subr.bf16.mxu0 0
  %4400 = vmatpush2.bf16.msra.mxu0 0
  %4401 = vmatprep.subr.bf16.mxu0 0
  %4402 = vmatpush2.bf16.msra.mxu0 0
  %4403 = vmatprep.subr.bf16.mxu0 0
  %4404 = vmatpush2.bf16.msra.mxu0 0
  %4405 = vmatprep.subr.bf16.mxu0 0
  %4406 = vmatpush2.bf16.msra.mxu0 0
  %4407 = vmatprep.mubr.bf16.mxu0 0
  %4408 = vmatmul.mubr.bf16.gmra.mxu0 %v4370
  %v4409 = vpop.f32.mrf.mxu0
  %v4410 = vadd.f32 0.0, %v4409
  %v4411 = vpop.f32.mrf.mxu0
  %v4412 = vadd.f32 0.0, %v4411
  %v4413 = vpop.f32.mrf.mxu0
  %v4414 = vadd.f32 0.0, %v4413
  %v4415 = vpop.f32.mrf.mxu0
  %v4416 = vadd.f32 0.0, %v4415
  %4417 = vmatprep.mubr.bf16.mxu0 0
  %4418 = vmatmul.mubr.bf16.gmra.mxu0 %v4373
  %v4419 = vpop.f32.mrf.mxu0
  %v4420 = vadd.f32 0.0, %v4419
  %v4421 = vpop.f32.mrf.mxu0
  %v4422 = vadd.f32 0.0, %v4421
  %v4423 = vpop.f32.mrf.mxu0
  %v4424 = vadd.f32 0.0, %v4423
  %v4425 = vpop.f32.mrf.mxu0
  %v4426 = vadd.f32 0.0, %v4425
  %4427 = vdwg.mxu0
  %v4428 = vld [vmem:[%s5 + $0x30] sm:$0xf]
  %v4429 = vld [vmem:[%s5 + $0x34] sm:$0xf]
  %v4430 = vld [vmem:[%s5 + $0x38] sm:$0xf]
  %v4431 = vld [vmem:[%s5 + $0x3c] sm:$0xf]
  %v4432 = vpack.c.bf16 %v4168, %v4164
  %v4433 = vpack.c.bf16 %v4170, %v4166
  %v4434 = vpack.c.bf16 %v4414, %v4410
  %v4435 = vpack.c.bf16 %v4416, %v4412
  %v4436 = vpack.c.bf16 %v4178, %v4174
  %v4437 = vpack.c.bf16 %v4180, %v4176
  %v4438 = vpack.c.bf16 %v4424, %v4420
  %v4439 = vpack.c.bf16 %v4426, %v4422
  %v4440 = vld [vmem:[%s1 + $0x120] sm:$0xff]
  %v4441 = vld [vmem:[%s1 + $0x128] sm:$0xff]
  %v4442 = vld [vmem:[%s1 + $0x130] sm:$0xff]
  %v4443 = vld [vmem:[%s1 + $0x138] sm:$0xff]
  %4445 = vset.pattern.permute.xlu0 0
  %4446 = vperm.xlu0 %4445, %v4440
  %v4447 = vpop.permute.xlu0 %4446
  %4450 = vset.pattern.permute.xlu0 0
  %4451 = vperm.xlu0 %4450, %v4441
  %v4452 = vpop.permute.xlu0 %4451
  %4455 = vset.pattern.permute.xlu0 0
  %4456 = vperm.xlu0 %4455, %v4442
  %v4457 = vpop.permute.xlu0 %4456
  %4460 = vset.pattern.permute.xlu0 0
  %4461 = vperm.xlu0 %4460, %v4443
  %v4462 = vpop.permute.xlu0 %4461
  %v4468 = vunpack.c.l.b16 %v4428
  %v4469 = vunpack.c.l.b16 %v4429
  %v4470 = vunpack.c.l.b16 %v4430
  %v4471 = vunpack.c.l.b16 %v4431
  %v4472 = vpack.c.b16 %v4469, %v4468
  %v4473 = vpack.c.b16 %v4471, %v4470
  %v4475 = vsel %vm397, %v4472, 0
  %v4478 = vsel %vm397, %v4473, 0
  %4480 = vmatprep.subr.bf16.mxu0 0
  %4481 = vmatpush1.bf16.msra.mxu0 0
  %4482 = vmatprep.subr.bf16.mxu0 0
  %4483 = vmatpush1.bf16.msra.mxu0 0
  %4484 = vmatprep.subr.bf16.mxu0 0
  %4485 = vmatpush1.bf16.msra.mxu0 0
  %4486 = vmatprep.subr.bf16.mxu0 0
  %4487 = vmatpush1.bf16.msra.mxu0 0
  %4488 = vmatprep.subr.bf16.mxu0 0
  %4489 = vmatpush1.bf16.msra.mxu0 0
  %4490 = vmatprep.subr.bf16.mxu0 0
  %4491 = vmatpush1.bf16.msra.mxu0 0
  %4492 = vmatprep.subr.bf16.mxu0 %v4437
  %4493 = vmatpush1.bf16.msra.mxu0 %v4436
  %4494 = vmatprep.subr.bf16.mxu0 %v4433
  %4495 = vmatpush1.bf16.msra.mxu0 %v4432
  %4496 = vmatprep.subr.bf16.mxu0 0
  %4497 = vmatpush2.bf16.msra.mxu0 0
  %4498 = vmatprep.subr.bf16.mxu0 0
  %4499 = vmatpush2.bf16.msra.mxu0 0
  %4500 = vmatprep.subr.bf16.mxu0 0
  %4501 = vmatpush2.bf16.msra.mxu0 0
  %4502 = vmatprep.subr.bf16.mxu0 0
  %4503 = vmatpush2.bf16.msra.mxu0 0
  %4504 = vmatprep.subr.bf16.mxu0 0
  %4505 = vmatpush2.bf16.msra.mxu0 0
  %4506 = vmatprep.subr.bf16.mxu0 0
  %4507 = vmatpush2.bf16.msra.mxu0 0
  %4508 = vmatprep.subr.bf16.mxu0 0
  %4509 = vmatpush2.bf16.msra.mxu0 0
  %4510 = vmatprep.subr.bf16.mxu0 0
  %4511 = vmatpush2.bf16.msra.mxu0 0
  %4512 = vmatprep.mubr.bf16.mxu0 0
  %4513 = vmatmul.mubr.bf16.gmra.mxu0 %v4475
  %v4514 = vpop.f32.mrf.mxu0
  %v4515 = vadd.f32 %v4447, %v4514
  %v4516 = vpop.f32.mrf.mxu0
  %v4517 = vadd.f32 %v4447, %v4516
  %v4518 = vpop.f32.mrf.mxu0
  %v4519 = vadd.f32 %v4452, %v4518
  %v4520 = vpop.f32.mrf.mxu0
  %v4521 = vadd.f32 %v4452, %v4520
  %4522 = vmatprep.mubr.bf16.mxu0 0
  %4523 = vmatmul.mubr.bf16.gmra.mxu0 %v4478
  %v4524 = vpop.f32.mrf.mxu0
  %v4525 = vadd.f32 %v4457, %v4524
  %v4526 = vpop.f32.mrf.mxu0
  %v4527 = vadd.f32 %v4457, %v4526
  %v4528 = vpop.f32.mrf.mxu0
  %v4529 = vadd.f32 %v4462, %v4528
  %v4530 = vpop.f32.mrf.mxu0
  %v4531 = vadd.f32 %v4462, %v4530
  %4532 = vdwg.mxu0
  %4533 = vmatprep.subr.bf16.mxu0 0
  %4534 = vmatpush1.bf16.msra.mxu0 0
  %4535 = vmatprep.subr.bf16.mxu0 0
  %4536 = vmatpush1.bf16.msra.mxu0 0
  %4537 = vmatprep.subr.bf16.mxu0 0
  %4538 = vmatpush1.bf16.msra.mxu0 0
  %4539 = vmatprep.subr.bf16.mxu0 0
  %4540 = vmatpush1.bf16.msra.mxu0 0
  %4541 = vmatprep.subr.bf16.mxu0 0
  %4542 = vmatpush1.bf16.msra.mxu0 0
  %4543 = vmatprep.subr.bf16.mxu0 0
  %4544 = vmatpush1.bf16.msra.mxu0 0
  %4545 = vmatprep.subr.bf16.mxu0 %v4439
  %4546 = vmatpush1.bf16.msra.mxu0 %v4438
  %4547 = vmatprep.subr.bf16.mxu0 %v4435
  %4548 = vmatpush1.bf16.msra.mxu0 %v4434
  %4549 = vmatprep.subr.bf16.mxu0 0
  %4550 = vmatpush2.bf16.msra.mxu0 0
  %4551 = vmatprep.subr.bf16.mxu0 0
  %4552 = vmatpush2.bf16.msra.mxu0 0
  %4553 = vmatprep.subr.bf16.mxu0 0
  %4554 = vmatpush2.bf16.msra.mxu0 0
  %4555 = vmatprep.subr.bf16.mxu0 0
  %4556 = vmatpush2.bf16.msra.mxu0 0
  %4557 = vmatprep.subr.bf16.mxu0 0
  %4558 = vmatpush2.bf16.msra.mxu0 0
  %4559 = vmatprep.subr.bf16.mxu0 0
  %4560 = vmatpush2.bf16.msra.mxu0 0
  %4561 = vmatprep.subr.bf16.mxu0 0
  %4562 = vmatpush2.bf16.msra.mxu0 0
  %4563 = vmatprep.subr.bf16.mxu0 0
  %4564 = vmatpush2.bf16.msra.mxu0 0
  %4565 = vmatprep.mubr.bf16.mxu0 0
  %4566 = vmatmul.mubr.bf16.gmra.mxu0 %v4475
  %v4567 = vpop.f32.mrf.mxu0
  %v4568 = vadd.f32 %v4447, %v4567
  %v4569 = vpop.f32.mrf.mxu0
  %v4570 = vadd.f32 %v4447, %v4569
  %v4571 = vpop.f32.mrf.mxu0
  %v4572 = vadd.f32 %v4452, %v4571
  %v4573 = vpop.f32.mrf.mxu0
  %v4574 = vadd.f32 %v4452, %v4573
  %4575 = vmatprep.mubr.bf16.mxu0 0
  %4576 = vmatmul.mubr.bf16.gmra.mxu0 %v4478
  %v4577 = vpop.f32.mrf.mxu0
  %v4578 = vadd.f32 %v4457, %v4577
  %v4579 = vpop.f32.mrf.mxu0
  %v4580 = vadd.f32 %v4457, %v4579
  %v4581 = vpop.f32.mrf.mxu0
  %v4582 = vadd.f32 %v4462, %v4581
  %v4583 = vpop.f32.mrf.mxu0
  %v4584 = vadd.f32 %v4462, %v4583
  %4585 = vdwg.mxu0
  %v4586 = vadd.f32 %v27, %v4515
  %v4587 = vadd.f32 %v28, %v4517
  %v4588 = vadd.f32 %v29, %v4568
  %v4589 = vadd.f32 %v30, %v4570
  %v4590 = vadd.f32 %v31, %v4519
  %v4591 = vadd.f32 %v32, %v4521
  %v4592 = vadd.f32 %v33, %v4572
  %v4593 = vadd.f32 %v34, %v4574
  %v4594 = vadd.f32 %v35, %v4525
  %v4595 = vadd.f32 %v36, %v4527
  %v4596 = vadd.f32 %v37, %v4578
  %v4597 = vadd.f32 %v38, %v4580
  %v4598 = vadd.f32 %v39, %v4529
  %v4599 = vadd.f32 %v40, %v4531
  %v4600 = vadd.f32 %v41, %v4582
  %v4601 = vadd.f32 %v42, %v4584
  %v4602 = vld [vmem:[%s1 + $0x140] sm:$0xff]
  %v4603 = vld [vmem:[%s1 + $0x148] sm:$0xff]
  %v4604 = vld [vmem:[%s1 + $0x150] sm:$0xff]
  %v4605 = vld [vmem:[%s1 + $0x158] sm:$0xff]
  %v4606 = vld [vmem:[%s1 + $0x160] sm:$0xff]
  %v4607 = vld [vmem:[%s1 + $0x168] sm:$0xff]
  %v4608 = vld [vmem:[%s1 + $0x170] sm:$0xff]
  %v4609 = vld [vmem:[%s1 + $0x178] sm:$0xff]
  %v4610 = vadd.f32 %v4586, %v4590
  %v4611 = vadd.f32 %v4610, %v4594
  %v4612 = vadd.f32 %v4611, %v4598
  %v4613 = vrot.slane %v4612, 4
  %v4614 = vadd.f32 %v4612, %v4613
  %v4615 = vrot.slane %v4614, 2
  %v4616 = vadd.f32 %v4614, %v4615
  %v4617 = vrot.slane %v4616, 1
  %v4618 = vadd.f32 %v4616, %v4617
  %v4619 = vadd.f32 %v4587, %v4591
  %v4620 = vadd.f32 %v4619, %v4595
  %v4621 = vadd.f32 %v4620, %v4599
  %v4622 = vrot.slane %v4621, 4
  %v4623 = vadd.f32 %v4621, %v4622
  %v4624 = vrot.slane %v4623, 2
  %v4625 = vadd.f32 %v4623, %v4624
  %v4626 = vrot.slane %v4625, 1
  %v4627 = vadd.f32 %v4625, %v4626
  %v4628 = vadd.f32 %v4588, %v4592
  %v4629 = vadd.f32 %v4628, %v4596
  %v4630 = vadd.f32 %v4629, %v4600
  %v4631 = vrot.slane %v4630, 4
  %v4632 = vadd.f32 %v4630, %v4631
  %v4633 = vrot.slane %v4632, 2
  %v4634 = vadd.f32 %v4632, %v4633
  %v4635 = vrot.slane %v4634, 1
  %v4636 = vadd.f32 %v4634, %v4635
  %v4637 = vadd.f32 %v4589, %v4593
  %v4638 = vadd.f32 %v4637, %v4597
  %v4639 = vadd.f32 %v4638, %v4601
  %v4640 = vrot.slane %v4639, 4
  %v4641 = vadd.f32 %v4639, %v4640
  %v4642 = vrot.slane %v4641, 2
  %v4643 = vadd.f32 %v4641, %v4642
  %v4644 = vrot.slane %v4643, 1
  %v4645 = vadd.f32 %v4643, %v4644
  %v4646 = vmul.f32 %v4618, %v102
  %v4647 = vmul.f32 %v4627, %v102
  %v4648 = vmul.f32 %v4636, %v102
  %v4649 = vmul.f32 %v4645, %v102
  %v4650 = vsub.f32 %v4586, %v4646
  %v4651 = vsub.f32 %v4587, %v4647
  %v4652 = vsub.f32 %v4588, %v4648
  %v4653 = vsub.f32 %v4589, %v4649
  %v4654 = vsub.f32 %v4590, %v4646
  %v4655 = vsub.f32 %v4591, %v4647
  %v4656 = vsub.f32 %v4592, %v4648
  %v4657 = vsub.f32 %v4593, %v4649
  %v4658 = vsub.f32 %v4594, %v4646
  %v4659 = vsub.f32 %v4595, %v4647
  %v4660 = vsub.f32 %v4596, %v4648
  %v4661 = vsub.f32 %v4597, %v4649
  %v4662 = vsub.f32 %v4598, %v4646
  %v4663 = vsub.f32 %v4599, %v4647
  %v4664 = vsub.f32 %v4600, %v4648
  %v4665 = vsub.f32 %v4601, %v4649
  %v4666 = vmul.f32 %v4650, %v4650
  %v4667 = vmul.f32 %v4651, %v4651
  %v4668 = vmul.f32 %v4652, %v4652
  %v4669 = vmul.f32 %v4653, %v4653
  %v4670 = vmul.f32 %v4654, %v4654
  %v4671 = vmul.f32 %v4655, %v4655
  %v4672 = vmul.f32 %v4656, %v4656
  %v4673 = vmul.f32 %v4657, %v4657
  %v4674 = vmul.f32 %v4658, %v4658
  %v4675 = vmul.f32 %v4659, %v4659
  %v4676 = vmul.f32 %v4660, %v4660
  %v4677 = vmul.f32 %v4661, %v4661
  %v4678 = vmul.f32 %v4662, %v4662
  %v4679 = vmul.f32 %v4663, %v4663
  %v4680 = vmul.f32 %v4664, %v4664
  %v4681 = vmul.f32 %v4665, %v4665
  %v4682 = vadd.f32 %v4666, %v4670
  %v4683 = vadd.f32 %v4682, %v4674
  %v4684 = vadd.f32 %v4683, %v4678
  %v4685 = vrot.slane %v4684, 4
  %v4686 = vadd.f32 %v4684, %v4685
  %v4687 = vrot.slane %v4686, 2
  %v4688 = vadd.f32 %v4686, %v4687
  %v4689 = vrot.slane %v4688, 1
  %v4690 = vadd.f32 %v4688, %v4689
  %v4691 = vadd.f32 %v4667, %v4671
  %v4692 = vadd.f32 %v4691, %v4675
  %v4693 = vadd.f32 %v4692, %v4679
  %v4694 = vrot.slane %v4693, 4
  %v4695 = vadd.f32 %v4693, %v4694
  %v4696 = vrot.slane %v4695, 2
  %v4697 = vadd.f32 %v4695, %v4696
  %v4698 = vrot.slane %v4697, 1
  %v4699 = vadd.f32 %v4697, %v4698
  %v4700 = vadd.f32 %v4668, %v4672
  %v4701 = vadd.f32 %v4700, %v4676
  %v4702 = vadd.f32 %v4701, %v4680
  %v4703 = vrot.slane %v4702, 4
  %v4704 = vadd.f32 %v4702, %v4703
  %v4705 = vrot.slane %v4704, 2
  %v4706 = vadd.f32 %v4704, %v4705
  %v4707 = vrot.slane %v4706, 1
  %v4708 = vadd.f32 %v4706, %v4707
  %v4709 = vadd.f32 %v4669, %v4673
  %v4710 = vadd.f32 %v4709, %v4677
  %v4711 = vadd.f32 %v4710, %v4681
  %v4712 = vrot.slane %v4711, 4
  %v4713 = vadd.f32 %v4711, %v4712
  %v4714 = vrot.slane %v4713, 2
  %v4715 = vadd.f32 %v4713, %v4714
  %v4716 = vrot.slane %v4715, 1
  %v4717 = vadd.f32 %v4715, %v4716
  %v4718 = vmul.f32 %v4690, %v102
  %v4719 = vmul.f32 %v4699, %v102
  %v4720 = vmul.f32 %v4708, %v102
  %v4721 = vmul.f32 %v4717, %v102
  %v4722 = vadd.f32 %v4718, 1e-05
  %v4723 = vadd.f32 %v4719, 1e-05
  %v4724 = vadd.f32 %v4720, 1e-05
  %v4725 = vadd.f32 %v4721, 1e-05
  %v4726 = vrsqrt.pop %v4722
  %v4727 = vrsqrt.pop %v4723
  %v4728 = vrsqrt.pop %v4724
  %v4729 = vrsqrt.pop %v4725
  %v4730 = vmul.f32 %v4650, %v4726
  %v4731 = vmul.f32 %v4651, %v4727
  %v4732 = vmul.f32 %v4652, %v4728
  %v4733 = vmul.f32 %v4653, %v4729
  %v4734 = vmul.f32 %v4654, %v4726
  %v4735 = vmul.f32 %v4655, %v4727
  %v4736 = vmul.f32 %v4656, %v4728
  %v4737 = vmul.f32 %v4657, %v4729
  %v4738 = vmul.f32 %v4658, %v4726
  %v4739 = vmul.f32 %v4659, %v4727
  %v4740 = vmul.f32 %v4660, %v4728
  %v4741 = vmul.f32 %v4661, %v4729
  %v4742 = vmul.f32 %v4662, %v4726
  %v4743 = vmul.f32 %v4663, %v4727
  %v4744 = vmul.f32 %v4664, %v4728
  %v4745 = vmul.f32 %v4665, %v4729
  %4747 = vset.pattern.permute.xlu0 0
  %4748 = vperm.xlu0 %4747, %v4602
  %v4749 = vpop.permute.xlu0 %4748
  %4752 = vset.pattern.permute.xlu0 0
  %4753 = vperm.xlu0 %4752, %v4603
  %v4754 = vpop.permute.xlu0 %4753
  %4757 = vset.pattern.permute.xlu0 0
  %4758 = vperm.xlu0 %4757, %v4604
  %v4759 = vpop.permute.xlu0 %4758
  %4762 = vset.pattern.permute.xlu0 0
  %4763 = vperm.xlu0 %4762, %v4605
  %v4764 = vpop.permute.xlu0 %4763
  %v4766 = vmul.f32 %v4730, %v4749
  %v4767 = vmul.f32 %v4731, %v4749
  %v4768 = vmul.f32 %v4732, %v4749
  %v4769 = vmul.f32 %v4733, %v4749
  %v4770 = vmul.f32 %v4734, %v4754
  %v4771 = vmul.f32 %v4735, %v4754
  %v4772 = vmul.f32 %v4736, %v4754
  %v4773 = vmul.f32 %v4737, %v4754
  %v4774 = vmul.f32 %v4738, %v4759
  %v4775 = vmul.f32 %v4739, %v4759
  %v4776 = vmul.f32 %v4740, %v4759
  %v4777 = vmul.f32 %v4741, %v4759
  %v4778 = vmul.f32 %v4742, %v4764
  %v4779 = vmul.f32 %v4743, %v4764
  %v4780 = vmul.f32 %v4744, %v4764
  %v4781 = vmul.f32 %v4745, %v4764
  %4783 = vset.pattern.permute.xlu0 0
  %4784 = vperm.xlu0 %4783, %v4606
  %v4785 = vpop.permute.xlu0 %4784
  %4788 = vset.pattern.permute.xlu0 0
  %4789 = vperm.xlu0 %4788, %v4607
  %v4790 = vpop.permute.xlu0 %4789
  %4793 = vset.pattern.permute.xlu0 0
  %4794 = vperm.xlu0 %4793, %v4608
  %v4795 = vpop.permute.xlu0 %4794
  %4798 = vset.pattern.permute.xlu0 0
  %4799 = vperm.xlu0 %4798, %v4609
  %v4800 = vpop.permute.xlu0 %4799
  %v4802 = vadd.f32 %v4766, %v4785
  %v4803 = vadd.f32 %v4767, %v4785
  %v4804 = vadd.f32 %v4768, %v4785
  %v4805 = vadd.f32 %v4769, %v4785
  %v4806 = vadd.f32 %v4770, %v4790
  %v4807 = vadd.f32 %v4771, %v4790
  %v4808 = vadd.f32 %v4772, %v4790
  %v4809 = vadd.f32 %v4773, %v4790
  %v4810 = vadd.f32 %v4774, %v4795
  %v4811 = vadd.f32 %v4775, %v4795
  %v4812 = vadd.f32 %v4776, %v4795
  %v4813 = vadd.f32 %v4777, %v4795
  %v4814 = vadd.f32 %v4778, %v4800
  %v4815 = vadd.f32 %v4779, %v4800
  %v4816 = vadd.f32 %v4780, %v4800
  %v4817 = vadd.f32 %v4781, %v4800
  %v4818 = vld [vmem:[%s5 + $0x40] sm:$0xf]
  %v4819 = vld [vmem:[%s5 + $0x44] sm:$0xf]
  %v4820 = vld [vmem:[%s5 + $0x48] sm:$0xf]
  %v4821 = vld [vmem:[%s5 + $0x4c] sm:$0xf]
  %v4822 = vld [vmem:[%s5 + $0x50] sm:$0xf]
  %v4823 = vld [vmem:[%s5 + $0x54] sm:$0xf]
  %v4824 = vld [vmem:[%s5 + $0x58] sm:$0xf]
  %v4825 = vld [vmem:[%s5 + $0x5c] sm:$0xf]
  %v4826 = vld [vmem:[%s5 + $0x60] sm:$0xf]
  %v4827 = vld [vmem:[%s5 + $0x64] sm:$0xf]
  %v4828 = vld [vmem:[%s5 + $0x68] sm:$0xf]
  %v4829 = vld [vmem:[%s5 + $0x6c] sm:$0xf]
  %v4830 = vld [vmem:[%s5 + $0x70] sm:$0xf]
  %v4831 = vld [vmem:[%s5 + $0x74] sm:$0xf]
  %v4832 = vld [vmem:[%s5 + $0x78] sm:$0xf]
  %v4833 = vld [vmem:[%s5 + $0x7c] sm:$0xf]
  %v4834 = vpack.c.bf16 %v4806, %v4802
  %v4835 = vpack.c.bf16 %v4807, %v4803
  %v4836 = vpack.c.bf16 %v4808, %v4804
  %v4837 = vpack.c.bf16 %v4809, %v4805
  %v4838 = vpack.c.bf16 %v4814, %v4810
  %v4839 = vpack.c.bf16 %v4815, %v4811
  %v4840 = vpack.c.bf16 %v4816, %v4812
  %v4841 = vpack.c.bf16 %v4817, %v4813
  %v4842 = vld [vmem:[%s1 + $0x180] sm:$0xff]
  %v4843 = vld [vmem:[%s1 + $0x188] sm:$0xff]
  %v4844 = vld [vmem:[%s1 + $0x190] sm:$0xff]
  %v4845 = vld [vmem:[%s1 + $0x198] sm:$0xff]
  %v4846 = vld [vmem:[%s1 + $0x1a0] sm:$0xff]
  %v4847 = vld [vmem:[%s1 + $0x1a8] sm:$0xff]
  %v4848 = vld [vmem:[%s1 + $0x1b0] sm:$0xff]
  %v4849 = vld [vmem:[%s1 + $0x1b8] sm:$0xff]
  %v4850 = vld [vmem:[%s1 + $0x1c0] sm:$0xff]
  %v4851 = vld [vmem:[%s1 + $0x1c8] sm:$0xff]
  %v4852 = vld [vmem:[%s1 + $0x1d0] sm:$0xff]
  %v4853 = vld [vmem:[%s1 + $0x1d8] sm:$0xff]
  %v4854 = vld [vmem:[%s1 + $0x1e0] sm:$0xff]
  %v4855 = vld [vmem:[%s1 + $0x1e8] sm:$0xff]
  %v4856 = vld [vmem:[%s1 + $0x1f0] sm:$0xff]
  %v4857 = vld [vmem:[%s1 + $0x1f8] sm:$0xff]
  %4859 = vset.pattern.permute.xlu0 0
  %4860 = vperm.xlu0 %4859, %v4842
  %v4861 = vpop.permute.xlu0 %4860
  %4864 = vset.pattern.permute.xlu0 0
  %4865 = vperm.xlu0 %4864, %v4843
  %v4866 = vpop.permute.xlu0 %4865
  %4869 = vset.pattern.permute.xlu0 0
  %4870 = vperm.xlu0 %4869, %v4844
  %v4871 = vpop.permute.xlu0 %4870
  %4874 = vset.pattern.permute.xlu0 0
  %4875 = vperm.xlu0 %4874, %v4845
  %v4876 = vpop.permute.xlu0 %4875
  %4879 = vset.pattern.permute.xlu0 0
  %4880 = vperm.xlu0 %4879, %v4846
  %v4881 = vpop.permute.xlu0 %4880
  %4884 = vset.pattern.permute.xlu0 0
  %4885 = vperm.xlu0 %4884, %v4847
  %v4886 = vpop.permute.xlu0 %4885
  %4889 = vset.pattern.permute.xlu0 0
  %4890 = vperm.xlu0 %4889, %v4848
  %v4891 = vpop.permute.xlu0 %4890
  %4894 = vset.pattern.permute.xlu0 0
  %4895 = vperm.xlu0 %4894, %v4849
  %v4896 = vpop.permute.xlu0 %4895
  %4899 = vset.pattern.permute.xlu0 0
  %4900 = vperm.xlu0 %4899, %v4850
  %v4901 = vpop.permute.xlu0 %4900
  %4904 = vset.pattern.permute.xlu0 0
  %4905 = vperm.xlu0 %4904, %v4851
  %v4906 = vpop.permute.xlu0 %4905
  %4909 = vset.pattern.permute.xlu0 0
  %4910 = vperm.xlu0 %4909, %v4852
  %v4911 = vpop.permute.xlu0 %4910
  %4914 = vset.pattern.permute.xlu0 0
  %4915 = vperm.xlu0 %4914, %v4853
  %v4916 = vpop.permute.xlu0 %4915
  %4919 = vset.pattern.permute.xlu0 0
  %4920 = vperm.xlu0 %4919, %v4854
  %v4921 = vpop.permute.xlu0 %4920
  %4924 = vset.pattern.permute.xlu0 0
  %4925 = vperm.xlu0 %4924, %v4855
  %v4926 = vpop.permute.xlu0 %4925
  %4929 = vset.pattern.permute.xlu0 0
  %4930 = vperm.xlu0 %4929, %v4856
  %v4931 = vpop.permute.xlu0 %4930
  %4934 = vset.pattern.permute.xlu0 0
  %4935 = vperm.xlu0 %4934, %v4857
  %v4936 = vpop.permute.xlu0 %4935
  %v4954 = vunpack.c.l.b16 %v4818
  %v4955 = vunpack.c.l.b16 %v4819
  %v4956 = vunpack.c.l.b16 %v4820
  %v4957 = vunpack.c.l.b16 %v4821
  %v4958 = vunpack.c.l.b16 %v4822
  %v4959 = vunpack.c.l.b16 %v4823
  %v4960 = vunpack.c.l.b16 %v4824
  %v4961 = vunpack.c.l.b16 %v4825
  %v4962 = vunpack.c.l.b16 %v4826
  %v4963 = vunpack.c.l.b16 %v4827
  %v4964 = vunpack.c.l.b16 %v4828
  %v4965 = vunpack.c.l.b16 %v4829
  %v4966 = vunpack.c.l.b16 %v4830
  %v4967 = vunpack.c.l.b16 %v4831
  %v4968 = vunpack.c.l.b16 %v4832
  %v4969 = vunpack.c.l.b16 %v4833
  %v4970 = vpack.c.b16 %v4955, %v4954
  %v4971 = vpack.c.b16 %v4957, %v4956
  %v4972 = vpack.c.b16 %v4959, %v4958
  %v4973 = vpack.c.b16 %v4961, %v4960
  %v4974 = vpack.c.b16 %v4963, %v4962
  %v4975 = vpack.c.b16 %v4965, %v4964
  %v4976 = vpack.c.b16 %v4967, %v4966
  %v4977 = vpack.c.b16 %v4969, %v4968
  %v4979 = vsel %vm397, %v4970, 0
  %v4982 = vsel %vm397, %v4971, 0
  %v4985 = vsel %vm397, %v4972, 0
  %v4988 = vsel %vm397, %v4973, 0
  %v4991 = vsel %vm397, %v4974, 0
  %v4994 = vsel %vm397, %v4975, 0
  %v4997 = vsel %vm397, %v4976, 0
  %v5000 = vsel %vm397, %v4977, 0
  %5002 = vmatprep.subr.bf16.mxu0 0
  %5003 = vmatpush1.bf16.msra.mxu0 0
  %5004 = vmatprep.subr.bf16.mxu0 0
  %5005 = vmatpush1.bf16.msra.mxu0 0
  %5006 = vmatprep.subr.bf16.mxu0 0
  %5007 = vmatpush1.bf16.msra.mxu0 0
  %5008 = vmatprep.subr.bf16.mxu0 0
  %5009 = vmatpush1.bf16.msra.mxu0 0
  %5010 = vmatprep.subr.bf16.mxu0 0
  %5011 = vmatpush1.bf16.msra.mxu0 0
  %5012 = vmatprep.subr.bf16.mxu0 0
  %5013 = vmatpush1.bf16.msra.mxu0 0
  %5014 = vmatprep.subr.bf16.mxu0 %v4839
  %5015 = vmatpush1.bf16.msra.mxu0 %v4838
  %5016 = vmatprep.subr.bf16.mxu0 %v4835
  %5017 = vmatpush1.bf16.msra.mxu0 %v4834
  %5018 = vmatprep.subr.bf16.mxu0 0
  %5019 = vmatpush2.bf16.msra.mxu0 0
  %5020 = vmatprep.subr.bf16.mxu0 0
  %5021 = vmatpush2.bf16.msra.mxu0 0
  %5022 = vmatprep.subr.bf16.mxu0 0
  %5023 = vmatpush2.bf16.msra.mxu0 0
  %5024 = vmatprep.subr.bf16.mxu0 0
  %5025 = vmatpush2.bf16.msra.mxu0 0
  %5026 = vmatprep.subr.bf16.mxu0 0
  %5027 = vmatpush2.bf16.msra.mxu0 0
  %5028 = vmatprep.subr.bf16.mxu0 0
  %5029 = vmatpush2.bf16.msra.mxu0 0
  %5030 = vmatprep.subr.bf16.mxu0 0
  %5031 = vmatpush2.bf16.msra.mxu0 0
  %5032 = vmatprep.subr.bf16.mxu0 0
  %5033 = vmatpush2.bf16.msra.mxu0 0
  %5034 = vmatprep.mubr.bf16.mxu0 0
  %5035 = vmatmul.mubr.bf16.gmra.mxu0 %v4979
  %v5036 = vpop.f32.mrf.mxu0
  %v5037 = vadd.f32 %v4861, %v5036
  %v5038 = vpop.f32.mrf.mxu0
  %v5039 = vadd.f32 %v4861, %v5038
  %v5040 = vpop.f32.mrf.mxu0
  %v5041 = vadd.f32 %v4866, %v5040
  %v5042 = vpop.f32.mrf.mxu0
  %v5043 = vadd.f32 %v4866, %v5042
  %5044 = vmatprep.mubr.bf16.mxu0 0
  %5045 = vmatmul.mubr.bf16.gmra.mxu0 %v4982
  %v5046 = vpop.f32.mrf.mxu0
  %v5047 = vadd.f32 %v4871, %v5046
  %v5048 = vpop.f32.mrf.mxu0
  %v5049 = vadd.f32 %v4871, %v5048
  %v5050 = vpop.f32.mrf.mxu0
  %v5051 = vadd.f32 %v4876, %v5050
  %v5052 = vpop.f32.mrf.mxu0
  %v5053 = vadd.f32 %v4876, %v5052
  %5054 = vmatprep.mubr.bf16.mxu0 0
  %5055 = vmatmul.mubr.bf16.gmra.mxu0 %v4985
  %v5056 = vpop.f32.mrf.mxu0
  %v5057 = vadd.f32 %v4881, %v5056
  %v5058 = vpop.f32.mrf.mxu0
  %v5059 = vadd.f32 %v4881, %v5058
  %v5060 = vpop.f32.mrf.mxu0
  %v5061 = vadd.f32 %v4886, %v5060
  %v5062 = vpop.f32.mrf.mxu0
  %v5063 = vadd.f32 %v4886, %v5062
  %5064 = vmatprep.mubr.bf16.mxu0 0
  %5065 = vmatmul.mubr.bf16.gmra.mxu0 %v4988
  %v5066 = vpop.f32.mrf.mxu0
  %v5067 = vadd.f32 %v4891, %v5066
  %v5068 = vpop.f32.mrf.mxu0
  %v5069 = vadd.f32 %v4891, %v5068
  %v5070 = vpop.f32.mrf.mxu0
  %v5071 = vadd.f32 %v4896, %v5070
  %v5072 = vpop.f32.mrf.mxu0
  %v5073 = vadd.f32 %v4896, %v5072
  %5074 = vmatprep.mubr.bf16.mxu0 0
  %5075 = vmatmul.mubr.bf16.gmra.mxu0 %v4991
  %v5076 = vpop.f32.mrf.mxu0
  %v5077 = vadd.f32 %v4901, %v5076
  %v5078 = vpop.f32.mrf.mxu0
  %v5079 = vadd.f32 %v4901, %v5078
  %v5080 = vpop.f32.mrf.mxu0
  %v5081 = vadd.f32 %v4906, %v5080
  %v5082 = vpop.f32.mrf.mxu0
  %v5083 = vadd.f32 %v4906, %v5082
  %5084 = vmatprep.mubr.bf16.mxu0 0
  %5085 = vmatmul.mubr.bf16.gmra.mxu0 %v4994
  %v5086 = vpop.f32.mrf.mxu0
  %v5087 = vadd.f32 %v4911, %v5086
  %v5088 = vpop.f32.mrf.mxu0
  %v5089 = vadd.f32 %v4911, %v5088
  %v5090 = vpop.f32.mrf.mxu0
  %v5091 = vadd.f32 %v4916, %v5090
  %v5092 = vpop.f32.mrf.mxu0
  %v5093 = vadd.f32 %v4916, %v5092
  %5094 = vmatprep.mubr.bf16.mxu0 0
  %5095 = vmatmul.mubr.bf16.gmra.mxu0 %v4997
  %v5096 = vpop.f32.mrf.mxu0
  %v5097 = vadd.f32 %v4921, %v5096
  %v5098 = vpop.f32.mrf.mxu0
  %v5099 = vadd.f32 %v4921, %v5098
  %v5100 = vpop.f32.mrf.mxu0
  %v5101 = vadd.f32 %v4926, %v5100
  %v5102 = vpop.f32.mrf.mxu0
  %v5103 = vadd.f32 %v4926, %v5102
  %5104 = vmatprep.mubr.bf16.mxu0 0
  %5105 = vmatmul.mubr.bf16.gmra.mxu0 %v5000
  %v5106 = vpop.f32.mrf.mxu0
  %v5107 = vadd.f32 %v4931, %v5106
  %v5108 = vpop.f32.mrf.mxu0
  %v5109 = vadd.f32 %v4931, %v5108
  %v5110 = vpop.f32.mrf.mxu0
  %v5111 = vadd.f32 %v4936, %v5110
  %v5112 = vpop.f32.mrf.mxu0
  %v5113 = vadd.f32 %v4936, %v5112
  %5114 = vdwg.mxu0
  %5115 = vmatprep.subr.bf16.mxu0 0
  %5116 = vmatpush1.bf16.msra.mxu0 0
  %5117 = vmatprep.subr.bf16.mxu0 0
  %5118 = vmatpush1.bf16.msra.mxu0 0
  %5119 = vmatprep.subr.bf16.mxu0 0
  %5120 = vmatpush1.bf16.msra.mxu0 0
  %5121 = vmatprep.subr.bf16.mxu0 0
  %5122 = vmatpush1.bf16.msra.mxu0 0
  %5123 = vmatprep.subr.bf16.mxu0 0
  %5124 = vmatpush1.bf16.msra.mxu0 0
  %5125 = vmatprep.subr.bf16.mxu0 0
  %5126 = vmatpush1.bf16.msra.mxu0 0
  %5127 = vmatprep.subr.bf16.mxu0 %v4841
  %5128 = vmatpush1.bf16.msra.mxu0 %v4840
  %5129 = vmatprep.subr.bf16.mxu0 %v4837
  %5130 = vmatpush1.bf16.msra.mxu0 %v4836
  %5131 = vmatprep.subr.bf16.mxu0 0
  %5132 = vmatpush2.bf16.msra.mxu0 0
  %5133 = vmatprep.subr.bf16.mxu0 0
  %5134 = vmatpush2.bf16.msra.mxu0 0
  %5135 = vmatprep.subr.bf16.mxu0 0
  %5136 = vmatpush2.bf16.msra.mxu0 0
  %5137 = vmatprep.subr.bf16.mxu0 0
  %5138 = vmatpush2.bf16.msra.mxu0 0
  %5139 = vmatprep.subr.bf16.mxu0 0
  %5140 = vmatpush2.bf16.msra.mxu0 0
  %5141 = vmatprep.subr.bf16.mxu0 0
  %5142 = vmatpush2.bf16.msra.mxu0 0
  %5143 = vmatprep.subr.bf16.mxu0 0
  %5144 = vmatpush2.bf16.msra.mxu0 0
  %5145 = vmatprep.subr.bf16.mxu0 0
  %5146 = vmatpush2.bf16.msra.mxu0 0
  %5147 = vmatprep.mubr.bf16.mxu0 0
  %5148 = vmatmul.mubr.bf16.gmra.mxu0 %v4979
  %v5149 = vpop.f32.mrf.mxu0
  %v5150 = vadd.f32 %v4861, %v5149
  %v5151 = vpop.f32.mrf.mxu0
  %v5152 = vadd.f32 %v4861, %v5151
  %v5153 = vpop.f32.mrf.mxu0
  %v5154 = vadd.f32 %v4866, %v5153
  %v5155 = vpop.f32.mrf.mxu0
  %v5156 = vadd.f32 %v4866, %v5155
  %5157 = vmatprep.mubr.bf16.mxu0 0
  %5158 = vmatmul.mubr.bf16.gmra.mxu0 %v4982
  %v5159 = vpop.f32.mrf.mxu0
  %v5160 = vadd.f32 %v4871, %v5159
  %v5161 = vpop.f32.mrf.mxu0
  %v5162 = vadd.f32 %v4871, %v5161
  %v5163 = vpop.f32.mrf.mxu0
  %v5164 = vadd.f32 %v4876, %v5163
  %v5165 = vpop.f32.mrf.mxu0
  %v5166 = vadd.f32 %v4876, %v5165
  %5167 = vmatprep.mubr.bf16.mxu0 0
  %5168 = vmatmul.mubr.bf16.gmra.mxu0 %v4985
  %v5169 = vpop.f32.mrf.mxu0
  %v5170 = vadd.f32 %v4881, %v5169
  %v5171 = vpop.f32.mrf.mxu0
  %v5172 = vadd.f32 %v4881, %v5171
  %v5173 = vpop.f32.mrf.mxu0
  %v5174 = vadd.f32 %v4886, %v5173
  %v5175 = vpop.f32.mrf.mxu0
  %v5176 = vadd.f32 %v4886, %v5175
  %5177 = vmatprep.mubr.bf16.mxu0 0
  %5178 = vmatmul.mubr.bf16.gmra.mxu0 %v4988
  %v5179 = vpop.f32.mrf.mxu0
  %v5180 = vadd.f32 %v4891, %v5179
  %v5181 = vpop.f32.mrf.mxu0
  %v5182 = vadd.f32 %v4891, %v5181
  %v5183 = vpop.f32.mrf.mxu0
  %v5184 = vadd.f32 %v4896, %v5183
  %v5185 = vpop.f32.mrf.mxu0
  %v5186 = vadd.f32 %v4896, %v5185
  %5187 = vmatprep.mubr.bf16.mxu0 0
  %5188 = vmatmul.mubr.bf16.gmra.mxu0 %v4991
  %v5189 = vpop.f32.mrf.mxu0
  %v5190 = vadd.f32 %v4901, %v5189
  %v5191 = vpop.f32.mrf.mxu0
  %v5192 = vadd.f32 %v4901, %v5191
  %v5193 = vpop.f32.mrf.mxu0
  %v5194 = vadd.f32 %v4906, %v5193
  %v5195 = vpop.f32.mrf.mxu0
  %v5196 = vadd.f32 %v4906, %v5195
  %5197 = vmatprep.mubr.bf16.mxu0 0
  %5198 = vmatmul.mubr.bf16.gmra.mxu0 %v4994
  %v5199 = vpop.f32.mrf.mxu0
  %v5200 = vadd.f32 %v4911, %v5199
  %v5201 = vpop.f32.mrf.mxu0
  %v5202 = vadd.f32 %v4911, %v5201
  %v5203 = vpop.f32.mrf.mxu0
  %v5204 = vadd.f32 %v4916, %v5203
  %v5205 = vpop.f32.mrf.mxu0
  %v5206 = vadd.f32 %v4916, %v5205
  %5207 = vmatprep.mubr.bf16.mxu0 0
  %5208 = vmatmul.mubr.bf16.gmra.mxu0 %v4997
  %v5209 = vpop.f32.mrf.mxu0
  %v5210 = vadd.f32 %v4921, %v5209
  %v5211 = vpop.f32.mrf.mxu0
  %v5212 = vadd.f32 %v4921, %v5211
  %v5213 = vpop.f32.mrf.mxu0
  %v5214 = vadd.f32 %v4926, %v5213
  %v5215 = vpop.f32.mrf.mxu0
  %v5216 = vadd.f32 %v4926, %v5215
  %5217 = vmatprep.mubr.bf16.mxu0 0
  %5218 = vmatmul.mubr.bf16.gmra.mxu0 %v5000
  %v5219 = vpop.f32.mrf.mxu0
  %v5220 = vadd.f32 %v4931, %v5219
  %v5221 = vpop.f32.mrf.mxu0
  %v5222 = vadd.f32 %v4931, %v5221
  %v5223 = vpop.f32.mrf.mxu0
  %v5224 = vadd.f32 %v4936, %v5223
  %v5225 = vpop.f32.mrf.mxu0
  %v5226 = vadd.f32 %v4936, %v5225
  %5227 = vdwg.mxu0
  %v5228 = vld [vmem:[%s1 + $0x200] sm:$0xff]
  %v5229 = vld [vmem:[%s1 + $0x208] sm:$0xff]
  %v5230 = vld [vmem:[%s1 + $0x210] sm:$0xff]
  %v5231 = vld [vmem:[%s1 + $0x218] sm:$0xff]
  %v5232 = vld [vmem:[%s606 + $0x60] sm:$0xff]
  %v5233 = vld [vmem:[%s606 + $0x68] sm:$0xff]
  %v5234 = vld [vmem:[%s606 + $0x70] sm:$0xff]
  %v5235 = vld [vmem:[%s606 + $0x78] sm:$0xff]
  %5237 = vset.pattern.permute.xlu0 0
  %5238 = vperm.xlu0 %5237, %v5232
  %v5239 = vpop.permute.xlu0 %5238
  %5242 = vset.pattern.permute.xlu0 0
  %5243 = vperm.xlu0 %5242, %v5233
  %v5244 = vpop.permute.xlu0 %5243
  %5247 = vset.pattern.permute.xlu0 0
  %5248 = vperm.xlu0 %5247, %v5234
  %v5249 = vpop.permute.xlu0 %5248
  %5252 = vset.pattern.permute.xlu0 0
  %5253 = vperm.xlu0 %5252, %v5235
  %v5254 = vpop.permute.xlu0 %5253
  %v5256 = vmul.f32 %v5037, %v5239
  %v5257 = vmul.f32 %v5039, %v5239
  %v5258 = vmul.f32 %v5150, %v5239
  %v5259 = vmul.f32 %v5152, %v5239
  %v5260 = vmul.f32 %v5041, %v5244
  %v5261 = vmul.f32 %v5043, %v5244
  %v5262 = vmul.f32 %v5154, %v5244
  %v5263 = vmul.f32 %v5156, %v5244
  %v5264 = vmul.f32 %v5047, %v5249
  %v5265 = vmul.f32 %v5049, %v5249
  %v5266 = vmul.f32 %v5160, %v5249
  %v5267 = vmul.f32 %v5162, %v5249
  %v5268 = vmul.f32 %v5051, %v5254
  %v5269 = vmul.f32 %v5053, %v5254
  %v5270 = vmul.f32 %v5164, %v5254
  %v5271 = vmul.f32 %v5166, %v5254
  %5272 = vrot.lane.b32.xlu0 %v5037, 17
  %v5273 = vpop.permute.xlu0 %5272
  %5274 = vrot.lane.b32.xlu0 %v5041, 17
  %v5275 = vpop.permute.xlu0 %5274
  %5276 = vrot.lane.b32.xlu0 %v5047, 17
  %v5277 = vpop.permute.xlu0 %5276
  %5278 = vrot.lane.b32.xlu0 %v5051, 17
  %v5279 = vpop.permute.xlu0 %5278
  %5280 = vrot.lane.b32.xlu0 %v5039, 17
  %v5281 = vpop.permute.xlu0 %5280
  %5282 = vrot.lane.b32.xlu0 %v5043, 17
  %v5283 = vpop.permute.xlu0 %5282
  %5284 = vrot.lane.b32.xlu0 %v5049, 17
  %v5285 = vpop.permute.xlu0 %5284
  %5286 = vrot.lane.b32.xlu0 %v5053, 17
  %v5287 = vpop.permute.xlu0 %5286
  %5288 = vrot.lane.b32.xlu0 %v5150, 17
  %v5289 = vpop.permute.xlu0 %5288
  %5290 = vrot.lane.b32.xlu0 %v5154, 17
  %v5291 = vpop.permute.xlu0 %5290
  %5292 = vrot.lane.b32.xlu0 %v5160, 17
  %v5293 = vpop.permute.xlu0 %5292
  %5294 = vrot.lane.b32.xlu0 %v5164, 17
  %v5295 = vpop.permute.xlu0 %5294
  %5296 = vrot.lane.b32.xlu0 %v5152, 17
  %v5297 = vpop.permute.xlu0 %5296
  %5298 = vrot.lane.b32.xlu0 %v5156, 17
  %v5299 = vpop.permute.xlu0 %5298
  %5300 = vrot.lane.b32.xlu0 %v5162, 17
  %v5301 = vpop.permute.xlu0 %5300
  %5302 = vrot.lane.b32.xlu0 %v5166, 17
  %v5303 = vpop.permute.xlu0 %5302
  %v5304 = vsel %vm681, %v5289, %v5297
  %v5305 = vsel %vm681, %v5291, %v5299
  %v5306 = vsel %vm681, %v5293, %v5301
  %v5307 = vsel %vm681, %v5295, %v5303
  %v5308 = vsel %vm681, %v5281, %v5289
  %v5309 = vsel %vm681, %v5283, %v5291
  %v5310 = vsel %vm681, %v5285, %v5293
  %v5311 = vsel %vm681, %v5287, %v5295
  %v5312 = vsel %vm681, %v5273, %v5281
  %v5313 = vsel %vm681, %v5275, %v5283
  %v5314 = vsel %vm681, %v5277, %v5285
  %v5315 = vsel %vm681, %v5279, %v5287
  %v5316 = vsel %vm681, %v5297, %v5273
  %v5317 = vsel %vm681, %v5299, %v5275
  %v5318 = vsel %vm681, %v5301, %v5277
  %v5319 = vsel %vm681, %v5303, %v5279
  %v5320 = vmul.f32 %v5316, %v702
  %v5321 = vmul.f32 %v5312, %v706
  %v5322 = vmul.f32 %v5308, %v710
  %v5323 = vmul.f32 %v5304, %v714
  %v5324 = vmul.f32 %v5317, %v702
  %v5325 = vmul.f32 %v5313, %v706
  %v5326 = vmul.f32 %v5309, %v710
  %v5327 = vmul.f32 %v5305, %v714
  %v5328 = vmul.f32 %v5318, %v702
  %v5329 = vmul.f32 %v5314, %v706
  %v5330 = vmul.f32 %v5310, %v710
  %v5331 = vmul.f32 %v5306, %v714
  %v5332 = vmul.f32 %v5319, %v702
  %v5333 = vmul.f32 %v5315, %v706
  %v5334 = vmul.f32 %v5311, %v710
  %v5335 = vmul.f32 %v5307, %v714
  %v5336 = vld [vmem:[%s2 + $0x60] sm:$0xff]
  %v5337 = vld [vmem:[%s2 + $0x68] sm:$0xff]
  %v5338 = vld [vmem:[%s2 + $0x70] sm:$0xff]
  %v5339 = vld [vmem:[%s2 + $0x78] sm:$0xff]
  %5341 = vset.pattern.permute.xlu0 0
  %5342 = vperm.xlu0 %5341, %v5336
  %v5343 = vpop.permute.xlu0 %5342
  %5346 = vset.pattern.permute.xlu0 0
  %5347 = vperm.xlu0 %5346, %v5337
  %v5348 = vpop.permute.xlu0 %5347
  %5351 = vset.pattern.permute.xlu0 0
  %5352 = vperm.xlu0 %5351, %v5338
  %v5353 = vpop.permute.xlu0 %5352
  %5356 = vset.pattern.permute.xlu0 0
  %5357 = vperm.xlu0 %5356, %v5339
  %v5358 = vpop.permute.xlu0 %5357
  %v5360 = vmul.f32 %v5320, %v5343
  %v5361 = vmul.f32 %v5321, %v5343
  %v5362 = vmul.f32 %v5322, %v5343
  %v5363 = vmul.f32 %v5323, %v5343
  %v5364 = vmul.f32 %v5324, %v5348
  %v5365 = vmul.f32 %v5325, %v5348
  %v5366 = vmul.f32 %v5326, %v5348
  %v5367 = vmul.f32 %v5327, %v5348
  %v5368 = vmul.f32 %v5328, %v5353
  %v5369 = vmul.f32 %v5329, %v5353
  %v5370 = vmul.f32 %v5330, %v5353
  %v5371 = vmul.f32 %v5331, %v5353
  %v5372 = vmul.f32 %v5332, %v5358
  %v5373 = vmul.f32 %v5333, %v5358
  %v5374 = vmul.f32 %v5334, %v5358
  %v5375 = vmul.f32 %v5335, %v5358
  %v5376 = vadd.f32 %v5256, %v5360
  %v5377 = vadd.f32 %v5257, %v5361
  %v5378 = vadd.f32 %v5258, %v5362
  %v5379 = vadd.f32 %v5259, %v5363
  %v5380 = vadd.f32 %v5260, %v5364
  %v5381 = vadd.f32 %v5261, %v5365
  %v5382 = vadd.f32 %v5262, %v5366
  %v5383 = vadd.f32 %v5263, %v5367
  %v5384 = vadd.f32 %v5264, %v5368
  %v5385 = vadd.f32 %v5265, %v5369
  %v5386 = vadd.f32 %v5266, %v5370
  %v5387 = vadd.f32 %v5267, %v5371
  %v5388 = vadd.f32 %v5268, %v5372
  %v5389 = vadd.f32 %v5269, %v5373
  %v5390 = vadd.f32 %v5270, %v5374
  %v5391 = vadd.f32 %v5271, %v5375
  %5392 = vrot.lane.b32.xlu0 %v5037, 16
  %v5393 = vpop.permute.xlu0 %5392
  %5394 = vrot.lane.b32.xlu0 %v5041, 16
  %v5395 = vpop.permute.xlu0 %5394
  %5396 = vrot.lane.b32.xlu0 %v5047, 16
  %v5397 = vpop.permute.xlu0 %5396
  %5398 = vrot.lane.b32.xlu0 %v5051, 16
  %v5399 = vpop.permute.xlu0 %5398
  %5400 = vrot.lane.b32.xlu0 %v5039, 16
  %v5401 = vpop.permute.xlu0 %5400
  %5402 = vrot.lane.b32.xlu0 %v5043, 16
  %v5403 = vpop.permute.xlu0 %5402
  %5404 = vrot.lane.b32.xlu0 %v5049, 16
  %v5405 = vpop.permute.xlu0 %5404
  %5406 = vrot.lane.b32.xlu0 %v5053, 16
  %v5407 = vpop.permute.xlu0 %5406
  %5408 = vrot.lane.b32.xlu0 %v5150, 16
  %v5409 = vpop.permute.xlu0 %5408
  %5410 = vrot.lane.b32.xlu0 %v5154, 16
  %v5411 = vpop.permute.xlu0 %5410
  %5412 = vrot.lane.b32.xlu0 %v5160, 16
  %v5413 = vpop.permute.xlu0 %5412
  %5414 = vrot.lane.b32.xlu0 %v5164, 16
  %v5415 = vpop.permute.xlu0 %5414
  %5416 = vrot.lane.b32.xlu0 %v5152, 16
  %v5417 = vpop.permute.xlu0 %5416
  %5418 = vrot.lane.b32.xlu0 %v5156, 16
  %v5419 = vpop.permute.xlu0 %5418
  %5420 = vrot.lane.b32.xlu0 %v5162, 16
  %v5421 = vpop.permute.xlu0 %5420
  %5422 = vrot.lane.b32.xlu0 %v5166, 16
  %v5423 = vpop.permute.xlu0 %5422
  %v5424 = vsel %vm823, %v5409, %v5417
  %v5425 = vsel %vm823, %v5411, %v5419
  %v5426 = vsel %vm823, %v5413, %v5421
  %v5427 = vsel %vm823, %v5415, %v5423
  %v5428 = vsel %vm823, %v5401, %v5409
  %v5429 = vsel %vm823, %v5403, %v5411
  %v5430 = vsel %vm823, %v5405, %v5413
  %v5431 = vsel %vm823, %v5407, %v5415
  %v5432 = vsel %vm823, %v5393, %v5401
  %v5433 = vsel %vm823, %v5395, %v5403
  %v5434 = vsel %vm823, %v5397, %v5405
  %v5435 = vsel %vm823, %v5399, %v5407
  %v5436 = vsel %vm823, %v5417, %v5393
  %v5437 = vsel %vm823, %v5419, %v5395
  %v5438 = vsel %vm823, %v5421, %v5397
  %v5439 = vsel %vm823, %v5423, %v5399
  %v5440 = vmul.f32 %v5436, %v844
  %v5441 = vmul.f32 %v5432, %v848
  %v5442 = vmul.f32 %v5428, %v852
  %v5443 = vmul.f32 %v5424, %v856
  %v5444 = vmul.f32 %v5437, %v844
  %v5445 = vmul.f32 %v5433, %v848
  %v5446 = vmul.f32 %v5429, %v852
  %v5447 = vmul.f32 %v5425, %v856
  %v5448 = vmul.f32 %v5438, %v844
  %v5449 = vmul.f32 %v5434, %v848
  %v5450 = vmul.f32 %v5430, %v852
  %v5451 = vmul.f32 %v5426, %v856
  %v5452 = vmul.f32 %v5439, %v844
  %v5453 = vmul.f32 %v5435, %v848
  %v5454 = vmul.f32 %v5431, %v852
  %v5455 = vmul.f32 %v5427, %v856
  %v5456 = vld [vmem:[%s877 + $0x60] sm:$0xff]
  %v5457 = vld [vmem:[%s877 + $0x68] sm:$0xff]
  %v5458 = vld [vmem:[%s877 + $0x70] sm:$0xff]
  %v5459 = vld [vmem:[%s877 + $0x78] sm:$0xff]
  %5461 = vset.pattern.permute.xlu0 0
  %5462 = vperm.xlu0 %5461, %v5456
  %v5463 = vpop.permute.xlu0 %5462
  %5466 = vset.pattern.permute.xlu0 0
  %5467 = vperm.xlu0 %5466, %v5457
  %v5468 = vpop.permute.xlu0 %5467
  %5471 = vset.pattern.permute.xlu0 0
  %5472 = vperm.xlu0 %5471, %v5458
  %v5473 = vpop.permute.xlu0 %5472
  %5476 = vset.pattern.permute.xlu0 0
  %5477 = vperm.xlu0 %5476, %v5459
  %v5478 = vpop.permute.xlu0 %5477
  %v5480 = vmul.f32 %v5440, %v5463
  %v5481 = vmul.f32 %v5441, %v5463
  %v5482 = vmul.f32 %v5442, %v5463
  %v5483 = vmul.f32 %v5443, %v5463
  %v5484 = vmul.f32 %v5444, %v5468
  %v5485 = vmul.f32 %v5445, %v5468
  %v5486 = vmul.f32 %v5446, %v5468
  %v5487 = vmul.f32 %v5447, %v5468
  %v5488 = vmul.f32 %v5448, %v5473
  %v5489 = vmul.f32 %v5449, %v5473
  %v5490 = vmul.f32 %v5450, %v5473
  %v5491 = vmul.f32 %v5451, %v5473
  %v5492 = vmul.f32 %v5452, %v5478
  %v5493 = vmul.f32 %v5453, %v5478
  %v5494 = vmul.f32 %v5454, %v5478
  %v5495 = vmul.f32 %v5455, %v5478
  %v5496 = vadd.f32 %v5376, %v5480
  %v5497 = vadd.f32 %v5377, %v5481
  %v5498 = vadd.f32 %v5378, %v5482
  %v5499 = vadd.f32 %v5379, %v5483
  %v5500 = vadd.f32 %v5380, %v5484
  %v5501 = vadd.f32 %v5381, %v5485
  %v5502 = vadd.f32 %v5382, %v5486
  %v5503 = vadd.f32 %v5383, %v5487
  %v5504 = vadd.f32 %v5384, %v5488
  %v5505 = vadd.f32 %v5385, %v5489
  %v5506 = vadd.f32 %v5386, %v5490
  %v5507 = vadd.f32 %v5387, %v5491
  %v5508 = vadd.f32 %v5388, %v5492
  %v5509 = vadd.f32 %v5389, %v5493
  %v5510 = vadd.f32 %v5390, %v5494
  %v5511 = vadd.f32 %v5391, %v5495
  %5512 = vrot.lane.b32.xlu0 %v5037, 15
  %v5513 = vpop.permute.xlu0 %5512
  %5514 = vrot.lane.b32.xlu0 %v5041, 15
  %v5515 = vpop.permute.xlu0 %5514
  %5516 = vrot.lane.b32.xlu0 %v5047, 15
  %v5517 = vpop.permute.xlu0 %5516
  %5518 = vrot.lane.b32.xlu0 %v5051, 15
  %v5519 = vpop.permute.xlu0 %5518
  %5520 = vrot.lane.b32.xlu0 %v5039, 15
  %v5521 = vpop.permute.xlu0 %5520
  %5522 = vrot.lane.b32.xlu0 %v5043, 15
  %v5523 = vpop.permute.xlu0 %5522
  %5524 = vrot.lane.b32.xlu0 %v5049, 15
  %v5525 = vpop.permute.xlu0 %5524
  %5526 = vrot.lane.b32.xlu0 %v5053, 15
  %v5527 = vpop.permute.xlu0 %5526
  %5528 = vrot.lane.b32.xlu0 %v5150, 15
  %v5529 = vpop.permute.xlu0 %5528
  %5530 = vrot.lane.b32.xlu0 %v5154, 15
  %v5531 = vpop.permute.xlu0 %5530
  %5532 = vrot.lane.b32.xlu0 %v5160, 15
  %v5533 = vpop.permute.xlu0 %5532
  %5534 = vrot.lane.b32.xlu0 %v5164, 15
  %v5535 = vpop.permute.xlu0 %5534
  %5536 = vrot.lane.b32.xlu0 %v5152, 15
  %v5537 = vpop.permute.xlu0 %5536
  %5538 = vrot.lane.b32.xlu0 %v5156, 15
  %v5539 = vpop.permute.xlu0 %5538
  %5540 = vrot.lane.b32.xlu0 %v5162, 15
  %v5541 = vpop.permute.xlu0 %5540
  %5542 = vrot.lane.b32.xlu0 %v5166, 15
  %v5543 = vpop.permute.xlu0 %5542
  %v5544 = vsel %vm966, %v5529, %v5537
  %v5545 = vsel %vm966, %v5531, %v5539
  %v5546 = vsel %vm966, %v5533, %v5541
  %v5547 = vsel %vm966, %v5535, %v5543
  %v5548 = vsel %vm966, %v5521, %v5529
  %v5549 = vsel %vm966, %v5523, %v5531
  %v5550 = vsel %vm966, %v5525, %v5533
  %v5551 = vsel %vm966, %v5527, %v5535
  %v5552 = vsel %vm966, %v5513, %v5521
  %v5553 = vsel %vm966, %v5515, %v5523
  %v5554 = vsel %vm966, %v5517, %v5525
  %v5555 = vsel %vm966, %v5519, %v5527
  %v5556 = vsel %vm966, %v5537, %v5513
  %v5557 = vsel %vm966, %v5539, %v5515
  %v5558 = vsel %vm966, %v5541, %v5517
  %v5559 = vsel %vm966, %v5543, %v5519
  %v5560 = vmul.f32 %v5556, %v987
  %v5561 = vmul.f32 %v5552, %v991
  %v5562 = vmul.f32 %v5548, %v995
  %v5563 = vmul.f32 %v5544, %v999
  %v5564 = vmul.f32 %v5557, %v987
  %v5565 = vmul.f32 %v5553, %v991
  %v5566 = vmul.f32 %v5549, %v995
  %v5567 = vmul.f32 %v5545, %v999
  %v5568 = vmul.f32 %v5558, %v987
  %v5569 = vmul.f32 %v5554, %v991
  %v5570 = vmul.f32 %v5550, %v995
  %v5571 = vmul.f32 %v5546, %v999
  %v5572 = vmul.f32 %v5559, %v987
  %v5573 = vmul.f32 %v5555, %v991
  %v5574 = vmul.f32 %v5551, %v995
  %v5575 = vmul.f32 %v5547, %v999
  %v5576 = vld [vmem:[%s1020 + $0x60] sm:$0xff]
  %v5577 = vld [vmem:[%s1020 + $0x68] sm:$0xff]
  %v5578 = vld [vmem:[%s1020 + $0x70] sm:$0xff]
  %v5579 = vld [vmem:[%s1020 + $0x78] sm:$0xff]
  %5581 = vset.pattern.permute.xlu0 0
  %5582 = vperm.xlu0 %5581, %v5576
  %v5583 = vpop.permute.xlu0 %5582
  %5586 = vset.pattern.permute.xlu0 0
  %5587 = vperm.xlu0 %5586, %v5577
  %v5588 = vpop.permute.xlu0 %5587
  %5591 = vset.pattern.permute.xlu0 0
  %5592 = vperm.xlu0 %5591, %v5578
  %v5593 = vpop.permute.xlu0 %5592
  %5596 = vset.pattern.permute.xlu0 0
  %5597 = vperm.xlu0 %5596, %v5579
  %v5598 = vpop.permute.xlu0 %5597
  %v5600 = vmul.f32 %v5560, %v5583
  %v5601 = vmul.f32 %v5561, %v5583
  %v5602 = vmul.f32 %v5562, %v5583
  %v5603 = vmul.f32 %v5563, %v5583
  %v5604 = vmul.f32 %v5564, %v5588
  %v5605 = vmul.f32 %v5565, %v5588
  %v5606 = vmul.f32 %v5566, %v5588
  %v5607 = vmul.f32 %v5567, %v5588
  %v5608 = vmul.f32 %v5568, %v5593
  %v5609 = vmul.f32 %v5569, %v5593
  %v5610 = vmul.f32 %v5570, %v5593
  %v5611 = vmul.f32 %v5571, %v5593
  %v5612 = vmul.f32 %v5572, %v5598
  %v5613 = vmul.f32 %v5573, %v5598
  %v5614 = vmul.f32 %v5574, %v5598
  %v5615 = vmul.f32 %v5575, %v5598
  %v5616 = vadd.f32 %v5496, %v5600
  %v5617 = vadd.f32 %v5497, %v5601
  %v5618 = vadd.f32 %v5498, %v5602
  %v5619 = vadd.f32 %v5499, %v5603
  %v5620 = vadd.f32 %v5500, %v5604
  %v5621 = vadd.f32 %v5501, %v5605
  %v5622 = vadd.f32 %v5502, %v5606
  %v5623 = vadd.f32 %v5503, %v5607
  %v5624 = vadd.f32 %v5504, %v5608
  %v5625 = vadd.f32 %v5505, %v5609
  %v5626 = vadd.f32 %v5506, %v5610
  %v5627 = vadd.f32 %v5507, %v5611
  %v5628 = vadd.f32 %v5508, %v5612
  %v5629 = vadd.f32 %v5509, %v5613
  %v5630 = vadd.f32 %v5510, %v5614
  %v5631 = vadd.f32 %v5511, %v5615
  %5632 = vrot.lane.b32.xlu0 %v5037, 1
  %v5633 = vpop.permute.xlu0 %5632
  %5634 = vrot.lane.b32.xlu0 %v5041, 1
  %v5635 = vpop.permute.xlu0 %5634
  %5636 = vrot.lane.b32.xlu0 %v5047, 1
  %v5637 = vpop.permute.xlu0 %5636
  %5638 = vrot.lane.b32.xlu0 %v5051, 1
  %v5639 = vpop.permute.xlu0 %5638
  %5640 = vrot.lane.b32.xlu0 %v5039, 1
  %v5641 = vpop.permute.xlu0 %5640
  %5642 = vrot.lane.b32.xlu0 %v5043, 1
  %v5643 = vpop.permute.xlu0 %5642
  %5644 = vrot.lane.b32.xlu0 %v5049, 1
  %v5645 = vpop.permute.xlu0 %5644
  %5646 = vrot.lane.b32.xlu0 %v5053, 1
  %v5647 = vpop.permute.xlu0 %5646
  %5648 = vrot.lane.b32.xlu0 %v5150, 1
  %v5649 = vpop.permute.xlu0 %5648
  %5650 = vrot.lane.b32.xlu0 %v5154, 1
  %v5651 = vpop.permute.xlu0 %5650
  %5652 = vrot.lane.b32.xlu0 %v5160, 1
  %v5653 = vpop.permute.xlu0 %5652
  %5654 = vrot.lane.b32.xlu0 %v5164, 1
  %v5655 = vpop.permute.xlu0 %5654
  %5656 = vrot.lane.b32.xlu0 %v5152, 1
  %v5657 = vpop.permute.xlu0 %5656
  %5658 = vrot.lane.b32.xlu0 %v5156, 1
  %v5659 = vpop.permute.xlu0 %5658
  %5660 = vrot.lane.b32.xlu0 %v5162, 1
  %v5661 = vpop.permute.xlu0 %5660
  %5662 = vrot.lane.b32.xlu0 %v5166, 1
  %v5663 = vpop.permute.xlu0 %5662
  %v5664 = vsel %vm1109, %v5649, %v5657
  %v5665 = vsel %vm1109, %v5651, %v5659
  %v5666 = vsel %vm1109, %v5653, %v5661
  %v5667 = vsel %vm1109, %v5655, %v5663
  %v5668 = vsel %vm1109, %v5641, %v5649
  %v5669 = vsel %vm1109, %v5643, %v5651
  %v5670 = vsel %vm1109, %v5645, %v5653
  %v5671 = vsel %vm1109, %v5647, %v5655
  %v5672 = vsel %vm1109, %v5633, %v5641
  %v5673 = vsel %vm1109, %v5635, %v5643
  %v5674 = vsel %vm1109, %v5637, %v5645
  %v5675 = vsel %vm1109, %v5639, %v5647
  %v5676 = vsel %vm1109, %v5657, %v5633
  %v5677 = vsel %vm1109, %v5659, %v5635
  %v5678 = vsel %vm1109, %v5661, %v5637
  %v5679 = vsel %vm1109, %v5663, %v5639
  %v5680 = vmul.f32 %v5676, %v1130
  %v5681 = vmul.f32 %v5672, %v1134
  %v5682 = vmul.f32 %v5668, %v1138
  %v5683 = vmul.f32 %v5664, %v1142
  %v5684 = vmul.f32 %v5677, %v1130
  %v5685 = vmul.f32 %v5673, %v1134
  %v5686 = vmul.f32 %v5669, %v1138
  %v5687 = vmul.f32 %v5665, %v1142
  %v5688 = vmul.f32 %v5678, %v1130
  %v5689 = vmul.f32 %v5674, %v1134
  %v5690 = vmul.f32 %v5670, %v1138
  %v5691 = vmul.f32 %v5666, %v1142
  %v5692 = vmul.f32 %v5679, %v1130
  %v5693 = vmul.f32 %v5675, %v1134
  %v5694 = vmul.f32 %v5671, %v1138
  %v5695 = vmul.f32 %v5667, %v1142
  %v5696 = vld [vmem:[%s1163 + $0x60] sm:$0xff]
  %v5697 = vld [vmem:[%s1163 + $0x68] sm:$0xff]
  %v5698 = vld [vmem:[%s1163 + $0x70] sm:$0xff]
  %v5699 = vld [vmem:[%s1163 + $0x78] sm:$0xff]
  %5701 = vset.pattern.permute.xlu0 0
  %5702 = vperm.xlu0 %5701, %v5696
  %v5703 = vpop.permute.xlu0 %5702
  %5706 = vset.pattern.permute.xlu0 0
  %5707 = vperm.xlu0 %5706, %v5697
  %v5708 = vpop.permute.xlu0 %5707
  %5711 = vset.pattern.permute.xlu0 0
  %5712 = vperm.xlu0 %5711, %v5698
  %v5713 = vpop.permute.xlu0 %5712
  %5716 = vset.pattern.permute.xlu0 0
  %5717 = vperm.xlu0 %5716, %v5699
  %v5718 = vpop.permute.xlu0 %5717
  %v5720 = vmul.f32 %v5680, %v5703
  %v5721 = vmul.f32 %v5681, %v5703
  %v5722 = vmul.f32 %v5682, %v5703
  %v5723 = vmul.f32 %v5683, %v5703
  %v5724 = vmul.f32 %v5684, %v5708
  %v5725 = vmul.f32 %v5685, %v5708
  %v5726 = vmul.f32 %v5686, %v5708
  %v5727 = vmul.f32 %v5687, %v5708
  %v5728 = vmul.f32 %v5688, %v5713
  %v5729 = vmul.f32 %v5689, %v5713
  %v5730 = vmul.f32 %v5690, %v5713
  %v5731 = vmul.f32 %v5691, %v5713
  %v5732 = vmul.f32 %v5692, %v5718
  %v5733 = vmul.f32 %v5693, %v5718
  %v5734 = vmul.f32 %v5694, %v5718
  %v5735 = vmul.f32 %v5695, %v5718
  %v5736 = vadd.f32 %v5616, %v5720
  %v5737 = vadd.f32 %v5617, %v5721
  %v5738 = vadd.f32 %v5618, %v5722
  %v5739 = vadd.f32 %v5619, %v5723
  %v5740 = vadd.f32 %v5620, %v5724
  %v5741 = vadd.f32 %v5621, %v5725
  %v5742 = vadd.f32 %v5622, %v5726
  %v5743 = vadd.f32 %v5623, %v5727
  %v5744 = vadd.f32 %v5624, %v5728
  %v5745 = vadd.f32 %v5625, %v5729
  %v5746 = vadd.f32 %v5626, %v5730
  %v5747 = vadd.f32 %v5627, %v5731
  %v5748 = vadd.f32 %v5628, %v5732
  %v5749 = vadd.f32 %v5629, %v5733
  %v5750 = vadd.f32 %v5630, %v5734
  %v5751 = vadd.f32 %v5631, %v5735
  %5752 = vrot.lane.b32.xlu0 %v5037, 127
  %v5753 = vpop.permute.xlu0 %5752
  %5754 = vrot.lane.b32.xlu0 %v5041, 127
  %v5755 = vpop.permute.xlu0 %5754
  %5756 = vrot.lane.b32.xlu0 %v5047, 127
  %v5757 = vpop.permute.xlu0 %5756
  %5758 = vrot.lane.b32.xlu0 %v5051, 127
  %v5759 = vpop.permute.xlu0 %5758
  %5760 = vrot.lane.b32.xlu0 %v5039, 127
  %v5761 = vpop.permute.xlu0 %5760
  %5762 = vrot.lane.b32.xlu0 %v5043, 127
  %v5763 = vpop.permute.xlu0 %5762
  %5764 = vrot.lane.b32.xlu0 %v5049, 127
  %v5765 = vpop.permute.xlu0 %5764
  %5766 = vrot.lane.b32.xlu0 %v5053, 127
  %v5767 = vpop.permute.xlu0 %5766
  %5768 = vrot.lane.b32.xlu0 %v5150, 127
  %v5769 = vpop.permute.xlu0 %5768
  %5770 = vrot.lane.b32.xlu0 %v5154, 127
  %v5771 = vpop.permute.xlu0 %5770
  %5772 = vrot.lane.b32.xlu0 %v5160, 127
  %v5773 = vpop.permute.xlu0 %5772
  %5774 = vrot.lane.b32.xlu0 %v5164, 127
  %v5775 = vpop.permute.xlu0 %5774
  %5776 = vrot.lane.b32.xlu0 %v5152, 127
  %v5777 = vpop.permute.xlu0 %5776
  %5778 = vrot.lane.b32.xlu0 %v5156, 127
  %v5779 = vpop.permute.xlu0 %5778
  %5780 = vrot.lane.b32.xlu0 %v5162, 127
  %v5781 = vpop.permute.xlu0 %5780
  %5782 = vrot.lane.b32.xlu0 %v5166, 127
  %v5783 = vpop.permute.xlu0 %5782
  %v5784 = vsel %vm1252, %v5769, %v5777
  %v5785 = vsel %vm1252, %v5771, %v5779
  %v5786 = vsel %vm1252, %v5773, %v5781
  %v5787 = vsel %vm1252, %v5775, %v5783
  %v5788 = vsel %vm1252, %v5761, %v5769
  %v5789 = vsel %vm1252, %v5763, %v5771
  %v5790 = vsel %vm1252, %v5765, %v5773
  %v5791 = vsel %vm1252, %v5767, %v5775
  %v5792 = vsel %vm1252, %v5753, %v5761
  %v5793 = vsel %vm1252, %v5755, %v5763
  %v5794 = vsel %vm1252, %v5757, %v5765
  %v5795 = vsel %vm1252, %v5759, %v5767
  %v5796 = vsel %vm1252, %v5777, %v5753
  %v5797 = vsel %vm1252, %v5779, %v5755
  %v5798 = vsel %vm1252, %v5781, %v5757
  %v5799 = vsel %vm1252, %v5783, %v5759
  %v5800 = vmul.f32 %v5792, %v1273
  %v5801 = vmul.f32 %v5788, %v1277
  %v5802 = vmul.f32 %v5784, %v1281
  %v5803 = vmul.f32 %v5796, %v1285
  %v5804 = vmul.f32 %v5793, %v1273
  %v5805 = vmul.f32 %v5789, %v1277
  %v5806 = vmul.f32 %v5785, %v1281
  %v5807 = vmul.f32 %v5797, %v1285
  %v5808 = vmul.f32 %v5794, %v1273
  %v5809 = vmul.f32 %v5790, %v1277
  %v5810 = vmul.f32 %v5786, %v1281
  %v5811 = vmul.f32 %v5798, %v1285
  %v5812 = vmul.f32 %v5795, %v1273
  %v5813 = vmul.f32 %v5791, %v1277
  %v5814 = vmul.f32 %v5787, %v1281
  %v5815 = vmul.f32 %v5799, %v1285
  %v5816 = vld [vmem:[%s1306 + $0x60] sm:$0xff]
  %v5817 = vld [vmem:[%s1306 + $0x68] sm:$0xff]
  %v5818 = vld [vmem:[%s1306 + $0x70] sm:$0xff]
  %v5819 = vld [vmem:[%s1306 + $0x78] sm:$0xff]
  %5821 = vset.pattern.permute.xlu0 0
  %5822 = vperm.xlu0 %5821, %v5816
  %v5823 = vpop.permute.xlu0 %5822
  %5826 = vset.pattern.permute.xlu0 0
  %5827 = vperm.xlu0 %5826, %v5817
  %v5828 = vpop.permute.xlu0 %5827
  %5831 = vset.pattern.permute.xlu0 0
  %5832 = vperm.xlu0 %5831, %v5818
  %v5833 = vpop.permute.xlu0 %5832
  %5836 = vset.pattern.permute.xlu0 0
  %5837 = vperm.xlu0 %5836, %v5819
  %v5838 = vpop.permute.xlu0 %5837
  %v5840 = vmul.f32 %v5800, %v5823
  %v5841 = vmul.f32 %v5801, %v5823
  %v5842 = vmul.f32 %v5802, %v5823
  %v5843 = vmul.f32 %v5803, %v5823
  %v5844 = vmul.f32 %v5804, %v5828
  %v5845 = vmul.f32 %v5805, %v5828
  %v5846 = vmul.f32 %v5806, %v5828
  %v5847 = vmul.f32 %v5807, %v5828
  %v5848 = vmul.f32 %v5808, %v5833
  %v5849 = vmul.f32 %v5809, %v5833
  %v5850 = vmul.f32 %v5810, %v5833
  %v5851 = vmul.f32 %v5811, %v5833
  %v5852 = vmul.f32 %v5812, %v5838
  %v5853 = vmul.f32 %v5813, %v5838
  %v5854 = vmul.f32 %v5814, %v5838
  %v5855 = vmul.f32 %v5815, %v5838
  %v5856 = vadd.f32 %v5736, %v5840
  %v5857 = vadd.f32 %v5737, %v5841
  %v5858 = vadd.f32 %v5738, %v5842
  %v5859 = vadd.f32 %v5739, %v5843
  %v5860 = vadd.f32 %v5740, %v5844
  %v5861 = vadd.f32 %v5741, %v5845
  %v5862 = vadd.f32 %v5742, %v5846
  %v5863 = vadd.f32 %v5743, %v5847
  %v5864 = vadd.f32 %v5744, %v5848
  %v5865 = vadd.f32 %v5745, %v5849
  %v5866 = vadd.f32 %v5746, %v5850
  %v5867 = vadd.f32 %v5747, %v5851
  %v5868 = vadd.f32 %v5748, %v5852
  %v5869 = vadd.f32 %v5749, %v5853
  %v5870 = vadd.f32 %v5750, %v5854
  %v5871 = vadd.f32 %v5751, %v5855
  %5872 = vrot.lane.b32.xlu0 %v5037, 113
  %v5873 = vpop.permute.xlu0 %5872
  %5874 = vrot.lane.b32.xlu0 %v5041, 113
  %v5875 = vpop.permute.xlu0 %5874
  %5876 = vrot.lane.b32.xlu0 %v5047, 113
  %v5877 = vpop.permute.xlu0 %5876
  %5878 = vrot.lane.b32.xlu0 %v5051, 113
  %v5879 = vpop.permute.xlu0 %5878
  %5880 = vrot.lane.b32.xlu0 %v5039, 113
  %v5881 = vpop.permute.xlu0 %5880
  %5882 = vrot.lane.b32.xlu0 %v5043, 113
  %v5883 = vpop.permute.xlu0 %5882
  %5884 = vrot.lane.b32.xlu0 %v5049, 113
  %v5885 = vpop.permute.xlu0 %5884
  %5886 = vrot.lane.b32.xlu0 %v5053, 113
  %v5887 = vpop.permute.xlu0 %5886
  %5888 = vrot.lane.b32.xlu0 %v5150, 113
  %v5889 = vpop.permute.xlu0 %5888
  %5890 = vrot.lane.b32.xlu0 %v5154, 113
  %v5891 = vpop.permute.xlu0 %5890
  %5892 = vrot.lane.b32.xlu0 %v5160, 113
  %v5893 = vpop.permute.xlu0 %5892
  %5894 = vrot.lane.b32.xlu0 %v5164, 113
  %v5895 = vpop.permute.xlu0 %5894
  %5896 = vrot.lane.b32.xlu0 %v5152, 113
  %v5897 = vpop.permute.xlu0 %5896
  %5898 = vrot.lane.b32.xlu0 %v5156, 113
  %v5899 = vpop.permute.xlu0 %5898
  %5900 = vrot.lane.b32.xlu0 %v5162, 113
  %v5901 = vpop.permute.xlu0 %5900
  %5902 = vrot.lane.b32.xlu0 %v5166, 113
  %v5903 = vpop.permute.xlu0 %5902
  %v5904 = vsel %vm1395, %v5889, %v5897
  %v5905 = vsel %vm1395, %v5891, %v5899
  %v5906 = vsel %vm1395, %v5893, %v5901
  %v5907 = vsel %vm1395, %v5895, %v5903
  %v5908 = vsel %vm1395, %v5881, %v5889
  %v5909 = vsel %vm1395, %v5883, %v5891
  %v5910 = vsel %vm1395, %v5885, %v5893
  %v5911 = vsel %vm1395, %v5887, %v5895
  %v5912 = vsel %vm1395, %v5873, %v5881
  %v5913 = vsel %vm1395, %v5875, %v5883
  %v5914 = vsel %vm1395, %v5877, %v5885
  %v5915 = vsel %vm1395, %v5879, %v5887
  %v5916 = vsel %vm1395, %v5897, %v5873
  %v5917 = vsel %vm1395, %v5899, %v5875
  %v5918 = vsel %vm1395, %v5901, %v5877
  %v5919 = vsel %vm1395, %v5903, %v5879
  %v5920 = vmul.f32 %v5912, %v1416
  %v5921 = vmul.f32 %v5908, %v1420
  %v5922 = vmul.f32 %v5904, %v1424
  %v5923 = vmul.f32 %v5916, %v1428
  %v5924 = vmul.f32 %v5913, %v1416
  %v5925 = vmul.f32 %v5909, %v1420
  %v5926 = vmul.f32 %v5905, %v1424
  %v5927 = vmul.f32 %v5917, %v1428
  %v5928 = vmul.f32 %v5914, %v1416
  %v5929 = vmul.f32 %v5910, %v1420
  %v5930 = vmul.f32 %v5906, %v1424
  %v5931 = vmul.f32 %v5918, %v1428
  %v5932 = vmul.f32 %v5915, %v1416
  %v5933 = vmul.f32 %v5911, %v1420
  %v5934 = vmul.f32 %v5907, %v1424
  %v5935 = vmul.f32 %v5919, %v1428
  %v5936 = vld [vmem:[%s1449 + $0x60] sm:$0xff]
  %v5937 = vld [vmem:[%s1449 + $0x68] sm:$0xff]
  %v5938 = vld [vmem:[%s1449 + $0x70] sm:$0xff]
  %v5939 = vld [vmem:[%s1449 + $0x78] sm:$0xff]
  %5941 = vset.pattern.permute.xlu0 0
  %5942 = vperm.xlu0 %5941, %v5936
  %v5943 = vpop.permute.xlu0 %5942
  %5946 = vset.pattern.permute.xlu0 0
  %5947 = vperm.xlu0 %5946, %v5937
  %v5948 = vpop.permute.xlu0 %5947
  %5951 = vset.pattern.permute.xlu0 0
  %5952 = vperm.xlu0 %5951, %v5938
  %v5953 = vpop.permute.xlu0 %5952
  %5956 = vset.pattern.permute.xlu0 0
  %5957 = vperm.xlu0 %5956, %v5939
  %v5958 = vpop.permute.xlu0 %5957
  %v5960 = vmul.f32 %v5920, %v5943
  %v5961 = vmul.f32 %v5921, %v5943
  %v5962 = vmul.f32 %v5922, %v5943
  %v5963 = vmul.f32 %v5923, %v5943
  %v5964 = vmul.f32 %v5924, %v5948
  %v5965 = vmul.f32 %v5925, %v5948
  %v5966 = vmul.f32 %v5926, %v5948
  %v5967 = vmul.f32 %v5927, %v5948
  %v5968 = vmul.f32 %v5928, %v5953
  %v5969 = vmul.f32 %v5929, %v5953
  %v5970 = vmul.f32 %v5930, %v5953
  %v5971 = vmul.f32 %v5931, %v5953
  %v5972 = vmul.f32 %v5932, %v5958
  %v5973 = vmul.f32 %v5933, %v5958
  %v5974 = vmul.f32 %v5934, %v5958
  %v5975 = vmul.f32 %v5935, %v5958
  %v5976 = vadd.f32 %v5856, %v5960
  %v5977 = vadd.f32 %v5857, %v5961
  %v5978 = vadd.f32 %v5858, %v5962
  %v5979 = vadd.f32 %v5859, %v5963
  %v5980 = vadd.f32 %v5860, %v5964
  %v5981 = vadd.f32 %v5861, %v5965
  %v5982 = vadd.f32 %v5862, %v5966
  %v5983 = vadd.f32 %v5863, %v5967
  %v5984 = vadd.f32 %v5864, %v5968
  %v5985 = vadd.f32 %v5865, %v5969
  %v5986 = vadd.f32 %v5866, %v5970
  %v5987 = vadd.f32 %v5867, %v5971
  %v5988 = vadd.f32 %v5868, %v5972
  %v5989 = vadd.f32 %v5869, %v5973
  %v5990 = vadd.f32 %v5870, %v5974
  %v5991 = vadd.f32 %v5871, %v5975
  %5992 = vrot.lane.b32.xlu0 %v5037, 112
  %v5993 = vpop.permute.xlu0 %5992
  %5994 = vrot.lane.b32.xlu0 %v5041, 112
  %v5995 = vpop.permute.xlu0 %5994
  %5996 = vrot.lane.b32.xlu0 %v5047, 112
  %v5997 = vpop.permute.xlu0 %5996
  %5998 = vrot.lane.b32.xlu0 %v5051, 112
  %v5999 = vpop.permute.xlu0 %5998
  %6000 = vrot.lane.b32.xlu0 %v5039, 112
  %v6001 = vpop.permute.xlu0 %6000
  %6002 = vrot.lane.b32.xlu0 %v5043, 112
  %v6003 = vpop.permute.xlu0 %6002
  %6004 = vrot.lane.b32.xlu0 %v5049, 112
  %v6005 = vpop.permute.xlu0 %6004
  %6006 = vrot.lane.b32.xlu0 %v5053, 112
  %v6007 = vpop.permute.xlu0 %6006
  %6008 = vrot.lane.b32.xlu0 %v5150, 112
  %v6009 = vpop.permute.xlu0 %6008
  %6010 = vrot.lane.b32.xlu0 %v5154, 112
  %v6011 = vpop.permute.xlu0 %6010
  %6012 = vrot.lane.b32.xlu0 %v5160, 112
  %v6013 = vpop.permute.xlu0 %6012
  %6014 = vrot.lane.b32.xlu0 %v5164, 112
  %v6015 = vpop.permute.xlu0 %6014
  %6016 = vrot.lane.b32.xlu0 %v5152, 112
  %v6017 = vpop.permute.xlu0 %6016
  %6018 = vrot.lane.b32.xlu0 %v5156, 112
  %v6019 = vpop.permute.xlu0 %6018
  %6020 = vrot.lane.b32.xlu0 %v5162, 112
  %v6021 = vpop.permute.xlu0 %6020
  %6022 = vrot.lane.b32.xlu0 %v5166, 112
  %v6023 = vpop.permute.xlu0 %6022
  %v6024 = vsel %vm1538, %v6009, %v6017
  %v6025 = vsel %vm1538, %v6011, %v6019
  %v6026 = vsel %vm1538, %v6013, %v6021
  %v6027 = vsel %vm1538, %v6015, %v6023
  %v6028 = vsel %vm1538, %v6001, %v6009
  %v6029 = vsel %vm1538, %v6003, %v6011
  %v6030 = vsel %vm1538, %v6005, %v6013
  %v6031 = vsel %vm1538, %v6007, %v6015
  %v6032 = vsel %vm1538, %v5993, %v6001
  %v6033 = vsel %vm1538, %v5995, %v6003
  %v6034 = vsel %vm1538, %v5997, %v6005
  %v6035 = vsel %vm1538, %v5999, %v6007
  %v6036 = vsel %vm1538, %v6017, %v5993
  %v6037 = vsel %vm1538, %v6019, %v5995
  %v6038 = vsel %vm1538, %v6021, %v5997
  %v6039 = vsel %vm1538, %v6023, %v5999
  %v6040 = vmul.f32 %v6032, %v1559
  %v6041 = vmul.f32 %v6028, %v1563
  %v6042 = vmul.f32 %v6024, %v1567
  %v6043 = vmul.f32 %v6036, %v1571
  %v6044 = vmul.f32 %v6033, %v1559
  %v6045 = vmul.f32 %v6029, %v1563
  %v6046 = vmul.f32 %v6025, %v1567
  %v6047 = vmul.f32 %v6037, %v1571
  %v6048 = vmul.f32 %v6034, %v1559
  %v6049 = vmul.f32 %v6030, %v1563
  %v6050 = vmul.f32 %v6026, %v1567
  %v6051 = vmul.f32 %v6038, %v1571
  %v6052 = vmul.f32 %v6035, %v1559
  %v6053 = vmul.f32 %v6031, %v1563
  %v6054 = vmul.f32 %v6027, %v1567
  %v6055 = vmul.f32 %v6039, %v1571
  %v6056 = vld [vmem:[%s1592 + $0x60] sm:$0xff]
  %v6057 = vld [vmem:[%s1592 + $0x68] sm:$0xff]
  %v6058 = vld [vmem:[%s1592 + $0x70] sm:$0xff]
  %v6059 = vld [vmem:[%s1592 + $0x78] sm:$0xff]
  %6061 = vset.pattern.permute.xlu0 0
  %6062 = vperm.xlu0 %6061, %v6056
  %v6063 = vpop.permute.xlu0 %6062
  %6066 = vset.pattern.permute.xlu0 0
  %6067 = vperm.xlu0 %6066, %v6057
  %v6068 = vpop.permute.xlu0 %6067
  %6071 = vset.pattern.permute.xlu0 0
  %6072 = vperm.xlu0 %6071, %v6058
  %v6073 = vpop.permute.xlu0 %6072
  %6076 = vset.pattern.permute.xlu0 0
  %6077 = vperm.xlu0 %6076, %v6059
  %v6078 = vpop.permute.xlu0 %6077
  %v6080 = vmul.f32 %v6040, %v6063
  %v6081 = vmul.f32 %v6041, %v6063
  %v6082 = vmul.f32 %v6042, %v6063
  %v6083 = vmul.f32 %v6043, %v6063
  %v6084 = vmul.f32 %v6044, %v6068
  %v6085 = vmul.f32 %v6045, %v6068
  %v6086 = vmul.f32 %v6046, %v6068
  %v6087 = vmul.f32 %v6047, %v6068
  %v6088 = vmul.f32 %v6048, %v6073
  %v6089 = vmul.f32 %v6049, %v6073
  %v6090 = vmul.f32 %v6050, %v6073
  %v6091 = vmul.f32 %v6051, %v6073
  %v6092 = vmul.f32 %v6052, %v6078
  %v6093 = vmul.f32 %v6053, %v6078
  %v6094 = vmul.f32 %v6054, %v6078
  %v6095 = vmul.f32 %v6055, %v6078
  %v6096 = vadd.f32 %v5976, %v6080
  %v6097 = vadd.f32 %v5977, %v6081
  %v6098 = vadd.f32 %v5978, %v6082
  %v6099 = vadd.f32 %v5979, %v6083
  %v6100 = vadd.f32 %v5980, %v6084
  %v6101 = vadd.f32 %v5981, %v6085
  %v6102 = vadd.f32 %v5982, %v6086
  %v6103 = vadd.f32 %v5983, %v6087
  %v6104 = vadd.f32 %v5984, %v6088
  %v6105 = vadd.f32 %v5985, %v6089
  %v6106 = vadd.f32 %v5986, %v6090
  %v6107 = vadd.f32 %v5987, %v6091
  %v6108 = vadd.f32 %v5988, %v6092
  %v6109 = vadd.f32 %v5989, %v6093
  %v6110 = vadd.f32 %v5990, %v6094
  %v6111 = vadd.f32 %v5991, %v6095
  %6112 = vrot.lane.b32.xlu0 %v5037, 111
  %v6113 = vpop.permute.xlu0 %6112
  %6114 = vrot.lane.b32.xlu0 %v5041, 111
  %v6115 = vpop.permute.xlu0 %6114
  %6116 = vrot.lane.b32.xlu0 %v5047, 111
  %v6117 = vpop.permute.xlu0 %6116
  %6118 = vrot.lane.b32.xlu0 %v5051, 111
  %v6119 = vpop.permute.xlu0 %6118
  %6120 = vrot.lane.b32.xlu0 %v5039, 111
  %v6121 = vpop.permute.xlu0 %6120
  %6122 = vrot.lane.b32.xlu0 %v5043, 111
  %v6123 = vpop.permute.xlu0 %6122
  %6124 = vrot.lane.b32.xlu0 %v5049, 111
  %v6125 = vpop.permute.xlu0 %6124
  %6126 = vrot.lane.b32.xlu0 %v5053, 111
  %v6127 = vpop.permute.xlu0 %6126
  %6128 = vrot.lane.b32.xlu0 %v5150, 111
  %v6129 = vpop.permute.xlu0 %6128
  %6130 = vrot.lane.b32.xlu0 %v5154, 111
  %v6131 = vpop.permute.xlu0 %6130
  %6132 = vrot.lane.b32.xlu0 %v5160, 111
  %v6133 = vpop.permute.xlu0 %6132
  %6134 = vrot.lane.b32.xlu0 %v5164, 111
  %v6135 = vpop.permute.xlu0 %6134
  %6136 = vrot.lane.b32.xlu0 %v5152, 111
  %v6137 = vpop.permute.xlu0 %6136
  %6138 = vrot.lane.b32.xlu0 %v5156, 111
  %v6139 = vpop.permute.xlu0 %6138
  %6140 = vrot.lane.b32.xlu0 %v5162, 111
  %v6141 = vpop.permute.xlu0 %6140
  %6142 = vrot.lane.b32.xlu0 %v5166, 111
  %v6143 = vpop.permute.xlu0 %6142
  %v6144 = vsel %vm1681, %v6129, %v6137
  %v6145 = vsel %vm1681, %v6131, %v6139
  %v6146 = vsel %vm1681, %v6133, %v6141
  %v6147 = vsel %vm1681, %v6135, %v6143
  %v6148 = vsel %vm1681, %v6121, %v6129
  %v6149 = vsel %vm1681, %v6123, %v6131
  %v6150 = vsel %vm1681, %v6125, %v6133
  %v6151 = vsel %vm1681, %v6127, %v6135
  %v6152 = vsel %vm1681, %v6113, %v6121
  %v6153 = vsel %vm1681, %v6115, %v6123
  %v6154 = vsel %vm1681, %v6117, %v6125
  %v6155 = vsel %vm1681, %v6119, %v6127
  %v6156 = vsel %vm1681, %v6137, %v6113
  %v6157 = vsel %vm1681, %v6139, %v6115
  %v6158 = vsel %vm1681, %v6141, %v6117
  %v6159 = vsel %vm1681, %v6143, %v6119
  %v6160 = vmul.f32 %v6152, %v1702
  %v6161 = vmul.f32 %v6148, %v1706
  %v6162 = vmul.f32 %v6144, %v1710
  %v6163 = vmul.f32 %v6156, %v1714
  %v6164 = vmul.f32 %v6153, %v1702
  %v6165 = vmul.f32 %v6149, %v1706
  %v6166 = vmul.f32 %v6145, %v1710
  %v6167 = vmul.f32 %v6157, %v1714
  %v6168 = vmul.f32 %v6154, %v1702
  %v6169 = vmul.f32 %v6150, %v1706
  %v6170 = vmul.f32 %v6146, %v1710
  %v6171 = vmul.f32 %v6158, %v1714
  %v6172 = vmul.f32 %v6155, %v1702
  %v6173 = vmul.f32 %v6151, %v1706
  %v6174 = vmul.f32 %v6147, %v1710
  %v6175 = vmul.f32 %v6159, %v1714
  %v6176 = vld [vmem:[%s1735 + $0x60] sm:$0xff]
  %v6177 = vld [vmem:[%s1735 + $0x68] sm:$0xff]
  %v6178 = vld [vmem:[%s1735 + $0x70] sm:$0xff]
  %v6179 = vld [vmem:[%s1735 + $0x78] sm:$0xff]
  %6181 = vset.pattern.permute.xlu0 0
  %6182 = vperm.xlu0 %6181, %v6176
  %v6183 = vpop.permute.xlu0 %6182
  %6186 = vset.pattern.permute.xlu0 0
  %6187 = vperm.xlu0 %6186, %v6177
  %v6188 = vpop.permute.xlu0 %6187
  %6191 = vset.pattern.permute.xlu0 0
  %6192 = vperm.xlu0 %6191, %v6178
  %v6193 = vpop.permute.xlu0 %6192
  %6196 = vset.pattern.permute.xlu0 0
  %6197 = vperm.xlu0 %6196, %v6179
  %v6198 = vpop.permute.xlu0 %6197
  %v6200 = vmul.f32 %v6160, %v6183
  %v6201 = vmul.f32 %v6161, %v6183
  %v6202 = vmul.f32 %v6162, %v6183
  %v6203 = vmul.f32 %v6163, %v6183
  %v6204 = vmul.f32 %v6164, %v6188
  %v6205 = vmul.f32 %v6165, %v6188
  %v6206 = vmul.f32 %v6166, %v6188
  %v6207 = vmul.f32 %v6167, %v6188
  %v6208 = vmul.f32 %v6168, %v6193
  %v6209 = vmul.f32 %v6169, %v6193
  %v6210 = vmul.f32 %v6170, %v6193
  %v6211 = vmul.f32 %v6171, %v6193
  %v6212 = vmul.f32 %v6172, %v6198
  %v6213 = vmul.f32 %v6173, %v6198
  %v6214 = vmul.f32 %v6174, %v6198
  %v6215 = vmul.f32 %v6175, %v6198
  %v6216 = vadd.f32 %v6096, %v6200
  %v6217 = vadd.f32 %v6097, %v6201
  %v6218 = vadd.f32 %v6098, %v6202
  %v6219 = vadd.f32 %v6099, %v6203
  %v6220 = vadd.f32 %v6100, %v6204
  %v6221 = vadd.f32 %v6101, %v6205
  %v6222 = vadd.f32 %v6102, %v6206
  %v6223 = vadd.f32 %v6103, %v6207
  %v6224 = vadd.f32 %v6104, %v6208
  %v6225 = vadd.f32 %v6105, %v6209
  %v6226 = vadd.f32 %v6106, %v6210
  %v6227 = vadd.f32 %v6107, %v6211
  %v6228 = vadd.f32 %v6108, %v6212
  %v6229 = vadd.f32 %v6109, %v6213
  %v6230 = vadd.f32 %v6110, %v6214
  %v6231 = vadd.f32 %v6111, %v6215
  %6233 = vset.pattern.permute.xlu0 0
  %6234 = vperm.xlu0 %6233, %v5228
  %v6235 = vpop.permute.xlu0 %6234
  %6238 = vset.pattern.permute.xlu0 0
  %6239 = vperm.xlu0 %6238, %v5229
  %v6240 = vpop.permute.xlu0 %6239
  %6243 = vset.pattern.permute.xlu0 0
  %6244 = vperm.xlu0 %6243, %v5230
  %v6245 = vpop.permute.xlu0 %6244
  %6248 = vset.pattern.permute.xlu0 0
  %6249 = vperm.xlu0 %6248, %v5231
  %v6250 = vpop.permute.xlu0 %6249
  %v6252 = vadd.f32 %v6216, %v6235
  %v6253 = vadd.f32 %v6217, %v6235
  %v6254 = vadd.f32 %v6218, %v6235
  %v6255 = vadd.f32 %v6219, %v6235
  %v6256 = vadd.f32 %v6220, %v6240
  %v6257 = vadd.f32 %v6221, %v6240
  %v6258 = vadd.f32 %v6222, %v6240
  %v6259 = vadd.f32 %v6223, %v6240
  %v6260 = vadd.f32 %v6224, %v6245
  %v6261 = vadd.f32 %v6225, %v6245
  %v6262 = vadd.f32 %v6226, %v6245
  %v6263 = vadd.f32 %v6227, %v6245
  %v6264 = vadd.f32 %v6228, %v6250
  %v6265 = vadd.f32 %v6229, %v6250
  %v6266 = vadd.f32 %v6230, %v6250
  %v6267 = vadd.f32 %v6231, %v6250
  %v6268 = vld [vmem:[%s1 + $0x220] sm:$0xff]
  %v6269 = vld [vmem:[%s1 + $0x228] sm:$0xff]
  %v6270 = vld [vmem:[%s1 + $0x230] sm:$0xff]
  %v6271 = vld [vmem:[%s1 + $0x238] sm:$0xff]
  %v6272 = vld [vmem:[%s606 + $0x80] sm:$0xff]
  %v6273 = vld [vmem:[%s606 + $0x88] sm:$0xff]
  %v6274 = vld [vmem:[%s606 + $0x90] sm:$0xff]
  %v6275 = vld [vmem:[%s606 + $0x98] sm:$0xff]
  %6277 = vset.pattern.permute.xlu0 0
  %6278 = vperm.xlu0 %6277, %v6272
  %v6279 = vpop.permute.xlu0 %6278
  %6282 = vset.pattern.permute.xlu0 0
  %6283 = vperm.xlu0 %6282, %v6273
  %v6284 = vpop.permute.xlu0 %6283
  %6287 = vset.pattern.permute.xlu0 0
  %6288 = vperm.xlu0 %6287, %v6274
  %v6289 = vpop.permute.xlu0 %6288
  %6292 = vset.pattern.permute.xlu0 0
  %6293 = vperm.xlu0 %6292, %v6275
  %v6294 = vpop.permute.xlu0 %6293
  %v6296 = vmul.f32 %v5057, %v6279
  %v6297 = vmul.f32 %v5059, %v6279
  %v6298 = vmul.f32 %v5170, %v6279
  %v6299 = vmul.f32 %v5172, %v6279
  %v6300 = vmul.f32 %v5061, %v6284
  %v6301 = vmul.f32 %v5063, %v6284
  %v6302 = vmul.f32 %v5174, %v6284
  %v6303 = vmul.f32 %v5176, %v6284
  %v6304 = vmul.f32 %v5067, %v6289
  %v6305 = vmul.f32 %v5069, %v6289
  %v6306 = vmul.f32 %v5180, %v6289
  %v6307 = vmul.f32 %v5182, %v6289
  %v6308 = vmul.f32 %v5071, %v6294
  %v6309 = vmul.f32 %v5073, %v6294
  %v6310 = vmul.f32 %v5184, %v6294
  %v6311 = vmul.f32 %v5186, %v6294
  %6312 = vrot.lane.b32.xlu0 %v5057, 17
  %v6313 = vpop.permute.xlu0 %6312
  %6314 = vrot.lane.b32.xlu0 %v5061, 17
  %v6315 = vpop.permute.xlu0 %6314
  %6316 = vrot.lane.b32.xlu0 %v5067, 17
  %v6317 = vpop.permute.xlu0 %6316
  %6318 = vrot.lane.b32.xlu0 %v5071, 17
  %v6319 = vpop.permute.xlu0 %6318
  %6320 = vrot.lane.b32.xlu0 %v5059, 17
  %v6321 = vpop.permute.xlu0 %6320
  %6322 = vrot.lane.b32.xlu0 %v5063, 17
  %v6323 = vpop.permute.xlu0 %6322
  %6324 = vrot.lane.b32.xlu0 %v5069, 17
  %v6325 = vpop.permute.xlu0 %6324
  %6326 = vrot.lane.b32.xlu0 %v5073, 17
  %v6327 = vpop.permute.xlu0 %6326
  %6328 = vrot.lane.b32.xlu0 %v5170, 17
  %v6329 = vpop.permute.xlu0 %6328
  %6330 = vrot.lane.b32.xlu0 %v5174, 17
  %v6331 = vpop.permute.xlu0 %6330
  %6332 = vrot.lane.b32.xlu0 %v5180, 17
  %v6333 = vpop.permute.xlu0 %6332
  %6334 = vrot.lane.b32.xlu0 %v5184, 17
  %v6335 = vpop.permute.xlu0 %6334
  %6336 = vrot.lane.b32.xlu0 %v5172, 17
  %v6337 = vpop.permute.xlu0 %6336
  %6338 = vrot.lane.b32.xlu0 %v5176, 17
  %v6339 = vpop.permute.xlu0 %6338
  %6340 = vrot.lane.b32.xlu0 %v5182, 17
  %v6341 = vpop.permute.xlu0 %6340
  %6342 = vrot.lane.b32.xlu0 %v5186, 17
  %v6343 = vpop.permute.xlu0 %6342
  %v6344 = vsel %vm681, %v6329, %v6337
  %v6345 = vsel %vm681, %v6331, %v6339
  %v6346 = vsel %vm681, %v6333, %v6341
  %v6347 = vsel %vm681, %v6335, %v6343
  %v6348 = vsel %vm681, %v6321, %v6329
  %v6349 = vsel %vm681, %v6323, %v6331
  %v6350 = vsel %vm681, %v6325, %v6333
  %v6351 = vsel %vm681, %v6327, %v6335
  %v6352 = vsel %vm681, %v6313, %v6321
  %v6353 = vsel %vm681, %v6315, %v6323
  %v6354 = vsel %vm681, %v6317, %v6325
  %v6355 = vsel %vm681, %v6319, %v6327
  %v6356 = vsel %vm681, %v6337, %v6313
  %v6357 = vsel %vm681, %v6339, %v6315
  %v6358 = vsel %vm681, %v6341, %v6317
  %v6359 = vsel %vm681, %v6343, %v6319
  %v6360 = vmul.f32 %v6356, %v702
  %v6361 = vmul.f32 %v6352, %v706
  %v6362 = vmul.f32 %v6348, %v710
  %v6363 = vmul.f32 %v6344, %v714
  %v6364 = vmul.f32 %v6357, %v702
  %v6365 = vmul.f32 %v6353, %v706
  %v6366 = vmul.f32 %v6349, %v710
  %v6367 = vmul.f32 %v6345, %v714
  %v6368 = vmul.f32 %v6358, %v702
  %v6369 = vmul.f32 %v6354, %v706
  %v6370 = vmul.f32 %v6350, %v710
  %v6371 = vmul.f32 %v6346, %v714
  %v6372 = vmul.f32 %v6359, %v702
  %v6373 = vmul.f32 %v6355, %v706
  %v6374 = vmul.f32 %v6351, %v710
  %v6375 = vmul.f32 %v6347, %v714
  %v6376 = vld [vmem:[%s2 + $0x80] sm:$0xff]
  %v6377 = vld [vmem:[%s2 + $0x88] sm:$0xff]
  %v6378 = vld [vmem:[%s2 + $0x90] sm:$0xff]
  %v6379 = vld [vmem:[%s2 + $0x98] sm:$0xff]
  %6381 = vset.pattern.permute.xlu0 0
  %6382 = vperm.xlu0 %6381, %v6376
  %v6383 = vpop.permute.xlu0 %6382
  %6386 = vset.pattern.permute.xlu0 0
  %6387 = vperm.xlu0 %6386, %v6377
  %v6388 = vpop.permute.xlu0 %6387
  %6391 = vset.pattern.permute.xlu0 0
  %6392 = vperm.xlu0 %6391, %v6378
  %v6393 = vpop.permute.xlu0 %6392
  %6396 = vset.pattern.permute.xlu0 0
  %6397 = vperm.xlu0 %6396, %v6379
  %v6398 = vpop.permute.xlu0 %6397
  %v6400 = vmul.f32 %v6360, %v6383
  %v6401 = vmul.f32 %v6361, %v6383
  %v6402 = vmul.f32 %v6362, %v6383
  %v6403 = vmul.f32 %v6363, %v6383
  %v6404 = vmul.f32 %v6364, %v6388
  %v6405 = vmul.f32 %v6365, %v6388
  %v6406 = vmul.f32 %v6366, %v6388
  %v6407 = vmul.f32 %v6367, %v6388
  %v6408 = vmul.f32 %v6368, %v6393
  %v6409 = vmul.f32 %v6369, %v6393
  %v6410 = vmul.f32 %v6370, %v6393
  %v6411 = vmul.f32 %v6371, %v6393
  %v6412 = vmul.f32 %v6372, %v6398
  %v6413 = vmul.f32 %v6373, %v6398
  %v6414 = vmul.f32 %v6374, %v6398
  %v6415 = vmul.f32 %v6375, %v6398
  %v6416 = vadd.f32 %v6296, %v6400
  %v6417 = vadd.f32 %v6297, %v6401
  %v6418 = vadd.f32 %v6298, %v6402
  %v6419 = vadd.f32 %v6299, %v6403
  %v6420 = vadd.f32 %v6300, %v6404
  %v6421 = vadd.f32 %v6301, %v6405
  %v6422 = vadd.f32 %v6302, %v6406
  %v6423 = vadd.f32 %v6303, %v6407
  %v6424 = vadd.f32 %v6304, %v6408
  %v6425 = vadd.f32 %v6305, %v6409
  %v6426 = vadd.f32 %v6306, %v6410
  %v6427 = vadd.f32 %v6307, %v6411
  %v6428 = vadd.f32 %v6308, %v6412
  %v6429 = vadd.f32 %v6309, %v6413
  %v6430 = vadd.f32 %v6310, %v6414
  %v6431 = vadd.f32 %v6311, %v6415
  %6432 = vrot.lane.b32.xlu0 %v5057, 16
  %v6433 = vpop.permute.xlu0 %6432
  %6434 = vrot.lane.b32.xlu0 %v5061, 16
  %v6435 = vpop.permute.xlu0 %6434
  %6436 = vrot.lane.b32.xlu0 %v5067, 16
  %v6437 = vpop.permute.xlu0 %6436
  %6438 = vrot.lane.b32.xlu0 %v5071, 16
  %v6439 = vpop.permute.xlu0 %6438
  %6440 = vrot.lane.b32.xlu0 %v5059, 16
  %v6441 = vpop.permute.xlu0 %6440
  %6442 = vrot.lane.b32.xlu0 %v5063, 16
  %v6443 = vpop.permute.xlu0 %6442
  %6444 = vrot.lane.b32.xlu0 %v5069, 16
  %v6445 = vpop.permute.xlu0 %6444
  %6446 = vrot.lane.b32.xlu0 %v5073, 16
  %v6447 = vpop.permute.xlu0 %6446
  %6448 = vrot.lane.b32.xlu0 %v5170, 16
  %v6449 = vpop.permute.xlu0 %6448
  %6450 = vrot.lane.b32.xlu0 %v5174, 16
  %v6451 = vpop.permute.xlu0 %6450
  %6452 = vrot.lane.b32.xlu0 %v5180, 16
  %v6453 = vpop.permute.xlu0 %6452
  %6454 = vrot.lane.b32.xlu0 %v5184, 16
  %v6455 = vpop.permute.xlu0 %6454
  %6456 = vrot.lane.b32.xlu0 %v5172, 16
  %v6457 = vpop.permute.xlu0 %6456
  %6458 = vrot.lane.b32.xlu0 %v5176, 16
  %v6459 = vpop.permute.xlu0 %6458
  %6460 = vrot.lane.b32.xlu0 %v5182, 16
  %v6461 = vpop.permute.xlu0 %6460
  %6462 = vrot.lane.b32.xlu0 %v5186, 16
  %v6463 = vpop.permute.xlu0 %6462
  %v6464 = vsel %vm823, %v6449, %v6457
  %v6465 = vsel %vm823, %v6451, %v6459
  %v6466 = vsel %vm823, %v6453, %v6461
  %v6467 = vsel %vm823, %v6455, %v6463
  %v6468 = vsel %vm823, %v6441, %v6449
  %v6469 = vsel %vm823, %v6443, %v6451
  %v6470 = vsel %vm823, %v6445, %v6453
  %v6471 = vsel %vm823, %v6447, %v6455
  %v6472 = vsel %vm823, %v6433, %v6441
  %v6473 = vsel %vm823, %v6435, %v6443
  %v6474 = vsel %vm823, %v6437, %v6445
  %v6475 = vsel %vm823, %v6439, %v6447
  %v6476 = vsel %vm823, %v6457, %v6433
  %v6477 = vsel %vm823, %v6459, %v6435
  %v6478 = vsel %vm823, %v6461, %v6437
  %v6479 = vsel %vm823, %v6463, %v6439
  %v6480 = vmul.f32 %v6476, %v844
  %v6481 = vmul.f32 %v6472, %v848
  %v6482 = vmul.f32 %v6468, %v852
  %v6483 = vmul.f32 %v6464, %v856
  %v6484 = vmul.f32 %v6477, %v844
  %v6485 = vmul.f32 %v6473, %v848
  %v6486 = vmul.f32 %v6469, %v852
  %v6487 = vmul.f32 %v6465, %v856
  %v6488 = vmul.f32 %v6478, %v844
  %v6489 = vmul.f32 %v6474, %v848
  %v6490 = vmul.f32 %v6470, %v852
  %v6491 = vmul.f32 %v6466, %v856
  %v6492 = vmul.f32 %v6479, %v844
  %v6493 = vmul.f32 %v6475, %v848
  %v6494 = vmul.f32 %v6471, %v852
  %v6495 = vmul.f32 %v6467, %v856
  %v6496 = vld [vmem:[%s877 + $0x80] sm:$0xff]
  %v6497 = vld [vmem:[%s877 + $0x88] sm:$0xff]
  %v6498 = vld [vmem:[%s877 + $0x90] sm:$0xff]
  %v6499 = vld [vmem:[%s877 + $0x98] sm:$0xff]
  %6501 = vset.pattern.permute.xlu0 0
  %6502 = vperm.xlu0 %6501, %v6496
  %v6503 = vpop.permute.xlu0 %6502
  %6506 = vset.pattern.permute.xlu0 0
  %6507 = vperm.xlu0 %6506, %v6497
  %v6508 = vpop.permute.xlu0 %6507
  %6511 = vset.pattern.permute.xlu0 0
  %6512 = vperm.xlu0 %6511, %v6498
  %v6513 = vpop.permute.xlu0 %6512
  %6516 = vset.pattern.permute.xlu0 0
  %6517 = vperm.xlu0 %6516, %v6499
  %v6518 = vpop.permute.xlu0 %6517
  %v6520 = vmul.f32 %v6480, %v6503
  %v6521 = vmul.f32 %v6481, %v6503
  %v6522 = vmul.f32 %v6482, %v6503
  %v6523 = vmul.f32 %v6483, %v6503
  %v6524 = vmul.f32 %v6484, %v6508
  %v6525 = vmul.f32 %v6485, %v6508
  %v6526 = vmul.f32 %v6486, %v6508
  %v6527 = vmul.f32 %v6487, %v6508
  %v6528 = vmul.f32 %v6488, %v6513
  %v6529 = vmul.f32 %v6489, %v6513
  %v6530 = vmul.f32 %v6490, %v6513
  %v6531 = vmul.f32 %v6491, %v6513
  %v6532 = vmul.f32 %v6492, %v6518
  %v6533 = vmul.f32 %v6493, %v6518
  %v6534 = vmul.f32 %v6494, %v6518
  %v6535 = vmul.f32 %v6495, %v6518
  %v6536 = vadd.f32 %v6416, %v6520
  %v6537 = vadd.f32 %v6417, %v6521
  %v6538 = vadd.f32 %v6418, %v6522
  %v6539 = vadd.f32 %v6419, %v6523
  %v6540 = vadd.f32 %v6420, %v6524
  %v6541 = vadd.f32 %v6421, %v6525
  %v6542 = vadd.f32 %v6422, %v6526
  %v6543 = vadd.f32 %v6423, %v6527
  %v6544 = vadd.f32 %v6424, %v6528
  %v6545 = vadd.f32 %v6425, %v6529
  %v6546 = vadd.f32 %v6426, %v6530
  %v6547 = vadd.f32 %v6427, %v6531
  %v6548 = vadd.f32 %v6428, %v6532
  %v6549 = vadd.f32 %v6429, %v6533
  %v6550 = vadd.f32 %v6430, %v6534
  %v6551 = vadd.f32 %v6431, %v6535
  %6552 = vrot.lane.b32.xlu0 %v5057, 15
  %v6553 = vpop.permute.xlu0 %6552
  %6554 = vrot.lane.b32.xlu0 %v5061, 15
  %v6555 = vpop.permute.xlu0 %6554
  %6556 = vrot.lane.b32.xlu0 %v5067, 15
  %v6557 = vpop.permute.xlu0 %6556
  %6558 = vrot.lane.b32.xlu0 %v5071, 15
  %v6559 = vpop.permute.xlu0 %6558
  %6560 = vrot.lane.b32.xlu0 %v5059, 15
  %v6561 = vpop.permute.xlu0 %6560
  %6562 = vrot.lane.b32.xlu0 %v5063, 15
  %v6563 = vpop.permute.xlu0 %6562
  %6564 = vrot.lane.b32.xlu0 %v5069, 15
  %v6565 = vpop.permute.xlu0 %6564
  %6566 = vrot.lane.b32.xlu0 %v5073, 15
  %v6567 = vpop.permute.xlu0 %6566
  %6568 = vrot.lane.b32.xlu0 %v5170, 15
  %v6569 = vpop.permute.xlu0 %6568
  %6570 = vrot.lane.b32.xlu0 %v5174, 15
  %v6571 = vpop.permute.xlu0 %6570
  %6572 = vrot.lane.b32.xlu0 %v5180, 15
  %v6573 = vpop.permute.xlu0 %6572
  %6574 = vrot.lane.b32.xlu0 %v5184, 15
  %v6575 = vpop.permute.xlu0 %6574
  %6576 = vrot.lane.b32.xlu0 %v5172, 15
  %v6577 = vpop.permute.xlu0 %6576
  %6578 = vrot.lane.b32.xlu0 %v5176, 15
  %v6579 = vpop.permute.xlu0 %6578
  %6580 = vrot.lane.b32.xlu0 %v5182, 15
  %v6581 = vpop.permute.xlu0 %6580
  %6582 = vrot.lane.b32.xlu0 %v5186, 15
  %v6583 = vpop.permute.xlu0 %6582
  %v6584 = vsel %vm966, %v6569, %v6577
  %v6585 = vsel %vm966, %v6571, %v6579
  %v6586 = vsel %vm966, %v6573, %v6581
  %v6587 = vsel %vm966, %v6575, %v6583
  %v6588 = vsel %vm966, %v6561, %v6569
  %v6589 = vsel %vm966, %v6563, %v6571
  %v6590 = vsel %vm966, %v6565, %v6573
  %v6591 = vsel %vm966, %v6567, %v6575
  %v6592 = vsel %vm966, %v6553, %v6561
  %v6593 = vsel %vm966, %v6555, %v6563
  %v6594 = vsel %vm966, %v6557, %v6565
  %v6595 = vsel %vm966, %v6559, %v6567
  %v6596 = vsel %vm966, %v6577, %v6553
  %v6597 = vsel %vm966, %v6579, %v6555
  %v6598 = vsel %vm966, %v6581, %v6557
  %v6599 = vsel %vm966, %v6583, %v6559
  %v6600 = vmul.f32 %v6596, %v987
  %v6601 = vmul.f32 %v6592, %v991
  %v6602 = vmul.f32 %v6588, %v995
  %v6603 = vmul.f32 %v6584, %v999
  %v6604 = vmul.f32 %v6597, %v987
  %v6605 = vmul.f32 %v6593, %v991
  %v6606 = vmul.f32 %v6589, %v995
  %v6607 = vmul.f32 %v6585, %v999
  %v6608 = vmul.f32 %v6598, %v987
  %v6609 = vmul.f32 %v6594, %v991
  %v6610 = vmul.f32 %v6590, %v995
  %v6611 = vmul.f32 %v6586, %v999
  %v6612 = vmul.f32 %v6599, %v987
  %v6613 = vmul.f32 %v6595, %v991
  %v6614 = vmul.f32 %v6591, %v995
  %v6615 = vmul.f32 %v6587, %v999
  %v6616 = vld [vmem:[%s1020 + $0x80] sm:$0xff]
  %v6617 = vld [vmem:[%s1020 + $0x88] sm:$0xff]
  %v6618 = vld [vmem:[%s1020 + $0x90] sm:$0xff]
  %v6619 = vld [vmem:[%s1020 + $0x98] sm:$0xff]
  %6621 = vset.pattern.permute.xlu0 0
  %6622 = vperm.xlu0 %6621, %v6616
  %v6623 = vpop.permute.xlu0 %6622
  %6626 = vset.pattern.permute.xlu0 0
  %6627 = vperm.xlu0 %6626, %v6617
  %v6628 = vpop.permute.xlu0 %6627
  %6631 = vset.pattern.permute.xlu0 0
  %6632 = vperm.xlu0 %6631, %v6618
  %v6633 = vpop.permute.xlu0 %6632
  %6636 = vset.pattern.permute.xlu0 0
  %6637 = vperm.xlu0 %6636, %v6619
  %v6638 = vpop.permute.xlu0 %6637
  %v6640 = vmul.f32 %v6600, %v6623
  %v6641 = vmul.f32 %v6601, %v6623
  %v6642 = vmul.f32 %v6602, %v6623
  %v6643 = vmul.f32 %v6603, %v6623
  %v6644 = vmul.f32 %v6604, %v6628
  %v6645 = vmul.f32 %v6605, %v6628
  %v6646 = vmul.f32 %v6606, %v6628
  %v6647 = vmul.f32 %v6607, %v6628
  %v6648 = vmul.f32 %v6608, %v6633
  %v6649 = vmul.f32 %v6609, %v6633
  %v6650 = vmul.f32 %v6610, %v6633
  %v6651 = vmul.f32 %v6611, %v6633
  %v6652 = vmul.f32 %v6612, %v6638
  %v6653 = vmul.f32 %v6613, %v6638
  %v6654 = vmul.f32 %v6614, %v6638
  %v6655 = vmul.f32 %v6615, %v6638
  %v6656 = vadd.f32 %v6536, %v6640
  %v6657 = vadd.f32 %v6537, %v6641
  %v6658 = vadd.f32 %v6538, %v6642
  %v6659 = vadd.f32 %v6539, %v6643
  %v6660 = vadd.f32 %v6540, %v6644
  %v6661 = vadd.f32 %v6541, %v6645
  %v6662 = vadd.f32 %v6542, %v6646
  %v6663 = vadd.f32 %v6543, %v6647
  %v6664 = vadd.f32 %v6544, %v6648
  %v6665 = vadd.f32 %v6545, %v6649
  %v6666 = vadd.f32 %v6546, %v6650
  %v6667 = vadd.f32 %v6547, %v6651
  %v6668 = vadd.f32 %v6548, %v6652
  %v6669 = vadd.f32 %v6549, %v6653
  %v6670 = vadd.f32 %v6550, %v6654
  %v6671 = vadd.f32 %v6551, %v6655
  %6672 = vrot.lane.b32.xlu0 %v5057, 1
  %v6673 = vpop.permute.xlu0 %6672
  %6674 = vrot.lane.b32.xlu0 %v5061, 1
  %v6675 = vpop.permute.xlu0 %6674
  %6676 = vrot.lane.b32.xlu0 %v5067, 1
  %v6677 = vpop.permute.xlu0 %6676
  %6678 = vrot.lane.b32.xlu0 %v5071, 1
  %v6679 = vpop.permute.xlu0 %6678
  %6680 = vrot.lane.b32.xlu0 %v5059, 1
  %v6681 = vpop.permute.xlu0 %6680
  %6682 = vrot.lane.b32.xlu0 %v5063, 1
  %v6683 = vpop.permute.xlu0 %6682
  %6684 = vrot.lane.b32.xlu0 %v5069, 1
  %v6685 = vpop.permute.xlu0 %6684
  %6686 = vrot.lane.b32.xlu0 %v5073, 1
  %v6687 = vpop.permute.xlu0 %6686
  %6688 = vrot.lane.b32.xlu0 %v5170, 1
  %v6689 = vpop.permute.xlu0 %6688
  %6690 = vrot.lane.b32.xlu0 %v5174, 1
  %v6691 = vpop.permute.xlu0 %6690
  %6692 = vrot.lane.b32.xlu0 %v5180, 1
  %v6693 = vpop.permute.xlu0 %6692
  %6694 = vrot.lane.b32.xlu0 %v5184, 1
  %v6695 = vpop.permute.xlu0 %6694
  %6696 = vrot.lane.b32.xlu0 %v5172, 1
  %v6697 = vpop.permute.xlu0 %6696
  %6698 = vrot.lane.b32.xlu0 %v5176, 1
  %v6699 = vpop.permute.xlu0 %6698
  %6700 = vrot.lane.b32.xlu0 %v5182, 1
  %v6701 = vpop.permute.xlu0 %6700
  %6702 = vrot.lane.b32.xlu0 %v5186, 1
  %v6703 = vpop.permute.xlu0 %6702
  %v6704 = vsel %vm1109, %v6689, %v6697
  %v6705 = vsel %vm1109, %v6691, %v6699
  %v6706 = vsel %vm1109, %v6693, %v6701
  %v6707 = vsel %vm1109, %v6695, %v6703
  %v6708 = vsel %vm1109, %v6681, %v6689
  %v6709 = vsel %vm1109, %v6683, %v6691
  %v6710 = vsel %vm1109, %v6685, %v6693
  %v6711 = vsel %vm1109, %v6687, %v6695
  %v6712 = vsel %vm1109, %v6673, %v6681
  %v6713 = vsel %vm1109, %v6675, %v6683
  %v6714 = vsel %vm1109, %v6677, %v6685
  %v6715 = vsel %vm1109, %v6679, %v6687
  %v6716 = vsel %vm1109, %v6697, %v6673
  %v6717 = vsel %vm1109, %v6699, %v6675
  %v6718 = vsel %vm1109, %v6701, %v6677
  %v6719 = vsel %vm1109, %v6703, %v6679
  %v6720 = vmul.f32 %v6716, %v1130
  %v6721 = vmul.f32 %v6712, %v1134
  %v6722 = vmul.f32 %v6708, %v1138
  %v6723 = vmul.f32 %v6704, %v1142
  %v6724 = vmul.f32 %v6717, %v1130
  %v6725 = vmul.f32 %v6713, %v1134
  %v6726 = vmul.f32 %v6709, %v1138
  %v6727 = vmul.f32 %v6705, %v1142
  %v6728 = vmul.f32 %v6718, %v1130
  %v6729 = vmul.f32 %v6714, %v1134
  %v6730 = vmul.f32 %v6710, %v1138
  %v6731 = vmul.f32 %v6706, %v1142
  %v6732 = vmul.f32 %v6719, %v1130
  %v6733 = vmul.f32 %v6715, %v1134
  %v6734 = vmul.f32 %v6711, %v1138
  %v6735 = vmul.f32 %v6707, %v1142
  %v6736 = vld [vmem:[%s1163 + $0x80] sm:$0xff]
  %v6737 = vld [vmem:[%s1163 + $0x88] sm:$0xff]
  %v6738 = vld [vmem:[%s1163 + $0x90] sm:$0xff]
  %v6739 = vld [vmem:[%s1163 + $0x98] sm:$0xff]
  %6741 = vset.pattern.permute.xlu0 0
  %6742 = vperm.xlu0 %6741, %v6736
  %v6743 = vpop.permute.xlu0 %6742
  %6746 = vset.pattern.permute.xlu0 0
  %6747 = vperm.xlu0 %6746, %v6737
  %v6748 = vpop.permute.xlu0 %6747
  %6751 = vset.pattern.permute.xlu0 0
  %6752 = vperm.xlu0 %6751, %v6738
  %v6753 = vpop.permute.xlu0 %6752
  %6756 = vset.pattern.permute.xlu0 0
  %6757 = vperm.xlu0 %6756, %v6739
  %v6758 = vpop.permute.xlu0 %6757
  %v6760 = vmul.f32 %v6720, %v6743
  %v6761 = vmul.f32 %v6721, %v6743
  %v6762 = vmul.f32 %v6722, %v6743
  %v6763 = vmul.f32 %v6723, %v6743
  %v6764 = vmul.f32 %v6724, %v6748
  %v6765 = vmul.f32 %v6725, %v6748
  %v6766 = vmul.f32 %v6726, %v6748
  %v6767 = vmul.f32 %v6727, %v6748
  %v6768 = vmul.f32 %v6728, %v6753
  %v6769 = vmul.f32 %v6729, %v6753
  %v6770 = vmul.f32 %v6730, %v6753
  %v6771 = vmul.f32 %v6731, %v6753
  %v6772 = vmul.f32 %v6732, %v6758
  %v6773 = vmul.f32 %v6733, %v6758
  %v6774 = vmul.f32 %v6734, %v6758
  %v6775 = vmul.f32 %v6735, %v6758
  %v6776 = vadd.f32 %v6656, %v6760
  %v6777 = vadd.f32 %v6657, %v6761
  %v6778 = vadd.f32 %v6658, %v6762
  %v6779 = vadd.f32 %v6659, %v6763
  %v6780 = vadd.f32 %v6660, %v6764
  %v6781 = vadd.f32 %v6661, %v6765
  %v6782 = vadd.f32 %v6662, %v6766
  %v6783 = vadd.f32 %v6663, %v6767
  %v6784 = vadd.f32 %v6664, %v6768
  %v6785 = vadd.f32 %v6665, %v6769
  %v6786 = vadd.f32 %v6666, %v6770
  %v6787 = vadd.f32 %v6667, %v6771
  %v6788 = vadd.f32 %v6668, %v6772
  %v6789 = vadd.f32 %v6669, %v6773
  %v6790 = vadd.f32 %v6670, %v6774
  %v6791 = vadd.f32 %v6671, %v6775
  %6792 = vrot.lane.b32.xlu0 %v5057, 127
  %v6793 = vpop.permute.xlu0 %6792
  %6794 = vrot.lane.b32.xlu0 %v5061, 127
  %v6795 = vpop.permute.xlu0 %6794
  %6796 = vrot.lane.b32.xlu0 %v5067, 127
  %v6797 = vpop.permute.xlu0 %6796
  %6798 = vrot.lane.b32.xlu0 %v5071, 127
  %v6799 = vpop.permute.xlu0 %6798
  %6800 = vrot.lane.b32.xlu0 %v5059, 127
  %v6801 = vpop.permute.xlu0 %6800
  %6802 = vrot.lane.b32.xlu0 %v5063, 127
  %v6803 = vpop.permute.xlu0 %6802
  %6804 = vrot.lane.b32.xlu0 %v5069, 127
  %v6805 = vpop.permute.xlu0 %6804
  %6806 = vrot.lane.b32.xlu0 %v5073, 127
  %v6807 = vpop.permute.xlu0 %6806
  %6808 = vrot.lane.b32.xlu0 %v5170, 127
  %v6809 = vpop.permute.xlu0 %6808
  %6810 = vrot.lane.b32.xlu0 %v5174, 127
  %v6811 = vpop.permute.xlu0 %6810
  %6812 = vrot.lane.b32.xlu0 %v5180, 127
  %v6813 = vpop.permute.xlu0 %6812
  %6814 = vrot.lane.b32.xlu0 %v5184, 127
  %v6815 = vpop.permute.xlu0 %6814
  %6816 = vrot.lane.b32.xlu0 %v5172, 127
  %v6817 = vpop.permute.xlu0 %6816
  %6818 = vrot.lane.b32.xlu0 %v5176, 127
  %v6819 = vpop.permute.xlu0 %6818
  %6820 = vrot.lane.b32.xlu0 %v5182, 127
  %v6821 = vpop.permute.xlu0 %6820
  %6822 = vrot.lane.b32.xlu0 %v5186, 127
  %v6823 = vpop.permute.xlu0 %6822
  %v6824 = vsel %vm1252, %v6809, %v6817
  %v6825 = vsel %vm1252, %v6811, %v6819
  %v6826 = vsel %vm1252, %v6813, %v6821
  %v6827 = vsel %vm1252, %v6815, %v6823
  %v6828 = vsel %vm1252, %v6801, %v6809
  %v6829 = vsel %vm1252, %v6803, %v6811
  %v6830 = vsel %vm1252, %v6805, %v6813
  %v6831 = vsel %vm1252, %v6807, %v6815
  %v6832 = vsel %vm1252, %v6793, %v6801
  %v6833 = vsel %vm1252, %v6795, %v6803
  %v6834 = vsel %vm1252, %v6797, %v6805
  %v6835 = vsel %vm1252, %v6799, %v6807
  %v6836 = vsel %vm1252, %v6817, %v6793
  %v6837 = vsel %vm1252, %v6819, %v6795
  %v6838 = vsel %vm1252, %v6821, %v6797
  %v6839 = vsel %vm1252, %v6823, %v6799
  %v6840 = vmul.f32 %v6832, %v1273
  %v6841 = vmul.f32 %v6828, %v1277
  %v6842 = vmul.f32 %v6824, %v1281
  %v6843 = vmul.f32 %v6836, %v1285
  %v6844 = vmul.f32 %v6833, %v1273
  %v6845 = vmul.f32 %v6829, %v1277
  %v6846 = vmul.f32 %v6825, %v1281
  %v6847 = vmul.f32 %v6837, %v1285
  %v6848 = vmul.f32 %v6834, %v1273
  %v6849 = vmul.f32 %v6830, %v1277
  %v6850 = vmul.f32 %v6826, %v1281
  %v6851 = vmul.f32 %v6838, %v1285
  %v6852 = vmul.f32 %v6835, %v1273
  %v6853 = vmul.f32 %v6831, %v1277
  %v6854 = vmul.f32 %v6827, %v1281
  %v6855 = vmul.f32 %v6839, %v1285
  %v6856 = vld [vmem:[%s1306 + $0x80] sm:$0xff]
  %v6857 = vld [vmem:[%s1306 + $0x88] sm:$0xff]
  %v6858 = vld [vmem:[%s1306 + $0x90] sm:$0xff]
  %v6859 = vld [vmem:[%s1306 + $0x98] sm:$0xff]
  %6861 = vset.pattern.permute.xlu0 0
  %6862 = vperm.xlu0 %6861, %v6856
  %v6863 = vpop.permute.xlu0 %6862
  %6866 = vset.pattern.permute.xlu0 0
  %6867 = vperm.xlu0 %6866, %v6857
  %v6868 = vpop.permute.xlu0 %6867
  %6871 = vset.pattern.permute.xlu0 0
  %6872 = vperm.xlu0 %6871, %v6858
  %v6873 = vpop.permute.xlu0 %6872
  %6876 = vset.pattern.permute.xlu0 0
  %6877 = vperm.xlu0 %6876, %v6859
  %v6878 = vpop.permute.xlu0 %6877
  %v6880 = vmul.f32 %v6840, %v6863
  %v6881 = vmul.f32 %v6841, %v6863
  %v6882 = vmul.f32 %v6842, %v6863
  %v6883 = vmul.f32 %v6843, %v6863
  %v6884 = vmul.f32 %v6844, %v6868
  %v6885 = vmul.f32 %v6845, %v6868
  %v6886 = vmul.f32 %v6846, %v6868
  %v6887 = vmul.f32 %v6847, %v6868
  %v6888 = vmul.f32 %v6848, %v6873
  %v6889 = vmul.f32 %v6849, %v6873
  %v6890 = vmul.f32 %v6850, %v6873
  %v6891 = vmul.f32 %v6851, %v6873
  %v6892 = vmul.f32 %v6852, %v6878
  %v6893 = vmul.f32 %v6853, %v6878
  %v6894 = vmul.f32 %v6854, %v6878
  %v6895 = vmul.f32 %v6855, %v6878
  %v6896 = vadd.f32 %v6776, %v6880
  %v6897 = vadd.f32 %v6777, %v6881
  %v6898 = vadd.f32 %v6778, %v6882
  %v6899 = vadd.f32 %v6779, %v6883
  %v6900 = vadd.f32 %v6780, %v6884
  %v6901 = vadd.f32 %v6781, %v6885
  %v6902 = vadd.f32 %v6782, %v6886
  %v6903 = vadd.f32 %v6783, %v6887
  %v6904 = vadd.f32 %v6784, %v6888
  %v6905 = vadd.f32 %v6785, %v6889
  %v6906 = vadd.f32 %v6786, %v6890
  %v6907 = vadd.f32 %v6787, %v6891
  %v6908 = vadd.f32 %v6788, %v6892
  %v6909 = vadd.f32 %v6789, %v6893
  %v6910 = vadd.f32 %v6790, %v6894
  %v6911 = vadd.f32 %v6791, %v6895
  %6912 = vrot.lane.b32.xlu0 %v5057, 113
  %v6913 = vpop.permute.xlu0 %6912
  %6914 = vrot.lane.b32.xlu0 %v5061, 113
  %v6915 = vpop.permute.xlu0 %6914
  %6916 = vrot.lane.b32.xlu0 %v5067, 113
  %v6917 = vpop.permute.xlu0 %6916
  %6918 = vrot.lane.b32.xlu0 %v5071, 113
  %v6919 = vpop.permute.xlu0 %6918
  %6920 = vrot.lane.b32.xlu0 %v5059, 113
  %v6921 = vpop.permute.xlu0 %6920
  %6922 = vrot.lane.b32.xlu0 %v5063, 113
  %v6923 = vpop.permute.xlu0 %6922
  %6924 = vrot.lane.b32.xlu0 %v5069, 113
  %v6925 = vpop.permute.xlu0 %6924
  %6926 = vrot.lane.b32.xlu0 %v5073, 113
  %v6927 = vpop.permute.xlu0 %6926
  %6928 = vrot.lane.b32.xlu0 %v5170, 113
  %v6929 = vpop.permute.xlu0 %6928
  %6930 = vrot.lane.b32.xlu0 %v5174, 113
  %v6931 = vpop.permute.xlu0 %6930
  %6932 = vrot.lane.b32.xlu0 %v5180, 113
  %v6933 = vpop.permute.xlu0 %6932
  %6934 = vrot.lane.b32.xlu0 %v5184, 113
  %v6935 = vpop.permute.xlu0 %6934
  %6936 = vrot.lane.b32.xlu0 %v5172, 113
  %v6937 = vpop.permute.xlu0 %6936
  %6938 = vrot.lane.b32.xlu0 %v5176, 113
  %v6939 = vpop.permute.xlu0 %6938
  %6940 = vrot.lane.b32.xlu0 %v5182, 113
  %v6941 = vpop.permute.xlu0 %6940
  %6942 = vrot.lane.b32.xlu0 %v5186, 113
  %v6943 = vpop.permute.xlu0 %6942
  %v6944 = vsel %vm1395, %v6929, %v6937
  %v6945 = vsel %vm1395, %v6931, %v6939
  %v6946 = vsel %vm1395, %v6933, %v6941
  %v6947 = vsel %vm1395, %v6935, %v6943
  %v6948 = vsel %vm1395, %v6921, %v6929
  %v6949 = vsel %vm1395, %v6923, %v6931
  %v6950 = vsel %vm1395, %v6925, %v6933
  %v6951 = vsel %vm1395, %v6927, %v6935
  %v6952 = vsel %vm1395, %v6913, %v6921
  %v6953 = vsel %vm1395, %v6915, %v6923
  %v6954 = vsel %vm1395, %v6917, %v6925
  %v6955 = vsel %vm1395, %v6919, %v6927
  %v6956 = vsel %vm1395, %v6937, %v6913
  %v6957 = vsel %vm1395, %v6939, %v6915
  %v6958 = vsel %vm1395, %v6941, %v6917
  %v6959 = vsel %vm1395, %v6943, %v6919
  %v6960 = vmul.f32 %v6952, %v1416
  %v6961 = vmul.f32 %v6948, %v1420
  %v6962 = vmul.f32 %v6944, %v1424
  %v6963 = vmul.f32 %v6956, %v1428
  %v6964 = vmul.f32 %v6953, %v1416
  %v6965 = vmul.f32 %v6949, %v1420
  %v6966 = vmul.f32 %v6945, %v1424
  %v6967 = vmul.f32 %v6957, %v1428
  %v6968 = vmul.f32 %v6954, %v1416
  %v6969 = vmul.f32 %v6950, %v1420
  %v6970 = vmul.f32 %v6946, %v1424
  %v6971 = vmul.f32 %v6958, %v1428
  %v6972 = vmul.f32 %v6955, %v1416
  %v6973 = vmul.f32 %v6951, %v1420
  %v6974 = vmul.f32 %v6947, %v1424
  %v6975 = vmul.f32 %v6959, %v1428
  %v6976 = vld [vmem:[%s1449 + $0x80] sm:$0xff]
  %v6977 = vld [vmem:[%s1449 + $0x88] sm:$0xff]
  %v6978 = vld [vmem:[%s1449 + $0x90] sm:$0xff]
  %v6979 = vld [vmem:[%s1449 + $0x98] sm:$0xff]
  %6981 = vset.pattern.permute.xlu0 0
  %6982 = vperm.xlu0 %6981, %v6976
  %v6983 = vpop.permute.xlu0 %6982
  %6986 = vset.pattern.permute.xlu0 0
  %6987 = vperm.xlu0 %6986, %v6977
  %v6988 = vpop.permute.xlu0 %6987
  %6991 = vset.pattern.permute.xlu0 0
  %6992 = vperm.xlu0 %6991, %v6978
  %v6993 = vpop.permute.xlu0 %6992
  %6996 = vset.pattern.permute.xlu0 0
  %6997 = vperm.xlu0 %6996, %v6979
  %v6998 = vpop.permute.xlu0 %6997
  %v7000 = vmul.f32 %v6960, %v6983
  %v7001 = vmul.f32 %v6961, %v6983
  %v7002 = vmul.f32 %v6962, %v6983
  %v7003 = vmul.f32 %v6963, %v6983
  %v7004 = vmul.f32 %v6964, %v6988
  %v7005 = vmul.f32 %v6965, %v6988
  %v7006 = vmul.f32 %v6966, %v6988
  %v7007 = vmul.f32 %v6967, %v6988
  %v7008 = vmul.f32 %v6968, %v6993
  %v7009 = vmul.f32 %v6969, %v6993
  %v7010 = vmul.f32 %v6970, %v6993
  %v7011 = vmul.f32 %v6971, %v6993
  %v7012 = vmul.f32 %v6972, %v6998
  %v7013 = vmul.f32 %v6973, %v6998
  %v7014 = vmul.f32 %v6974, %v6998
  %v7015 = vmul.f32 %v6975, %v6998
  %v7016 = vadd.f32 %v6896, %v7000
  %v7017 = vadd.f32 %v6897, %v7001
  %v7018 = vadd.f32 %v6898, %v7002
  %v7019 = vadd.f32 %v6899, %v7003
  %v7020 = vadd.f32 %v6900, %v7004
  %v7021 = vadd.f32 %v6901, %v7005
  %v7022 = vadd.f32 %v6902, %v7006
  %v7023 = vadd.f32 %v6903, %v7007
  %v7024 = vadd.f32 %v6904, %v7008
  %v7025 = vadd.f32 %v6905, %v7009
  %v7026 = vadd.f32 %v6906, %v7010
  %v7027 = vadd.f32 %v6907, %v7011
  %v7028 = vadd.f32 %v6908, %v7012
  %v7029 = vadd.f32 %v6909, %v7013
  %v7030 = vadd.f32 %v6910, %v7014
  %v7031 = vadd.f32 %v6911, %v7015
  %7032 = vrot.lane.b32.xlu0 %v5057, 112
  %v7033 = vpop.permute.xlu0 %7032
  %7034 = vrot.lane.b32.xlu0 %v5061, 112
  %v7035 = vpop.permute.xlu0 %7034
  %7036 = vrot.lane.b32.xlu0 %v5067, 112
  %v7037 = vpop.permute.xlu0 %7036
  %7038 = vrot.lane.b32.xlu0 %v5071, 112
  %v7039 = vpop.permute.xlu0 %7038
  %7040 = vrot.lane.b32.xlu0 %v5059, 112
  %v7041 = vpop.permute.xlu0 %7040
  %7042 = vrot.lane.b32.xlu0 %v5063, 112
  %v7043 = vpop.permute.xlu0 %7042
  %7044 = vrot.lane.b32.xlu0 %v5069, 112
  %v7045 = vpop.permute.xlu0 %7044
  %7046 = vrot.lane.b32.xlu0 %v5073, 112
  %v7047 = vpop.permute.xlu0 %7046
  %7048 = vrot.lane.b32.xlu0 %v5170, 112
  %v7049 = vpop.permute.xlu0 %7048
  %7050 = vrot.lane.b32.xlu0 %v5174, 112
  %v7051 = vpop.permute.xlu0 %7050
  %7052 = vrot.lane.b32.xlu0 %v5180, 112
  %v7053 = vpop.permute.xlu0 %7052
  %7054 = vrot.lane.b32.xlu0 %v5184, 112
  %v7055 = vpop.permute.xlu0 %7054
  %7056 = vrot.lane.b32.xlu0 %v5172, 112
  %v7057 = vpop.permute.xlu0 %7056
  %7058 = vrot.lane.b32.xlu0 %v5176, 112
  %v7059 = vpop.permute.xlu0 %7058
  %7060 = vrot.lane.b32.xlu0 %v5182, 112
  %v7061 = vpop.permute.xlu0 %7060
  %7062 = vrot.lane.b32.xlu0 %v5186, 112
  %v7063 = vpop.permute.xlu0 %7062
  %v7064 = vsel %vm1538, %v7049, %v7057
  %v7065 = vsel %vm1538, %v7051, %v7059
  %v7066 = vsel %vm1538, %v7053, %v7061
  %v7067 = vsel %vm1538, %v7055, %v7063
  %v7068 = vsel %vm1538, %v7041, %v7049
  %v7069 = vsel %vm1538, %v7043, %v7051
  %v7070 = vsel %vm1538, %v7045, %v7053
  %v7071 = vsel %vm1538, %v7047, %v7055
  %v7072 = vsel %vm1538, %v7033, %v7041
  %v7073 = vsel %vm1538, %v7035, %v7043
  %v7074 = vsel %vm1538, %v7037, %v7045
  %v7075 = vsel %vm1538, %v7039, %v7047
  %v7076 = vsel %vm1538, %v7057, %v7033
  %v7077 = vsel %vm1538, %v7059, %v7035
  %v7078 = vsel %vm1538, %v7061, %v7037
  %v7079 = vsel %vm1538, %v7063, %v7039
  %v7080 = vmul.f32 %v7072, %v1559
  %v7081 = vmul.f32 %v7068, %v1563
  %v7082 = vmul.f32 %v7064, %v1567
  %v7083 = vmul.f32 %v7076, %v1571
  %v7084 = vmul.f32 %v7073, %v1559
  %v7085 = vmul.f32 %v7069, %v1563
  %v7086 = vmul.f32 %v7065, %v1567
  %v7087 = vmul.f32 %v7077, %v1571
  %v7088 = vmul.f32 %v7074, %v1559
  %v7089 = vmul.f32 %v7070, %v1563
  %v7090 = vmul.f32 %v7066, %v1567
  %v7091 = vmul.f32 %v7078, %v1571
  %v7092 = vmul.f32 %v7075, %v1559
  %v7093 = vmul.f32 %v7071, %v1563
  %v7094 = vmul.f32 %v7067, %v1567
  %v7095 = vmul.f32 %v7079, %v1571
  %v7096 = vld [vmem:[%s1592 + $0x80] sm:$0xff]
  %v7097 = vld [vmem:[%s1592 + $0x88] sm:$0xff]
  %v7098 = vld [vmem:[%s1592 + $0x90] sm:$0xff]
  %v7099 = vld [vmem:[%s1592 + $0x98] sm:$0xff]
  %7101 = vset.pattern.permute.xlu0 0
  %7102 = vperm.xlu0 %7101, %v7096
  %v7103 = vpop.permute.xlu0 %7102
  %7106 = vset.pattern.permute.xlu0 0
  %7107 = vperm.xlu0 %7106, %v7097
  %v7108 = vpop.permute.xlu0 %7107
  %7111 = vset.pattern.permute.xlu0 0
  %7112 = vperm.xlu0 %7111, %v7098
  %v7113 = vpop.permute.xlu0 %7112
  %7116 = vset.pattern.permute.xlu0 0
  %7117 = vperm.xlu0 %7116, %v7099
  %v7118 = vpop.permute.xlu0 %7117
  %v7120 = vmul.f32 %v7080, %v7103
  %v7121 = vmul.f32 %v7081, %v7103
  %v7122 = vmul.f32 %v7082, %v7103
  %v7123 = vmul.f32 %v7083, %v7103
  %v7124 = vmul.f32 %v7084, %v7108
  %v7125 = vmul.f32 %v7085, %v7108
  %v7126 = vmul.f32 %v7086, %v7108
  %v7127 = vmul.f32 %v7087, %v7108
  %v7128 = vmul.f32 %v7088, %v7113
  %v7129 = vmul.f32 %v7089, %v7113
  %v7130 = vmul.f32 %v7090, %v7113
  %v7131 = vmul.f32 %v7091, %v7113
  %v7132 = vmul.f32 %v7092, %v7118
  %v7133 = vmul.f32 %v7093, %v7118
  %v7134 = vmul.f32 %v7094, %v7118
  %v7135 = vmul.f32 %v7095, %v7118
  %v7136 = vadd.f32 %v7016, %v7120
  %v7137 = vadd.f32 %v7017, %v7121
  %v7138 = vadd.f32 %v7018, %v7122
  %v7139 = vadd.f32 %v7019, %v7123
  %v7140 = vadd.f32 %v7020, %v7124
  %v7141 = vadd.f32 %v7021, %v7125
  %v7142 = vadd.f32 %v7022, %v7126
  %v7143 = vadd.f32 %v7023, %v7127
  %v7144 = vadd.f32 %v7024, %v7128
  %v7145 = vadd.f32 %v7025, %v7129
  %v7146 = vadd.f32 %v7026, %v7130
  %v7147 = vadd.f32 %v7027, %v7131
  %v7148 = vadd.f32 %v7028, %v7132
  %v7149 = vadd.f32 %v7029, %v7133
  %v7150 = vadd.f32 %v7030, %v7134
  %v7151 = vadd.f32 %v7031, %v7135
  %7152 = vrot.lane.b32.xlu0 %v5057, 111
  %v7153 = vpop.permute.xlu0 %7152
  %7154 = vrot.lane.b32.xlu0 %v5061, 111
  %v7155 = vpop.permute.xlu0 %7154
  %7156 = vrot.lane.b32.xlu0 %v5067, 111
  %v7157 = vpop.permute.xlu0 %7156
  %7158 = vrot.lane.b32.xlu0 %v5071, 111
  %v7159 = vpop.permute.xlu0 %7158
  %7160 = vrot.lane.b32.xlu0 %v5059, 111
  %v7161 = vpop.permute.xlu0 %7160
  %7162 = vrot.lane.b32.xlu0 %v5063, 111
  %v7163 = vpop.permute.xlu0 %7162
  %7164 = vrot.lane.b32.xlu0 %v5069, 111
  %v7165 = vpop.permute.xlu0 %7164
  %7166 = vrot.lane.b32.xlu0 %v5073, 111
  %v7167 = vpop.permute.xlu0 %7166
  %7168 = vrot.lane.b32.xlu0 %v5170, 111
  %v7169 = vpop.permute.xlu0 %7168
  %7170 = vrot.lane.b32.xlu0 %v5174, 111
  %v7171 = vpop.permute.xlu0 %7170
  %7172 = vrot.lane.b32.xlu0 %v5180, 111
  %v7173 = vpop.permute.xlu0 %7172
  %7174 = vrot.lane.b32.xlu0 %v5184, 111
  %v7175 = vpop.permute.xlu0 %7174
  %7176 = vrot.lane.b32.xlu0 %v5172, 111
  %v7177 = vpop.permute.xlu0 %7176
  %7178 = vrot.lane.b32.xlu0 %v5176, 111
  %v7179 = vpop.permute.xlu0 %7178
  %7180 = vrot.lane.b32.xlu0 %v5182, 111
  %v7181 = vpop.permute.xlu0 %7180
  %7182 = vrot.lane.b32.xlu0 %v5186, 111
  %v7183 = vpop.permute.xlu0 %7182
  %v7184 = vsel %vm1681, %v7169, %v7177
  %v7185 = vsel %vm1681, %v7171, %v7179
  %v7186 = vsel %vm1681, %v7173, %v7181
  %v7187 = vsel %vm1681, %v7175, %v7183
  %v7188 = vsel %vm1681, %v7161, %v7169
  %v7189 = vsel %vm1681, %v7163, %v7171
  %v7190 = vsel %vm1681, %v7165, %v7173
  %v7191 = vsel %vm1681, %v7167, %v7175
  %v7192 = vsel %vm1681, %v7153, %v7161
  %v7193 = vsel %vm1681, %v7155, %v7163
  %v7194 = vsel %vm1681, %v7157, %v7165
  %v7195 = vsel %vm1681, %v7159, %v7167
  %v7196 = vsel %vm1681, %v7177, %v7153
  %v7197 = vsel %vm1681, %v7179, %v7155
  %v7198 = vsel %vm1681, %v7181, %v7157
  %v7199 = vsel %vm1681, %v7183, %v7159
  %v7200 = vmul.f32 %v7192, %v1702
  %v7201 = vmul.f32 %v7188, %v1706
  %v7202 = vmul.f32 %v7184, %v1710
  %v7203 = vmul.f32 %v7196, %v1714
  %v7204 = vmul.f32 %v7193, %v1702
  %v7205 = vmul.f32 %v7189, %v1706
  %v7206 = vmul.f32 %v7185, %v1710
  %v7207 = vmul.f32 %v7197, %v1714
  %v7208 = vmul.f32 %v7194, %v1702
  %v7209 = vmul.f32 %v7190, %v1706
  %v7210 = vmul.f32 %v7186, %v1710
  %v7211 = vmul.f32 %v7198, %v1714
  %v7212 = vmul.f32 %v7195, %v1702
  %v7213 = vmul.f32 %v7191, %v1706
  %v7214 = vmul.f32 %v7187, %v1710
  %v7215 = vmul.f32 %v7199, %v1714
  %v7216 = vld [vmem:[%s1735 + $0x80] sm:$0xff]
  %v7217 = vld [vmem:[%s1735 + $0x88] sm:$0xff]
  %v7218 = vld [vmem:[%s1735 + $0x90] sm:$0xff]
  %v7219 = vld [vmem:[%s1735 + $0x98] sm:$0xff]
  %7221 = vset.pattern.permute.xlu0 0
  %7222 = vperm.xlu0 %7221, %v7216
  %v7223 = vpop.permute.xlu0 %7222
  %7226 = vset.pattern.permute.xlu0 0
  %7227 = vperm.xlu0 %7226, %v7217
  %v7228 = vpop.permute.xlu0 %7227
  %7231 = vset.pattern.permute.xlu0 0
  %7232 = vperm.xlu0 %7231, %v7218
  %v7233 = vpop.permute.xlu0 %7232
  %7236 = vset.pattern.permute.xlu0 0
  %7237 = vperm.xlu0 %7236, %v7219
  %v7238 = vpop.permute.xlu0 %7237
  %v7240 = vmul.f32 %v7200, %v7223
  %v7241 = vmul.f32 %v7201, %v7223
  %v7242 = vmul.f32 %v7202, %v7223
  %v7243 = vmul.f32 %v7203, %v7223
  %v7244 = vmul.f32 %v7204, %v7228
  %v7245 = vmul.f32 %v7205, %v7228
  %v7246 = vmul.f32 %v7206, %v7228
  %v7247 = vmul.f32 %v7207, %v7228
  %v7248 = vmul.f32 %v7208, %v7233
  %v7249 = vmul.f32 %v7209, %v7233
  %v7250 = vmul.f32 %v7210, %v7233
  %v7251 = vmul.f32 %v7211, %v7233
  %v7252 = vmul.f32 %v7212, %v7238
  %v7253 = vmul.f32 %v7213, %v7238
  %v7254 = vmul.f32 %v7214, %v7238
  %v7255 = vmul.f32 %v7215, %v7238
  %v7256 = vadd.f32 %v7136, %v7240
  %v7257 = vadd.f32 %v7137, %v7241
  %v7258 = vadd.f32 %v7138, %v7242
  %v7259 = vadd.f32 %v7139, %v7243
  %v7260 = vadd.f32 %v7140, %v7244
  %v7261 = vadd.f32 %v7141, %v7245
  %v7262 = vadd.f32 %v7142, %v7246
  %v7263 = vadd.f32 %v7143, %v7247
  %v7264 = vadd.f32 %v7144, %v7248
  %v7265 = vadd.f32 %v7145, %v7249
  %v7266 = vadd.f32 %v7146, %v7250
  %v7267 = vadd.f32 %v7147, %v7251
  %v7268 = vadd.f32 %v7148, %v7252
  %v7269 = vadd.f32 %v7149, %v7253
  %v7270 = vadd.f32 %v7150, %v7254
  %v7271 = vadd.f32 %v7151, %v7255
  %7273 = vset.pattern.permute.xlu0 0
  %7274 = vperm.xlu0 %7273, %v6268
  %v7275 = vpop.permute.xlu0 %7274
  %7278 = vset.pattern.permute.xlu0 0
  %7279 = vperm.xlu0 %7278, %v6269
  %v7280 = vpop.permute.xlu0 %7279
  %7283 = vset.pattern.permute.xlu0 0
  %7284 = vperm.xlu0 %7283, %v6270
  %v7285 = vpop.permute.xlu0 %7284
  %7288 = vset.pattern.permute.xlu0 0
  %7289 = vperm.xlu0 %7288, %v6271
  %v7290 = vpop.permute.xlu0 %7289
  %v7292 = vadd.f32 %v7256, %v7275
  %v7293 = vadd.f32 %v7257, %v7275
  %v7294 = vadd.f32 %v7258, %v7275
  %v7295 = vadd.f32 %v7259, %v7275
  %v7296 = vadd.f32 %v7260, %v7280
  %v7297 = vadd.f32 %v7261, %v7280
  %v7298 = vadd.f32 %v7262, %v7280
  %v7299 = vadd.f32 %v7263, %v7280
  %v7300 = vadd.f32 %v7264, %v7285
  %v7301 = vadd.f32 %v7265, %v7285
  %v7302 = vadd.f32 %v7266, %v7285
  %v7303 = vadd.f32 %v7267, %v7285
  %v7304 = vadd.f32 %v7268, %v7290
  %v7305 = vadd.f32 %v7269, %v7290
  %v7306 = vadd.f32 %v7270, %v7290
  %v7307 = vadd.f32 %v7271, %v7290
  %v7308 = vld [vmem:[%s1 + $0x240] sm:$0xff]
  %v7309 = vld [vmem:[%s1 + $0x248] sm:$0xff]
  %v7310 = vld [vmem:[%s1 + $0x250] sm:$0xff]
  %v7311 = vld [vmem:[%s1 + $0x258] sm:$0xff]
  %v7312 = vld [vmem:[%s606 + $0xa0] sm:$0xff]
  %v7313 = vld [vmem:[%s606 + $0xa8] sm:$0xff]
  %v7314 = vld [vmem:[%s606 + $0xb0] sm:$0xff]
  %v7315 = vld [vmem:[%s606 + $0xb8] sm:$0xff]
  %7317 = vset.pattern.permute.xlu0 0
  %7318 = vperm.xlu0 %7317, %v7312
  %v7319 = vpop.permute.xlu0 %7318
  %7322 = vset.pattern.permute.xlu0 0
  %7323 = vperm.xlu0 %7322, %v7313
  %v7324 = vpop.permute.xlu0 %7323
  %7327 = vset.pattern.permute.xlu0 0
  %7328 = vperm.xlu0 %7327, %v7314
  %v7329 = vpop.permute.xlu0 %7328
  %7332 = vset.pattern.permute.xlu0 0
  %7333 = vperm.xlu0 %7332, %v7315
  %v7334 = vpop.permute.xlu0 %7333
  %v7336 = vmul.f32 %v5077, %v7319
  %v7337 = vmul.f32 %v5079, %v7319
  %v7338 = vmul.f32 %v5190, %v7319
  %v7339 = vmul.f32 %v5192, %v7319
  %v7340 = vmul.f32 %v5081, %v7324
  %v7341 = vmul.f32 %v5083, %v7324
  %v7342 = vmul.f32 %v5194, %v7324
  %v7343 = vmul.f32 %v5196, %v7324
  %v7344 = vmul.f32 %v5087, %v7329
  %v7345 = vmul.f32 %v5089, %v7329
  %v7346 = vmul.f32 %v5200, %v7329
  %v7347 = vmul.f32 %v5202, %v7329
  %v7348 = vmul.f32 %v5091, %v7334
  %v7349 = vmul.f32 %v5093, %v7334
  %v7350 = vmul.f32 %v5204, %v7334
  %v7351 = vmul.f32 %v5206, %v7334
  %7352 = vrot.lane.b32.xlu0 %v5077, 17
  %v7353 = vpop.permute.xlu0 %7352
  %7354 = vrot.lane.b32.xlu0 %v5081, 17
  %v7355 = vpop.permute.xlu0 %7354
  %7356 = vrot.lane.b32.xlu0 %v5087, 17
  %v7357 = vpop.permute.xlu0 %7356
  %7358 = vrot.lane.b32.xlu0 %v5091, 17
  %v7359 = vpop.permute.xlu0 %7358
  %7360 = vrot.lane.b32.xlu0 %v5079, 17
  %v7361 = vpop.permute.xlu0 %7360
  %7362 = vrot.lane.b32.xlu0 %v5083, 17
  %v7363 = vpop.permute.xlu0 %7362
  %7364 = vrot.lane.b32.xlu0 %v5089, 17
  %v7365 = vpop.permute.xlu0 %7364
  %7366 = vrot.lane.b32.xlu0 %v5093, 17
  %v7367 = vpop.permute.xlu0 %7366
  %7368 = vrot.lane.b32.xlu0 %v5190, 17
  %v7369 = vpop.permute.xlu0 %7368
  %7370 = vrot.lane.b32.xlu0 %v5194, 17
  %v7371 = vpop.permute.xlu0 %7370
  %7372 = vrot.lane.b32.xlu0 %v5200, 17
  %v7373 = vpop.permute.xlu0 %7372
  %7374 = vrot.lane.b32.xlu0 %v5204, 17
  %v7375 = vpop.permute.xlu0 %7374
  %7376 = vrot.lane.b32.xlu0 %v5192, 17
  %v7377 = vpop.permute.xlu0 %7376
  %7378 = vrot.lane.b32.xlu0 %v5196, 17
  %v7379 = vpop.permute.xlu0 %7378
  %7380 = vrot.lane.b32.xlu0 %v5202, 17
  %v7381 = vpop.permute.xlu0 %7380
  %7382 = vrot.lane.b32.xlu0 %v5206, 17
  %v7383 = vpop.permute.xlu0 %7382
  %v7384 = vsel %vm681, %v7369, %v7377
  %v7385 = vsel %vm681, %v7371, %v7379
  %v7386 = vsel %vm681, %v7373, %v7381
  %v7387 = vsel %vm681, %v7375, %v7383
  %v7388 = vsel %vm681, %v7361, %v7369
  %v7389 = vsel %vm681, %v7363, %v7371
  %v7390 = vsel %vm681, %v7365, %v7373
  %v7391 = vsel %vm681, %v7367, %v7375
  %v7392 = vsel %vm681, %v7353, %v7361
  %v7393 = vsel %vm681, %v7355, %v7363
  %v7394 = vsel %vm681, %v7357, %v7365
  %v7395 = vsel %vm681, %v7359, %v7367
  %v7396 = vsel %vm681, %v7377, %v7353
  %v7397 = vsel %vm681, %v7379, %v7355
  %v7398 = vsel %vm681, %v7381, %v7357
  %v7399 = vsel %vm681, %v7383, %v7359
  %v7400 = vmul.f32 %v7396, %v702
  %v7401 = vmul.f32 %v7392, %v706
  %v7402 = vmul.f32 %v7388, %v710
  %v7403 = vmul.f32 %v7384, %v714
  %v7404 = vmul.f32 %v7397, %v702
  %v7405 = vmul.f32 %v7393, %v706
  %v7406 = vmul.f32 %v7389, %v710
  %v7407 = vmul.f32 %v7385, %v714
  %v7408 = vmul.f32 %v7398, %v702
  %v7409 = vmul.f32 %v7394, %v706
  %v7410 = vmul.f32 %v7390, %v710
  %v7411 = vmul.f32 %v7386, %v714
  %v7412 = vmul.f32 %v7399, %v702
  %v7413 = vmul.f32 %v7395, %v706
  %v7414 = vmul.f32 %v7391, %v710
  %v7415 = vmul.f32 %v7387, %v714
  %v7416 = vld [vmem:[%s2 + $0xa0] sm:$0xff]
  %v7417 = vld [vmem:[%s2 + $0xa8] sm:$0xff]
  %v7418 = vld [vmem:[%s2 + $0xb0] sm:$0xff]
  %v7419 = vld [vmem:[%s2 + $0xb8] sm:$0xff]
  %7421 = vset.pattern.permute.xlu0 0
  %7422 = vperm.xlu0 %7421, %v7416
  %v7423 = vpop.permute.xlu0 %7422
  %7426 = vset.pattern.permute.xlu0 0
  %7427 = vperm.xlu0 %7426, %v7417
  %v7428 = vpop.permute.xlu0 %7427
  %7431 = vset.pattern.permute.xlu0 0
  %7432 = vperm.xlu0 %7431, %v7418
  %v7433 = vpop.permute.xlu0 %7432
  %7436 = vset.pattern.permute.xlu0 0
  %7437 = vperm.xlu0 %7436, %v7419
  %v7438 = vpop.permute.xlu0 %7437
  %v7440 = vmul.f32 %v7400, %v7423
  %v7441 = vmul.f32 %v7401, %v7423
  %v7442 = vmul.f32 %v7402, %v7423
  %v7443 = vmul.f32 %v7403, %v7423
  %v7444 = vmul.f32 %v7404, %v7428
  %v7445 = vmul.f32 %v7405, %v7428
  %v7446 = vmul.f32 %v7406, %v7428
  %v7447 = vmul.f32 %v7407, %v7428
  %v7448 = vmul.f32 %v7408, %v7433
  %v7449 = vmul.f32 %v7409, %v7433
  %v7450 = vmul.f32 %v7410, %v7433
  %v7451 = vmul.f32 %v7411, %v7433
  %v7452 = vmul.f32 %v7412, %v7438
  %v7453 = vmul.f32 %v7413, %v7438
  %v7454 = vmul.f32 %v7414, %v7438
  %v7455 = vmul.f32 %v7415, %v7438
  %v7456 = vadd.f32 %v7336, %v7440
  %v7457 = vadd.f32 %v7337, %v7441
  %v7458 = vadd.f32 %v7338, %v7442
  %v7459 = vadd.f32 %v7339, %v7443
  %v7460 = vadd.f32 %v7340, %v7444
  %v7461 = vadd.f32 %v7341, %v7445
  %v7462 = vadd.f32 %v7342, %v7446
  %v7463 = vadd.f32 %v7343, %v7447
  %v7464 = vadd.f32 %v7344, %v7448
  %v7465 = vadd.f32 %v7345, %v7449
  %v7466 = vadd.f32 %v7346, %v7450
  %v7467 = vadd.f32 %v7347, %v7451
  %v7468 = vadd.f32 %v7348, %v7452
  %v7469 = vadd.f32 %v7349, %v7453
  %v7470 = vadd.f32 %v7350, %v7454
  %v7471 = vadd.f32 %v7351, %v7455
  %7472 = vrot.lane.b32.xlu0 %v5077, 16
  %v7473 = vpop.permute.xlu0 %7472
  %7474 = vrot.lane.b32.xlu0 %v5081, 16
  %v7475 = vpop.permute.xlu0 %7474
  %7476 = vrot.lane.b32.xlu0 %v5087, 16
  %v7477 = vpop.permute.xlu0 %7476
  %7478 = vrot.lane.b32.xlu0 %v5091, 16
  %v7479 = vpop.permute.xlu0 %7478
  %7480 = vrot.lane.b32.xlu0 %v5079, 16
  %v7481 = vpop.permute.xlu0 %7480
  %7482 = vrot.lane.b32.xlu0 %v5083, 16
  %v7483 = vpop.permute.xlu0 %7482
  %7484 = vrot.lane.b32.xlu0 %v5089, 16
  %v7485 = vpop.permute.xlu0 %7484
  %7486 = vrot.lane.b32.xlu0 %v5093, 16
  %v7487 = vpop.permute.xlu0 %7486
  %7488 = vrot.lane.b32.xlu0 %v5190, 16
  %v7489 = vpop.permute.xlu0 %7488
  %7490 = vrot.lane.b32.xlu0 %v5194, 16
  %v7491 = vpop.permute.xlu0 %7490
  %7492 = vrot.lane.b32.xlu0 %v5200, 16
  %v7493 = vpop.permute.xlu0 %7492
  %7494 = vrot.lane.b32.xlu0 %v5204, 16
  %v7495 = vpop.permute.xlu0 %7494
  %7496 = vrot.lane.b32.xlu0 %v5192, 16
  %v7497 = vpop.permute.xlu0 %7496
  %7498 = vrot.lane.b32.xlu0 %v5196, 16
  %v7499 = vpop.permute.xlu0 %7498
  %7500 = vrot.lane.b32.xlu0 %v5202, 16
  %v7501 = vpop.permute.xlu0 %7500
  %7502 = vrot.lane.b32.xlu0 %v5206, 16
  %v7503 = vpop.permute.xlu0 %7502
  %v7504 = vsel %vm823, %v7489, %v7497
  %v7505 = vsel %vm823, %v7491, %v7499
  %v7506 = vsel %vm823, %v7493, %v7501
  %v7507 = vsel %vm823, %v7495, %v7503
  %v7508 = vsel %vm823, %v7481, %v7489
  %v7509 = vsel %vm823, %v7483, %v7491
  %v7510 = vsel %vm823, %v7485, %v7493
  %v7511 = vsel %vm823, %v7487, %v7495
  %v7512 = vsel %vm823, %v7473, %v7481
  %v7513 = vsel %vm823, %v7475, %v7483
  %v7514 = vsel %vm823, %v7477, %v7485
  %v7515 = vsel %vm823, %v7479, %v7487
  %v7516 = vsel %vm823, %v7497, %v7473
  %v7517 = vsel %vm823, %v7499, %v7475
  %v7518 = vsel %vm823, %v7501, %v7477
  %v7519 = vsel %vm823, %v7503, %v7479
  %v7520 = vmul.f32 %v7516, %v844
  %v7521 = vmul.f32 %v7512, %v848
  %v7522 = vmul.f32 %v7508, %v852
  %v7523 = vmul.f32 %v7504, %v856
  %v7524 = vmul.f32 %v7517, %v844
  %v7525 = vmul.f32 %v7513, %v848
  %v7526 = vmul.f32 %v7509, %v852
  %v7527 = vmul.f32 %v7505, %v856
  %v7528 = vmul.f32 %v7518, %v844
  %v7529 = vmul.f32 %v7514, %v848
  %v7530 = vmul.f32 %v7510, %v852
  %v7531 = vmul.f32 %v7506, %v856
  %v7532 = vmul.f32 %v7519, %v844
  %v7533 = vmul.f32 %v7515, %v848
  %v7534 = vmul.f32 %v7511, %v852
  %v7535 = vmul.f32 %v7507, %v856
  %v7536 = vld [vmem:[%s877 + $0xa0] sm:$0xff]
  %v7537 = vld [vmem:[%s877 + $0xa8] sm:$0xff]
  %v7538 = vld [vmem:[%s877 + $0xb0] sm:$0xff]
  %v7539 = vld [vmem:[%s877 + $0xb8] sm:$0xff]
  %7541 = vset.pattern.permute.xlu0 0
  %7542 = vperm.xlu0 %7541, %v7536
  %v7543 = vpop.permute.xlu0 %7542
  %7546 = vset.pattern.permute.xlu0 0
  %7547 = vperm.xlu0 %7546, %v7537
  %v7548 = vpop.permute.xlu0 %7547
  %7551 = vset.pattern.permute.xlu0 0
  %7552 = vperm.xlu0 %7551, %v7538
  %v7553 = vpop.permute.xlu0 %7552
  %7556 = vset.pattern.permute.xlu0 0
  %7557 = vperm.xlu0 %7556, %v7539
  %v7558 = vpop.permute.xlu0 %7557
  %v7560 = vmul.f32 %v7520, %v7543
  %v7561 = vmul.f32 %v7521, %v7543
  %v7562 = vmul.f32 %v7522, %v7543
  %v7563 = vmul.f32 %v7523, %v7543
  %v7564 = vmul.f32 %v7524, %v7548
  %v7565 = vmul.f32 %v7525, %v7548
  %v7566 = vmul.f32 %v7526, %v7548
  %v7567 = vmul.f32 %v7527, %v7548
  %v7568 = vmul.f32 %v7528, %v7553
  %v7569 = vmul.f32 %v7529, %v7553
  %v7570 = vmul.f32 %v7530, %v7553
  %v7571 = vmul.f32 %v7531, %v7553
  %v7572 = vmul.f32 %v7532, %v7558
  %v7573 = vmul.f32 %v7533, %v7558
  %v7574 = vmul.f32 %v7534, %v7558
  %v7575 = vmul.f32 %v7535, %v7558
  %v7576 = vadd.f32 %v7456, %v7560
  %v7577 = vadd.f32 %v7457, %v7561
  %v7578 = vadd.f32 %v7458, %v7562
  %v7579 = vadd.f32 %v7459, %v7563
  %v7580 = vadd.f32 %v7460, %v7564
  %v7581 = vadd.f32 %v7461, %v7565
  %v7582 = vadd.f32 %v7462, %v7566
  %v7583 = vadd.f32 %v7463, %v7567
  %v7584 = vadd.f32 %v7464, %v7568
  %v7585 = vadd.f32 %v7465, %v7569
  %v7586 = vadd.f32 %v7466, %v7570
  %v7587 = vadd.f32 %v7467, %v7571
  %v7588 = vadd.f32 %v7468, %v7572
  %v7589 = vadd.f32 %v7469, %v7573
  %v7590 = vadd.f32 %v7470, %v7574
  %v7591 = vadd.f32 %v7471, %v7575
  %7592 = vrot.lane.b32.xlu0 %v5077, 15
  %v7593 = vpop.permute.xlu0 %7592
  %7594 = vrot.lane.b32.xlu0 %v5081, 15
  %v7595 = vpop.permute.xlu0 %7594
  %7596 = vrot.lane.b32.xlu0 %v5087, 15
  %v7597 = vpop.permute.xlu0 %7596
  %7598 = vrot.lane.b32.xlu0 %v5091, 15
  %v7599 = vpop.permute.xlu0 %7598
  %7600 = vrot.lane.b32.xlu0 %v5079, 15
  %v7601 = vpop.permute.xlu0 %7600
  %7602 = vrot.lane.b32.xlu0 %v5083, 15
  %v7603 = vpop.permute.xlu0 %7602
  %7604 = vrot.lane.b32.xlu0 %v5089, 15
  %v7605 = vpop.permute.xlu0 %7604
  %7606 = vrot.lane.b32.xlu0 %v5093, 15
  %v7607 = vpop.permute.xlu0 %7606
  %7608 = vrot.lane.b32.xlu0 %v5190, 15
  %v7609 = vpop.permute.xlu0 %7608
  %7610 = vrot.lane.b32.xlu0 %v5194, 15
  %v7611 = vpop.permute.xlu0 %7610
  %7612 = vrot.lane.b32.xlu0 %v5200, 15
  %v7613 = vpop.permute.xlu0 %7612
  %7614 = vrot.lane.b32.xlu0 %v5204, 15
  %v7615 = vpop.permute.xlu0 %7614
  %7616 = vrot.lane.b32.xlu0 %v5192, 15
  %v7617 = vpop.permute.xlu0 %7616
  %7618 = vrot.lane.b32.xlu0 %v5196, 15
  %v7619 = vpop.permute.xlu0 %7618
  %7620 = vrot.lane.b32.xlu0 %v5202, 15
  %v7621 = vpop.permute.xlu0 %7620
  %7622 = vrot.lane.b32.xlu0 %v5206, 15
  %v7623 = vpop.permute.xlu0 %7622
  %v7624 = vsel %vm966, %v7609, %v7617
  %v7625 = vsel %vm966, %v7611, %v7619
  %v7626 = vsel %vm966, %v7613, %v7621
  %v7627 = vsel %vm966, %v7615, %v7623
  %v7628 = vsel %vm966, %v7601, %v7609
  %v7629 = vsel %vm966, %v7603, %v7611
  %v7630 = vsel %vm966, %v7605, %v7613
  %v7631 = vsel %vm966, %v7607, %v7615
  %v7632 = vsel %vm966, %v7593, %v7601
  %v7633 = vsel %vm966, %v7595, %v7603
  %v7634 = vsel %vm966, %v7597, %v7605
  %v7635 = vsel %vm966, %v7599, %v7607
  %v7636 = vsel %vm966, %v7617, %v7593
  %v7637 = vsel %vm966, %v7619, %v7595
  %v7638 = vsel %vm966, %v7621, %v7597
  %v7639 = vsel %vm966, %v7623, %v7599
  %v7640 = vmul.f32 %v7636, %v987
  %v7641 = vmul.f32 %v7632, %v991
  %v7642 = vmul.f32 %v7628, %v995
  %v7643 = vmul.f32 %v7624, %v999
  %v7644 = vmul.f32 %v7637, %v987
  %v7645 = vmul.f32 %v7633, %v991
  %v7646 = vmul.f32 %v7629, %v995
  %v7647 = vmul.f32 %v7625, %v999
  %v7648 = vmul.f32 %v7638, %v987
  %v7649 = vmul.f32 %v7634, %v991
  %v7650 = vmul.f32 %v7630, %v995
  %v7651 = vmul.f32 %v7626, %v999
  %v7652 = vmul.f32 %v7639, %v987
  %v7653 = vmul.f32 %v7635, %v991
  %v7654 = vmul.f32 %v7631, %v995
  %v7655 = vmul.f32 %v7627, %v999
  %v7656 = vld [vmem:[%s1020 + $0xa0] sm:$0xff]
  %v7657 = vld [vmem:[%s1020 + $0xa8] sm:$0xff]
  %v7658 = vld [vmem:[%s1020 + $0xb0] sm:$0xff]
  %v7659 = vld [vmem:[%s1020 + $0xb8] sm:$0xff]
  %7661 = vset.pattern.permute.xlu0 0
  %7662 = vperm.xlu0 %7661, %v7656
  %v7663 = vpop.permute.xlu0 %7662
  %7666 = vset.pattern.permute.xlu0 0
  %7667 = vperm.xlu0 %7666, %v7657
  %v7668 = vpop.permute.xlu0 %7667
  %7671 = vset.pattern.permute.xlu0 0
  %7672 = vperm.xlu0 %7671, %v7658
  %v7673 = vpop.permute.xlu0 %7672
  %7676 = vset.pattern.permute.xlu0 0
  %7677 = vperm.xlu0 %7676, %v7659
  %v7678 = vpop.permute.xlu0 %7677
  %v7680 = vmul.f32 %v7640, %v7663
  %v7681 = vmul.f32 %v7641, %v7663
  %v7682 = vmul.f32 %v7642, %v7663
  %v7683 = vmul.f32 %v7643, %v7663
  %v7684 = vmul.f32 %v7644, %v7668
  %v7685 = vmul.f32 %v7645, %v7668
  %v7686 = vmul.f32 %v7646, %v7668
  %v7687 = vmul.f32 %v7647, %v7668
  %v7688 = vmul.f32 %v7648, %v7673
  %v7689 = vmul.f32 %v7649, %v7673
  %v7690 = vmul.f32 %v7650, %v7673
  %v7691 = vmul.f32 %v7651, %v7673
  %v7692 = vmul.f32 %v7652, %v7678
  %v7693 = vmul.f32 %v7653, %v7678
  %v7694 = vmul.f32 %v7654, %v7678
  %v7695 = vmul.f32 %v7655, %v7678
  %v7696 = vadd.f32 %v7576, %v7680
  %v7697 = vadd.f32 %v7577, %v7681
  %v7698 = vadd.f32 %v7578, %v7682
  %v7699 = vadd.f32 %v7579, %v7683
  %v7700 = vadd.f32 %v7580, %v7684
  %v7701 = vadd.f32 %v7581, %v7685
  %v7702 = vadd.f32 %v7582, %v7686
  %v7703 = vadd.f32 %v7583, %v7687
  %v7704 = vadd.f32 %v7584, %v7688
  %v7705 = vadd.f32 %v7585, %v7689
  %v7706 = vadd.f32 %v7586, %v7690
  %v7707 = vadd.f32 %v7587, %v7691
  %v7708 = vadd.f32 %v7588, %v7692
  %v7709 = vadd.f32 %v7589, %v7693
  %v7710 = vadd.f32 %v7590, %v7694
  %v7711 = vadd.f32 %v7591, %v7695
  %7712 = vrot.lane.b32.xlu0 %v5077, 1
  %v7713 = vpop.permute.xlu0 %7712
  %7714 = vrot.lane.b32.xlu0 %v5081, 1
  %v7715 = vpop.permute.xlu0 %7714
  %7716 = vrot.lane.b32.xlu0 %v5087, 1
  %v7717 = vpop.permute.xlu0 %7716
  %7718 = vrot.lane.b32.xlu0 %v5091, 1
  %v7719 = vpop.permute.xlu0 %7718
  %7720 = vrot.lane.b32.xlu0 %v5079, 1
  %v7721 = vpop.permute.xlu0 %7720
  %7722 = vrot.lane.b32.xlu0 %v5083, 1
  %v7723 = vpop.permute.xlu0 %7722
  %7724 = vrot.lane.b32.xlu0 %v5089, 1
  %v7725 = vpop.permute.xlu0 %7724
  %7726 = vrot.lane.b32.xlu0 %v5093, 1
  %v7727 = vpop.permute.xlu0 %7726
  %7728 = vrot.lane.b32.xlu0 %v5190, 1
  %v7729 = vpop.permute.xlu0 %7728
  %7730 = vrot.lane.b32.xlu0 %v5194, 1
  %v7731 = vpop.permute.xlu0 %7730
  %7732 = vrot.lane.b32.xlu0 %v5200, 1
  %v7733 = vpop.permute.xlu0 %7732
  %7734 = vrot.lane.b32.xlu0 %v5204, 1
  %v7735 = vpop.permute.xlu0 %7734
  %7736 = vrot.lane.b32.xlu0 %v5192, 1
  %v7737 = vpop.permute.xlu0 %7736
  %7738 = vrot.lane.b32.xlu0 %v5196, 1
  %v7739 = vpop.permute.xlu0 %7738
  %7740 = vrot.lane.b32.xlu0 %v5202, 1
  %v7741 = vpop.permute.xlu0 %7740
  %7742 = vrot.lane.b32.xlu0 %v5206, 1
  %v7743 = vpop.permute.xlu0 %7742
  %v7744 = vsel %vm1109, %v7729, %v7737
  %v7745 = vsel %vm1109, %v7731, %v7739
  %v7746 = vsel %vm1109, %v7733, %v7741
  %v7747 = vsel %vm1109, %v7735, %v7743
  %v7748 = vsel %vm1109, %v7721, %v7729
  %v7749 = vsel %vm1109, %v7723, %v7731
  %v7750 = vsel %vm1109, %v7725, %v7733
  %v7751 = vsel %vm1109, %v7727, %v7735
  %v7752 = vsel %vm1109, %v7713, %v7721
  %v7753 = vsel %vm1109, %v7715, %v7723
  %v7754 = vsel %vm1109, %v7717, %v7725
  %v7755 = vsel %vm1109, %v7719, %v7727
  %v7756 = vsel %vm1109, %v7737, %v7713
  %v7757 = vsel %vm1109, %v7739, %v7715
  %v7758 = vsel %vm1109, %v7741, %v7717
  %v7759 = vsel %vm1109, %v7743, %v7719
  %v7760 = vmul.f32 %v7756, %v1130
  %v7761 = vmul.f32 %v7752, %v1134
  %v7762 = vmul.f32 %v7748, %v1138
  %v7763 = vmul.f32 %v7744, %v1142
  %v7764 = vmul.f32 %v7757, %v1130
  %v7765 = vmul.f32 %v7753, %v1134
  %v7766 = vmul.f32 %v7749, %v1138
  %v7767 = vmul.f32 %v7745, %v1142
  %v7768 = vmul.f32 %v7758, %v1130
  %v7769 = vmul.f32 %v7754, %v1134
  %v7770 = vmul.f32 %v7750, %v1138
  %v7771 = vmul.f32 %v7746, %v1142
  %v7772 = vmul.f32 %v7759, %v1130
  %v7773 = vmul.f32 %v7755, %v1134
  %v7774 = vmul.f32 %v7751, %v1138
  %v7775 = vmul.f32 %v7747, %v1142
  %v7776 = vld [vmem:[%s1163 + $0xa0] sm:$0xff]
  %v7777 = vld [vmem:[%s1163 + $0xa8] sm:$0xff]
  %v7778 = vld [vmem:[%s1163 + $0xb0] sm:$0xff]
  %v7779 = vld [vmem:[%s1163 + $0xb8] sm:$0xff]
  %7781 = vset.pattern.permute.xlu0 0
  %7782 = vperm.xlu0 %7781, %v7776
  %v7783 = vpop.permute.xlu0 %7782
  %7786 = vset.pattern.permute.xlu0 0
  %7787 = vperm.xlu0 %7786, %v7777
  %v7788 = vpop.permute.xlu0 %7787
  %7791 = vset.pattern.permute.xlu0 0
  %7792 = vperm.xlu0 %7791, %v7778
  %v7793 = vpop.permute.xlu0 %7792
  %7796 = vset.pattern.permute.xlu0 0
  %7797 = vperm.xlu0 %7796, %v7779
  %v7798 = vpop.permute.xlu0 %7797
  %v7800 = vmul.f32 %v7760, %v7783
  %v7801 = vmul.f32 %v7761, %v7783
  %v7802 = vmul.f32 %v7762, %v7783
  %v7803 = vmul.f32 %v7763, %v7783
  %v7804 = vmul.f32 %v7764, %v7788
  %v7805 = vmul.f32 %v7765, %v7788
  %v7806 = vmul.f32 %v7766, %v7788
  %v7807 = vmul.f32 %v7767, %v7788
  %v7808 = vmul.f32 %v7768, %v7793
  %v7809 = vmul.f32 %v7769, %v7793
  %v7810 = vmul.f32 %v7770, %v7793
  %v7811 = vmul.f32 %v7771, %v7793
  %v7812 = vmul.f32 %v7772, %v7798
  %v7813 = vmul.f32 %v7773, %v7798
  %v7814 = vmul.f32 %v7774, %v7798
  %v7815 = vmul.f32 %v7775, %v7798
  %v7816 = vadd.f32 %v7696, %v7800
  %v7817 = vadd.f32 %v7697, %v7801
  %v7818 = vadd.f32 %v7698, %v7802
  %v7819 = vadd.f32 %v7699, %v7803
  %v7820 = vadd.f32 %v7700, %v7804
  %v7821 = vadd.f32 %v7701, %v7805
  %v7822 = vadd.f32 %v7702, %v7806
  %v7823 = vadd.f32 %v7703, %v7807
  %v7824 = vadd.f32 %v7704, %v7808
  %v7825 = vadd.f32 %v7705, %v7809
  %v7826 = vadd.f32 %v7706, %v7810
  %v7827 = vadd.f32 %v7707, %v7811
  %v7828 = vadd.f32 %v7708, %v7812
  %v7829 = vadd.f32 %v7709, %v7813
  %v7830 = vadd.f32 %v7710, %v7814
  %v7831 = vadd.f32 %v7711, %v7815
  %7832 = vrot.lane.b32.xlu0 %v5077, 127
  %v7833 = vpop.permute.xlu0 %7832
  %7834 = vrot.lane.b32.xlu0 %v5081, 127
  %v7835 = vpop.permute.xlu0 %7834
  %7836 = vrot.lane.b32.xlu0 %v5087, 127
  %v7837 = vpop.permute.xlu0 %7836
  %7838 = vrot.lane.b32.xlu0 %v5091, 127
  %v7839 = vpop.permute.xlu0 %7838
  %7840 = vrot.lane.b32.xlu0 %v5079, 127
  %v7841 = vpop.permute.xlu0 %7840
  %7842 = vrot.lane.b32.xlu0 %v5083, 127
  %v7843 = vpop.permute.xlu0 %7842
  %7844 = vrot.lane.b32.xlu0 %v5089, 127
  %v7845 = vpop.permute.xlu0 %7844
  %7846 = vrot.lane.b32.xlu0 %v5093, 127
  %v7847 = vpop.permute.xlu0 %7846
  %7848 = vrot.lane.b32.xlu0 %v5190, 127
  %v7849 = vpop.permute.xlu0 %7848
  %7850 = vrot.lane.b32.xlu0 %v5194, 127
  %v7851 = vpop.permute.xlu0 %7850
  %7852 = vrot.lane.b32.xlu0 %v5200, 127
  %v7853 = vpop.permute.xlu0 %7852
  %7854 = vrot.lane.b32.xlu0 %v5204, 127
  %v7855 = vpop.permute.xlu0 %7854
  %7856 = vrot.lane.b32.xlu0 %v5192, 127
  %v7857 = vpop.permute.xlu0 %7856
  %7858 = vrot.lane.b32.xlu0 %v5196, 127
  %v7859 = vpop.permute.xlu0 %7858
  %7860 = vrot.lane.b32.xlu0 %v5202, 127
  %v7861 = vpop.permute.xlu0 %7860
  %7862 = vrot.lane.b32.xlu0 %v5206, 127
  %v7863 = vpop.permute.xlu0 %7862
  %v7864 = vsel %vm1252, %v7849, %v7857
  %v7865 = vsel %vm1252, %v7851, %v7859
  %v7866 = vsel %vm1252, %v7853, %v7861
  %v7867 = vsel %vm1252, %v7855, %v7863
  %v7868 = vsel %vm1252, %v7841, %v7849
  %v7869 = vsel %vm1252, %v7843, %v7851
  %v7870 = vsel %vm1252, %v7845, %v7853
  %v7871 = vsel %vm1252, %v7847, %v7855
  %v7872 = vsel %vm1252, %v7833, %v7841
  %v7873 = vsel %vm1252, %v7835, %v7843
  %v7874 = vsel %vm1252, %v7837, %v7845
  %v7875 = vsel %vm1252, %v7839, %v7847
  %v7876 = vsel %vm1252, %v7857, %v7833
  %v7877 = vsel %vm1252, %v7859, %v7835
  %v7878 = vsel %vm1252, %v7861, %v7837
  %v7879 = vsel %vm1252, %v7863, %v7839
  %v7880 = vmul.f32 %v7872, %v1273
  %v7881 = vmul.f32 %v7868, %v1277
  %v7882 = vmul.f32 %v7864, %v1281
  %v7883 = vmul.f32 %v7876, %v1285
  %v7884 = vmul.f32 %v7873, %v1273
  %v7885 = vmul.f32 %v7869, %v1277
  %v7886 = vmul.f32 %v7865, %v1281
  %v7887 = vmul.f32 %v7877, %v1285
  %v7888 = vmul.f32 %v7874, %v1273
  %v7889 = vmul.f32 %v7870, %v1277
  %v7890 = vmul.f32 %v7866, %v1281
  %v7891 = vmul.f32 %v7878, %v1285
  %v7892 = vmul.f32 %v7875, %v1273
  %v7893 = vmul.f32 %v7871, %v1277
  %v7894 = vmul.f32 %v7867, %v1281
  %v7895 = vmul.f32 %v7879, %v1285
  %v7896 = vld [vmem:[%s1306 + $0xa0] sm:$0xff]
  %v7897 = vld [vmem:[%s1306 + $0xa8] sm:$0xff]
  %v7898 = vld [vmem:[%s1306 + $0xb0] sm:$0xff]
  %v7899 = vld [vmem:[%s1306 + $0xb8] sm:$0xff]
  %7901 = vset.pattern.permute.xlu0 0
  %7902 = vperm.xlu0 %7901, %v7896
  %v7903 = vpop.permute.xlu0 %7902
  %7906 = vset.pattern.permute.xlu0 0
  %7907 = vperm.xlu0 %7906, %v7897
  %v7908 = vpop.permute.xlu0 %7907
  %7911 = vset.pattern.permute.xlu0 0
  %7912 = vperm.xlu0 %7911, %v7898
  %v7913 = vpop.permute.xlu0 %7912
  %7916 = vset.pattern.permute.xlu0 0
  %7917 = vperm.xlu0 %7916, %v7899
  %v7918 = vpop.permute.xlu0 %7917
  %v7920 = vmul.f32 %v7880, %v7903
  %v7921 = vmul.f32 %v7881, %v7903
  %v7922 = vmul.f32 %v7882, %v7903
  %v7923 = vmul.f32 %v7883, %v7903
  %v7924 = vmul.f32 %v7884, %v7908
  %v7925 = vmul.f32 %v7885, %v7908
  %v7926 = vmul.f32 %v7886, %v7908
  %v7927 = vmul.f32 %v7887, %v7908
  %v7928 = vmul.f32 %v7888, %v7913
  %v7929 = vmul.f32 %v7889, %v7913
  %v7930 = vmul.f32 %v7890, %v7913
  %v7931 = vmul.f32 %v7891, %v7913
  %v7932 = vmul.f32 %v7892, %v7918
  %v7933 = vmul.f32 %v7893, %v7918
  %v7934 = vmul.f32 %v7894, %v7918
  %v7935 = vmul.f32 %v7895, %v7918
  %v7936 = vadd.f32 %v7816, %v7920
  %v7937 = vadd.f32 %v7817, %v7921
  %v7938 = vadd.f32 %v7818, %v7922
  %v7939 = vadd.f32 %v7819, %v7923
  %v7940 = vadd.f32 %v7820, %v7924
  %v7941 = vadd.f32 %v7821, %v7925
  %v7942 = vadd.f32 %v7822, %v7926
  %v7943 = vadd.f32 %v7823, %v7927
  %v7944 = vadd.f32 %v7824, %v7928
  %v7945 = vadd.f32 %v7825, %v7929
  %v7946 = vadd.f32 %v7826, %v7930
  %v7947 = vadd.f32 %v7827, %v7931
  %v7948 = vadd.f32 %v7828, %v7932
  %v7949 = vadd.f32 %v7829, %v7933
  %v7950 = vadd.f32 %v7830, %v7934
  %v7951 = vadd.f32 %v7831, %v7935
  %7952 = vrot.lane.b32.xlu0 %v5077, 113
  %v7953 = vpop.permute.xlu0 %7952
  %7954 = vrot.lane.b32.xlu0 %v5081, 113
  %v7955 = vpop.permute.xlu0 %7954
  %7956 = vrot.lane.b32.xlu0 %v5087, 113
  %v7957 = vpop.permute.xlu0 %7956
  %7958 = vrot.lane.b32.xlu0 %v5091, 113
  %v7959 = vpop.permute.xlu0 %7958
  %7960 = vrot.lane.b32.xlu0 %v5079, 113
  %v7961 = vpop.permute.xlu0 %7960
  %7962 = vrot.lane.b32.xlu0 %v5083, 113
  %v7963 = vpop.permute.xlu0 %7962
  %7964 = vrot.lane.b32.xlu0 %v5089, 113
  %v7965 = vpop.permute.xlu0 %7964
  %7966 = vrot.lane.b32.xlu0 %v5093, 113
  %v7967 = vpop.permute.xlu0 %7966
  %7968 = vrot.lane.b32.xlu0 %v5190, 113
  %v7969 = vpop.permute.xlu0 %7968
  %7970 = vrot.lane.b32.xlu0 %v5194, 113
  %v7971 = vpop.permute.xlu0 %7970
  %7972 = vrot.lane.b32.xlu0 %v5200, 113
  %v7973 = vpop.permute.xlu0 %7972
  %7974 = vrot.lane.b32.xlu0 %v5204, 113
  %v7975 = vpop.permute.xlu0 %7974
  %7976 = vrot.lane.b32.xlu0 %v5192, 113
  %v7977 = vpop.permute.xlu0 %7976
  %7978 = vrot.lane.b32.xlu0 %v5196, 113
  %v7979 = vpop.permute.xlu0 %7978
  %7980 = vrot.lane.b32.xlu0 %v5202, 113
  %v7981 = vpop.permute.xlu0 %7980
  %7982 = vrot.lane.b32.xlu0 %v5206, 113
  %v7983 = vpop.permute.xlu0 %7982
  %v7984 = vsel %vm1395, %v7969, %v7977
  %v7985 = vsel %vm1395, %v7971, %v7979
  %v7986 = vsel %vm1395, %v7973, %v7981
  %v7987 = vsel %vm1395, %v7975, %v7983
  %v7988 = vsel %vm1395, %v7961, %v7969
  %v7989 = vsel %vm1395, %v7963, %v7971
  %v7990 = vsel %vm1395, %v7965, %v7973
  %v7991 = vsel %vm1395, %v7967, %v7975
  %v7992 = vsel %vm1395, %v7953, %v7961
  %v7993 = vsel %vm1395, %v7955, %v7963
  %v7994 = vsel %vm1395, %v7957, %v7965
  %v7995 = vsel %vm1395, %v7959, %v7967
  %v7996 = vsel %vm1395, %v7977, %v7953
  %v7997 = vsel %vm1395, %v7979, %v7955
  %v7998 = vsel %vm1395, %v7981, %v7957
  %v7999 = vsel %vm1395, %v7983, %v7959
  %v8000 = vmul.f32 %v7992, %v1416
  %v8001 = vmul.f32 %v7988, %v1420
  %v8002 = vmul.f32 %v7984, %v1424
  %v8003 = vmul.f32 %v7996, %v1428
  %v8004 = vmul.f32 %v7993, %v1416
  %v8005 = vmul.f32 %v7989, %v1420
  %v8006 = vmul.f32 %v7985, %v1424
  %v8007 = vmul.f32 %v7997, %v1428
  %v8008 = vmul.f32 %v7994, %v1416
  %v8009 = vmul.f32 %v7990, %v1420
  %v8010 = vmul.f32 %v7986, %v1424
  %v8011 = vmul.f32 %v7998, %v1428
  %v8012 = vmul.f32 %v7995, %v1416
  %v8013 = vmul.f32 %v7991, %v1420
  %v8014 = vmul.f32 %v7987, %v1424
  %v8015 = vmul.f32 %v7999, %v1428
  %v8016 = vld [vmem:[%s1449 + $0xa0] sm:$0xff]
  %v8017 = vld [vmem:[%s1449 + $0xa8] sm:$0xff]
  %v8018 = vld [vmem:[%s1449 + $0xb0] sm:$0xff]
  %v8019 = vld [vmem:[%s1449 + $0xb8] sm:$0xff]
  %8021 = vset.pattern.permute.xlu0 0
  %8022 = vperm.xlu0 %8021, %v8016
  %v8023 = vpop.permute.xlu0 %8022
  %8026 = vset.pattern.permute.xlu0 0
  %8027 = vperm.xlu0 %8026, %v8017
  %v8028 = vpop.permute.xlu0 %8027
  %8031 = vset.pattern.permute.xlu0 0
  %8032 = vperm.xlu0 %8031, %v8018
  %v8033 = vpop.permute.xlu0 %8032
  %8036 = vset.pattern.permute.xlu0 0
  %8037 = vperm.xlu0 %8036, %v8019
  %v8038 = vpop.permute.xlu0 %8037
  %v8040 = vmul.f32 %v8000, %v8023
  %v8041 = vmul.f32 %v8001, %v8023
  %v8042 = vmul.f32 %v8002, %v8023
  %v8043 = vmul.f32 %v8003, %v8023
  %v8044 = vmul.f32 %v8004, %v8028
  %v8045 = vmul.f32 %v8005, %v8028
  %v8046 = vmul.f32 %v8006, %v8028
  %v8047 = vmul.f32 %v8007, %v8028
  %v8048 = vmul.f32 %v8008, %v8033
  %v8049 = vmul.f32 %v8009, %v8033
  %v8050 = vmul.f32 %v8010, %v8033
  %v8051 = vmul.f32 %v8011, %v8033
  %v8052 = vmul.f32 %v8012, %v8038
  %v8053 = vmul.f32 %v8013, %v8038
  %v8054 = vmul.f32 %v8014, %v8038
  %v8055 = vmul.f32 %v8015, %v8038
  %v8056 = vadd.f32 %v7936, %v8040
  %v8057 = vadd.f32 %v7937, %v8041
  %v8058 = vadd.f32 %v7938, %v8042
  %v8059 = vadd.f32 %v7939, %v8043
  %v8060 = vadd.f32 %v7940, %v8044
  %v8061 = vadd.f32 %v7941, %v8045
  %v8062 = vadd.f32 %v7942, %v8046
  %v8063 = vadd.f32 %v7943, %v8047
  %v8064 = vadd.f32 %v7944, %v8048
  %v8065 = vadd.f32 %v7945, %v8049
  %v8066 = vadd.f32 %v7946, %v8050
  %v8067 = vadd.f32 %v7947, %v8051
  %v8068 = vadd.f32 %v7948, %v8052
  %v8069 = vadd.f32 %v7949, %v8053
  %v8070 = vadd.f32 %v7950, %v8054
  %v8071 = vadd.f32 %v7951, %v8055
  %8072 = vrot.lane.b32.xlu0 %v5077, 112
  %v8073 = vpop.permute.xlu0 %8072
  %8074 = vrot.lane.b32.xlu0 %v5081, 112
  %v8075 = vpop.permute.xlu0 %8074
  %8076 = vrot.lane.b32.xlu0 %v5087, 112
  %v8077 = vpop.permute.xlu0 %8076
  %8078 = vrot.lane.b32.xlu0 %v5091, 112
  %v8079 = vpop.permute.xlu0 %8078
  %8080 = vrot.lane.b32.xlu0 %v5079, 112
  %v8081 = vpop.permute.xlu0 %8080
  %8082 = vrot.lane.b32.xlu0 %v5083, 112
  %v8083 = vpop.permute.xlu0 %8082
  %8084 = vrot.lane.b32.xlu0 %v5089, 112
  %v8085 = vpop.permute.xlu0 %8084
  %8086 = vrot.lane.b32.xlu0 %v5093, 112
  %v8087 = vpop.permute.xlu0 %8086
  %8088 = vrot.lane.b32.xlu0 %v5190, 112
  %v8089 = vpop.permute.xlu0 %8088
  %8090 = vrot.lane.b32.xlu0 %v5194, 112
  %v8091 = vpop.permute.xlu0 %8090
  %8092 = vrot.lane.b32.xlu0 %v5200, 112
  %v8093 = vpop.permute.xlu0 %8092
  %8094 = vrot.lane.b32.xlu0 %v5204, 112
  %v8095 = vpop.permute.xlu0 %8094
  %8096 = vrot.lane.b32.xlu0 %v5192, 112
  %v8097 = vpop.permute.xlu0 %8096
  %8098 = vrot.lane.b32.xlu0 %v5196, 112
  %v8099 = vpop.permute.xlu0 %8098
  %8100 = vrot.lane.b32.xlu0 %v5202, 112
  %v8101 = vpop.permute.xlu0 %8100
  %8102 = vrot.lane.b32.xlu0 %v5206, 112
  %v8103 = vpop.permute.xlu0 %8102
  %v8104 = vsel %vm1538, %v8089, %v8097
  %v8105 = vsel %vm1538, %v8091, %v8099
  %v8106 = vsel %vm1538, %v8093, %v8101
  %v8107 = vsel %vm1538, %v8095, %v8103
  %v8108 = vsel %vm1538, %v8081, %v8089
  %v8109 = vsel %vm1538, %v8083, %v8091
  %v8110 = vsel %vm1538, %v8085, %v8093
  %v8111 = vsel %vm1538, %v8087, %v8095
  %v8112 = vsel %vm1538, %v8073, %v8081
  %v8113 = vsel %vm1538, %v8075, %v8083
  %v8114 = vsel %vm1538, %v8077, %v8085
  %v8115 = vsel %vm1538, %v8079, %v8087
  %v8116 = vsel %vm1538, %v8097, %v8073
  %v8117 = vsel %vm1538, %v8099, %v8075
  %v8118 = vsel %vm1538, %v8101, %v8077
  %v8119 = vsel %vm1538, %v8103, %v8079
  %v8120 = vmul.f32 %v8112, %v1559
  %v8121 = vmul.f32 %v8108, %v1563
  %v8122 = vmul.f32 %v8104, %v1567
  %v8123 = vmul.f32 %v8116, %v1571
  %v8124 = vmul.f32 %v8113, %v1559
  %v8125 = vmul.f32 %v8109, %v1563
  %v8126 = vmul.f32 %v8105, %v1567
  %v8127 = vmul.f32 %v8117, %v1571
  %v8128 = vmul.f32 %v8114, %v1559
  %v8129 = vmul.f32 %v8110, %v1563
  %v8130 = vmul.f32 %v8106, %v1567
  %v8131 = vmul.f32 %v8118, %v1571
  %v8132 = vmul.f32 %v8115, %v1559
  %v8133 = vmul.f32 %v8111, %v1563
  %v8134 = vmul.f32 %v8107, %v1567
  %v8135 = vmul.f32 %v8119, %v1571
  %v8136 = vld [vmem:[%s1592 + $0xa0] sm:$0xff]
  %v8137 = vld [vmem:[%s1592 + $0xa8] sm:$0xff]
  %v8138 = vld [vmem:[%s1592 + $0xb0] sm:$0xff]
  %v8139 = vld [vmem:[%s1592 + $0xb8] sm:$0xff]
  %8141 = vset.pattern.permute.xlu0 0
  %8142 = vperm.xlu0 %8141, %v8136
  %v8143 = vpop.permute.xlu0 %8142
  %8146 = vset.pattern.permute.xlu0 0
  %8147 = vperm.xlu0 %8146, %v8137
  %v8148 = vpop.permute.xlu0 %8147
  %8151 = vset.pattern.permute.xlu0 0
  %8152 = vperm.xlu0 %8151, %v8138
  %v8153 = vpop.permute.xlu0 %8152
  %8156 = vset.pattern.permute.xlu0 0
  %8157 = vperm.xlu0 %8156, %v8139
  %v8158 = vpop.permute.xlu0 %8157
  %v8160 = vmul.f32 %v8120, %v8143
  %v8161 = vmul.f32 %v8121, %v8143
  %v8162 = vmul.f32 %v8122, %v8143
  %v8163 = vmul.f32 %v8123, %v8143
  %v8164 = vmul.f32 %v8124, %v8148
  %v8165 = vmul.f32 %v8125, %v8148
  %v8166 = vmul.f32 %v8126, %v8148
  %v8167 = vmul.f32 %v8127, %v8148
  %v8168 = vmul.f32 %v8128, %v8153
  %v8169 = vmul.f32 %v8129, %v8153
  %v8170 = vmul.f32 %v8130, %v8153
  %v8171 = vmul.f32 %v8131, %v8153
  %v8172 = vmul.f32 %v8132, %v8158
  %v8173 = vmul.f32 %v8133, %v8158
  %v8174 = vmul.f32 %v8134, %v8158
  %v8175 = vmul.f32 %v8135, %v8158
  %v8176 = vadd.f32 %v8056, %v8160
  %v8177 = vadd.f32 %v8057, %v8161
  %v8178 = vadd.f32 %v8058, %v8162
  %v8179 = vadd.f32 %v8059, %v8163
  %v8180 = vadd.f32 %v8060, %v8164
  %v8181 = vadd.f32 %v8061, %v8165
  %v8182 = vadd.f32 %v8062, %v8166
  %v8183 = vadd.f32 %v8063, %v8167
  %v8184 = vadd.f32 %v8064, %v8168
  %v8185 = vadd.f32 %v8065, %v8169
  %v8186 = vadd.f32 %v8066, %v8170
  %v8187 = vadd.f32 %v8067, %v8171
  %v8188 = vadd.f32 %v8068, %v8172
  %v8189 = vadd.f32 %v8069, %v8173
  %v8190 = vadd.f32 %v8070, %v8174
  %v8191 = vadd.f32 %v8071, %v8175
  %8192 = vrot.lane.b32.xlu0 %v5077, 111
  %v8193 = vpop.permute.xlu0 %8192
  %8194 = vrot.lane.b32.xlu0 %v5081, 111
  %v8195 = vpop.permute.xlu0 %8194
  %8196 = vrot.lane.b32.xlu0 %v5087, 111
  %v8197 = vpop.permute.xlu0 %8196
  %8198 = vrot.lane.b32.xlu0 %v5091, 111
  %v8199 = vpop.permute.xlu0 %8198
  %8200 = vrot.lane.b32.xlu0 %v5079, 111
  %v8201 = vpop.permute.xlu0 %8200
  %8202 = vrot.lane.b32.xlu0 %v5083, 111
  %v8203 = vpop.permute.xlu0 %8202
  %8204 = vrot.lane.b32.xlu0 %v5089, 111
  %v8205 = vpop.permute.xlu0 %8204
  %8206 = vrot.lane.b32.xlu0 %v5093, 111
  %v8207 = vpop.permute.xlu0 %8206
  %8208 = vrot.lane.b32.xlu0 %v5190, 111
  %v8209 = vpop.permute.xlu0 %8208
  %8210 = vrot.lane.b32.xlu0 %v5194, 111
  %v8211 = vpop.permute.xlu0 %8210
  %8212 = vrot.lane.b32.xlu0 %v5200, 111
  %v8213 = vpop.permute.xlu0 %8212
  %8214 = vrot.lane.b32.xlu0 %v5204, 111
  %v8215 = vpop.permute.xlu0 %8214
  %8216 = vrot.lane.b32.xlu0 %v5192, 111
  %v8217 = vpop.permute.xlu0 %8216
  %8218 = vrot.lane.b32.xlu0 %v5196, 111
  %v8219 = vpop.permute.xlu0 %8218
  %8220 = vrot.lane.b32.xlu0 %v5202, 111
  %v8221 = vpop.permute.xlu0 %8220
  %8222 = vrot.lane.b32.xlu0 %v5206, 111
  %v8223 = vpop.permute.xlu0 %8222
  %v8224 = vsel %vm1681, %v8209, %v8217
  %v8225 = vsel %vm1681, %v8211, %v8219
  %v8226 = vsel %vm1681, %v8213, %v8221
  %v8227 = vsel %vm1681, %v8215, %v8223
  %v8228 = vsel %vm1681, %v8201, %v8209
  %v8229 = vsel %vm1681, %v8203, %v8211
  %v8230 = vsel %vm1681, %v8205, %v8213
  %v8231 = vsel %vm1681, %v8207, %v8215
  %v8232 = vsel %vm1681, %v8193, %v8201
  %v8233 = vsel %vm1681, %v8195, %v8203
  %v8234 = vsel %vm1681, %v8197, %v8205
  %v8235 = vsel %vm1681, %v8199, %v8207
  %v8236 = vsel %vm1681, %v8217, %v8193
  %v8237 = vsel %vm1681, %v8219, %v8195
  %v8238 = vsel %vm1681, %v8221, %v8197
  %v8239 = vsel %vm1681, %v8223, %v8199
  %v8240 = vmul.f32 %v8232, %v1702
  %v8241 = vmul.f32 %v8228, %v1706
  %v8242 = vmul.f32 %v8224, %v1710
  %v8243 = vmul.f32 %v8236, %v1714
  %v8244 = vmul.f32 %v8233, %v1702
  %v8245 = vmul.f32 %v8229, %v1706
  %v8246 = vmul.f32 %v8225, %v1710
  %v8247 = vmul.f32 %v8237, %v1714
  %v8248 = vmul.f32 %v8234, %v1702
  %v8249 = vmul.f32 %v8230, %v1706
  %v8250 = vmul.f32 %v8226, %v1710
  %v8251 = vmul.f32 %v8238, %v1714
  %v8252 = vmul.f32 %v8235, %v1702
  %v8253 = vmul.f32 %v8231, %v1706
  %v8254 = vmul.f32 %v8227, %v1710
  %v8255 = vmul.f32 %v8239, %v1714
  %v8256 = vld [vmem:[%s1735 + $0xa0] sm:$0xff]
  %v8257 = vld [vmem:[%s1735 + $0xa8] sm:$0xff]
  %v8258 = vld [vmem:[%s1735 + $0xb0] sm:$0xff]
  %v8259 = vld [vmem:[%s1735 + $0xb8] sm:$0xff]
  %8261 = vset.pattern.permute.xlu0 0
  %8262 = vperm.xlu0 %8261, %v8256
  %v8263 = vpop.permute.xlu0 %8262
  %8266 = vset.pattern.permute.xlu0 0
  %8267 = vperm.xlu0 %8266, %v8257
  %v8268 = vpop.permute.xlu0 %8267
  %8271 = vset.pattern.permute.xlu0 0
  %8272 = vperm.xlu0 %8271, %v8258
  %v8273 = vpop.permute.xlu0 %8272
  %8276 = vset.pattern.permute.xlu0 0
  %8277 = vperm.xlu0 %8276, %v8259
  %v8278 = vpop.permute.xlu0 %8277
  %v8280 = vmul.f32 %v8240, %v8263
  %v8281 = vmul.f32 %v8241, %v8263
  %v8282 = vmul.f32 %v8242, %v8263
  %v8283 = vmul.f32 %v8243, %v8263
  %v8284 = vmul.f32 %v8244, %v8268
  %v8285 = vmul.f32 %v8245, %v8268
  %v8286 = vmul.f32 %v8246, %v8268
  %v8287 = vmul.f32 %v8247, %v8268
  %v8288 = vmul.f32 %v8248, %v8273
  %v8289 = vmul.f32 %v8249, %v8273
  %v8290 = vmul.f32 %v8250, %v8273
  %v8291 = vmul.f32 %v8251, %v8273
  %v8292 = vmul.f32 %v8252, %v8278
  %v8293 = vmul.f32 %v8253, %v8278
  %v8294 = vmul.f32 %v8254, %v8278
  %v8295 = vmul.f32 %v8255, %v8278
  %v8296 = vadd.f32 %v8176, %v8280
  %v8297 = vadd.f32 %v8177, %v8281
  %v8298 = vadd.f32 %v8178, %v8282
  %v8299 = vadd.f32 %v8179, %v8283
  %v8300 = vadd.f32 %v8180, %v8284
  %v8301 = vadd.f32 %v8181, %v8285
  %v8302 = vadd.f32 %v8182, %v8286
  %v8303 = vadd.f32 %v8183, %v8287
  %v8304 = vadd.f32 %v8184, %v8288
  %v8305 = vadd.f32 %v8185, %v8289
  %v8306 = vadd.f32 %v8186, %v8290
  %v8307 = vadd.f32 %v8187, %v8291
  %v8308 = vadd.f32 %v8188, %v8292
  %v8309 = vadd.f32 %v8189, %v8293
  %v8310 = vadd.f32 %v8190, %v8294
  %v8311 = vadd.f32 %v8191, %v8295
  %8313 = vset.pattern.permute.xlu0 0
  %8314 = vperm.xlu0 %8313, %v7308
  %v8315 = vpop.permute.xlu0 %8314
  %8318 = vset.pattern.permute.xlu0 0
  %8319 = vperm.xlu0 %8318, %v7309
  %v8320 = vpop.permute.xlu0 %8319
  %8323 = vset.pattern.permute.xlu0 0
  %8324 = vperm.xlu0 %8323, %v7310
  %v8325 = vpop.permute.xlu0 %8324
  %8328 = vset.pattern.permute.xlu0 0
  %8329 = vperm.xlu0 %8328, %v7311
  %v8330 = vpop.permute.xlu0 %8329
  %v8332 = vadd.f32 %v8296, %v8315
  %v8333 = vadd.f32 %v8297, %v8315
  %v8334 = vadd.f32 %v8298, %v8315
  %v8335 = vadd.f32 %v8299, %v8315
  %v8336 = vadd.f32 %v8300, %v8320
  %v8337 = vadd.f32 %v8301, %v8320
  %v8338 = vadd.f32 %v8302, %v8320
  %v8339 = vadd.f32 %v8303, %v8320
  %v8340 = vadd.f32 %v8304, %v8325
  %v8341 = vadd.f32 %v8305, %v8325
  %v8342 = vadd.f32 %v8306, %v8325
  %v8343 = vadd.f32 %v8307, %v8325
  %v8344 = vadd.f32 %v8308, %v8330
  %v8345 = vadd.f32 %v8309, %v8330
  %v8346 = vadd.f32 %v8310, %v8330
  %v8347 = vadd.f32 %v8311, %v8330
  %v8348 = vld [vmem:[%s1 + $0x260] sm:$0xff]
  %v8349 = vld [vmem:[%s1 + $0x268] sm:$0xff]
  %v8350 = vld [vmem:[%s1 + $0x270] sm:$0xff]
  %v8351 = vld [vmem:[%s1 + $0x278] sm:$0xff]
  %v8352 = vld [vmem:[%s606 + $0xc0] sm:$0xff]
  %v8353 = vld [vmem:[%s606 + $0xc8] sm:$0xff]
  %v8354 = vld [vmem:[%s606 + $0xd0] sm:$0xff]
  %v8355 = vld [vmem:[%s606 + $0xd8] sm:$0xff]
  %8357 = vset.pattern.permute.xlu0 0
  %8358 = vperm.xlu0 %8357, %v8352
  %v8359 = vpop.permute.xlu0 %8358
  %8362 = vset.pattern.permute.xlu0 0
  %8363 = vperm.xlu0 %8362, %v8353
  %v8364 = vpop.permute.xlu0 %8363
  %8367 = vset.pattern.permute.xlu0 0
  %8368 = vperm.xlu0 %8367, %v8354
  %v8369 = vpop.permute.xlu0 %8368
  %8372 = vset.pattern.permute.xlu0 0
  %8373 = vperm.xlu0 %8372, %v8355
  %v8374 = vpop.permute.xlu0 %8373
  %v8376 = vmul.f32 %v5097, %v8359
  %v8377 = vmul.f32 %v5099, %v8359
  %v8378 = vmul.f32 %v5210, %v8359
  %v8379 = vmul.f32 %v5212, %v8359
  %v8380 = vmul.f32 %v5101, %v8364
  %v8381 = vmul.f32 %v5103, %v8364
  %v8382 = vmul.f32 %v5214, %v8364
  %v8383 = vmul.f32 %v5216, %v8364
  %v8384 = vmul.f32 %v5107, %v8369
  %v8385 = vmul.f32 %v5109, %v8369
  %v8386 = vmul.f32 %v5220, %v8369
  %v8387 = vmul.f32 %v5222, %v8369
  %v8388 = vmul.f32 %v5111, %v8374
  %v8389 = vmul.f32 %v5113, %v8374
  %v8390 = vmul.f32 %v5224, %v8374
  %v8391 = vmul.f32 %v5226, %v8374
  %8392 = vrot.lane.b32.xlu0 %v5097, 17
  %v8393 = vpop.permute.xlu0 %8392
  %8394 = vrot.lane.b32.xlu0 %v5101, 17
  %v8395 = vpop.permute.xlu0 %8394
  %8396 = vrot.lane.b32.xlu0 %v5107, 17
  %v8397 = vpop.permute.xlu0 %8396
  %8398 = vrot.lane.b32.xlu0 %v5111, 17
  %v8399 = vpop.permute.xlu0 %8398
  %8400 = vrot.lane.b32.xlu0 %v5099, 17
  %v8401 = vpop.permute.xlu0 %8400
  %8402 = vrot.lane.b32.xlu0 %v5103, 17
  %v8403 = vpop.permute.xlu0 %8402
  %8404 = vrot.lane.b32.xlu0 %v5109, 17
  %v8405 = vpop.permute.xlu0 %8404
  %8406 = vrot.lane.b32.xlu0 %v5113, 17
  %v8407 = vpop.permute.xlu0 %8406
  %8408 = vrot.lane.b32.xlu0 %v5210, 17
  %v8409 = vpop.permute.xlu0 %8408
  %8410 = vrot.lane.b32.xlu0 %v5214, 17
  %v8411 = vpop.permute.xlu0 %8410
  %8412 = vrot.lane.b32.xlu0 %v5220, 17
  %v8413 = vpop.permute.xlu0 %8412
  %8414 = vrot.lane.b32.xlu0 %v5224, 17
  %v8415 = vpop.permute.xlu0 %8414
  %8416 = vrot.lane.b32.xlu0 %v5212, 17
  %v8417 = vpop.permute.xlu0 %8416
  %8418 = vrot.lane.b32.xlu0 %v5216, 17
  %v8419 = vpop.permute.xlu0 %8418
  %8420 = vrot.lane.b32.xlu0 %v5222, 17
  %v8421 = vpop.permute.xlu0 %8420
  %8422 = vrot.lane.b32.xlu0 %v5226, 17
  %v8423 = vpop.permute.xlu0 %8422
  %v8424 = vsel %vm681, %v8409, %v8417
  %v8425 = vsel %vm681, %v8411, %v8419
  %v8426 = vsel %vm681, %v8413, %v8421
  %v8427 = vsel %vm681, %v8415, %v8423
  %v8428 = vsel %vm681, %v8401, %v8409
  %v8429 = vsel %vm681, %v8403, %v8411
  %v8430 = vsel %vm681, %v8405, %v8413
  %v8431 = vsel %vm681, %v8407, %v8415
  %v8432 = vsel %vm681, %v8393, %v8401
  %v8433 = vsel %vm681, %v8395, %v8403
  %v8434 = vsel %vm681, %v8397, %v8405
  %v8435 = vsel %vm681, %v8399, %v8407
  %v8436 = vsel %vm681, %v8417, %v8393
  %v8437 = vsel %vm681, %v8419, %v8395
  %v8438 = vsel %vm681, %v8421, %v8397
  %v8439 = vsel %vm681, %v8423, %v8399
  %v8440 = vmul.f32 %v8436, %v702
  %v8441 = vmul.f32 %v8432, %v706
  %v8442 = vmul.f32 %v8428, %v710
  %v8443 = vmul.f32 %v8424, %v714
  %v8444 = vmul.f32 %v8437, %v702
  %v8445 = vmul.f32 %v8433, %v706
  %v8446 = vmul.f32 %v8429, %v710
  %v8447 = vmul.f32 %v8425, %v714
  %v8448 = vmul.f32 %v8438, %v702
  %v8449 = vmul.f32 %v8434, %v706
  %v8450 = vmul.f32 %v8430, %v710
  %v8451 = vmul.f32 %v8426, %v714
  %v8452 = vmul.f32 %v8439, %v702
  %v8453 = vmul.f32 %v8435, %v706
  %v8454 = vmul.f32 %v8431, %v710
  %v8455 = vmul.f32 %v8427, %v714
  %v8456 = vld [vmem:[%s2 + $0xc0] sm:$0xff]
  %v8457 = vld [vmem:[%s2 + $0xc8] sm:$0xff]
  %v8458 = vld [vmem:[%s2 + $0xd0] sm:$0xff]
  %v8459 = vld [vmem:[%s2 + $0xd8] sm:$0xff]
  %8461 = vset.pattern.permute.xlu0 0
  %8462 = vperm.xlu0 %8461, %v8456
  %v8463 = vpop.permute.xlu0 %8462
  %8466 = vset.pattern.permute.xlu0 0
  %8467 = vperm.xlu0 %8466, %v8457
  %v8468 = vpop.permute.xlu0 %8467
  %8471 = vset.pattern.permute.xlu0 0
  %8472 = vperm.xlu0 %8471, %v8458
  %v8473 = vpop.permute.xlu0 %8472
  %8476 = vset.pattern.permute.xlu0 0
  %8477 = vperm.xlu0 %8476, %v8459
  %v8478 = vpop.permute.xlu0 %8477
  %v8480 = vmul.f32 %v8440, %v8463
  %v8481 = vmul.f32 %v8441, %v8463
  %v8482 = vmul.f32 %v8442, %v8463
  %v8483 = vmul.f32 %v8443, %v8463
  %v8484 = vmul.f32 %v8444, %v8468
  %v8485 = vmul.f32 %v8445, %v8468
  %v8486 = vmul.f32 %v8446, %v8468
  %v8487 = vmul.f32 %v8447, %v8468
  %v8488 = vmul.f32 %v8448, %v8473
  %v8489 = vmul.f32 %v8449, %v8473
  %v8490 = vmul.f32 %v8450, %v8473
  %v8491 = vmul.f32 %v8451, %v8473
  %v8492 = vmul.f32 %v8452, %v8478
  %v8493 = vmul.f32 %v8453, %v8478
  %v8494 = vmul.f32 %v8454, %v8478
  %v8495 = vmul.f32 %v8455, %v8478
  %v8496 = vadd.f32 %v8376, %v8480
  %v8497 = vadd.f32 %v8377, %v8481
  %v8498 = vadd.f32 %v8378, %v8482
  %v8499 = vadd.f32 %v8379, %v8483
  %v8500 = vadd.f32 %v8380, %v8484
  %v8501 = vadd.f32 %v8381, %v8485
  %v8502 = vadd.f32 %v8382, %v8486
  %v8503 = vadd.f32 %v8383, %v8487
  %v8504 = vadd.f32 %v8384, %v8488
  %v8505 = vadd.f32 %v8385, %v8489
  %v8506 = vadd.f32 %v8386, %v8490
  %v8507 = vadd.f32 %v8387, %v8491
  %v8508 = vadd.f32 %v8388, %v8492
  %v8509 = vadd.f32 %v8389, %v8493
  %v8510 = vadd.f32 %v8390, %v8494
  %v8511 = vadd.f32 %v8391, %v8495
  %8512 = vrot.lane.b32.xlu0 %v5097, 16
  %v8513 = vpop.permute.xlu0 %8512
  %8514 = vrot.lane.b32.xlu0 %v5101, 16
  %v8515 = vpop.permute.xlu0 %8514
  %8516 = vrot.lane.b32.xlu0 %v5107, 16
  %v8517 = vpop.permute.xlu0 %8516
  %8518 = vrot.lane.b32.xlu0 %v5111, 16
  %v8519 = vpop.permute.xlu0 %8518
  %8520 = vrot.lane.b32.xlu0 %v5099, 16
  %v8521 = vpop.permute.xlu0 %8520
  %8522 = vrot.lane.b32.xlu0 %v5103, 16
  %v8523 = vpop.permute.xlu0 %8522
  %8524 = vrot.lane.b32.xlu0 %v5109, 16
  %v8525 = vpop.permute.xlu0 %8524
  %8526 = vrot.lane.b32.xlu0 %v5113, 16
  %v8527 = vpop.permute.xlu0 %8526
  %8528 = vrot.lane.b32.xlu0 %v5210, 16
  %v8529 = vpop.permute.xlu0 %8528
  %8530 = vrot.lane.b32.xlu0 %v5214, 16
  %v8531 = vpop.permute.xlu0 %8530
  %8532 = vrot.lane.b32.xlu0 %v5220, 16
  %v8533 = vpop.permute.xlu0 %8532
  %8534 = vrot.lane.b32.xlu0 %v5224, 16
  %v8535 = vpop.permute.xlu0 %8534
  %8536 = vrot.lane.b32.xlu0 %v5212, 16
  %v8537 = vpop.permute.xlu0 %8536
  %8538 = vrot.lane.b32.xlu0 %v5216, 16
  %v8539 = vpop.permute.xlu0 %8538
  %8540 = vrot.lane.b32.xlu0 %v5222, 16
  %v8541 = vpop.permute.xlu0 %8540
  %8542 = vrot.lane.b32.xlu0 %v5226, 16
  %v8543 = vpop.permute.xlu0 %8542
  %v8544 = vsel %vm823, %v8529, %v8537
  %v8545 = vsel %vm823, %v8531, %v8539
  %v8546 = vsel %vm823, %v8533, %v8541
  %v8547 = vsel %vm823, %v8535, %v8543
  %v8548 = vsel %vm823, %v8521, %v8529
  %v8549 = vsel %vm823, %v8523, %v8531
  %v8550 = vsel %vm823, %v8525, %v8533
  %v8551 = vsel %vm823, %v8527, %v8535
  %v8552 = vsel %vm823, %v8513, %v8521
  %v8553 = vsel %vm823, %v8515, %v8523
  %v8554 = vsel %vm823, %v8517, %v8525
  %v8555 = vsel %vm823, %v8519, %v8527
  %v8556 = vsel %vm823, %v8537, %v8513
  %v8557 = vsel %vm823, %v8539, %v8515
  %v8558 = vsel %vm823, %v8541, %v8517
  %v8559 = vsel %vm823, %v8543, %v8519
  %v8560 = vmul.f32 %v8556, %v844
  %v8561 = vmul.f32 %v8552, %v848
  %v8562 = vmul.f32 %v8548, %v852
  %v8563 = vmul.f32 %v8544, %v856
  %v8564 = vmul.f32 %v8557, %v844
  %v8565 = vmul.f32 %v8553, %v848
  %v8566 = vmul.f32 %v8549, %v852
  %v8567 = vmul.f32 %v8545, %v856
  %v8568 = vmul.f32 %v8558, %v844
  %v8569 = vmul.f32 %v8554, %v848
  %v8570 = vmul.f32 %v8550, %v852
  %v8571 = vmul.f32 %v8546, %v856
  %v8572 = vmul.f32 %v8559, %v844
  %v8573 = vmul.f32 %v8555, %v848
  %v8574 = vmul.f32 %v8551, %v852
  %v8575 = vmul.f32 %v8547, %v856
  %v8576 = vld [vmem:[%s877 + $0xc0] sm:$0xff]
  %v8577 = vld [vmem:[%s877 + $0xc8] sm:$0xff]
  %v8578 = vld [vmem:[%s877 + $0xd0] sm:$0xff]
  %v8579 = vld [vmem:[%s877 + $0xd8] sm:$0xff]
  %8581 = vset.pattern.permute.xlu0 0
  %8582 = vperm.xlu0 %8581, %v8576
  %v8583 = vpop.permute.xlu0 %8582
  %8586 = vset.pattern.permute.xlu0 0
  %8587 = vperm.xlu0 %8586, %v8577
  %v8588 = vpop.permute.xlu0 %8587
  %8591 = vset.pattern.permute.xlu0 0
  %8592 = vperm.xlu0 %8591, %v8578
  %v8593 = vpop.permute.xlu0 %8592
  %8596 = vset.pattern.permute.xlu0 0
  %8597 = vperm.xlu0 %8596, %v8579
  %v8598 = vpop.permute.xlu0 %8597
  %v8600 = vmul.f32 %v8560, %v8583
  %v8601 = vmul.f32 %v8561, %v8583
  %v8602 = vmul.f32 %v8562, %v8583
  %v8603 = vmul.f32 %v8563, %v8583
  %v8604 = vmul.f32 %v8564, %v8588
  %v8605 = vmul.f32 %v8565, %v8588
  %v8606 = vmul.f32 %v8566, %v8588
  %v8607 = vmul.f32 %v8567, %v8588
  %v8608 = vmul.f32 %v8568, %v8593
  %v8609 = vmul.f32 %v8569, %v8593
  %v8610 = vmul.f32 %v8570, %v8593
  %v8611 = vmul.f32 %v8571, %v8593
  %v8612 = vmul.f32 %v8572, %v8598
  %v8613 = vmul.f32 %v8573, %v8598
  %v8614 = vmul.f32 %v8574, %v8598
  %v8615 = vmul.f32 %v8575, %v8598
  %v8616 = vadd.f32 %v8496, %v8600
  %v8617 = vadd.f32 %v8497, %v8601
  %v8618 = vadd.f32 %v8498, %v8602
  %v8619 = vadd.f32 %v8499, %v8603
  %v8620 = vadd.f32 %v8500, %v8604
  %v8621 = vadd.f32 %v8501, %v8605
  %v8622 = vadd.f32 %v8502, %v8606
  %v8623 = vadd.f32 %v8503, %v8607
  %v8624 = vadd.f32 %v8504, %v8608
  %v8625 = vadd.f32 %v8505, %v8609
  %v8626 = vadd.f32 %v8506, %v8610
  %v8627 = vadd.f32 %v8507, %v8611
  %v8628 = vadd.f32 %v8508, %v8612
  %v8629 = vadd.f32 %v8509, %v8613
  %v8630 = vadd.f32 %v8510, %v8614
  %v8631 = vadd.f32 %v8511, %v8615
  %8632 = vrot.lane.b32.xlu0 %v5097, 15
  %v8633 = vpop.permute.xlu0 %8632
  %8634 = vrot.lane.b32.xlu0 %v5101, 15
  %v8635 = vpop.permute.xlu0 %8634
  %8636 = vrot.lane.b32.xlu0 %v5107, 15
  %v8637 = vpop.permute.xlu0 %8636
  %8638 = vrot.lane.b32.xlu0 %v5111, 15
  %v8639 = vpop.permute.xlu0 %8638
  %8640 = vrot.lane.b32.xlu0 %v5099, 15
  %v8641 = vpop.permute.xlu0 %8640
  %8642 = vrot.lane.b32.xlu0 %v5103, 15
  %v8643 = vpop.permute.xlu0 %8642
  %8644 = vrot.lane.b32.xlu0 %v5109, 15
  %v8645 = vpop.permute.xlu0 %8644
  %8646 = vrot.lane.b32.xlu0 %v5113, 15
  %v8647 = vpop.permute.xlu0 %8646
  %8648 = vrot.lane.b32.xlu0 %v5210, 15
  %v8649 = vpop.permute.xlu0 %8648
  %8650 = vrot.lane.b32.xlu0 %v5214, 15
  %v8651 = vpop.permute.xlu0 %8650
  %8652 = vrot.lane.b32.xlu0 %v5220, 15
  %v8653 = vpop.permute.xlu0 %8652
  %8654 = vrot.lane.b32.xlu0 %v5224, 15
  %v8655 = vpop.permute.xlu0 %8654
  %8656 = vrot.lane.b32.xlu0 %v5212, 15
  %v8657 = vpop.permute.xlu0 %8656
  %8658 = vrot.lane.b32.xlu0 %v5216, 15
  %v8659 = vpop.permute.xlu0 %8658
  %8660 = vrot.lane.b32.xlu0 %v5222, 15
  %v8661 = vpop.permute.xlu0 %8660
  %8662 = vrot.lane.b32.xlu0 %v5226, 15
  %v8663 = vpop.permute.xlu0 %8662
  %v8664 = vsel %vm966, %v8649, %v8657
  %v8665 = vsel %vm966, %v8651, %v8659
  %v8666 = vsel %vm966, %v8653, %v8661
  %v8667 = vsel %vm966, %v8655, %v8663
  %v8668 = vsel %vm966, %v8641, %v8649
  %v8669 = vsel %vm966, %v8643, %v8651
  %v8670 = vsel %vm966, %v8645, %v8653
  %v8671 = vsel %vm966, %v8647, %v8655
  %v8672 = vsel %vm966, %v8633, %v8641
  %v8673 = vsel %vm966, %v8635, %v8643
  %v8674 = vsel %vm966, %v8637, %v8645
  %v8675 = vsel %vm966, %v8639, %v8647
  %v8676 = vsel %vm966, %v8657, %v8633
  %v8677 = vsel %vm966, %v8659, %v8635
  %v8678 = vsel %vm966, %v8661, %v8637
  %v8679 = vsel %vm966, %v8663, %v8639
  %v8680 = vmul.f32 %v8676, %v987
  %v8681 = vmul.f32 %v8672, %v991
  %v8682 = vmul.f32 %v8668, %v995
  %v8683 = vmul.f32 %v8664, %v999
  %v8684 = vmul.f32 %v8677, %v987
  %v8685 = vmul.f32 %v8673, %v991
  %v8686 = vmul.f32 %v8669, %v995
  %v8687 = vmul.f32 %v8665, %v999
  %v8688 = vmul.f32 %v8678, %v987
  %v8689 = vmul.f32 %v8674, %v991
  %v8690 = vmul.f32 %v8670, %v995
  %v8691 = vmul.f32 %v8666, %v999
  %v8692 = vmul.f32 %v8679, %v987
  %v8693 = vmul.f32 %v8675, %v991
  %v8694 = vmul.f32 %v8671, %v995
  %v8695 = vmul.f32 %v8667, %v999
  %v8696 = vld [vmem:[%s1020 + $0xc0] sm:$0xff]
  %v8697 = vld [vmem:[%s1020 + $0xc8] sm:$0xff]
  %v8698 = vld [vmem:[%s1020 + $0xd0] sm:$0xff]
  %v8699 = vld [vmem:[%s1020 + $0xd8] sm:$0xff]
  %8701 = vset.pattern.permute.xlu0 0
  %8702 = vperm.xlu0 %8701, %v8696
  %v8703 = vpop.permute.xlu0 %8702
  %8706 = vset.pattern.permute.xlu0 0
  %8707 = vperm.xlu0 %8706, %v8697
  %v8708 = vpop.permute.xlu0 %8707
  %8711 = vset.pattern.permute.xlu0 0
  %8712 = vperm.xlu0 %8711, %v8698
  %v8713 = vpop.permute.xlu0 %8712
  %8716 = vset.pattern.permute.xlu0 0
  %8717 = vperm.xlu0 %8716, %v8699
  %v8718 = vpop.permute.xlu0 %8717
  %v8720 = vmul.f32 %v8680, %v8703
  %v8721 = vmul.f32 %v8681, %v8703
  %v8722 = vmul.f32 %v8682, %v8703
  %v8723 = vmul.f32 %v8683, %v8703
  %v8724 = vmul.f32 %v8684, %v8708
  %v8725 = vmul.f32 %v8685, %v8708
  %v8726 = vmul.f32 %v8686, %v8708
  %v8727 = vmul.f32 %v8687, %v8708
  %v8728 = vmul.f32 %v8688, %v8713
  %v8729 = vmul.f32 %v8689, %v8713
  %v8730 = vmul.f32 %v8690, %v8713
  %v8731 = vmul.f32 %v8691, %v8713
  %v8732 = vmul.f32 %v8692, %v8718
  %v8733 = vmul.f32 %v8693, %v8718
  %v8734 = vmul.f32 %v8694, %v8718
  %v8735 = vmul.f32 %v8695, %v8718
  %v8736 = vadd.f32 %v8616, %v8720
  %v8737 = vadd.f32 %v8617, %v8721
  %v8738 = vadd.f32 %v8618, %v8722
  %v8739 = vadd.f32 %v8619, %v8723
  %v8740 = vadd.f32 %v8620, %v8724
  %v8741 = vadd.f32 %v8621, %v8725
  %v8742 = vadd.f32 %v8622, %v8726
  %v8743 = vadd.f32 %v8623, %v8727
  %v8744 = vadd.f32 %v8624, %v8728
  %v8745 = vadd.f32 %v8625, %v8729
  %v8746 = vadd.f32 %v8626, %v8730
  %v8747 = vadd.f32 %v8627, %v8731
  %v8748 = vadd.f32 %v8628, %v8732
  %v8749 = vadd.f32 %v8629, %v8733
  %v8750 = vadd.f32 %v8630, %v8734
  %v8751 = vadd.f32 %v8631, %v8735
  %8752 = vrot.lane.b32.xlu0 %v5097, 1
  %v8753 = vpop.permute.xlu0 %8752
  %8754 = vrot.lane.b32.xlu0 %v5101, 1
  %v8755 = vpop.permute.xlu0 %8754
  %8756 = vrot.lane.b32.xlu0 %v5107, 1
  %v8757 = vpop.permute.xlu0 %8756
  %8758 = vrot.lane.b32.xlu0 %v5111, 1
  %v8759 = vpop.permute.xlu0 %8758
  %8760 = vrot.lane.b32.xlu0 %v5099, 1
  %v8761 = vpop.permute.xlu0 %8760
  %8762 = vrot.lane.b32.xlu0 %v5103, 1
  %v8763 = vpop.permute.xlu0 %8762
  %8764 = vrot.lane.b32.xlu0 %v5109, 1
  %v8765 = vpop.permute.xlu0 %8764
  %8766 = vrot.lane.b32.xlu0 %v5113, 1
  %v8767 = vpop.permute.xlu0 %8766
  %8768 = vrot.lane.b32.xlu0 %v5210, 1
  %v8769 = vpop.permute.xlu0 %8768
  %8770 = vrot.lane.b32.xlu0 %v5214, 1
  %v8771 = vpop.permute.xlu0 %8770
  %8772 = vrot.lane.b32.xlu0 %v5220, 1
  %v8773 = vpop.permute.xlu0 %8772
  %8774 = vrot.lane.b32.xlu0 %v5224, 1
  %v8775 = vpop.permute.xlu0 %8774
  %8776 = vrot.lane.b32.xlu0 %v5212, 1
  %v8777 = vpop.permute.xlu0 %8776
  %8778 = vrot.lane.b32.xlu0 %v5216, 1
  %v8779 = vpop.permute.xlu0 %8778
  %8780 = vrot.lane.b32.xlu0 %v5222, 1
  %v8781 = vpop.permute.xlu0 %8780
  %8782 = vrot.lane.b32.xlu0 %v5226, 1
  %v8783 = vpop.permute.xlu0 %8782
  %v8784 = vsel %vm1109, %v8769, %v8777
  %v8785 = vsel %vm1109, %v8771, %v8779
  %v8786 = vsel %vm1109, %v8773, %v8781
  %v8787 = vsel %vm1109, %v8775, %v8783
  %v8788 = vsel %vm1109, %v8761, %v8769
  %v8789 = vsel %vm1109, %v8763, %v8771
  %v8790 = vsel %vm1109, %v8765, %v8773
  %v8791 = vsel %vm1109, %v8767, %v8775
  %v8792 = vsel %vm1109, %v8753, %v8761
  %v8793 = vsel %vm1109, %v8755, %v8763
  %v8794 = vsel %vm1109, %v8757, %v8765
  %v8795 = vsel %vm1109, %v8759, %v8767
  %v8796 = vsel %vm1109, %v8777, %v8753
  %v8797 = vsel %vm1109, %v8779, %v8755
  %v8798 = vsel %vm1109, %v8781, %v8757
  %v8799 = vsel %vm1109, %v8783, %v8759
  %v8800 = vmul.f32 %v8796, %v1130
  %v8801 = vmul.f32 %v8792, %v1134
  %v8802 = vmul.f32 %v8788, %v1138
  %v8803 = vmul.f32 %v8784, %v1142
  %v8804 = vmul.f32 %v8797, %v1130
  %v8805 = vmul.f32 %v8793, %v1134
  %v8806 = vmul.f32 %v8789, %v1138
  %v8807 = vmul.f32 %v8785, %v1142
  %v8808 = vmul.f32 %v8798, %v1130
  %v8809 = vmul.f32 %v8794, %v1134
  %v8810 = vmul.f32 %v8790, %v1138
  %v8811 = vmul.f32 %v8786, %v1142
  %v8812 = vmul.f32 %v8799, %v1130
  %v8813 = vmul.f32 %v8795, %v1134
  %v8814 = vmul.f32 %v8791, %v1138
  %v8815 = vmul.f32 %v8787, %v1142
  %v8816 = vld [vmem:[%s1163 + $0xc0] sm:$0xff]
  %v8817 = vld [vmem:[%s1163 + $0xc8] sm:$0xff]
  %v8818 = vld [vmem:[%s1163 + $0xd0] sm:$0xff]
  %v8819 = vld [vmem:[%s1163 + $0xd8] sm:$0xff]
  %8821 = vset.pattern.permute.xlu0 0
  %8822 = vperm.xlu0 %8821, %v8816
  %v8823 = vpop.permute.xlu0 %8822
  %8826 = vset.pattern.permute.xlu0 0
  %8827 = vperm.xlu0 %8826, %v8817
  %v8828 = vpop.permute.xlu0 %8827
  %8831 = vset.pattern.permute.xlu0 0
  %8832 = vperm.xlu0 %8831, %v8818
  %v8833 = vpop.permute.xlu0 %8832
  %8836 = vset.pattern.permute.xlu0 0
  %8837 = vperm.xlu0 %8836, %v8819
  %v8838 = vpop.permute.xlu0 %8837
  %v8840 = vmul.f32 %v8800, %v8823
  %v8841 = vmul.f32 %v8801, %v8823
  %v8842 = vmul.f32 %v8802, %v8823
  %v8843 = vmul.f32 %v8803, %v8823
  %v8844 = vmul.f32 %v8804, %v8828
  %v8845 = vmul.f32 %v8805, %v8828
  %v8846 = vmul.f32 %v8806, %v8828
  %v8847 = vmul.f32 %v8807, %v8828
  %v8848 = vmul.f32 %v8808, %v8833
  %v8849 = vmul.f32 %v8809, %v8833
  %v8850 = vmul.f32 %v8810, %v8833
  %v8851 = vmul.f32 %v8811, %v8833
  %v8852 = vmul.f32 %v8812, %v8838
  %v8853 = vmul.f32 %v8813, %v8838
  %v8854 = vmul.f32 %v8814, %v8838
  %v8855 = vmul.f32 %v8815, %v8838
  %v8856 = vadd.f32 %v8736, %v8840
  %v8857 = vadd.f32 %v8737, %v8841
  %v8858 = vadd.f32 %v8738, %v8842
  %v8859 = vadd.f32 %v8739, %v8843
  %v8860 = vadd.f32 %v8740, %v8844
  %v8861 = vadd.f32 %v8741, %v8845
  %v8862 = vadd.f32 %v8742, %v8846
  %v8863 = vadd.f32 %v8743, %v8847
  %v8864 = vadd.f32 %v8744, %v8848
  %v8865 = vadd.f32 %v8745, %v8849
  %v8866 = vadd.f32 %v8746, %v8850
  %v8867 = vadd.f32 %v8747, %v8851
  %v8868 = vadd.f32 %v8748, %v8852
  %v8869 = vadd.f32 %v8749, %v8853
  %v8870 = vadd.f32 %v8750, %v8854
  %v8871 = vadd.f32 %v8751, %v8855
  %8872 = vrot.lane.b32.xlu0 %v5097, 127
  %v8873 = vpop.permute.xlu0 %8872
  %8874 = vrot.lane.b32.xlu0 %v5101, 127
  %v8875 = vpop.permute.xlu0 %8874
  %8876 = vrot.lane.b32.xlu0 %v5107, 127
  %v8877 = vpop.permute.xlu0 %8876
  %8878 = vrot.lane.b32.xlu0 %v5111, 127
  %v8879 = vpop.permute.xlu0 %8878
  %8880 = vrot.lane.b32.xlu0 %v5099, 127
  %v8881 = vpop.permute.xlu0 %8880
  %8882 = vrot.lane.b32.xlu0 %v5103, 127
  %v8883 = vpop.permute.xlu0 %8882
  %8884 = vrot.lane.b32.xlu0 %v5109, 127
  %v8885 = vpop.permute.xlu0 %8884
  %8886 = vrot.lane.b32.xlu0 %v5113, 127
  %v8887 = vpop.permute.xlu0 %8886
  %8888 = vrot.lane.b32.xlu0 %v5210, 127
  %v8889 = vpop.permute.xlu0 %8888
  %8890 = vrot.lane.b32.xlu0 %v5214, 127
  %v8891 = vpop.permute.xlu0 %8890
  %8892 = vrot.lane.b32.xlu0 %v5220, 127
  %v8893 = vpop.permute.xlu0 %8892
  %8894 = vrot.lane.b32.xlu0 %v5224, 127
  %v8895 = vpop.permute.xlu0 %8894
  %8896 = vrot.lane.b32.xlu0 %v5212, 127
  %v8897 = vpop.permute.xlu0 %8896
  %8898 = vrot.lane.b32.xlu0 %v5216, 127
  %v8899 = vpop.permute.xlu0 %8898
  %8900 = vrot.lane.b32.xlu0 %v5222, 127
  %v8901 = vpop.permute.xlu0 %8900
  %8902 = vrot.lane.b32.xlu0 %v5226, 127
  %v8903 = vpop.permute.xlu0 %8902
  %v8904 = vsel %vm1252, %v8889, %v8897
  %v8905 = vsel %vm1252, %v8891, %v8899
  %v8906 = vsel %vm1252, %v8893, %v8901
  %v8907 = vsel %vm1252, %v8895, %v8903
  %v8908 = vsel %vm1252, %v8881, %v8889
  %v8909 = vsel %vm1252, %v8883, %v8891
  %v8910 = vsel %vm1252, %v8885, %v8893
  %v8911 = vsel %vm1252, %v8887, %v8895
  %v8912 = vsel %vm1252, %v8873, %v8881
  %v8913 = vsel %vm1252, %v8875, %v8883
  %v8914 = vsel %vm1252, %v8877, %v8885
  %v8915 = vsel %vm1252, %v8879, %v8887
  %v8916 = vsel %vm1252, %v8897, %v8873
  %v8917 = vsel %vm1252, %v8899, %v8875
  %v8918 = vsel %vm1252, %v8901, %v8877
  %v8919 = vsel %vm1252, %v8903, %v8879
  %v8920 = vmul.f32 %v8912, %v1273
  %v8921 = vmul.f32 %v8908, %v1277
  %v8922 = vmul.f32 %v8904, %v1281
  %v8923 = vmul.f32 %v8916, %v1285
  %v8924 = vmul.f32 %v8913, %v1273
  %v8925 = vmul.f32 %v8909, %v1277
  %v8926 = vmul.f32 %v8905, %v1281
  %v8927 = vmul.f32 %v8917, %v1285
  %v8928 = vmul.f32 %v8914, %v1273
  %v8929 = vmul.f32 %v8910, %v1277
  %v8930 = vmul.f32 %v8906, %v1281
  %v8931 = vmul.f32 %v8918, %v1285
  %v8932 = vmul.f32 %v8915, %v1273
  %v8933 = vmul.f32 %v8911, %v1277
  %v8934 = vmul.f32 %v8907, %v1281
  %v8935 = vmul.f32 %v8919, %v1285
  %v8936 = vld [vmem:[%s1306 + $0xc0] sm:$0xff]
  %v8937 = vld [vmem:[%s1306 + $0xc8] sm:$0xff]
  %v8938 = vld [vmem:[%s1306 + $0xd0] sm:$0xff]
  %v8939 = vld [vmem:[%s1306 + $0xd8] sm:$0xff]
  %8941 = vset.pattern.permute.xlu0 0
  %8942 = vperm.xlu0 %8941, %v8936
  %v8943 = vpop.permute.xlu0 %8942
  %8946 = vset.pattern.permute.xlu0 0
  %8947 = vperm.xlu0 %8946, %v8937
  %v8948 = vpop.permute.xlu0 %8947
  %8951 = vset.pattern.permute.xlu0 0
  %8952 = vperm.xlu0 %8951, %v8938
  %v8953 = vpop.permute.xlu0 %8952
  %8956 = vset.pattern.permute.xlu0 0
  %8957 = vperm.xlu0 %8956, %v8939
  %v8958 = vpop.permute.xlu0 %8957
  %v8960 = vmul.f32 %v8920, %v8943
  %v8961 = vmul.f32 %v8921, %v8943
  %v8962 = vmul.f32 %v8922, %v8943
  %v8963 = vmul.f32 %v8923, %v8943
  %v8964 = vmul.f32 %v8924, %v8948
  %v8965 = vmul.f32 %v8925, %v8948
  %v8966 = vmul.f32 %v8926, %v8948
  %v8967 = vmul.f32 %v8927, %v8948
  %v8968 = vmul.f32 %v8928, %v8953
  %v8969 = vmul.f32 %v8929, %v8953
  %v8970 = vmul.f32 %v8930, %v8953
  %v8971 = vmul.f32 %v8931, %v8953
  %v8972 = vmul.f32 %v8932, %v8958
  %v8973 = vmul.f32 %v8933, %v8958
  %v8974 = vmul.f32 %v8934, %v8958
  %v8975 = vmul.f32 %v8935, %v8958
  %v8976 = vadd.f32 %v8856, %v8960
  %v8977 = vadd.f32 %v8857, %v8961
  %v8978 = vadd.f32 %v8858, %v8962
  %v8979 = vadd.f32 %v8859, %v8963
  %v8980 = vadd.f32 %v8860, %v8964
  %v8981 = vadd.f32 %v8861, %v8965
  %v8982 = vadd.f32 %v8862, %v8966
  %v8983 = vadd.f32 %v8863, %v8967
  %v8984 = vadd.f32 %v8864, %v8968
  %v8985 = vadd.f32 %v8865, %v8969
  %v8986 = vadd.f32 %v8866, %v8970
  %v8987 = vadd.f32 %v8867, %v8971
  %v8988 = vadd.f32 %v8868, %v8972
  %v8989 = vadd.f32 %v8869, %v8973
  %v8990 = vadd.f32 %v8870, %v8974
  %v8991 = vadd.f32 %v8871, %v8975
  %8992 = vrot.lane.b32.xlu0 %v5097, 113
  %v8993 = vpop.permute.xlu0 %8992
  %8994 = vrot.lane.b32.xlu0 %v5101, 113
  %v8995 = vpop.permute.xlu0 %8994
  %8996 = vrot.lane.b32.xlu0 %v5107, 113
  %v8997 = vpop.permute.xlu0 %8996
  %8998 = vrot.lane.b32.xlu0 %v5111, 113
  %v8999 = vpop.permute.xlu0 %8998
  %9000 = vrot.lane.b32.xlu0 %v5099, 113
  %v9001 = vpop.permute.xlu0 %9000
  %9002 = vrot.lane.b32.xlu0 %v5103, 113
  %v9003 = vpop.permute.xlu0 %9002
  %9004 = vrot.lane.b32.xlu0 %v5109, 113
  %v9005 = vpop.permute.xlu0 %9004
  %9006 = vrot.lane.b32.xlu0 %v5113, 113
  %v9007 = vpop.permute.xlu0 %9006
  %9008 = vrot.lane.b32.xlu0 %v5210, 113
  %v9009 = vpop.permute.xlu0 %9008
  %9010 = vrot.lane.b32.xlu0 %v5214, 113
  %v9011 = vpop.permute.xlu0 %9010
  %9012 = vrot.lane.b32.xlu0 %v5220, 113
  %v9013 = vpop.permute.xlu0 %9012
  %9014 = vrot.lane.b32.xlu0 %v5224, 113
  %v9015 = vpop.permute.xlu0 %9014
  %9016 = vrot.lane.b32.xlu0 %v5212, 113
  %v9017 = vpop.permute.xlu0 %9016
  %9018 = vrot.lane.b32.xlu0 %v5216, 113
  %v9019 = vpop.permute.xlu0 %9018
  %9020 = vrot.lane.b32.xlu0 %v5222, 113
  %v9021 = vpop.permute.xlu0 %9020
  %9022 = vrot.lane.b32.xlu0 %v5226, 113
  %v9023 = vpop.permute.xlu0 %9022
  %v9024 = vsel %vm1395, %v9009, %v9017
  %v9025 = vsel %vm1395, %v9011, %v9019
  %v9026 = vsel %vm1395, %v9013, %v9021
  %v9027 = vsel %vm1395, %v9015, %v9023
  %v9028 = vsel %vm1395, %v9001, %v9009
  %v9029 = vsel %vm1395, %v9003, %v9011
  %v9030 = vsel %vm1395, %v9005, %v9013
  %v9031 = vsel %vm1395, %v9007, %v9015
  %v9032 = vsel %vm1395, %v8993, %v9001
  %v9033 = vsel %vm1395, %v8995, %v9003
  %v9034 = vsel %vm1395, %v8997, %v9005
  %v9035 = vsel %vm1395, %v8999, %v9007
  %v9036 = vsel %vm1395, %v9017, %v8993
  %v9037 = vsel %vm1395, %v9019, %v8995
  %v9038 = vsel %vm1395, %v9021, %v8997
  %v9039 = vsel %vm1395, %v9023, %v8999
  %v9040 = vmul.f32 %v9032, %v1416
  %v9041 = vmul.f32 %v9028, %v1420
  %v9042 = vmul.f32 %v9024, %v1424
  %v9043 = vmul.f32 %v9036, %v1428
  %v9044 = vmul.f32 %v9033, %v1416
  %v9045 = vmul.f32 %v9029, %v1420
  %v9046 = vmul.f32 %v9025, %v1424
  %v9047 = vmul.f32 %v9037, %v1428
  %v9048 = vmul.f32 %v9034, %v1416
  %v9049 = vmul.f32 %v9030, %v1420
  %v9050 = vmul.f32 %v9026, %v1424
  %v9051 = vmul.f32 %v9038, %v1428
  %v9052 = vmul.f32 %v9035, %v1416
  %v9053 = vmul.f32 %v9031, %v1420
  %v9054 = vmul.f32 %v9027, %v1424
  %v9055 = vmul.f32 %v9039, %v1428
  %v9056 = vld [vmem:[%s1449 + $0xc0] sm:$0xff]
  %v9057 = vld [vmem:[%s1449 + $0xc8] sm:$0xff]
  %v9058 = vld [vmem:[%s1449 + $0xd0] sm:$0xff]
  %v9059 = vld [vmem:[%s1449 + $0xd8] sm:$0xff]
  %9061 = vset.pattern.permute.xlu0 0
  %9062 = vperm.xlu0 %9061, %v9056
  %v9063 = vpop.permute.xlu0 %9062
  %9066 = vset.pattern.permute.xlu0 0
  %9067 = vperm.xlu0 %9066, %v9057
  %v9068 = vpop.permute.xlu0 %9067
  %9071 = vset.pattern.permute.xlu0 0
  %9072 = vperm.xlu0 %9071, %v9058
  %v9073 = vpop.permute.xlu0 %9072
  %9076 = vset.pattern.permute.xlu0 0
  %9077 = vperm.xlu0 %9076, %v9059
  %v9078 = vpop.permute.xlu0 %9077
  %v9080 = vmul.f32 %v9040, %v9063
  %v9081 = vmul.f32 %v9041, %v9063
  %v9082 = vmul.f32 %v9042, %v9063
  %v9083 = vmul.f32 %v9043, %v9063
  %v9084 = vmul.f32 %v9044, %v9068
  %v9085 = vmul.f32 %v9045, %v9068
  %v9086 = vmul.f32 %v9046, %v9068
  %v9087 = vmul.f32 %v9047, %v9068
  %v9088 = vmul.f32 %v9048, %v9073
  %v9089 = vmul.f32 %v9049, %v9073
  %v9090 = vmul.f32 %v9050, %v9073
  %v9091 = vmul.f32 %v9051, %v9073
  %v9092 = vmul.f32 %v9052, %v9078
  %v9093 = vmul.f32 %v9053, %v9078
  %v9094 = vmul.f32 %v9054, %v9078
  %v9095 = vmul.f32 %v9055, %v9078
  %v9096 = vadd.f32 %v8976, %v9080
  %v9097 = vadd.f32 %v8977, %v9081
  %v9098 = vadd.f32 %v8978, %v9082
  %v9099 = vadd.f32 %v8979, %v9083
  %v9100 = vadd.f32 %v8980, %v9084
  %v9101 = vadd.f32 %v8981, %v9085
  %v9102 = vadd.f32 %v8982, %v9086
  %v9103 = vadd.f32 %v8983, %v9087
  %v9104 = vadd.f32 %v8984, %v9088
  %v9105 = vadd.f32 %v8985, %v9089
  %v9106 = vadd.f32 %v8986, %v9090
  %v9107 = vadd.f32 %v8987, %v9091
  %v9108 = vadd.f32 %v8988, %v9092
  %v9109 = vadd.f32 %v8989, %v9093
  %v9110 = vadd.f32 %v8990, %v9094
  %v9111 = vadd.f32 %v8991, %v9095
  %9112 = vrot.lane.b32.xlu0 %v5097, 112
  %v9113 = vpop.permute.xlu0 %9112
  %9114 = vrot.lane.b32.xlu0 %v5101, 112
  %v9115 = vpop.permute.xlu0 %9114
  %9116 = vrot.lane.b32.xlu0 %v5107, 112
  %v9117 = vpop.permute.xlu0 %9116
  %9118 = vrot.lane.b32.xlu0 %v5111, 112
  %v9119 = vpop.permute.xlu0 %9118
  %9120 = vrot.lane.b32.xlu0 %v5099, 112
  %v9121 = vpop.permute.xlu0 %9120
  %9122 = vrot.lane.b32.xlu0 %v5103, 112
  %v9123 = vpop.permute.xlu0 %9122
  %9124 = vrot.lane.b32.xlu0 %v5109, 112
  %v9125 = vpop.permute.xlu0 %9124
  %9126 = vrot.lane.b32.xlu0 %v5113, 112
  %v9127 = vpop.permute.xlu0 %9126
  %9128 = vrot.lane.b32.xlu0 %v5210, 112
  %v9129 = vpop.permute.xlu0 %9128
  %9130 = vrot.lane.b32.xlu0 %v5214, 112
  %v9131 = vpop.permute.xlu0 %9130
  %9132 = vrot.lane.b32.xlu0 %v5220, 112
  %v9133 = vpop.permute.xlu0 %9132
  %9134 = vrot.lane.b32.xlu0 %v5224, 112
  %v9135 = vpop.permute.xlu0 %9134
  %9136 = vrot.lane.b32.xlu0 %v5212, 112
  %v9137 = vpop.permute.xlu0 %9136
  %9138 = vrot.lane.b32.xlu0 %v5216, 112
  %v9139 = vpop.permute.xlu0 %9138
  %9140 = vrot.lane.b32.xlu0 %v5222, 112
  %v9141 = vpop.permute.xlu0 %9140
  %9142 = vrot.lane.b32.xlu0 %v5226, 112
  %v9143 = vpop.permute.xlu0 %9142
  %v9144 = vsel %vm1538, %v9129, %v9137
  %v9145 = vsel %vm1538, %v9131, %v9139
  %v9146 = vsel %vm1538, %v9133, %v9141
  %v9147 = vsel %vm1538, %v9135, %v9143
  %v9148 = vsel %vm1538, %v9121, %v9129
  %v9149 = vsel %vm1538, %v9123, %v9131
  %v9150 = vsel %vm1538, %v9125, %v9133
  %v9151 = vsel %vm1538, %v9127, %v9135
  %v9152 = vsel %vm1538, %v9113, %v9121
  %v9153 = vsel %vm1538, %v9115, %v9123
  %v9154 = vsel %vm1538, %v9117, %v9125
  %v9155 = vsel %vm1538, %v9119, %v9127
  %v9156 = vsel %vm1538, %v9137, %v9113
  %v9157 = vsel %vm1538, %v9139, %v9115
  %v9158 = vsel %vm1538, %v9141, %v9117
  %v9159 = vsel %vm1538, %v9143, %v9119
  %v9160 = vmul.f32 %v9152, %v1559
  %v9161 = vmul.f32 %v9148, %v1563
  %v9162 = vmul.f32 %v9144, %v1567
  %v9163 = vmul.f32 %v9156, %v1571
  %v9164 = vmul.f32 %v9153, %v1559
  %v9165 = vmul.f32 %v9149, %v1563
  %v9166 = vmul.f32 %v9145, %v1567
  %v9167 = vmul.f32 %v9157, %v1571
  %v9168 = vmul.f32 %v9154, %v1559
  %v9169 = vmul.f32 %v9150, %v1563
  %v9170 = vmul.f32 %v9146, %v1567
  %v9171 = vmul.f32 %v9158, %v1571
  %v9172 = vmul.f32 %v9155, %v1559
  %v9173 = vmul.f32 %v9151, %v1563
  %v9174 = vmul.f32 %v9147, %v1567
  %v9175 = vmul.f32 %v9159, %v1571
  %v9176 = vld [vmem:[%s1592 + $0xc0] sm:$0xff]
  %v9177 = vld [vmem:[%s1592 + $0xc8] sm:$0xff]
  %v9178 = vld [vmem:[%s1592 + $0xd0] sm:$0xff]
  %v9179 = vld [vmem:[%s1592 + $0xd8] sm:$0xff]
  %9181 = vset.pattern.permute.xlu0 0
  %9182 = vperm.xlu0 %9181, %v9176
  %v9183 = vpop.permute.xlu0 %9182
  %9186 = vset.pattern.permute.xlu0 0
  %9187 = vperm.xlu0 %9186, %v9177
  %v9188 = vpop.permute.xlu0 %9187
  %9191 = vset.pattern.permute.xlu0 0
  %9192 = vperm.xlu0 %9191, %v9178
  %v9193 = vpop.permute.xlu0 %9192
  %9196 = vset.pattern.permute.xlu0 0
  %9197 = vperm.xlu0 %9196, %v9179
  %v9198 = vpop.permute.xlu0 %9197
  %v9200 = vmul.f32 %v9160, %v9183
  %v9201 = vmul.f32 %v9161, %v9183
  %v9202 = vmul.f32 %v9162, %v9183
  %v9203 = vmul.f32 %v9163, %v9183
  %v9204 = vmul.f32 %v9164, %v9188
  %v9205 = vmul.f32 %v9165, %v9188
  %v9206 = vmul.f32 %v9166, %v9188
  %v9207 = vmul.f32 %v9167, %v9188
  %v9208 = vmul.f32 %v9168, %v9193
  %v9209 = vmul.f32 %v9169, %v9193
  %v9210 = vmul.f32 %v9170, %v9193
  %v9211 = vmul.f32 %v9171, %v9193
  %v9212 = vmul.f32 %v9172, %v9198
  %v9213 = vmul.f32 %v9173, %v9198
  %v9214 = vmul.f32 %v9174, %v9198
  %v9215 = vmul.f32 %v9175, %v9198
  %v9216 = vadd.f32 %v9096, %v9200
  %v9217 = vadd.f32 %v9097, %v9201
  %v9218 = vadd.f32 %v9098, %v9202
  %v9219 = vadd.f32 %v9099, %v9203
  %v9220 = vadd.f32 %v9100, %v9204
  %v9221 = vadd.f32 %v9101, %v9205
  %v9222 = vadd.f32 %v9102, %v9206
  %v9223 = vadd.f32 %v9103, %v9207
  %v9224 = vadd.f32 %v9104, %v9208
  %v9225 = vadd.f32 %v9105, %v9209
  %v9226 = vadd.f32 %v9106, %v9210
  %v9227 = vadd.f32 %v9107, %v9211
  %v9228 = vadd.f32 %v9108, %v9212
  %v9229 = vadd.f32 %v9109, %v9213
  %v9230 = vadd.f32 %v9110, %v9214
  %v9231 = vadd.f32 %v9111, %v9215
  %9232 = vrot.lane.b32.xlu0 %v5097, 111
  %v9233 = vpop.permute.xlu0 %9232
  %9234 = vrot.lane.b32.xlu0 %v5101, 111
  %v9235 = vpop.permute.xlu0 %9234
  %9236 = vrot.lane.b32.xlu0 %v5107, 111
  %v9237 = vpop.permute.xlu0 %9236
  %9238 = vrot.lane.b32.xlu0 %v5111, 111
  %v9239 = vpop.permute.xlu0 %9238
  %9240 = vrot.lane.b32.xlu0 %v5099, 111
  %v9241 = vpop.permute.xlu0 %9240
  %9242 = vrot.lane.b32.xlu0 %v5103, 111
  %v9243 = vpop.permute.xlu0 %9242
  %9244 = vrot.lane.b32.xlu0 %v5109, 111
  %v9245 = vpop.permute.xlu0 %9244
  %9246 = vrot.lane.b32.xlu0 %v5113, 111
  %v9247 = vpop.permute.xlu0 %9246
  %9248 = vrot.lane.b32.xlu0 %v5210, 111
  %v9249 = vpop.permute.xlu0 %9248
  %9250 = vrot.lane.b32.xlu0 %v5214, 111
  %v9251 = vpop.permute.xlu0 %9250
  %9252 = vrot.lane.b32.xlu0 %v5220, 111
  %v9253 = vpop.permute.xlu0 %9252
  %9254 = vrot.lane.b32.xlu0 %v5224, 111
  %v9255 = vpop.permute.xlu0 %9254
  %9256 = vrot.lane.b32.xlu0 %v5212, 111
  %v9257 = vpop.permute.xlu0 %9256
  %9258 = vrot.lane.b32.xlu0 %v5216, 111
  %v9259 = vpop.permute.xlu0 %9258
  %9260 = vrot.lane.b32.xlu0 %v5222, 111
  %v9261 = vpop.permute.xlu0 %9260
  %9262 = vrot.lane.b32.xlu0 %v5226, 111
  %v9263 = vpop.permute.xlu0 %9262
  %v9264 = vsel %vm1681, %v9249, %v9257
  %v9265 = vsel %vm1681, %v9251, %v9259
  %v9266 = vsel %vm1681, %v9253, %v9261
  %v9267 = vsel %vm1681, %v9255, %v9263
  %v9268 = vsel %vm1681, %v9241, %v9249
  %v9269 = vsel %vm1681, %v9243, %v9251
  %v9270 = vsel %vm1681, %v9245, %v9253
  %v9271 = vsel %vm1681, %v9247, %v9255
  %v9272 = vsel %vm1681, %v9233, %v9241
  %v9273 = vsel %vm1681, %v9235, %v9243
  %v9274 = vsel %vm1681, %v9237, %v9245
  %v9275 = vsel %vm1681, %v9239, %v9247
  %v9276 = vsel %vm1681, %v9257, %v9233
  %v9277 = vsel %vm1681, %v9259, %v9235
  %v9278 = vsel %vm1681, %v9261, %v9237
  %v9279 = vsel %vm1681, %v9263, %v9239
  %v9280 = vmul.f32 %v9272, %v1702
  %v9281 = vmul.f32 %v9268, %v1706
  %v9282 = vmul.f32 %v9264, %v1710
  %v9283 = vmul.f32 %v9276, %v1714
  %v9284 = vmul.f32 %v9273, %v1702
  %v9285 = vmul.f32 %v9269, %v1706
  %v9286 = vmul.f32 %v9265, %v1710
  %v9287 = vmul.f32 %v9277, %v1714
  %v9288 = vmul.f32 %v9274, %v1702
  %v9289 = vmul.f32 %v9270, %v1706
  %v9290 = vmul.f32 %v9266, %v1710
  %v9291 = vmul.f32 %v9278, %v1714
  %v9292 = vmul.f32 %v9275, %v1702
  %v9293 = vmul.f32 %v9271, %v1706
  %v9294 = vmul.f32 %v9267, %v1710
  %v9295 = vmul.f32 %v9279, %v1714
  %v9296 = vld [vmem:[%s1735 + $0xc0] sm:$0xff]
  %v9297 = vld [vmem:[%s1735 + $0xc8] sm:$0xff]
  %v9298 = vld [vmem:[%s1735 + $0xd0] sm:$0xff]
  %v9299 = vld [vmem:[%s1735 + $0xd8] sm:$0xff]
  %9301 = vset.pattern.permute.xlu0 0
  %9302 = vperm.xlu0 %9301, %v9296
  %v9303 = vpop.permute.xlu0 %9302
  %9306 = vset.pattern.permute.xlu0 0
  %9307 = vperm.xlu0 %9306, %v9297
  %v9308 = vpop.permute.xlu0 %9307
  %9311 = vset.pattern.permute.xlu0 0
  %9312 = vperm.xlu0 %9311, %v9298
  %v9313 = vpop.permute.xlu0 %9312
  %9316 = vset.pattern.permute.xlu0 0
  %9317 = vperm.xlu0 %9316, %v9299
  %v9318 = vpop.permute.xlu0 %9317
  %v9320 = vmul.f32 %v9280, %v9303
  %v9321 = vmul.f32 %v9281, %v9303
  %v9322 = vmul.f32 %v9282, %v9303
  %v9323 = vmul.f32 %v9283, %v9303
  %v9324 = vmul.f32 %v9284, %v9308
  %v9325 = vmul.f32 %v9285, %v9308
  %v9326 = vmul.f32 %v9286, %v9308
  %v9327 = vmul.f32 %v9287, %v9308
  %v9328 = vmul.f32 %v9288, %v9313
  %v9329 = vmul.f32 %v9289, %v9313
  %v9330 = vmul.f32 %v9290, %v9313
  %v9331 = vmul.f32 %v9291, %v9313
  %v9332 = vmul.f32 %v9292, %v9318
  %v9333 = vmul.f32 %v9293, %v9318
  %v9334 = vmul.f32 %v9294, %v9318
  %v9335 = vmul.f32 %v9295, %v9318
  %v9336 = vadd.f32 %v9216, %v9320
  %v9337 = vadd.f32 %v9217, %v9321
  %v9338 = vadd.f32 %v9218, %v9322
  %v9339 = vadd.f32 %v9219, %v9323
  %v9340 = vadd.f32 %v9220, %v9324
  %v9341 = vadd.f32 %v9221, %v9325
  %v9342 = vadd.f32 %v9222, %v9326
  %v9343 = vadd.f32 %v9223, %v9327
  %v9344 = vadd.f32 %v9224, %v9328
  %v9345 = vadd.f32 %v9225, %v9329
  %v9346 = vadd.f32 %v9226, %v9330
  %v9347 = vadd.f32 %v9227, %v9331
  %v9348 = vadd.f32 %v9228, %v9332
  %v9349 = vadd.f32 %v9229, %v9333
  %v9350 = vadd.f32 %v9230, %v9334
  %v9351 = vadd.f32 %v9231, %v9335
  %9353 = vset.pattern.permute.xlu0 0
  %9354 = vperm.xlu0 %9353, %v8348
  %v9355 = vpop.permute.xlu0 %9354
  %9358 = vset.pattern.permute.xlu0 0
  %9359 = vperm.xlu0 %9358, %v8349
  %v9360 = vpop.permute.xlu0 %9359
  %9363 = vset.pattern.permute.xlu0 0
  %9364 = vperm.xlu0 %9363, %v8350
  %v9365 = vpop.permute.xlu0 %9364
  %9368 = vset.pattern.permute.xlu0 0
  %9369 = vperm.xlu0 %9368, %v8351
  %v9370 = vpop.permute.xlu0 %9369
  %v9372 = vadd.f32 %v9336, %v9355
  %v9373 = vadd.f32 %v9337, %v9355
  %v9374 = vadd.f32 %v9338, %v9355
  %v9375 = vadd.f32 %v9339, %v9355
  %v9376 = vadd.f32 %v9340, %v9360
  %v9377 = vadd.f32 %v9341, %v9360
  %v9378 = vadd.f32 %v9342, %v9360
  %v9379 = vadd.f32 %v9343, %v9360
  %v9380 = vadd.f32 %v9344, %v9365
  %v9381 = vadd.f32 %v9345, %v9365
  %v9382 = vadd.f32 %v9346, %v9365
  %v9383 = vadd.f32 %v9347, %v9365
  %v9384 = vadd.f32 %v9348, %v9370
  %v9385 = vadd.f32 %v9349, %v9370
  %v9386 = vadd.f32 %v9350, %v9370
  %v9387 = vadd.f32 %v9351, %v9370
  %v9388 = vmul.f32 %v6252, %v6252
  %v9389 = vmul.f32 %v6253, %v6253
  %v9390 = vmul.f32 %v6254, %v6254
  %v9391 = vmul.f32 %v6255, %v6255
  %v9392 = vmul.f32 %v6256, %v6256
  %v9393 = vmul.f32 %v6257, %v6257
  %v9394 = vmul.f32 %v6258, %v6258
  %v9395 = vmul.f32 %v6259, %v6259
  %v9396 = vmul.f32 %v6260, %v6260
  %v9397 = vmul.f32 %v6261, %v6261
  %v9398 = vmul.f32 %v6262, %v6262
  %v9399 = vmul.f32 %v6263, %v6263
  %v9400 = vmul.f32 %v6264, %v6264
  %v9401 = vmul.f32 %v6265, %v6265
  %v9402 = vmul.f32 %v6266, %v6266
  %v9403 = vmul.f32 %v6267, %v6267
  %v9404 = vmul.f32 %v7292, %v7292
  %v9405 = vmul.f32 %v7293, %v7293
  %v9406 = vmul.f32 %v7294, %v7294
  %v9407 = vmul.f32 %v7295, %v7295
  %v9408 = vmul.f32 %v7296, %v7296
  %v9409 = vmul.f32 %v7297, %v7297
  %v9410 = vmul.f32 %v7298, %v7298
  %v9411 = vmul.f32 %v7299, %v7299
  %v9412 = vmul.f32 %v7300, %v7300
  %v9413 = vmul.f32 %v7301, %v7301
  %v9414 = vmul.f32 %v7302, %v7302
  %v9415 = vmul.f32 %v7303, %v7303
  %v9416 = vmul.f32 %v7304, %v7304
  %v9417 = vmul.f32 %v7305, %v7305
  %v9418 = vmul.f32 %v7306, %v7306
  %v9419 = vmul.f32 %v7307, %v7307
  %v9420 = vmul.f32 %v9388, %v6252
  %v9421 = vmul.f32 %v9389, %v6253
  %v9422 = vmul.f32 %v9390, %v6254
  %v9423 = vmul.f32 %v9391, %v6255
  %v9424 = vmul.f32 %v9392, %v6256
  %v9425 = vmul.f32 %v9393, %v6257
  %v9426 = vmul.f32 %v9394, %v6258
  %v9427 = vmul.f32 %v9395, %v6259
  %v9428 = vmul.f32 %v9396, %v6260
  %v9429 = vmul.f32 %v9397, %v6261
  %v9430 = vmul.f32 %v9398, %v6262
  %v9431 = vmul.f32 %v9399, %v6263
  %v9432 = vmul.f32 %v9400, %v6264
  %v9433 = vmul.f32 %v9401, %v6265
  %v9434 = vmul.f32 %v9402, %v6266
  %v9435 = vmul.f32 %v9403, %v6267
  %v9436 = vmul.f32 %v9404, %v7292
  %v9437 = vmul.f32 %v9405, %v7293
  %v9438 = vmul.f32 %v9406, %v7294
  %v9439 = vmul.f32 %v9407, %v7295
  %v9440 = vmul.f32 %v9408, %v7296
  %v9441 = vmul.f32 %v9409, %v7297
  %v9442 = vmul.f32 %v9410, %v7298
  %v9443 = vmul.f32 %v9411, %v7299
  %v9444 = vmul.f32 %v9412, %v7300
  %v9445 = vmul.f32 %v9413, %v7301
  %v9446 = vmul.f32 %v9414, %v7302
  %v9447 = vmul.f32 %v9415, %v7303
  %v9448 = vmul.f32 %v9416, %v7304
  %v9449 = vmul.f32 %v9417, %v7305
  %v9450 = vmul.f32 %v9418, %v7306
  %v9451 = vmul.f32 %v9419, %v7307
  %v9452 = vmul.f32 %v9420, 0.044715
  %v9453 = vmul.f32 %v9421, 0.044715
  %v9454 = vmul.f32 %v9422, 0.044715
  %v9455 = vmul.f32 %v9423, 0.044715
  %v9456 = vmul.f32 %v9424, 0.044715
  %v9457 = vmul.f32 %v9425, 0.044715
  %v9458 = vmul.f32 %v9426, 0.044715
  %v9459 = vmul.f32 %v9427, 0.044715
  %v9460 = vmul.f32 %v9428, 0.044715
  %v9461 = vmul.f32 %v9429, 0.044715
  %v9462 = vmul.f32 %v9430, 0.044715
  %v9463 = vmul.f32 %v9431, 0.044715
  %v9464 = vmul.f32 %v9432, 0.044715
  %v9465 = vmul.f32 %v9433, 0.044715
  %v9466 = vmul.f32 %v9434, 0.044715
  %v9467 = vmul.f32 %v9435, 0.044715
  %v9468 = vmul.f32 %v9436, 0.044715
  %v9469 = vmul.f32 %v9437, 0.044715
  %v9470 = vmul.f32 %v9438, 0.044715
  %v9471 = vmul.f32 %v9439, 0.044715
  %v9472 = vmul.f32 %v9440, 0.044715
  %v9473 = vmul.f32 %v9441, 0.044715
  %v9474 = vmul.f32 %v9442, 0.044715
  %v9475 = vmul.f32 %v9443, 0.044715
  %v9476 = vmul.f32 %v9444, 0.044715
  %v9477 = vmul.f32 %v9445, 0.044715
  %v9478 = vmul.f32 %v9446, 0.044715
  %v9479 = vmul.f32 %v9447, 0.044715
  %v9480 = vmul.f32 %v9448, 0.044715
  %v9481 = vmul.f32 %v9449, 0.044715
  %v9482 = vmul.f32 %v9450, 0.044715
  %v9483 = vmul.f32 %v9451, 0.044715
  %v9484 = vadd.f32 %v6252, %v9452
  %v9485 = vadd.f32 %v6253, %v9453
  %v9486 = vadd.f32 %v6254, %v9454
  %v9487 = vadd.f32 %v6255, %v9455
  %v9488 = vadd.f32 %v6256, %v9456
  %v9489 = vadd.f32 %v6257, %v9457
  %v9490 = vadd.f32 %v6258, %v9458
  %v9491 = vadd.f32 %v6259, %v9459
  %v9492 = vadd.f32 %v6260, %v9460
  %v9493 = vadd.f32 %v6261, %v9461
  %v9494 = vadd.f32 %v6262, %v9462
  %v9495 = vadd.f32 %v6263, %v9463
  %v9496 = vadd.f32 %v6264, %v9464
  %v9497 = vadd.f32 %v6265, %v9465
  %v9498 = vadd.f32 %v6266, %v9466
  %v9499 = vadd.f32 %v6267, %v9467
  %v9500 = vadd.f32 %v7292, %v9468
  %v9501 = vadd.f32 %v7293, %v9469
  %v9502 = vadd.f32 %v7294, %v9470
  %v9503 = vadd.f32 %v7295, %v9471
  %v9504 = vadd.f32 %v7296, %v9472
  %v9505 = vadd.f32 %v7297, %v9473
  %v9506 = vadd.f32 %v7298, %v9474
  %v9507 = vadd.f32 %v7299, %v9475
  %v9508 = vadd.f32 %v7300, %v9476
  %v9509 = vadd.f32 %v7301, %v9477
  %v9510 = vadd.f32 %v7302, %v9478
  %v9511 = vadd.f32 %v7303, %v9479
  %v9512 = vadd.f32 %v7304, %v9480
  %v9513 = vadd.f32 %v7305, %v9481
  %v9514 = vadd.f32 %v7306, %v9482
  %v9515 = vadd.f32 %v7307, %v9483
  %v9516 = vmul.f32 %v9484, 0.7978846
  %v9517 = vmul.f32 %v9485, 0.7978846
  %v9518 = vmul.f32 %v9486, 0.7978846
  %v9519 = vmul.f32 %v9487, 0.7978846
  %v9520 = vmul.f32 %v9488, 0.7978846
  %v9521 = vmul.f32 %v9489, 0.7978846
  %v9522 = vmul.f32 %v9490, 0.7978846
  %v9523 = vmul.f32 %v9491, 0.7978846
  %v9524 = vmul.f32 %v9492, 0.7978846
  %v9525 = vmul.f32 %v9493, 0.7978846
  %v9526 = vmul.f32 %v9494, 0.7978846
  %v9527 = vmul.f32 %v9495, 0.7978846
  %v9528 = vmul.f32 %v9496, 0.7978846
  %v9529 = vmul.f32 %v9497, 0.7978846
  %v9530 = vmul.f32 %v9498, 0.7978846
  %v9531 = vmul.f32 %v9499, 0.7978846
  %v9532 = vmul.f32 %v9500, 0.7978846
  %v9533 = vmul.f32 %v9501, 0.7978846
  %v9534 = vmul.f32 %v9502, 0.7978846
  %v9535 = vmul.f32 %v9503, 0.7978846
  %v9536 = vmul.f32 %v9504, 0.7978846
  %v9537 = vmul.f32 %v9505, 0.7978846
  %v9538 = vmul.f32 %v9506, 0.7978846
  %v9539 = vmul.f32 %v9507, 0.7978846
  %v9540 = vmul.f32 %v9508, 0.7978846
  %v9541 = vmul.f32 %v9509, 0.7978846
  %v9542 = vmul.f32 %v9510, 0.7978846
  %v9543 = vmul.f32 %v9511, 0.7978846
  %v9544 = vmul.f32 %v9512, 0.7978846
  %v9545 = vmul.f32 %v9513, 0.7978846
  %v9546 = vmul.f32 %v9514, 0.7978846
  %v9547 = vmul.f32 %v9515, 0.7978846
  %v9548 = vtanh.pop %v9516
  %v9549 = vtanh.pop %v9517
  %v9550 = vtanh.pop %v9518
  %v9551 = vtanh.pop %v9519
  %v9552 = vtanh.pop %v9520
  %v9553 = vtanh.pop %v9521
  %v9554 = vtanh.pop %v9522
  %v9555 = vtanh.pop %v9523
  %v9556 = vtanh.pop %v9524
  %v9557 = vtanh.pop %v9525
  %v9558 = vtanh.pop %v9526
  %v9559 = vtanh.pop %v9527
  %v9560 = vtanh.pop %v9528
  %v9561 = vtanh.pop %v9529
  %v9562 = vtanh.pop %v9530
  %v9563 = vtanh.pop %v9531
  %v9564 = vtanh.pop %v9532
  %v9565 = vtanh.pop %v9533
  %v9566 = vtanh.pop %v9534
  %v9567 = vtanh.pop %v9535
  %v9568 = vtanh.pop %v9536
  %v9569 = vtanh.pop %v9537
  %v9570 = vtanh.pop %v9538
  %v9571 = vtanh.pop %v9539
  %v9572 = vtanh.pop %v9540
  %v9573 = vtanh.pop %v9541
  %v9574 = vtanh.pop %v9542
  %v9575 = vtanh.pop %v9543
  %v9576 = vtanh.pop %v9544
  %v9577 = vtanh.pop %v9545
  %v9578 = vtanh.pop %v9546
  %v9579 = vtanh.pop %v9547
  %v9580 = vadd.f32 %v9548, 1.0
  %v9581 = vadd.f32 %v9549, 1.0
  %v9582 = vadd.f32 %v9550, 1.0
  %v9583 = vadd.f32 %v9551, 1.0
  %v9584 = vadd.f32 %v9552, 1.0
  %v9585 = vadd.f32 %v9553, 1.0
  %v9586 = vadd.f32 %v9554, 1.0
  %v9587 = vadd.f32 %v9555, 1.0
  %v9588 = vadd.f32 %v9556, 1.0
  %v9589 = vadd.f32 %v9557, 1.0
  %v9590 = vadd.f32 %v9558, 1.0
  %v9591 = vadd.f32 %v9559, 1.0
  %v9592 = vadd.f32 %v9560, 1.0
  %v9593 = vadd.f32 %v9561, 1.0
  %v9594 = vadd.f32 %v9562, 1.0
  %v9595 = vadd.f32 %v9563, 1.0
  %v9596 = vadd.f32 %v9564, 1.0
  %v9597 = vadd.f32 %v9565, 1.0
  %v9598 = vadd.f32 %v9566, 1.0
  %v9599 = vadd.f32 %v9567, 1.0
  %v9600 = vadd.f32 %v9568, 1.0
  %v9601 = vadd.f32 %v9569, 1.0
  %v9602 = vadd.f32 %v9570, 1.0
  %v9603 = vadd.f32 %v9571, 1.0
  %v9604 = vadd.f32 %v9572, 1.0
  %v9605 = vadd.f32 %v9573, 1.0
  %v9606 = vadd.f32 %v9574, 1.0
  %v9607 = vadd.f32 %v9575, 1.0
  %v9608 = vadd.f32 %v9576, 1.0
  %v9609 = vadd.f32 %v9577, 1.0
  %v9610 = vadd.f32 %v9578, 1.0
  %v9611 = vadd.f32 %v9579, 1.0
  %v9612 = vmul.f32 %v6252, %v9580
  %v9613 = vmul.f32 %v6253, %v9581
  %v9614 = vmul.f32 %v6254, %v9582
  %v9615 = vmul.f32 %v6255, %v9583
  %v9616 = vmul.f32 %v6256, %v9584
  %v9617 = vmul.f32 %v6257, %v9585
  %v9618 = vmul.f32 %v6258, %v9586
  %v9619 = vmul.f32 %v6259, %v9587
  %v9620 = vmul.f32 %v6260, %v9588
  %v9621 = vmul.f32 %v6261, %v9589
  %v9622 = vmul.f32 %v6262, %v9590
  %v9623 = vmul.f32 %v6263, %v9591
  %v9624 = vmul.f32 %v6264, %v9592
  %v9625 = vmul.f32 %v6265, %v9593
  %v9626 = vmul.f32 %v6266, %v9594
  %v9627 = vmul.f32 %v6267, %v9595
  %v9628 = vmul.f32 %v7292, %v9596
  %v9629 = vmul.f32 %v7293, %v9597
  %v9630 = vmul.f32 %v7294, %v9598
  %v9631 = vmul.f32 %v7295, %v9599
  %v9632 = vmul.f32 %v7296, %v9600
  %v9633 = vmul.f32 %v7297, %v9601
  %v9634 = vmul.f32 %v7298, %v9602
  %v9635 = vmul.f32 %v7299, %v9603
  %v9636 = vmul.f32 %v7300, %v9604
  %v9637 = vmul.f32 %v7301, %v9605
  %v9638 = vmul.f32 %v7302, %v9606
  %v9639 = vmul.f32 %v7303, %v9607
  %v9640 = vmul.f32 %v7304, %v9608
  %v9641 = vmul.f32 %v7305, %v9609
  %v9642 = vmul.f32 %v7306, %v9610
  %v9643 = vmul.f32 %v7307, %v9611
  %v9644 = vmul.f32 %v9612, %v8332
  %v9645 = vmul.f32 %v9613, %v8333
  %v9646 = vmul.f32 %v9614, %v8334
  %v9647 = vmul.f32 %v9615, %v8335
  %v9648 = vmul.f32 %v9616, %v8336
  %v9649 = vmul.f32 %v9617, %v8337
  %v9650 = vmul.f32 %v9618, %v8338
  %v9651 = vmul.f32 %v9619, %v8339
  %v9652 = vmul.f32 %v9620, %v8340
  %v9653 = vmul.f32 %v9621, %v8341
  %v9654 = vmul.f32 %v9622, %v8342
  %v9655 = vmul.f32 %v9623, %v8343
  %v9656 = vmul.f32 %v9624, %v8344
  %v9657 = vmul.f32 %v9625, %v8345
  %v9658 = vmul.f32 %v9626, %v8346
  %v9659 = vmul.f32 %v9627, %v8347
  %v9660 = vmul.f32 %v9628, %v9372
  %v9661 = vmul.f32 %v9629, %v9373
  %v9662 = vmul.f32 %v9630, %v9374
  %v9663 = vmul.f32 %v9631, %v9375
  %v9664 = vmul.f32 %v9632, %v9376
  %v9665 = vmul.f32 %v9633, %v9377
  %v9666 = vmul.f32 %v9634, %v9378
  %v9667 = vmul.f32 %v9635, %v9379
  %v9668 = vmul.f32 %v9636, %v9380
  %v9669 = vmul.f32 %v9637, %v9381
  %v9670 = vmul.f32 %v9638, %v9382
  %v9671 = vmul.f32 %v9639, %v9383
  %v9672 = vmul.f32 %v9640, %v9384
  %v9673 = vmul.f32 %v9641, %v9385
  %v9674 = vmul.f32 %v9642, %v9386
  %v9675 = vmul.f32 %v9643, %v9387
  %v9676 = vld [vmem:[%s6] sm:$0xf]
  %v9677 = vld [vmem:[%s6 + $0x4] sm:$0xf]
  %v9678 = vld [vmem:[%s6 + $0x8] sm:$0xf]
  %v9679 = vld [vmem:[%s6 + $0xc] sm:$0xf]
  %v9680 = vpack.c.bf16 %v9648, %v9644
  %v9681 = vpack.c.bf16 %v9649, %v9645
  %v9682 = vpack.c.bf16 %v9650, %v9646
  %v9683 = vpack.c.bf16 %v9651, %v9647
  %v9684 = vpack.c.bf16 %v9656, %v9652
  %v9685 = vpack.c.bf16 %v9657, %v9653
  %v9686 = vpack.c.bf16 %v9658, %v9654
  %v9687 = vpack.c.bf16 %v9659, %v9655
  %v9688 = vpack.c.bf16 %v9664, %v9660
  %v9689 = vpack.c.bf16 %v9665, %v9661
  %v9690 = vpack.c.bf16 %v9666, %v9662
  %v9691 = vpack.c.bf16 %v9667, %v9663
  %v9692 = vpack.c.bf16 %v9672, %v9668
  %v9693 = vpack.c.bf16 %v9673, %v9669
  %v9694 = vpack.c.bf16 %v9674, %v9670
  %v9695 = vpack.c.bf16 %v9675, %v9671
  %v9696 = vld [vmem:[%s1 + $0x280] sm:$0xff]
  %v9697 = vld [vmem:[%s1 + $0x288] sm:$0xff]
  %v9698 = vld [vmem:[%s1 + $0x290] sm:$0xff]
  %v9699 = vld [vmem:[%s1 + $0x298] sm:$0xff]
  %9701 = vset.pattern.permute.xlu0 0
  %9702 = vperm.xlu0 %9701, %v9696
  %v9703 = vpop.permute.xlu0 %9702
  %9706 = vset.pattern.permute.xlu0 0
  %9707 = vperm.xlu0 %9706, %v9697
  %v9708 = vpop.permute.xlu0 %9707
  %9711 = vset.pattern.permute.xlu0 0
  %9712 = vperm.xlu0 %9711, %v9698
  %v9713 = vpop.permute.xlu0 %9712
  %9716 = vset.pattern.permute.xlu0 0
  %9717 = vperm.xlu0 %9716, %v9699
  %v9718 = vpop.permute.xlu0 %9717
  %v9724 = vunpack.c.l.b16 %v9676
  %v9725 = vunpack.c.l.b16 %v9677
  %v9726 = vunpack.c.l.b16 %v9678
  %v9727 = vunpack.c.l.b16 %v9679
  %v9728 = vpack.c.b16 %v9725, %v9724
  %v9729 = vpack.c.b16 %v9727, %v9726
  %vm9730 = vcmask 523264
  %v9732 = vsel %vm9730, %v9728, 0
  %v9735 = vsel %vm9730, %v9729, 0
  %9737 = vmatprep.subr.bf16.mxu0 0
  %9738 = vmatpush1.bf16.msra.mxu0 0
  %9739 = vmatprep.subr.bf16.mxu0 0
  %9740 = vmatpush1.bf16.msra.mxu0 0
  %9741 = vmatprep.subr.bf16.mxu0 0
  %9742 = vmatpush1.bf16.msra.mxu0 0
  %9743 = vmatprep.subr.bf16.mxu0 0
  %9744 = vmatpush1.bf16.msra.mxu0 0
  %9745 = vmatprep.subr.bf16.mxu0 %v9693
  %9746 = vmatpush1.bf16.msra.mxu0 %v9692
  %9747 = vmatprep.subr.bf16.mxu0 %v9689
  %9748 = vmatpush1.bf16.msra.mxu0 %v9688
  %9749 = vmatprep.subr.bf16.mxu0 %v9685
  %9750 = vmatpush1.bf16.msra.mxu0 %v9684
  %9751 = vmatprep.subr.bf16.mxu0 %v9681
  %9752 = vmatpush1.bf16.msra.mxu0 %v9680
  %9753 = vmatprep.subr.bf16.mxu0 0
  %9754 = vmatpush2.bf16.msra.mxu0 0
  %9755 = vmatprep.subr.bf16.mxu0 0
  %9756 = vmatpush2.bf16.msra.mxu0 0
  %9757 = vmatprep.subr.bf16.mxu0 0
  %9758 = vmatpush2.bf16.msra.mxu0 0
  %9759 = vmatprep.subr.bf16.mxu0 0
  %9760 = vmatpush2.bf16.msra.mxu0 0
  %9761 = vmatprep.subr.bf16.mxu0 0
  %9762 = vmatpush2.bf16.msra.mxu0 0
  %9763 = vmatprep.subr.bf16.mxu0 0
  %9764 = vmatpush2.bf16.msra.mxu0 0
  %9765 = vmatprep.subr.bf16.mxu0 0
  %9766 = vmatpush2.bf16.msra.mxu0 0
  %9767 = vmatprep.subr.bf16.mxu0 0
  %9768 = vmatpush2.bf16.msra.mxu0 0
  %9769 = vmatprep.mubr.bf16.mxu0 0
  %9770 = vmatmul.mubr.bf16.gmra.mxu0 %v9732
  %v9771 = vpop.f32.mrf.mxu0
  %v9772 = vadd.f32 %v9703, %v9771
  %v9773 = vpop.f32.mrf.mxu0
  %v9774 = vadd.f32 %v9703, %v9773
  %v9775 = vpop.f32.mrf.mxu0
  %v9776 = vadd.f32 %v9708, %v9775
  %v9777 = vpop.f32.mrf.mxu0
  %v9778 = vadd.f32 %v9708, %v9777
  %9779 = vmatprep.mubr.bf16.mxu0 0
  %9780 = vmatmul.mubr.bf16.gmra.mxu0 %v9735
  %v9781 = vpop.f32.mrf.mxu0
  %v9782 = vadd.f32 %v9713, %v9781
  %v9783 = vpop.f32.mrf.mxu0
  %v9784 = vadd.f32 %v9713, %v9783
  %v9785 = vpop.f32.mrf.mxu0
  %v9786 = vadd.f32 %v9718, %v9785
  %v9787 = vpop.f32.mrf.mxu0
  %v9788 = vadd.f32 %v9718, %v9787
  %9789 = vdwg.mxu0
  %9790 = vmatprep.subr.bf16.mxu0 0
  %9791 = vmatpush1.bf16.msra.mxu0 0
  %9792 = vmatprep.subr.bf16.mxu0 0
  %9793 = vmatpush1.bf16.msra.mxu0 0
  %9794 = vmatprep.subr.bf16.mxu0 0
  %9795 = vmatpush1.bf16.msra.mxu0 0
  %9796 = vmatprep.subr.bf16.mxu0 0
  %9797 = vmatpush1.bf16.msra.mxu0 0
  %9798 = vmatprep.subr.bf16.mxu0 %v9695
  %9799 = vmatpush1.bf16.msra.mxu0 %v9694
  %9800 = vmatprep.subr.bf16.mxu0 %v9691
  %9801 = vmatpush1.bf16.msra.mxu0 %v9690
  %9802 = vmatprep.subr.bf16.mxu0 %v9687
  %9803 = vmatpush1.bf16.msra.mxu0 %v9686
  %9804 = vmatprep.subr.bf16.mxu0 %v9683
  %9805 = vmatpush1.bf16.msra.mxu0 %v9682
  %9806 = vmatprep.subr.bf16.mxu0 0
  %9807 = vmatpush2.bf16.msra.mxu0 0
  %9808 = vmatprep.subr.bf16.mxu0 0
  %9809 = vmatpush2.bf16.msra.mxu0 0
  %9810 = vmatprep.subr.bf16.mxu0 0
  %9811 = vmatpush2.bf16.msra.mxu0 0
  %9812 = vmatprep.subr.bf16.mxu0 0
  %9813 = vmatpush2.bf16.msra.mxu0 0
  %9814 = vmatprep.subr.bf16.mxu0 0
  %9815 = vmatpush2.bf16.msra.mxu0 0
  %9816 = vmatprep.subr.bf16.mxu0 0
  %9817 = vmatpush2.bf16.msra.mxu0 0
  %9818 = vmatprep.subr.bf16.mxu0 0
  %9819 = vmatpush2.bf16.msra.mxu0 0
  %9820 = vmatprep.subr.bf16.mxu0 0
  %9821 = vmatpush2.bf16.msra.mxu0 0
  %9822 = vmatprep.mubr.bf16.mxu0 0
  %9823 = vmatmul.mubr.bf16.gmra.mxu0 %v9732
  %v9824 = vpop.f32.mrf.mxu0
  %v9825 = vadd.f32 %v9703, %v9824
  %v9826 = vpop.f32.mrf.mxu0
  %v9827 = vadd.f32 %v9703, %v9826
  %v9828 = vpop.f32.mrf.mxu0
  %v9829 = vadd.f32 %v9708, %v9828
  %v9830 = vpop.f32.mrf.mxu0
  %v9831 = vadd.f32 %v9708, %v9830
  %9832 = vmatprep.mubr.bf16.mxu0 0
  %9833 = vmatmul.mubr.bf16.gmra.mxu0 %v9735
  %v9834 = vpop.f32.mrf.mxu0
  %v9835 = vadd.f32 %v9713, %v9834
  %v9836 = vpop.f32.mrf.mxu0
  %v9837 = vadd.f32 %v9713, %v9836
  %v9838 = vpop.f32.mrf.mxu0
  %v9839 = vadd.f32 %v9718, %v9838
  %v9840 = vpop.f32.mrf.mxu0
  %v9841 = vadd.f32 %v9718, %v9840
  %9842 = vdwg.mxu0
  %v9843 = vadd.f32 %v4586, %v9772
  %v9844 = vadd.f32 %v4587, %v9774
  %v9845 = vadd.f32 %v4588, %v9825
  %v9846 = vadd.f32 %v4589, %v9827
  %v9847 = vadd.f32 %v4590, %v9776
  %v9848 = vadd.f32 %v4591, %v9778
  %v9849 = vadd.f32 %v4592, %v9829
  %v9850 = vadd.f32 %v4593, %v9831
  %v9851 = vadd.f32 %v4594, %v9782
  %v9852 = vadd.f32 %v4595, %v9784
  %v9853 = vadd.f32 %v4596, %v9835
  %v9854 = vadd.f32 %v4597, %v9837
  %v9855 = vadd.f32 %v4598, %v9786
  %v9856 = vadd.f32 %v4599, %v9788
  %v9857 = vadd.f32 %v4600, %v9839
  %v9858 = vadd.f32 %v4601, %v9841
  %9859 = vst [vmem:[%s7] sm:$0xff] %v9843
  %9860 = vst [vmem:[%s7 + $0x8] sm:$0xff] %v9844
  %9861 = vst [vmem:[%s7 + $0x10] sm:$0xff] %v9845
  %9862 = vst [vmem:[%s7 + $0x18] sm:$0xff] %v9846
  %9863 = vst [vmem:[%s7 + $0x20] sm:$0xff] %v9847
  %9864 = vst [vmem:[%s7 + $0x28] sm:$0xff] %v9848
  %9865 = vst [vmem:[%s7 + $0x30] sm:$0xff] %v9849
  %9866 = vst [vmem:[%s7 + $0x38] sm:$0xff] %v9850
  %9867 = vst [vmem:[%s7 + $0x40] sm:$0xff] %v9851
  %9868 = vst [vmem:[%s7 + $0x48] sm:$0xff] %v9852
  %9869 = vst [vmem:[%s7 + $0x50] sm:$0xff] %v9853
  %9870 = vst [vmem:[%s7 + $0x58] sm:$0xff] %v9854
  %9871 = vst [vmem:[%s7 + $0x60] sm:$0xff] %v9855
  %9872 = vst [vmem:[%s7 + $0x68] sm:$0xff] %v9856
  %9873 = vst [vmem:[%s7 + $0x70] sm:$0xff] %v9857
  %9874 = vst [vmem:[%s7 + $0x78] sm:$0xff] %v9858
  // Predicated region
  $region30: #{transformer_block.1} parent=0 // pred_check
    _
  $region31: #{transformer_block.1} parent=0 // pred_check_branch
    %9876 = sbr.rel (0) target = $region33
  $region32: #{transformer_block.1} parent=0 // pred_region
    _
  $region33: #{transformer_block.1} parent=0 // pred_fallthru
    _
  // Predicated region
  $region34: #{transformer_block.1} parent=0 // pred_check
    _
  $region35: #{transformer_block.1} parent=0 // pred_check_branch
    %9878 = sbr.rel (0) target = $region37
  $region36: #{transformer_block.1} parent=0 // pred_region
    _
  $region37: #{transformer_block.1} parent=0 // pred_fallthru
    _

</llo_original>
